<compile_context>
chip_gen: v7x
topology: tpu7x:2x2x1
jax: 0.10.0
libtpu: 0.0.40
codegen_flags: <defaults>
</compile_context>

<pallas_src>
import functools
import math

import jax
import jax.numpy as jnp
from jax.experimental import pallas as pl
from jax.experimental.pallas import tpu as pltpu


# ----------------------------- kernel helpers ------------------------------

def _ln(x, g, b, eps):
    # f32 LayerNorm over the last (lane) axis.
    mean = jnp.mean(x, axis=-1, keepdims=True)
    var = jnp.mean(jnp.square(x - mean), axis=-1, keepdims=True)
    return (x - mean) * jax.lax.rsqrt(var + eps) * g + b


# ----------------------------- Pallas kernels ------------------------------

def _embed_kernel(p_ref, w_ref, b_ref, cls_ref, pos_ref, o_ref):
    # One batch element per grid step: patches (N, C*P*P) -> tokens (S, D).
    p = p_ref[0].astype(jnp.bfloat16)
    tok = jnp.dot(p, w_ref[...], preferred_element_type=jnp.float32) + b_ref[...]
    full = jnp.concatenate([cls_ref[...], tok], axis=0) + pos_ref[...]
    o_ref[0] = full.astype(o_ref.dtype)


def _layer_kernel(x_ref, ln1_g_ref, ln1_b_ref,
                  wq_ref, wk_ref, wv_ref, bq_ref, bk_ref, bv_ref,
                  wo_ref, bo_ref, ln2_g_ref, ln2_b_ref,
                  w1_ref, b1_ref, w2_ref, b2_ref,
                  o_ref, *, nh, dh, scale, eps):
    # Entire transformer encoder layer for one batch element, fully fused.
    x = x_ref[0].astype(jnp.float32)                       # (S, D) residual stream

    # --- attention block: LN1 -> QKV -> SDPA (all heads) -> out-proj -> +res ---
    y = _ln(x, ln1_g_ref[...], ln1_b_ref[...], eps)
    yb = y.astype(jnp.bfloat16)
    q = jnp.dot(yb, wq_ref[...], preferred_element_type=jnp.float32) + bq_ref[...]
    k = jnp.dot(yb, wk_ref[...], preferred_element_type=jnp.float32) + bk_ref[...]
    v = jnp.dot(yb, wv_ref[...], preferred_element_type=jnp.float32) + bv_ref[...]

    heads = []
    for h in range(nh):                                    # unrolled, VMEM-resident
        sl = slice(h * dh, (h + 1) * dh)
        qh = (q[:, sl] * scale).astype(jnp.bfloat16)       # (S, dh)
        kh = k[:, sl].astype(jnp.bfloat16)
        vh = v[:, sl].astype(jnp.bfloat16)
        # Contract last dims directly (no materialized K transpose).
        s = jax.lax.dot_general(qh, kh, (((1,), (1,)), ((), ())),
                                preferred_element_type=jnp.float32)   # (S, S)
        m = jnp.max(s, axis=-1, keepdims=True)
        p = jnp.exp(s - m)
        l = jnp.sum(p, axis=-1, keepdims=True)
        p = p * pl.reciprocal(l, approx=True)              # EUP, free slot
        heads.append(jnp.dot(p.astype(jnp.bfloat16), vh,
                             preferred_element_type=jnp.float32))     # (S, dh)
    attn = jnp.concatenate(heads, axis=-1).astype(jnp.bfloat16)       # (S, D)
    x = x + jnp.dot(attn, wo_ref[...],
                    preferred_element_type=jnp.float32) + bo_ref[...]

    # --- MLP block: LN2 -> fc1 -> GELU -> fc2 -> +res ---
    y = _ln(x, ln2_g_ref[...], ln2_b_ref[...], eps).astype(jnp.bfloat16)
    hmid = jnp.dot(y, w1_ref[...], preferred_element_type=jnp.float32) + b1_ref[...]
    # TODO(synk): torchvision ViT uses exact (erf) GELU; tanh-approximate GELU
    # is used here for Mosaic-safe lowering of the transcendental.
    hmid = jax.nn.gelu(hmid, approximate=True).astype(jnp.bfloat16)
    x = x + jnp.dot(hmid, w2_ref[...],
                    preferred_element_type=jnp.float32) + b2_ref[...]

    o_ref[0] = x.astype(o_ref.dtype)


def _head_kernel(x_ref, g_ref, b_ref, w_ref, hb_ref, o_ref, *, eps):
    # Final LayerNorm (applied to the CLS token, per-token op) + classifier.
    cls = x_ref[...][:, 0, :].astype(jnp.float32)          # (B, D)
    y = _ln(cls, g_ref[...], b_ref[...], eps).astype(jnp.bfloat16)
    o_ref[...] = (jnp.dot(y, w_ref[...], preferred_element_type=jnp.float32)
                  + hb_ref[...]).astype(o_ref.dtype)


# ----------------------------- kernel wrappers ------------------------------

def _const_spec(shape):
    nd = len(shape)
    return pl.BlockSpec(shape, lambda b, _nd=nd: (0,) * _nd)


def patch_embed(patches, prep, cfg):
    B, N, CPP = patches.shape
    S, D = cfg["seq"], cfg["hidden"]
    return pl.pallas_call(
        _embed_kernel,
        grid=(B,),
        in_specs=[pl.BlockSpec((1, N, CPP), lambda b: (b, 0, 0)),
                  _const_spec((CPP, D)), _const_spec((1, D)),
                  _const_spec((1, D)), _const_spec((S, D))],
        out_specs=pl.BlockSpec((1, S, D), lambda b: (b, 0, 0)),
        out_shape=jax.ShapeDtypeStruct((B, S, D), jnp.float32),
        compiler_params=pltpu.CompilerParams(dimension_semantics=("parallel",)),
    )(patches, prep["conv_w"], prep["conv_b"], prep["cls"], prep["pos"])


def transformer_layer(xs, lp, cfg):
    B, S, D = xs.shape
    Dm, nh = cfg["mlp"], cfg["heads"]
    dh = D // nh
    kern = functools.partial(_layer_kernel, nh=nh, dh=dh,
                             scale=1.0 / math.sqrt(dh), eps=1e-6)
    x_spec = pl.BlockSpec((1, S, D), lambda b: (b, 0, 0))
    return pl.pallas_call(
        kern,
        grid=(B,),
        in_specs=[x_spec,
                  _const_spec((1, D)), _const_spec((1, D)),                     # ln1
                  _const_spec((D, D)), _const_spec((D, D)), _const_spec((D, D)),  # wq wk wv
                  _const_spec((1, D)), _const_spec((1, D)), _const_spec((1, D)),  # bq bk bv
                  _const_spec((D, D)), _const_spec((1, D)),                     # wo bo
                  _const_spec((1, D)), _const_spec((1, D)),                     # ln2
                  _const_spec((D, Dm)), _const_spec((1, Dm)),                   # w1 b1
                  _const_spec((Dm, D)), _const_spec((1, D))],                   # w2 b2
        out_specs=x_spec,
        out_shape=jax.ShapeDtypeStruct((B, S, D), jnp.float32),
        input_output_aliases={0: 0},   # residual stream updated in place
        compiler_params=pltpu.CompilerParams(dimension_semantics=("parallel",)),
    )(xs, lp["ln1_g"], lp["ln1_b"], lp["wq"], lp["wk"], lp["wv"],
      lp["bq"], lp["bk"], lp["bv"], lp["wo"], lp["bo"],
      lp["ln2_g"], lp["ln2_b"], lp["w1"], lp["b1"], lp["w2"], lp["b2"])


def head(xs, prep):
    B, S, D = xs.shape
    NCp = prep["head_w"].shape[1]
    return pl.pallas_call(
        functools.partial(_head_kernel, eps=1e-6),
        grid=(1,),
        in_specs=[_const_spec((B, S, D)), _const_spec((1, D)), _const_spec((1, D)),
                  _const_spec((D, NCp)), _const_spec((1, NCp))],
        out_specs=_const_spec((B, NCp)),
        out_shape=jax.ShapeDtypeStruct((B, NCp), jnp.float32),
    )(xs, prep["ln_g"], prep["ln_b"], prep["head_w"], prep["head_b"])


# ------------------------------- ViT forward --------------------------------

def vit_forward(prep, x, cfg):
    B, C, H, W = x.shape
    P = cfg["patch"]
    nH, nW = H // P, W // P
    N = nH * nW
    # Glue: NCHW -> (B, N, C*P*P), flatten order (c, kh, kw) matching Conv2d
    # weight layout; Conv2d(kernel=stride=P) == matmul on this layout.
    patches = x.reshape(B, C, nH, P, nW, P).transpose(0, 2, 4, 1, 3, 5)
    patches = patches.reshape(B, N, C * P * P)

    xs = patch_embed(patches, prep, cfg)        # (B, S, D) with cls + pos fused
    for lp in prep["layers"]:
        xs = transformer_layer(xs, lp, cfg)     # fully fused encoder layer
    logits = head(xs, prep)                     # (B, 128) lane-dense, padded
    return logits[:, :cfg["num_classes"]]


def vit_base_forward(prep, x, size, rgb_mean, cfg):
    # Matches ViT_Base.forward: size / rgb_mean are accepted but unused.
    del size, rgb_mean
    return vit_forward(prep, x, cfg)


# ------------------------------ parameter init ------------------------------

def init_params(key, cfg):
    D, P, C = cfg["hidden"], cfg["patch"], 3
    Dm, S, nc = cfg["mlp"], cfg["seq"], cfg["num_classes"]
    keys = iter(jax.random.split(key, 8 + 8 * cfg["layers"]))

    def nrm(shape, scale=0.02):
        return (scale * jax.random.normal(next(keys), shape)).astype(jnp.float32)

    params = {
        "conv_w": nrm((C * P * P, D)),
        "conv_b": jnp.zeros((D,), jnp.float32),
        "cls": nrm((1, 1, D)),
        "pos": nrm((1, S, D)),
        "ln_g": jnp.ones((D,), jnp.float32),
        "ln_b": jnp.zeros((D,), jnp.float32),
        "head_w": nrm((D, nc)),
        "head_b": jnp.zeros((nc,), jnp.float32),
        "layers": [],
    }
    for _ in range(cfg["layers"]):
        params["layers"].append({
            "ln1_g": jnp.ones((D,), jnp.float32),
            "ln1_b": jnp.zeros((D,), jnp.float32),
            "qkv_w": nrm((D, 3 * D)),
            "qkv_b": jnp.zeros((3 * D,), jnp.float32),
            "out_w": nrm((D, D)),
            "out_b": jnp.zeros((D,), jnp.float32),
            "ln2_g": jnp.ones((D,), jnp.float32),
            "ln2_b": jnp.zeros((D,), jnp.float32),
            "w1": nrm((D, Dm)),
            "b1": jnp.zeros((Dm,), jnp.float32),
            "w2": nrm((Dm, D)),
            "b2": jnp.zeros((D,), jnp.float32),
        })
    return params


def prepare_params(params, cfg):
    # One-time layout prep: split QKV, reshape biases/LN to (1, D) lane rows,
    # cast matmul weights to bf16 (f32 MXU accumulation in-kernel), pad the
    # classifier head to a lane-dense 128 columns.
    D, Dm, S, nc = cfg["hidden"], cfg["mlp"], cfg["seq"], cfg["num_classes"]
    ncp = max(128, ((nc + 127) // 128) * 128)
    bf = jnp.bfloat16
    prep = {
        "conv_w": params["conv_w"].astype(bf),
        "conv_b": params["conv_b"].reshape(1, D),
        "cls": params["cls"].reshape(1, D),
        "pos": params["pos"].reshape(S, D),
        "ln_g": params["ln_g"].reshape(1, D),
        "ln_b": params["ln_b"].reshape(1, D),
        "head_w": jnp.pad(params["head_w"], ((0, 0), (0, ncp - nc))).astype(bf),
        "head_b": jnp.pad(params["head_b"], (0, ncp - nc)).reshape(1, ncp),
        "layers": [],
    }
    for lp in params["layers"]:
        qw, qb = lp["qkv_w"], lp["qkv_b"]
        prep["layers"].append({
            "ln1_g": lp["ln1_g"].reshape(1, D), "ln1_b": lp["ln1_b"].reshape(1, D),
            "wq": qw[:, :D].astype(bf), "wk": qw[:, D:2 * D].astype(bf),
            "wv": qw[:, 2 * D:].astype(bf),
            "bq": qb[:D].reshape(1, D), "bk": qb[D:2 * D].reshape(1, D),
            "bv": qb[2 * D:].reshape(1, D),
            "wo": lp["out_w"].astype(bf), "bo": lp["out_b"].reshape(1, D),
            "ln2_g": lp["ln2_g"].reshape(1, D), "ln2_b": lp["ln2_b"].reshape(1, D),
            "w1": lp["w1"].astype(bf), "b1": lp["b1"].reshape(1, Dm),
            "w2": lp["w2"].astype(bf), "b2": lp["b2"].reshape(1, D),
        })
    return prep


# ----------------------------------- main -----------------------------------

if __name__ == "__main__":
    # Small ViT-B/16-shaped config: 32x32 image, 16x16 patches -> 4 patches + cls.
    cfg = dict(patch=16, hidden=256, heads=4, mlp=512, layers=2, image=32,
               num_classes=10)
    cfg["seq"] = (cfg["image"] // cfg["patch"]) ** 2 + 1

    key = jax.random.PRNGKey(0)
    kx, kp, ks, kr = jax.random.split(key, 4)
    x = jax.random.normal(kx, (2, 3, cfg["image"], cfg["image"]), jnp.float32)
    size = jax.random.normal(ks, (2, 2), jnp.float32)       # unused in forward
    rgb_mean = jax.random.normal(kr, (2, 3), jnp.float32)   # unused in forward

    params = init_params(kp, cfg)
    prep = prepare_params(params, cfg)                       # one-time, outside jit

    fwd = jax.jit(lambda p, xi, si, ri: vit_base_forward(p, xi, si, ri, cfg))
    out = jax.block_until_ready(fwd(prep, x, size, rgb_mean))
    assert out.shape == (2, cfg["num_classes"]) and out.dtype == jnp.float32
    print("KERNEL_OK")
</pallas_src>

<mosaic_0001>
module attributes {stable_mosaic.version = 11 : i64} {
  func.func @_embed_kernel(%arg0: i32, %arg1: memref<1x4x768xf32, #tpu.memory_space<vmem>>, %arg2: memref<768x256xbf16, #tpu.memory_space<vmem>>, %arg3: memref<1x256xf32, #tpu.memory_space<vmem>>, %arg4: memref<1x256xf32, #tpu.memory_space<vmem>>, %arg5: memref<5x256xf32, #tpu.memory_space<vmem>>, %arg6: memref<1x5x256xf32, #tpu.memory_space<vmem>>) attributes {dimension_semantics = [#tpu.dimension_semantics<parallel>], iteration_bounds = array<i64: 2>, scalar_prefetch = 0 : i64, scratch_operands = 0 : i64, tpu.core_type = #tpu.core_type<tc>, window_params = [{transform_indices = @transform_0, window_bounds = array<i64: 1, 4, 768>}, {pipeline_mode = #tpu.pipeline_mode<synchronous>, transform_indices = @transform_1, window_bounds = array<i64: 768, 256>}, {pipeline_mode = #tpu.pipeline_mode<synchronous>, transform_indices = @transform_2, window_bounds = array<i64: 1, 256>}, {pipeline_mode = #tpu.pipeline_mode<synchronous>, transform_indices = @transform_3, window_bounds = array<i64: 1, 256>}, {pipeline_mode = #tpu.pipeline_mode<synchronous>, transform_indices = @transform_4, window_bounds = array<i64: 5, 256>}, {transform_indices = @transform_5, window_bounds = array<i64: 1, 5, 256>}]} {
    %c0 = arith.constant 0 : index
    %c0_0 = arith.constant 0 : index
    %c0_1 = arith.constant 0 : index
    %0 = vector.load %arg1[%c0, %c0_0, %c0_1] : memref<1x4x768xf32, #tpu.memory_space<vmem>>, vector<1x4x768xf32>
    %1 = vector.shape_cast %0 : vector<1x4x768xf32> to vector<4x768xf32>
    %2 = arith.truncf %1 : vector<4x768xf32> to vector<4x768xbf16>
    %c0_2 = arith.constant 0 : index
    %c0_3 = arith.constant 0 : index
    %3 = vector.load %arg2[%c0_2, %c0_3] : memref<768x256xbf16, #tpu.memory_space<vmem>>, vector<768x256xbf16>
    %cst = arith.constant dense<0.000000e+00> : vector<4x256xf32>
    %4 = tpu.matmul %2, %3, %cst {dimension_numbers = #tpu.dot_dimension_numbers<[1], [0], [0], [1], [0, 0, 1, 1], [], []>} : vector<4x768xbf16>, vector<768x256xbf16>, vector<4x256xf32> -> vector<4x256xf32>
    %c0_4 = arith.constant 0 : index
    %c0_5 = arith.constant 0 : index
    %5 = vector.load %arg3[%c0_4, %c0_5] : memref<1x256xf32, #tpu.memory_space<vmem>>, vector<1x256xf32>
    %6 = vector.broadcast %5 : vector<1x256xf32> to vector<4x256xf32>
    %7 = arith.addf %4, %6 : vector<4x256xf32>
    %c0_6 = arith.constant 0 : index
    %c0_7 = arith.constant 0 : index
    %8 = vector.load %arg4[%c0_6, %c0_7] : memref<1x256xf32, #tpu.memory_space<vmem>>, vector<1x256xf32>
    %9 = tpu.concatenate %8, %7 in 0 : vector<1x256xf32>, vector<4x256xf32> -> vector<5x256xf32>
    %c0_8 = arith.constant 0 : index
    %c0_9 = arith.constant 0 : index
    %10 = vector.load %arg5[%c0_8, %c0_9] : memref<5x256xf32, #tpu.memory_space<vmem>>, vector<5x256xf32>
    %11 = arith.addf %9, %10 : vector<5x256xf32>
    %c0_10 = arith.constant 0 : index
    %c0_11 = arith.constant 0 : index
    %c0_12 = arith.constant 0 : index
    %12 = vector.load %arg6[%c0_10, %c0_11, %c0_12] : memref<1x5x256xf32, #tpu.memory_space<vmem>>, vector<1x5x256xf32>
    %13 = vector.shape_cast %12 : vector<1x5x256xf32> to vector<5x256xf32>
    %14 = vector.shape_cast %11 : vector<5x256xf32> to vector<1x5x256xf32>
    tpu.vector_store %arg6[%c0_10, %c0_11, %c0_12], %14 {strides = array<i32>} : memref<1x5x256xf32, #tpu.memory_space<vmem>>, vector<1x5x256xf32>,
    return
  }
  func.func @transform_0(%arg0: i32) -> (i32, i32, i32) {
    %c0_i32 = arith.constant 0 : i32
    %c0_i32_0 = arith.constant 0 : i32
    %c0_i32_1 = arith.constant 0 : i32
    return %arg0, %c0_i32, %c0_i32_0 : i32, i32, i32
  }
  func.func @transform_1(%arg0: i32) -> (i32, i32) {
    %c0_i32 = arith.constant 0 : i32
    %c0_i32_0 = arith.constant 0 : i32
    %c0_i32_1 = arith.constant 0 : i32
    return %c0_i32, %c0_i32_0 : i32, i32
  }
  func.func @transform_2(%arg0: i32) -> (i32, i32) {
    %c0_i32 = arith.constant 0 : i32
    %c0_i32_0 = arith.constant 0 : i32
    %c0_i32_1 = arith.constant 0 : i32
    return %c0_i32, %c0_i32_0 : i32, i32
  }
  func.func @transform_3(%arg0: i32) -> (i32, i32) {
    %c0_i32 = arith.constant 0 : i32
    %c0_i32_0 = arith.constant 0 : i32
    %c0_i32_1 = arith.constant 0 : i32
    return %c0_i32, %c0_i32_0 : i32, i32
  }
  func.func @transform_4(%arg0: i32) -> (i32, i32) {
    %c0_i32 = arith.constant 0 : i32
    %c0_i32_0 = arith.constant 0 : i32
    %c0_i32_1 = arith.constant 0 : i32
    return %c0_i32, %c0_i32_0 : i32, i32
  }
  func.func @transform_5(%arg0: i32) -> (i32, i32, i32) {
    %c0_i32 = arith.constant 0 : i32
    %c0_i32_0 = arith.constant 0 : i32
    %c0_i32_1 = arith.constant 0 : i32
    return %arg0, %c0_i32, %c0_i32_0 : i32, i32, i32
  }
}

module attributes {stable_mosaic.version = 11 : i64} {
  func.func @_layer_kernel(%arg0: i32, %arg1: memref<1x5x256xf32, #tpu.memory_space<vmem>>, %arg2: memref<1x256xf32, #tpu.memory_space<vmem>>, %arg3: memref<1x256xf32, #tpu.memory_space<vmem>>, %arg4: memref<256x256xbf16, #tpu.memory_space<vmem>>, %arg5: memref<256x256xbf16, #tpu.memory_space<vmem>>, %arg6: memref<256x256xbf16, #tpu.memory_space<vmem>>, %arg7: memref<1x256xf32, #tpu.memory_space<vmem>>, %arg8: memref<1x256xf32, #tpu.memory_space<vmem>>, %arg9: memref<1x256xf32, #tpu.memory_space<vmem>>, %arg10: memref<256x256xbf16, #tpu.memory_space<vmem>>, %arg11: memref<1x256xf32, #tpu.memory_space<vmem>>, %arg12: memref<1x256xf32, #tpu.memory_space<vmem>>, %arg13: memref<1x256xf32, #tpu.memory_space<vmem>>, %arg14: memref<256x512xbf16, #tpu.memory_space<vmem>>, %arg15: memref<1x512xf32, #tpu.memory_space<vmem>>, %arg16: memref<512x256xbf16, #tpu.memory_space<vmem>>, %arg17: memref<1x256xf32, #tpu.memory_space<vmem>>, %arg18: memref<1x5x256xf32, #tpu.memory_space<vmem>>) attributes {dimension_semantics = [#tpu.dimension_semantics<parallel>], iteration_bounds = array<i64: 2>, scalar_prefetch = 0 : i64, scratch_operands = 0 : i64, tpu.core_type = #tpu.core_type<tc>, window_params = [{transform_indices = @transform_0, window_bounds = array<i64: 1, 5, 256>}, {pipeline_mode = #tpu.pipeline_mode<synchronous>, transform_indices = @transform_1, window_bounds = array<i64: 1, 256>}, {pipeline_mode = #tpu.pipeline_mode<synchronous>, transform_indices = @transform_2, window_bounds = array<i64: 1, 256>}, {pipeline_mode = #tpu.pipeline_mode<synchronous>, transform_indices = @transform_3, window_bounds = array<i64: 256, 256>}, {pipeline_mode = #tpu.pipeline_mode<synchronous>, transform_indices = @transform_4, window_bounds = array<i64: 256, 256>}, {pipeline_mode = #tpu.pipeline_mode<synchronous>, transform_indices = @transform_5, window_bounds = array<i64: 256, 256>}, {pipeline_mode = #tpu.pipeline_mode<synchronous>, transform_indices = @transform_6, window_bounds = array<i64: 1, 256>}, {pipeline_mode = #tpu.pipeline_mode<synchronous>, transform_indices = @transform_7, window_bounds = array<i64: 1, 256>}, {pipeline_mode = #tpu.pipeline_mode<synchronous>, transform_indices = @transform_8, window_bounds = array<i64: 1, 256>}, {pipeline_mode = #tpu.pipeline_mode<synchronous>, transform_indices = @transform_9, window_bounds = array<i64: 256, 256>}, {pipeline_mode = #tpu.pipeline_mode<synchronous>, transform_indices = @transform_10, window_bounds = array<i64: 1, 256>}, {pipeline_mode = #tpu.pipeline_mode<synchronous>, transform_indices = @transform_11, window_bounds = array<i64: 1, 256>}, {pipeline_mode = #tpu.pipeline_mode<synchronous>, transform_indices = @transform_12, window_bounds = array<i64: 1, 256>}, {pipeline_mode = #tpu.pipeline_mode<synchronous>, transform_indices = @transform_13, window_bounds = array<i64: 256, 512>}, {pipeline_mode = #tpu.pipeline_mode<synchronous>, transform_indices = @transform_14, window_bounds = array<i64: 1, 512>}, {pipeline_mode = #tpu.pipeline_mode<synchronous>, transform_indices = @transform_15, window_bounds = array<i64: 512, 256>}, {pipeline_mode = #tpu.pipeline_mode<synchronous>, transform_indices = @transform_16, window_bounds = array<i64: 1, 256>}, {transform_indices = @transform_17, window_bounds = array<i64: 1, 5, 256>}]} {
    %c0 = arith.constant 0 : index
    %c0_0 = arith.constant 0 : index
    %c0_1 = arith.constant 0 : index
    %0 = vector.load %arg1[%c0, %c0_0, %c0_1] : memref<1x5x256xf32, #tpu.memory_space<vmem>>, vector<1x5x256xf32>
    %1 = vector.shape_cast %0 : vector<1x5x256xf32> to vector<5x256xf32>
    %c0_2 = arith.constant 0 : index
    %c0_3 = arith.constant 0 : index
    %2 = vector.load %arg2[%c0_2, %c0_3] : memref<1x256xf32, #tpu.memory_space<vmem>>, vector<1x256xf32>
    %c0_4 = arith.constant 0 : index
    %c0_5 = arith.constant 0 : index
    %3 = vector.load %arg3[%c0_4, %c0_5] : memref<1x256xf32, #tpu.memory_space<vmem>>, vector<1x256xf32>
    %cst = arith.constant dense<0.000000e+00> : vector<5xf32>
    %4 = vector.multi_reduction <add>, %1, %cst [1] : vector<5x256xf32> to vector<5xf32>
    %5 = vector.shape_cast %4 : vector<5xf32> to vector<5x1xf32>
    %cst_6 = arith.constant 2.560000e+02 : f32
    %6 = vector.broadcast %cst_6 : f32 to vector<5x1xf32>
    %7 = arith.divf %5, %6 : vector<5x1xf32>
    %8 = vector.broadcast %7 : vector<5x1xf32> to vector<5x256xf32>
    %9 = arith.subf %1, %8 : vector<5x256xf32>
    %10 = arith.mulf %9, %9 : vector<5x256xf32>
    %cst_7 = arith.constant dense<0.000000e+00> : vector<5xf32>
    %11 = vector.multi_reduction <add>, %10, %cst_7 [1] : vector<5x256xf32> to vector<5xf32>
    %12 = vector.shape_cast %11 : vector<5xf32> to vector<5x1xf32>
    %cst_8 = arith.constant 2.560000e+02 : f32
    %13 = vector.broadcast %cst_8 : f32 to vector<5x1xf32>
    %14 = arith.divf %12, %13 : vector<5x1xf32>
    %15 = vector.broadcast %7 : vector<5x1xf32> to vector<5x256xf32>
    %16 = arith.subf %1, %15 : vector<5x256xf32>
    %cst_9 = arith.constant 9.99999997E-7 : f32
    %17 = vector.broadcast %cst_9 : f32 to vector<5x1xf32>
    %18 = arith.addf %14, %17 : vector<5x1xf32>
    %19 = math.rsqrt %18 : vector<5x1xf32>
    %20 = vector.broadcast %19 : vector<5x1xf32> to vector<5x256xf32>
    %21 = arith.mulf %16, %20 : vector<5x256xf32>
    %22 = vector.broadcast %2 : vector<1x256xf32> to vector<5x256xf32>
    %23 = arith.mulf %21, %22 : vector<5x256xf32>
    %24 = vector.broadcast %3 : vector<1x256xf32> to vector<5x256xf32>
    %25 = arith.addf %23, %24 : vector<5x256xf32>
    %26 = arith.truncf %25 : vector<5x256xf32> to vector<5x256xbf16>
    %c0_10 = arith.constant 0 : index
    %c0_11 = arith.constant 0 : index
    %27 = vector.load %arg4[%c0_10, %c0_11] : memref<256x256xbf16, #tpu.memory_space<vmem>>, vector<256x256xbf16>
    %cst_12 = arith.constant dense<0.000000e+00> : vector<5x256xf32>
    %28 = tpu.matmul %26, %27, %cst_12 {dimension_numbers = #tpu.dot_dimension_numbers<[1], [0], [0], [1], [0, 0, 1, 1], [], []>} : vector<5x256xbf16>, vector<256x256xbf16>, vector<5x256xf32> -> vector<5x256xf32>
    %c0_13 = arith.constant 0 : index
    %c0_14 = arith.constant 0 : index
    %29 = vector.load %arg7[%c0_13, %c0_14] : memref<1x256xf32, #tpu.memory_space<vmem>>, vector<1x256xf32>
    %30 = vector.broadcast %29 : vector<1x256xf32> to vector<5x256xf32>
    %31 = arith.addf %28, %30 : vector<5x256xf32>
    %c0_15 = arith.constant 0 : index
    %c0_16 = arith.constant 0 : index
    %32 = vector.load %arg5[%c0_15, %c0_16] : memref<256x256xbf16, #tpu.memory_space<vmem>>, vector<256x256xbf16>
    %cst_17 = arith.constant dense<0.000000e+00> : vector<5x256xf32>
    %33 = tpu.matmul %26, %32, %cst_17 {dimension_numbers = #tpu.dot_dimension_numbers<[1], [0], [0], [1], [0, 0, 1, 1], [], []>} : vector<5x256xbf16>, vector<256x256xbf16>, vector<5x256xf32> -> vector<5x256xf32>
    %c0_18 = arith.constant 0 : index
    %c0_19 = arith.constant 0 : index
    %34 = vector.load %arg8[%c0_18, %c0_19] : memref<1x256xf32, #tpu.memory_space<vmem>>, vector<1x256xf32>
    %35 = vector.broadcast %34 : vector<1x256xf32> to vector<5x256xf32>
    %36 = arith.addf %33, %35 : vector<5x256xf32>
    %c0_20 = arith.constant 0 : index
    %c0_21 = arith.constant 0 : index
    %37 = vector.load %arg6[%c0_20, %c0_21] : memref<256x256xbf16, #tpu.memory_space<vmem>>, vector<256x256xbf16>
    %cst_22 = arith.constant dense<0.000000e+00> : vector<5x256xf32>
    %38 = tpu.matmul %26, %37, %cst_22 {dimension_numbers = #tpu.dot_dimension_numbers<[1], [0], [0], [1], [0, 0, 1, 1], [], []>} : vector<5x256xbf16>, vector<256x256xbf16>, vector<5x256xf32> -> vector<5x256xf32>
    %c0_23 = arith.constant 0 : index
    %c0_24 = arith.constant 0 : index
    %39 = vector.load %arg9[%c0_23, %c0_24] : memref<1x256xf32, #tpu.memory_space<vmem>>, vector<1x256xf32>
    %40 = vector.broadcast %39 : vector<1x256xf32> to vector<5x256xf32>
    %41 = arith.addf %38, %40 : vector<5x256xf32>
    %42 = vector.extract_strided_slice %31 {offsets = [0, 0], sizes = [5, 64], strides = [1, 1]} : vector<5x256xf32> to vector<5x64xf32>
    %cst_25 = arith.constant 1.250000e-01 : f32
    %43 = vector.broadcast %cst_25 : f32 to vector<5x64xf32>
    %44 = arith.mulf %42, %43 : vector<5x64xf32>
    %45 = arith.truncf %44 : vector<5x64xf32> to vector<5x64xbf16>
    %46 = vector.extract_strided_slice %36 {offsets = [0, 0], sizes = [5, 64], strides = [1, 1]} : vector<5x256xf32> to vector<5x64xf32>
    %47 = arith.truncf %46 : vector<5x64xf32> to vector<5x64xbf16>
    %48 = vector.extract_strided_slice %41 {offsets = [0, 0], sizes = [5, 64], strides = [1, 1]} : vector<5x256xf32> to vector<5x64xf32>
    %49 = arith.truncf %48 : vector<5x64xf32> to vector<5x64xbf16>
    %cst_26 = arith.constant dense<0.000000e+00> : vector<5x5xf32>
    %50 = tpu.matmul %45, %47, %cst_26 {dimension_numbers = #tpu.dot_dimension_numbers<[1], [1], [0], [0], [0, 0, 1, 0], [], []>} : vector<5x64xbf16>, vector<5x64xbf16>, vector<5x5xf32> -> vector<5x5xf32>
    %cst_27 = arith.constant dense<0xFF800000> : vector<5xf32>
    %51 = vector.multi_reduction <maximumf>, %50, %cst_27 [1] : vector<5x5xf32> to vector<5xf32>
    %52 = vector.shape_cast %51 : vector<5xf32> to vector<5x1xf32>
    %53 = vector.broadcast %52 : vector<5x1xf32> to vector<5x5xf32>
    %54 = arith.subf %50, %53 : vector<5x5xf32>
    %55 = math.exp %54 : vector<5x5xf32>
    %cst_28 = arith.constant dense<0.000000e+00> : vector<5xf32>
    %56 = vector.multi_reduction <add>, %55, %cst_28 [1] : vector<5x5xf32> to vector<5xf32>
    %57 = vector.shape_cast %56 : vector<5xf32> to vector<5x1xf32>
    %58 = tpu.reciprocal %57 {approx = true} : vector<5x1xf32> -> vector<5x1xf32>
    %59 = vector.broadcast %58 : vector<5x1xf32> to vector<5x5xf32>
    %60 = arith.mulf %55, %59 : vector<5x5xf32>
    %61 = arith.truncf %60 : vector<5x5xf32> to vector<5x5xbf16>
    %cst_29 = arith.constant dense<0.000000e+00> : vector<5x64xf32>
    %62 = tpu.matmul %61, %49, %cst_29 {dimension_numbers = #tpu.dot_dimension_numbers<[1], [0], [0], [1], [0, 0, 1, 1], [], []>} : vector<5x5xbf16>, vector<5x64xbf16>, vector<5x64xf32> -> vector<5x64xf32>
    %63 = vector.extract_strided_slice %31 {offsets = [0, 64], sizes = [5, 64], strides = [1, 1]} : vector<5x256xf32> to vector<5x64xf32>
    %cst_30 = arith.constant 1.250000e-01 : f32
    %64 = vector.broadcast %cst_30 : f32 to vector<5x64xf32>
    %65 = arith.mulf %63, %64 : vector<5x64xf32>
    %66 = arith.truncf %65 : vector<5x64xf32> to vector<5x64xbf16>
    %67 = vector.extract_strided_slice %36 {offsets = [0, 64], sizes = [5, 64], strides = [1, 1]} : vector<5x256xf32> to vector<5x64xf32>
    %68 = arith.truncf %67 : vector<5x64xf32> to vector<5x64xbf16>
    %69 = vector.extract_strided_slice %41 {offsets = [0, 64], sizes = [5, 64], strides = [1, 1]} : vector<5x256xf32> to vector<5x64xf32>
    %70 = arith.truncf %69 : vector<5x64xf32> to vector<5x64xbf16>
    %cst_31 = arith.constant dense<0.000000e+00> : vector<5x5xf32>
    %71 = tpu.matmul %66, %68, %cst_31 {dimension_numbers = #tpu.dot_dimension_numbers<[1], [1], [0], [0], [0, 0, 1, 0], [], []>} : vector<5x64xbf16>, vector<5x64xbf16>, vector<5x5xf32> -> vector<5x5xf32>
    %cst_32 = arith.constant dense<0xFF800000> : vector<5xf32>
    %72 = vector.multi_reduction <maximumf>, %71, %cst_32 [1] : vector<5x5xf32> to vector<5xf32>
    %73 = vector.shape_cast %72 : vector<5xf32> to vector<5x1xf32>
    %74 = vector.broadcast %73 : vector<5x1xf32> to vector<5x5xf32>
    %75 = arith.subf %71, %74 : vector<5x5xf32>
    %76 = math.exp %75 : vector<5x5xf32>
    %cst_33 = arith.constant dense<0.000000e+00> : vector<5xf32>
    %77 = vector.multi_reduction <add>, %76, %cst_33 [1] : vector<5x5xf32> to vector<5xf32>
    %78 = vector.shape_cast %77 : vector<5xf32> to vector<5x1xf32>
    %79 = tpu.reciprocal %78 {approx = true} : vector<5x1xf32> -> vector<5x1xf32>
    %80 = vector.broadcast %79 : vector<5x1xf32> to vector<5x5xf32>
    %81 = arith.mulf %76, %80 : vector<5x5xf32>
    %82 = arith.truncf %81 : vector<5x5xf32> to vector<5x5xbf16>
    %cst_34 = arith.constant dense<0.000000e+00> : vector<5x64xf32>
    %83 = tpu.matmul %82, %70, %cst_34 {dimension_numbers = #tpu.dot_dimension_numbers<[1], [0], [0], [1], [0, 0, 1, 1], [], []>} : vector<5x5xbf16>, vector<5x64xbf16>, vector<5x64xf32> -> vector<5x64xf32>
    %84 = vector.extract_strided_slice %31 {offsets = [0, 128], sizes = [5, 64], strides = [1, 1]} : vector<5x256xf32> to vector<5x64xf32>
    %cst_35 = arith.constant 1.250000e-01 : f32
    %85 = vector.broadcast %cst_35 : f32 to vector<5x64xf32>
    %86 = arith.mulf %84, %85 : vector<5x64xf32>
    %87 = arith.truncf %86 : vector<5x64xf32> to vector<5x64xbf16>
    %88 = vector.extract_strided_slice %36 {offsets = [0, 128], sizes = [5, 64], strides = [1, 1]} : vector<5x256xf32> to vector<5x64xf32>
    %89 = arith.truncf %88 : vector<5x64xf32> to vector<5x64xbf16>
    %90 = vector.extract_strided_slice %41 {offsets = [0, 128], sizes = [5, 64], strides = [1, 1]} : vector<5x256xf32> to vector<5x64xf32>
    %91 = arith.truncf %90 : vector<5x64xf32> to vector<5x64xbf16>
    %cst_36 = arith.constant dense<0.000000e+00> : vector<5x5xf32>
    %92 = tpu.matmul %87, %89, %cst_36 {dimension_numbers = #tpu.dot_dimension_numbers<[1], [1], [0], [0], [0, 0, 1, 0], [], []>} : vector<5x64xbf16>, vector<5x64xbf16>, vector<5x5xf32> -> vector<5x5xf32>
    %cst_37 = arith.constant dense<0xFF800000> : vector<5xf32>
    %93 = vector.multi_reduction <maximumf>, %92, %cst_37 [1] : vector<5x5xf32> to vector<5xf32>
    %94 = vector.shape_cast %93 : vector<5xf32> to vector<5x1xf32>
    %95 = vector.broadcast %94 : vector<5x1xf32> to vector<5x5xf32>
    %96 = arith.subf %92, %95 : vector<5x5xf32>
    %97 = math.exp %96 : vector<5x5xf32>
    %cst_38 = arith.constant dense<0.000000e+00> : vector<5xf32>
    %98 = vector.multi_reduction <add>, %97, %cst_38 [1] : vector<5x5xf32> to vector<5xf32>
    %99 = vector.shape_cast %98 : vector<5xf32> to vector<5x1xf32>
    %100 = tpu.reciprocal %99 {approx = true} : vector<5x1xf32> -> vector<5x1xf32>
    %101 = vector.broadcast %100 : vector<5x1xf32> to vector<5x5xf32>
    %102 = arith.mulf %97, %101 : vector<5x5xf32>
    %103 = arith.truncf %102 : vector<5x5xf32> to vector<5x5xbf16>
    %cst_39 = arith.constant dense<0.000000e+00> : vector<5x64xf32>
    %104 = tpu.matmul %103, %91, %cst_39 {dimension_numbers = #tpu.dot_dimension_numbers<[1], [0], [0], [1], [0, 0, 1, 1], [], []>} : vector<5x5xbf16>, vector<5x64xbf16>, vector<5x64xf32> -> vector<5x64xf32>
    %105 = vector.extract_strided_slice %31 {offsets = [0, 192], sizes = [5, 64], strides = [1, 1]} : vector<5x256xf32> to vector<5x64xf32>
    %cst_40 = arith.constant 1.250000e-01 : f32
    %106 = vector.broadcast %cst_40 : f32 to vector<5x64xf32>
    %107 = arith.mulf %105, %106 : vector<5x64xf32>
    %108 = arith.truncf %107 : vector<5x64xf32> to vector<5x64xbf16>
    %109 = vector.extract_strided_slice %36 {offsets = [0, 192], sizes = [5, 64], strides = [1, 1]} : vector<5x256xf32> to vector<5x64xf32>
    %110 = arith.truncf %109 : vector<5x64xf32> to vector<5x64xbf16>
    %111 = vector.extract_strided_slice %41 {offsets = [0, 192], sizes = [5, 64], strides = [1, 1]} : vector<5x256xf32> to vector<5x64xf32>
    %112 = arith.truncf %111 : vector<5x64xf32> to vector<5x64xbf16>
    %cst_41 = arith.constant dense<0.000000e+00> : vector<5x5xf32>
    %113 = tpu.matmul %108, %110, %cst_41 {dimension_numbers = #tpu.dot_dimension_numbers<[1], [1], [0], [0], [0, 0, 1, 0], [], []>} : vector<5x64xbf16>, vector<5x64xbf16>, vector<5x5xf32> -> vector<5x5xf32>
    %cst_42 = arith.constant dense<0xFF800000> : vector<5xf32>
    %114 = vector.multi_reduction <maximumf>, %113, %cst_42 [1] : vector<5x5xf32> to vector<5xf32>
    %115 = vector.shape_cast %114 : vector<5xf32> to vector<5x1xf32>
    %116 = vector.broadcast %115 : vector<5x1xf32> to vector<5x5xf32>
    %117 = arith.subf %113, %116 : vector<5x5xf32>
    %118 = math.exp %117 : vector<5x5xf32>
    %cst_43 = arith.constant dense<0.000000e+00> : vector<5xf32>
    %119 = vector.multi_reduction <add>, %118, %cst_43 [1] : vector<5x5xf32> to vector<5xf32>
    %120 = vector.shape_cast %119 : vector<5xf32> to vector<5x1xf32>
    %121 = tpu.reciprocal %120 {approx = true} : vector<5x1xf32> -> vector<5x1xf32>
    %122 = vector.broadcast %121 : vector<5x1xf32> to vector<5x5xf32>
    %123 = arith.mulf %118, %122 : vector<5x5xf32>
    %124 = arith.truncf %123 : vector<5x5xf32> to vector<5x5xbf16>
    %cst_44 = arith.constant dense<0.000000e+00> : vector<5x64xf32>
    %125 = tpu.matmul %124, %112, %cst_44 {dimension_numbers = #tpu.dot_dimension_numbers<[1], [0], [0], [1], [0, 0, 1, 1], [], []>} : vector<5x5xbf16>, vector<5x64xbf16>, vector<5x64xf32> -> vector<5x64xf32>
    %126 = tpu.concatenate %62, %83, %104, %125 in 1 : vector<5x64xf32>, vector<5x64xf32>, vector<5x64xf32>, vector<5x64xf32> -> vector<5x256xf32>
    %127 = arith.truncf %126 : vector<5x256xf32> to vector<5x256xbf16>
    %c0_45 = arith.constant 0 : index
    %c0_46 = arith.constant 0 : index
    %128 = vector.load %arg10[%c0_45, %c0_46] : memref<256x256xbf16, #tpu.memory_space<vmem>>, vector<256x256xbf16>
    %cst_47 = arith.constant dense<0.000000e+00> : vector<5x256xf32>
    %129 = tpu.matmul %127, %128, %cst_47 {dimension_numbers = #tpu.dot_dimension_numbers<[1], [0], [0], [1], [0, 0, 1, 1], [], []>} : vector<5x256xbf16>, vector<256x256xbf16>, vector<5x256xf32> -> vector<5x256xf32>
    %130 = arith.addf %1, %129 : vector<5x256xf32>
    %c0_48 = arith.constant 0 : index
    %c0_49 = arith.constant 0 : index
    %131 = vector.load %arg11[%c0_48, %c0_49] : memref<1x256xf32, #tpu.memory_space<vmem>>, vector<1x256xf32>
    %132 = vector.broadcast %131 : vector<1x256xf32> to vector<5x256xf32>
    %133 = arith.addf %130, %132 : vector<5x256xf32>
    %c0_50 = arith.constant 0 : index
    %c0_51 = arith.constant 0 : index
    %134 = vector.load %arg12[%c0_50, %c0_51] : memref<1x256xf32, #tpu.memory_space<vmem>>, vector<1x256xf32>
    %c0_52 = arith.constant 0 : index
    %c0_53 = arith.constant 0 : index
    %135 = vector.load %arg13[%c0_52, %c0_53] : memref<1x256xf32, #tpu.memory_space<vmem>>, vector<1x256xf32>
    %cst_54 = arith.constant dense<0.000000e+00> : vector<5xf32>
    %136 = vector.multi_reduction <add>, %133, %cst_54 [1] : vector<5x256xf32> to vector<5xf32>
    %137 = vector.shape_cast %136 : vector<5xf32> to vector<5x1xf32>
    %cst_55 = arith.constant 2.560000e+02 : f32
    %138 = vector.broadcast %cst_55 : f32 to vector<5x1xf32>
    %139 = arith.divf %137, %138 : vector<5x1xf32>
    %140 = vector.broadcast %139 : vector<5x1xf32> to vector<5x256xf32>
    %141 = arith.subf %133, %140 : vector<5x256xf32>
    %142 = arith.mulf %141, %141 : vector<5x256xf32>
    %cst_56 = arith.constant dense<0.000000e+00> : vector<5xf32>
    %143 = vector.multi_reduction <add>, %142, %cst_56 [1] : vector<5x256xf32> to vector<5xf32>
    %144 = vector.shape_cast %143 : vector<5xf32> to vector<5x1xf32>
    %cst_57 = arith.constant 2.560000e+02 : f32
    %145 = vector.broadcast %cst_57 : f32 to vector<5x1xf32>
    %146 = arith.divf %144, %145 : vector<5x1xf32>
    %147 = vector.broadcast %139 : vector<5x1xf32> to vector<5x256xf32>
    %148 = arith.subf %133, %147 : vector<5x256xf32>
    %cst_58 = arith.constant 9.99999997E-7 : f32
    %149 = vector.broadcast %cst_58 : f32 to vector<5x1xf32>
    %150 = arith.addf %146, %149 : vector<5x1xf32>
    %151 = math.rsqrt %150 : vector<5x1xf32>
    %152 = vector.broadcast %151 : vector<5x1xf32> to vector<5x256xf32>
    %153 = arith.mulf %148, %152 : vector<5x256xf32>
    %154 = vector.broadcast %134 : vector<1x256xf32> to vector<5x256xf32>
    %155 = arith.mulf %153, %154 : vector<5x256xf32>
    %156 = vector.broadcast %135 : vector<1x256xf32> to vector<5x256xf32>
    %157 = arith.addf %155, %156 : vector<5x256xf32>
    %158 = arith.truncf %157 : vector<5x256xf32> to vector<5x256xbf16>
    %c0_59 = arith.constant 0 : index
    %c0_60 = arith.constant 0 : index
    %159 = vector.load %arg14[%c0_59, %c0_60] : memref<256x512xbf16, #tpu.memory_space<vmem>>, vector<256x512xbf16>
    %cst_61 = arith.constant dense<0.000000e+00> : vector<5x512xf32>
    %160 = tpu.matmul %158, %159, %cst_61 {dimension_numbers = #tpu.dot_dimension_numbers<[1], [0], [0], [1], [0, 0, 1, 1], [], []>} : vector<5x256xbf16>, vector<256x512xbf16>, vector<5x512xf32> -> vector<5x512xf32>
    %c0_62 = arith.constant 0 : index
    %c0_63 = arith.constant 0 : index
    %161 = vector.load %arg15[%c0_62, %c0_63] : memref<1x512xf32, #tpu.memory_space<vmem>>, vector<1x512xf32>
    %162 = vector.broadcast %161 : vector<1x512xf32> to vector<5x512xf32>
    %163 = arith.addf %160, %162 : vector<5x512xf32>
    %164 = arith.mulf %163, %163 : vector<5x512xf32>
    %165 = arith.mulf %163, %164 : vector<5x512xf32>
    %cst_64 = arith.constant 4.471500e-02 : f32
    %166 = vector.broadcast %cst_64 : f32 to vector<5x512xf32>
    %167 = arith.mulf %166, %165 : vector<5x512xf32>
    %168 = arith.addf %163, %167 : vector<5x512xf32>
    %cst_65 = arith.constant 0.797884583 : f32
    %169 = vector.broadcast %cst_65 : f32 to vector<5x512xf32>
    %170 = arith.mulf %169, %168 : vector<5x512xf32>
    %171 = math.tanh %170 : vector<5x512xf32>
    %cst_66 = arith.constant 1.000000e+00 : f32
    %172 = vector.broadcast %cst_66 : f32 to vector<5x512xf32>
    %173 = arith.addf %172, %171 : vector<5x512xf32>
    %cst_67 = arith.constant 5.000000e-01 : f32
    %174 = vector.broadcast %cst_67 : f32 to vector<5x512xf32>
    %175 = arith.mulf %174, %173 : vector<5x512xf32>
    %176 = arith.mulf %163, %175 : vector<5x512xf32>
    %177 = arith.truncf %176 : vector<5x512xf32> to vector<5x512xbf16>
    %c0_68 = arith.constant 0 : index
    %c0_69 = arith.constant 0 : index
    %178 = vector.load %arg16[%c0_68, %c0_69] : memref<512x256xbf16, #tpu.memory_space<vmem>>, vector<512x256xbf16>
    %cst_70 = arith.constant dense<0.000000e+00> : vector<5x256xf32>
    %179 = tpu.matmul %177, %178, %cst_70 {dimension_numbers = #tpu.dot_dimension_numbers<[1], [0], [0], [1], [0, 0, 1, 1], [], []>} : vector<5x512xbf16>, vector<512x256xbf16>, vector<5x256xf32> -> vector<5x256xf32>
    %180 = arith.addf %133, %179 : vector<5x256xf32>
    %c0_71 = arith.constant 0 : index
    %c0_72 = arith.constant 0 : index
    %181 = vector.load %arg17[%c0_71, %c0_72] : memref<1x256xf32, #tpu.memory_space<vmem>>, vector<1x256xf32>
    %182 = vector.broadcast %181 : vector<1x256xf32> to vector<5x256xf32>
    %183 = arith.addf %180, %182 : vector<5x256xf32>
    %c0_73 = arith.constant 0 : index
    %c0_74 = arith.constant 0 : index
    %c0_75 = arith.constant 0 : index
    %184 = vector.load %arg18[%c0_73, %c0_74, %c0_75] : memref<1x5x256xf32, #tpu.memory_space<vmem>>, vector<1x5x256xf32>
    %185 = vector.shape_cast %184 : vector<1x5x256xf32> to vector<5x256xf32>
    %186 = vector.shape_cast %183 : vector<5x256xf32> to vector<1x5x256xf32>
    tpu.vector_store %arg18[%c0_73, %c0_74, %c0_75], %186 {strides = array<i32>} : memref<1x5x256xf32, #tpu.memory_space<vmem>>, vector<1x5x256xf32>,
    return
  }
  func.func @transform_0(%arg0: i32) -> (i32, i32, i32) {
    %c0_i32 = arith.constant 0 : i32
    %c0_i32_0 = arith.constant 0 : i32
    %c0_i32_1 = arith.constant 0 : i32
    return %arg0, %c0_i32, %c0_i32_0 : i32, i32, i32
  }
  func.func @transform_1(%arg0: i32) -> (i32, i32) {
    %c0_i32 = arith.constant 0 : i32
    %c0_i32_0 = arith.constant 0 : i32
    %c0_i32_1 = arith.constant 0 : i32
    return %c0_i32, %c0_i32_0 : i32, i32
  }
  func.func @transform_2(%arg0: i32) -> (i32, i32) {
    %c0_i32 = arith.constant 0 : i32
    %c0_i32_0 = arith.constant 0 : i32
    %c0_i32_1 = arith.constant 0 : i32
    return %c0_i32, %c0_i32_0 : i32, i32
  }
  func.func @transform_3(%arg0: i32) -> (i32, i32) {
    %c0_i32 = arith.constant 0 : i32
    %c0_i32_0 = arith.constant 0 : i32
    %c0_i32_1 = arith.constant 0 : i32
    return %c0_i32, %c0_i32_0 : i32, i32
  }
  func.func @transform_4(%arg0: i32) -> (i32, i32) {
    %c0_i32 = arith.constant 0 : i32
    %c0_i32_0 = arith.constant 0 : i32
    %c0_i32_1 = arith.constant 0 : i32
    return %c0_i32, %c0_i32_0 : i32, i32
  }
  func.func @transform_5(%arg0: i32) -> (i32, i32) {
    %c0_i32 = arith.constant 0 : i32
    %c0_i32_0 = arith.constant 0 : i32
    %c0_i32_1 = arith.constant 0 : i32
    return %c0_i32, %c0_i32_0 : i32, i32
  }
  func.func @transform_6(%arg0: i32) -> (i32, i32) {
    %c0_i32 = arith.constant 0 : i32
    %c0_i32_0 = arith.constant 0 : i32
    %c0_i32_1 = arith.constant 0 : i32
    return %c0_i32, %c0_i32_0 : i32, i32
  }
  func.func @transform_7(%arg0: i32) -> (i32, i32) {
    %c0_i32 = arith.constant 0 : i32
    %c0_i32_0 = arith.constant 0 : i32
    %c0_i32_1 = arith.constant 0 : i32
    return %c0_i32, %c0_i32_0 : i32, i32
  }
  func.func @transform_8(%arg0: i32) -> (i32, i32) {
    %c0_i32 = arith.constant 0 : i32
    %c0_i32_0 = arith.constant 0 : i32
    %c0_i32_1 = arith.constant 0 : i32
    return %c0_i32, %c0_i32_0 : i32, i32
  }
  func.func @transform_9(%arg0: i32) -> (i32, i32) {
    %c0_i32 = arith.constant 0 : i32
    %c0_i32_0 = arith.constant 0 : i32
    %c0_i32_1 = arith.constant 0 : i32
    return %c0_i32, %c0_i32_0 : i32, i32
  }
  func.func @transform_10(%arg0: i32) -> (i32, i32) {
    %c0_i32 = arith.constant 0 : i32
    %c0_i32_0 = arith.constant 0 : i32
    %c0_i32_1 = arith.constant 0 : i32
    return %c0_i32, %c0_i32_0 : i32, i32
  }
  func.func @transform_11(%arg0: i32) -> (i32, i32) {
    %c0_i32 = arith.constant 0 : i32
    %c0_i32_0 = arith.constant 0 : i32
    %c0_i32_1 = arith.constant 0 : i32
    return %c0_i32, %c0_i32_0 : i32, i32
  }
  func.func @transform_12(%arg0: i32) -> (i32, i32) {
    %c0_i32 = arith.constant 0 : i32
    %c0_i32_0 = arith.constant 0 : i32
    %c0_i32_1 = arith.constant 0 : i32
    return %c0_i32, %c0_i32_0 : i32, i32
  }
  func.func @transform_13(%arg0: i32) -> (i32, i32) {
    %c0_i32 = arith.constant 0 : i32
    %c0_i32_0 = arith.constant 0 : i32
    %c0_i32_1 = arith.constant 0 : i32
    return %c0_i32, %c0_i32_0 : i32, i32
  }
  func.func @transform_14(%arg0: i32) -> (i32, i32) {
    %c0_i32 = arith.constant 0 : i32
    %c0_i32_0 = arith.constant 0 : i32
    %c0_i32_1 = arith.constant 0 : i32
    return %c0_i32, %c0_i32_0 : i32, i32
  }
  func.func @transform_15(%arg0: i32) -> (i32, i32) {
    %c0_i32 = arith.constant 0 : i32
    %c0_i32_0 = arith.constant 0 : i32
    %c0_i32_1 = arith.constant 0 : i32
    return %c0_i32, %c0_i32_0 : i32, i32
  }
  func.func @transform_16(%arg0: i32) -> (i32, i32) {
    %c0_i32 = arith.constant 0 : i32
    %c0_i32_0 = arith.constant 0 : i32
    %c0_i32_1 = arith.constant 0 : i32
    return %c0_i32, %c0_i32_0 : i32, i32
  }
  func.func @transform_17(%arg0: i32) -> (i32, i32, i32) {
    %c0_i32 = arith.constant 0 : i32
    %c0_i32_0 = arith.constant 0 : i32
    %c0_i32_1 = arith.constant 0 : i32
    return %arg0, %c0_i32, %c0_i32_0 : i32, i32, i32
  }
}

module attributes {stable_mosaic.version = 11 : i64} {
  func.func @_layer_kernel(%arg0: i32, %arg1: memref<1x5x256xf32, #tpu.memory_space<vmem>>, %arg2: memref<1x256xf32, #tpu.memory_space<vmem>>, %arg3: memref<1x256xf32, #tpu.memory_space<vmem>>, %arg4: memref<256x256xbf16, #tpu.memory_space<vmem>>, %arg5: memref<256x256xbf16, #tpu.memory_space<vmem>>, %arg6: memref<256x256xbf16, #tpu.memory_space<vmem>>, %arg7: memref<1x256xf32, #tpu.memory_space<vmem>>, %arg8: memref<1x256xf32, #tpu.memory_space<vmem>>, %arg9: memref<1x256xf32, #tpu.memory_space<vmem>>, %arg10: memref<256x256xbf16, #tpu.memory_space<vmem>>, %arg11: memref<1x256xf32, #tpu.memory_space<vmem>>, %arg12: memref<1x256xf32, #tpu.memory_space<vmem>>, %arg13: memref<1x256xf32, #tpu.memory_space<vmem>>, %arg14: memref<256x512xbf16, #tpu.memory_space<vmem>>, %arg15: memref<1x512xf32, #tpu.memory_space<vmem>>, %arg16: memref<512x256xbf16, #tpu.memory_space<vmem>>, %arg17: memref<1x256xf32, #tpu.memory_space<vmem>>, %arg18: memref<1x5x256xf32, #tpu.memory_space<vmem>>) attributes {dimension_semantics = [#tpu.dimension_semantics<parallel>], iteration_bounds = array<i64: 2>, scalar_prefetch = 0 : i64, scratch_operands = 0 : i64, tpu.core_type = #tpu.core_type<tc>, window_params = [{transform_indices = @transform_0, window_bounds = array<i64: 1, 5, 256>}, {pipeline_mode = #tpu.pipeline_mode<synchronous>, transform_indices = @transform_1, window_bounds = array<i64: 1, 256>}, {pipeline_mode = #tpu.pipeline_mode<synchronous>, transform_indices = @transform_2, window_bounds = array<i64: 1, 256>}, {pipeline_mode = #tpu.pipeline_mode<synchronous>, transform_indices = @transform_3, window_bounds = array<i64: 256, 256>}, {pipeline_mode = #tpu.pipeline_mode<synchronous>, transform_indices = @transform_4, window_bounds = array<i64: 256, 256>}, {pipeline_mode = #tpu.pipeline_mode<synchronous>, transform_indices = @transform_5, window_bounds = array<i64: 256, 256>}, {pipeline_mode = #tpu.pipeline_mode<synchronous>, transform_indices = @transform_6, window_bounds = array<i64: 1, 256>}, {pipeline_mode = #tpu.pipeline_mode<synchronous>, transform_indices = @transform_7, window_bounds = array<i64: 1, 256>}, {pipeline_mode = #tpu.pipeline_mode<synchronous>, transform_indices = @transform_8, window_bounds = array<i64: 1, 256>}, {pipeline_mode = #tpu.pipeline_mode<synchronous>, transform_indices = @transform_9, window_bounds = array<i64: 256, 256>}, {pipeline_mode = #tpu.pipeline_mode<synchronous>, transform_indices = @transform_10, window_bounds = array<i64: 1, 256>}, {pipeline_mode = #tpu.pipeline_mode<synchronous>, transform_indices = @transform_11, window_bounds = array<i64: 1, 256>}, {pipeline_mode = #tpu.pipeline_mode<synchronous>, transform_indices = @transform_12, window_bounds = array<i64: 1, 256>}, {pipeline_mode = #tpu.pipeline_mode<synchronous>, transform_indices = @transform_13, window_bounds = array<i64: 256, 512>}, {pipeline_mode = #tpu.pipeline_mode<synchronous>, transform_indices = @transform_14, window_bounds = array<i64: 1, 512>}, {pipeline_mode = #tpu.pipeline_mode<synchronous>, transform_indices = @transform_15, window_bounds = array<i64: 512, 256>}, {pipeline_mode = #tpu.pipeline_mode<synchronous>, transform_indices = @transform_16, window_bounds = array<i64: 1, 256>}, {transform_indices = @transform_17, window_bounds = array<i64: 1, 5, 256>}]} {
    %c0 = arith.constant 0 : index
    %c0_0 = arith.constant 0 : index
    %c0_1 = arith.constant 0 : index
    %0 = vector.load %arg1[%c0, %c0_0, %c0_1] : memref<1x5x256xf32, #tpu.memory_space<vmem>>, vector<1x5x256xf32>
    %1 = vector.shape_cast %0 : vector<1x5x256xf32> to vector<5x256xf32>
    %c0_2 = arith.constant 0 : index
    %c0_3 = arith.constant 0 : index
    %2 = vector.load %arg2[%c0_2, %c0_3] : memref<1x256xf32, #tpu.memory_space<vmem>>, vector<1x256xf32>
    %c0_4 = arith.constant 0 : index
    %c0_5 = arith.constant 0 : index
    %3 = vector.load %arg3[%c0_4, %c0_5] : memref<1x256xf32, #tpu.memory_space<vmem>>, vector<1x256xf32>
    %cst = arith.constant dense<0.000000e+00> : vector<5xf32>
    %4 = vector.multi_reduction <add>, %1, %cst [1] : vector<5x256xf32> to vector<5xf32>
    %5 = vector.shape_cast %4 : vector<5xf32> to vector<5x1xf32>
    %cst_6 = arith.constant 2.560000e+02 : f32
    %6 = vector.broadcast %cst_6 : f32 to vector<5x1xf32>
    %7 = arith.divf %5, %6 : vector<5x1xf32>
    %8 = vector.broadcast %7 : vector<5x1xf32> to vector<5x256xf32>
    %9 = arith.subf %1, %8 : vector<5x256xf32>
    %10 = arith.mulf %9, %9 : vector<5x256xf32>
    %cst_7 = arith.constant dense<0.000000e+00> : vector<5xf32>
    %11 = vector.multi_reduction <add>, %10, %cst_7 [1] : vector<5x256xf32> to vector<5xf32>
    %12 = vector.shape_cast %11 : vector<5xf32> to vector<5x1xf32>
    %cst_8 = arith.constant 2.560000e+02 : f32
    %13 = vector.broadcast %cst_8 : f32 to vector<5x1xf32>
    %14 = arith.divf %12, %13 : vector<5x1xf32>
    %15 = vector.broadcast %7 : vector<5x1xf32> to vector<5x256xf32>
    %16 = arith.subf %1, %15 : vector<5x256xf32>
    %cst_9 = arith.constant 9.99999997E-7 : f32
    %17 = vector.broadcast %cst_9 : f32 to vector<5x1xf32>
    %18 = arith.addf %14, %17 : vector<5x1xf32>
    %19 = math.rsqrt %18 : vector<5x1xf32>
    %20 = vector.broadcast %19 : vector<5x1xf32> to vector<5x256xf32>
    %21 = arith.mulf %16, %20 : vector<5x256xf32>
    %22 = vector.broadcast %2 : vector<1x256xf32> to vector<5x256xf32>
    %23 = arith.mulf %21, %22 : vector<5x256xf32>
    %24 = vector.broadcast %3 : vector<1x256xf32> to vector<5x256xf32>
    %25 = arith.addf %23, %24 : vector<5x256xf32>
    %26 = arith.truncf %25 : vector<5x256xf32> to vector<5x256xbf16>
    %c0_10 = arith.constant 0 : index
    %c0_11 = arith.constant 0 : index
    %27 = vector.load %arg4[%c0_10, %c0_11] : memref<256x256xbf16, #tpu.memory_space<vmem>>, vector<256x256xbf16>
    %cst_12 = arith.constant dense<0.000000e+00> : vector<5x256xf32>
    %28 = tpu.matmul %26, %27, %cst_12 {dimension_numbers = #tpu.dot_dimension_numbers<[1], [0], [0], [1], [0, 0, 1, 1], [], []>} : vector<5x256xbf16>, vector<256x256xbf16>, vector<5x256xf32> -> vector<5x256xf32>
    %c0_13 = arith.constant 0 : index
    %c0_14 = arith.constant 0 : index
    %29 = vector.load %arg7[%c0_13, %c0_14] : memref<1x256xf32, #tpu.memory_space<vmem>>, vector<1x256xf32>
    %30 = vector.broadcast %29 : vector<1x256xf32> to vector<5x256xf32>
    %31 = arith.addf %28, %30 : vector<5x256xf32>
    %c0_15 = arith.constant 0 : index
    %c0_16 = arith.constant 0 : index
    %32 = vector.load %arg5[%c0_15, %c0_16] : memref<256x256xbf16, #tpu.memory_space<vmem>>, vector<256x256xbf16>
    %cst_17 = arith.constant dense<0.000000e+00> : vector<5x256xf32>
    %33 = tpu.matmul %26, %32, %cst_17 {dimension_numbers = #tpu.dot_dimension_numbers<[1], [0], [0], [1], [0, 0, 1, 1], [], []>} : vector<5x256xbf16>, vector<256x256xbf16>, vector<5x256xf32> -> vector<5x256xf32>
    %c0_18 = arith.constant 0 : index
    %c0_19 = arith.constant 0 : index
    %34 = vector.load %arg8[%c0_18, %c0_19] : memref<1x256xf32, #tpu.memory_space<vmem>>, vector<1x256xf32>
    %35 = vector.broadcast %34 : vector<1x256xf32> to vector<5x256xf32>
    %36 = arith.addf %33, %35 : vector<5x256xf32>
    %c0_20 = arith.constant 0 : index
    %c0_21 = arith.constant 0 : index
    %37 = vector.load %arg6[%c0_20, %c0_21] : memref<256x256xbf16, #tpu.memory_space<vmem>>, vector<256x256xbf16>
    %cst_22 = arith.constant dense<0.000000e+00> : vector<5x256xf32>
    %38 = tpu.matmul %26, %37, %cst_22 {dimension_numbers = #tpu.dot_dimension_numbers<[1], [0], [0], [1], [0, 0, 1, 1], [], []>} : vector<5x256xbf16>, vector<256x256xbf16>, vector<5x256xf32> -> vector<5x256xf32>
    %c0_23 = arith.constant 0 : index
    %c0_24 = arith.constant 0 : index
    %39 = vector.load %arg9[%c0_23, %c0_24] : memref<1x256xf32, #tpu.memory_space<vmem>>, vector<1x256xf32>
    %40 = vector.broadcast %39 : vector<1x256xf32> to vector<5x256xf32>
    %41 = arith.addf %38, %40 : vector<5x256xf32>
    %42 = vector.extract_strided_slice %31 {offsets = [0, 0], sizes = [5, 64], strides = [1, 1]} : vector<5x256xf32> to vector<5x64xf32>
    %cst_25 = arith.constant 1.250000e-01 : f32
    %43 = vector.broadcast %cst_25 : f32 to vector<5x64xf32>
    %44 = arith.mulf %42, %43 : vector<5x64xf32>
    %45 = arith.truncf %44 : vector<5x64xf32> to vector<5x64xbf16>
    %46 = vector.extract_strided_slice %36 {offsets = [0, 0], sizes = [5, 64], strides = [1, 1]} : vector<5x256xf32> to vector<5x64xf32>
    %47 = arith.truncf %46 : vector<5x64xf32> to vector<5x64xbf16>
    %48 = vector.extract_strided_slice %41 {offsets = [0, 0], sizes = [5, 64], strides = [1, 1]} : vector<5x256xf32> to vector<5x64xf32>
    %49 = arith.truncf %48 : vector<5x64xf32> to vector<5x64xbf16>
    %cst_26 = arith.constant dense<0.000000e+00> : vector<5x5xf32>
    %50 = tpu.matmul %45, %47, %cst_26 {dimension_numbers = #tpu.dot_dimension_numbers<[1], [1], [0], [0], [0, 0, 1, 0], [], []>} : vector<5x64xbf16>, vector<5x64xbf16>, vector<5x5xf32> -> vector<5x5xf32>
    %cst_27 = arith.constant dense<0xFF800000> : vector<5xf32>
    %51 = vector.multi_reduction <maximumf>, %50, %cst_27 [1] : vector<5x5xf32> to vector<5xf32>
    %52 = vector.shape_cast %51 : vector<5xf32> to vector<5x1xf32>
    %53 = vector.broadcast %52 : vector<5x1xf32> to vector<5x5xf32>
    %54 = arith.subf %50, %53 : vector<5x5xf32>
    %55 = math.exp %54 : vector<5x5xf32>
    %cst_28 = arith.constant dense<0.000000e+00> : vector<5xf32>
    %56 = vector.multi_reduction <add>, %55, %cst_28 [1] : vector<5x5xf32> to vector<5xf32>
    %57 = vector.shape_cast %56 : vector<5xf32> to vector<5x1xf32>
    %58 = tpu.reciprocal %57 {approx = true} : vector<5x1xf32> -> vector<5x1xf32>
    %59 = vector.broadcast %58 : vector<5x1xf32> to vector<5x5xf32>
    %60 = arith.mulf %55, %59 : vector<5x5xf32>
    %61 = arith.truncf %60 : vector<5x5xf32> to vector<5x5xbf16>
    %cst_29 = arith.constant dense<0.000000e+00> : vector<5x64xf32>
    %62 = tpu.matmul %61, %49, %cst_29 {dimension_numbers = #tpu.dot_dimension_numbers<[1], [0], [0], [1], [0, 0, 1, 1], [], []>} : vector<5x5xbf16>, vector<5x64xbf16>, vector<5x64xf32> -> vector<5x64xf32>
    %63 = vector.extract_strided_slice %31 {offsets = [0, 64], sizes = [5, 64], strides = [1, 1]} : vector<5x256xf32> to vector<5x64xf32>
    %cst_30 = arith.constant 1.250000e-01 : f32
    %64 = vector.broadcast %cst_30 : f32 to vector<5x64xf32>
    %65 = arith.mulf %63, %64 : vector<5x64xf32>
    %66 = arith.truncf %65 : vector<5x64xf32> to vector<5x64xbf16>
    %67 = vector.extract_strided_slice %36 {offsets = [0, 64], sizes = [5, 64], strides = [1, 1]} : vector<5x256xf32> to vector<5x64xf32>
    %68 = arith.truncf %67 : vector<5x64xf32> to vector<5x64xbf16>
    %69 = vector.extract_strided_slice %41 {offsets = [0, 64], sizes = [5, 64], strides = [1, 1]} : vector<5x256xf32> to vector<5x64xf32>
    %70 = arith.truncf %69 : vector<5x64xf32> to vector<5x64xbf16>
    %cst_31 = arith.constant dense<0.000000e+00> : vector<5x5xf32>
    %71 = tpu.matmul %66, %68, %cst_31 {dimension_numbers = #tpu.dot_dimension_numbers<[1], [1], [0], [0], [0, 0, 1, 0], [], []>} : vector<5x64xbf16>, vector<5x64xbf16>, vector<5x5xf32> -> vector<5x5xf32>
    %cst_32 = arith.constant dense<0xFF800000> : vector<5xf32>
    %72 = vector.multi_reduction <maximumf>, %71, %cst_32 [1] : vector<5x5xf32> to vector<5xf32>
    %73 = vector.shape_cast %72 : vector<5xf32> to vector<5x1xf32>
    %74 = vector.broadcast %73 : vector<5x1xf32> to vector<5x5xf32>
    %75 = arith.subf %71, %74 : vector<5x5xf32>
    %76 = math.exp %75 : vector<5x5xf32>
    %cst_33 = arith.constant dense<0.000000e+00> : vector<5xf32>
    %77 = vector.multi_reduction <add>, %76, %cst_33 [1] : vector<5x5xf32> to vector<5xf32>
    %78 = vector.shape_cast %77 : vector<5xf32> to vector<5x1xf32>
    %79 = tpu.reciprocal %78 {approx = true} : vector<5x1xf32> -> vector<5x1xf32>
    %80 = vector.broadcast %79 : vector<5x1xf32> to vector<5x5xf32>
    %81 = arith.mulf %76, %80 : vector<5x5xf32>
    %82 = arith.truncf %81 : vector<5x5xf32> to vector<5x5xbf16>
    %cst_34 = arith.constant dense<0.000000e+00> : vector<5x64xf32>
    %83 = tpu.matmul %82, %70, %cst_34 {dimension_numbers = #tpu.dot_dimension_numbers<[1], [0], [0], [1], [0, 0, 1, 1], [], []>} : vector<5x5xbf16>, vector<5x64xbf16>, vector<5x64xf32> -> vector<5x64xf32>
    %84 = vector.extract_strided_slice %31 {offsets = [0, 128], sizes = [5, 64], strides = [1, 1]} : vector<5x256xf32> to vector<5x64xf32>
    %cst_35 = arith.constant 1.250000e-01 : f32
    %85 = vector.broadcast %cst_35 : f32 to vector<5x64xf32>
    %86 = arith.mulf %84, %85 : vector<5x64xf32>
    %87 = arith.truncf %86 : vector<5x64xf32> to vector<5x64xbf16>
    %88 = vector.extract_strided_slice %36 {offsets = [0, 128], sizes = [5, 64], strides = [1, 1]} : vector<5x256xf32> to vector<5x64xf32>
    %89 = arith.truncf %88 : vector<5x64xf32> to vector<5x64xbf16>
    %90 = vector.extract_strided_slice %41 {offsets = [0, 128], sizes = [5, 64], strides = [1, 1]} : vector<5x256xf32> to vector<5x64xf32>
    %91 = arith.truncf %90 : vector<5x64xf32> to vector<5x64xbf16>
    %cst_36 = arith.constant dense<0.000000e+00> : vector<5x5xf32>
    %92 = tpu.matmul %87, %89, %cst_36 {dimension_numbers = #tpu.dot_dimension_numbers<[1], [1], [0], [0], [0, 0, 1, 0], [], []>} : vector<5x64xbf16>, vector<5x64xbf16>, vector<5x5xf32> -> vector<5x5xf32>
    %cst_37 = arith.constant dense<0xFF800000> : vector<5xf32>
    %93 = vector.multi_reduction <maximumf>, %92, %cst_37 [1] : vector<5x5xf32> to vector<5xf32>
    %94 = vector.shape_cast %93 : vector<5xf32> to vector<5x1xf32>
    %95 = vector.broadcast %94 : vector<5x1xf32> to vector<5x5xf32>
    %96 = arith.subf %92, %95 : vector<5x5xf32>
    %97 = math.exp %96 : vector<5x5xf32>
    %cst_38 = arith.constant dense<0.000000e+00> : vector<5xf32>
    %98 = vector.multi_reduction <add>, %97, %cst_38 [1] : vector<5x5xf32> to vector<5xf32>
    %99 = vector.shape_cast %98 : vector<5xf32> to vector<5x1xf32>
    %100 = tpu.reciprocal %99 {approx = true} : vector<5x1xf32> -> vector<5x1xf32>
    %101 = vector.broadcast %100 : vector<5x1xf32> to vector<5x5xf32>
    %102 = arith.mulf %97, %101 : vector<5x5xf32>
    %103 = arith.truncf %102 : vector<5x5xf32> to vector<5x5xbf16>
    %cst_39 = arith.constant dense<0.000000e+00> : vector<5x64xf32>
    %104 = tpu.matmul %103, %91, %cst_39 {dimension_numbers = #tpu.dot_dimension_numbers<[1], [0], [0], [1], [0, 0, 1, 1], [], []>} : vector<5x5xbf16>, vector<5x64xbf16>, vector<5x64xf32> -> vector<5x64xf32>
    %105 = vector.extract_strided_slice %31 {offsets = [0, 192], sizes = [5, 64], strides = [1, 1]} : vector<5x256xf32> to vector<5x64xf32>
    %cst_40 = arith.constant 1.250000e-01 : f32
    %106 = vector.broadcast %cst_40 : f32 to vector<5x64xf32>
    %107 = arith.mulf %105, %106 : vector<5x64xf32>
    %108 = arith.truncf %107 : vector<5x64xf32> to vector<5x64xbf16>
    %109 = vector.extract_strided_slice %36 {offsets = [0, 192], sizes = [5, 64], strides = [1, 1]} : vector<5x256xf32> to vector<5x64xf32>
    %110 = arith.truncf %109 : vector<5x64xf32> to vector<5x64xbf16>
    %111 = vector.extract_strided_slice %41 {offsets = [0, 192], sizes = [5, 64], strides = [1, 1]} : vector<5x256xf32> to vector<5x64xf32>
    %112 = arith.truncf %111 : vector<5x64xf32> to vector<5x64xbf16>
    %cst_41 = arith.constant dense<0.000000e+00> : vector<5x5xf32>
    %113 = tpu.matmul %108, %110, %cst_41 {dimension_numbers = #tpu.dot_dimension_numbers<[1], [1], [0], [0], [0, 0, 1, 0], [], []>} : vector<5x64xbf16>, vector<5x64xbf16>, vector<5x5xf32> -> vector<5x5xf32>
    %cst_42 = arith.constant dense<0xFF800000> : vector<5xf32>
    %114 = vector.multi_reduction <maximumf>, %113, %cst_42 [1] : vector<5x5xf32> to vector<5xf32>
    %115 = vector.shape_cast %114 : vector<5xf32> to vector<5x1xf32>
    %116 = vector.broadcast %115 : vector<5x1xf32> to vector<5x5xf32>
    %117 = arith.subf %113, %116 : vector<5x5xf32>
    %118 = math.exp %117 : vector<5x5xf32>
    %cst_43 = arith.constant dense<0.000000e+00> : vector<5xf32>
    %119 = vector.multi_reduction <add>, %118, %cst_43 [1] : vector<5x5xf32> to vector<5xf32>
    %120 = vector.shape_cast %119 : vector<5xf32> to vector<5x1xf32>
    %121 = tpu.reciprocal %120 {approx = true} : vector<5x1xf32> -> vector<5x1xf32>
    %122 = vector.broadcast %121 : vector<5x1xf32> to vector<5x5xf32>
    %123 = arith.mulf %118, %122 : vector<5x5xf32>
    %124 = arith.truncf %123 : vector<5x5xf32> to vector<5x5xbf16>
    %cst_44 = arith.constant dense<0.000000e+00> : vector<5x64xf32>
    %125 = tpu.matmul %124, %112, %cst_44 {dimension_numbers = #tpu.dot_dimension_numbers<[1], [0], [0], [1], [0, 0, 1, 1], [], []>} : vector<5x5xbf16>, vector<5x64xbf16>, vector<5x64xf32> -> vector<5x64xf32>
    %126 = tpu.concatenate %62, %83, %104, %125 in 1 : vector<5x64xf32>, vector<5x64xf32>, vector<5x64xf32>, vector<5x64xf32> -> vector<5x256xf32>
    %127 = arith.truncf %126 : vector<5x256xf32> to vector<5x256xbf16>
    %c0_45 = arith.constant 0 : index
    %c0_46 = arith.constant 0 : index
    %128 = vector.load %arg10[%c0_45, %c0_46] : memref<256x256xbf16, #tpu.memory_space<vmem>>, vector<256x256xbf16>
    %cst_47 = arith.constant dense<0.000000e+00> : vector<5x256xf32>
    %129 = tpu.matmul %127, %128, %cst_47 {dimension_numbers = #tpu.dot_dimension_numbers<[1], [0], [0], [1], [0, 0, 1, 1], [], []>} : vector<5x256xbf16>, vector<256x256xbf16>, vector<5x256xf32> -> vector<5x256xf32>
    %130 = arith.addf %1, %129 : vector<5x256xf32>
    %c0_48 = arith.constant 0 : index
    %c0_49 = arith.constant 0 : index
    %131 = vector.load %arg11[%c0_48, %c0_49] : memref<1x256xf32, #tpu.memory_space<vmem>>, vector<1x256xf32>
    %132 = vector.broadcast %131 : vector<1x256xf32> to vector<5x256xf32>
    %133 = arith.addf %130, %132 : vector<5x256xf32>
    %c0_50 = arith.constant 0 : index
    %c0_51 = arith.constant 0 : index
    %134 = vector.load %arg12[%c0_50, %c0_51] : memref<1x256xf32, #tpu.memory_space<vmem>>, vector<1x256xf32>
    %c0_52 = arith.constant 0 : index
    %c0_53 = arith.constant 0 : index
    %135 = vector.load %arg13[%c0_52, %c0_53] : memref<1x256xf32, #tpu.memory_space<vmem>>, vector<1x256xf32>
    %cst_54 = arith.constant dense<0.000000e+00> : vector<5xf32>
    %136 = vector.multi_reduction <add>, %133, %cst_54 [1] : vector<5x256xf32> to vector<5xf32>
    %137 = vector.shape_cast %136 : vector<5xf32> to vector<5x1xf32>
    %cst_55 = arith.constant 2.560000e+02 : f32
    %138 = vector.broadcast %cst_55 : f32 to vector<5x1xf32>
    %139 = arith.divf %137, %138 : vector<5x1xf32>
    %140 = vector.broadcast %139 : vector<5x1xf32> to vector<5x256xf32>
    %141 = arith.subf %133, %140 : vector<5x256xf32>
    %142 = arith.mulf %141, %141 : vector<5x256xf32>
    %cst_56 = arith.constant dense<0.000000e+00> : vector<5xf32>
    %143 = vector.multi_reduction <add>, %142, %cst_56 [1] : vector<5x256xf32> to vector<5xf32>
    %144 = vector.shape_cast %143 : vector<5xf32> to vector<5x1xf32>
    %cst_57 = arith.constant 2.560000e+02 : f32
    %145 = vector.broadcast %cst_57 : f32 to vector<5x1xf32>
    %146 = arith.divf %144, %145 : vector<5x1xf32>
    %147 = vector.broadcast %139 : vector<5x1xf32> to vector<5x256xf32>
    %148 = arith.subf %133, %147 : vector<5x256xf32>
    %cst_58 = arith.constant 9.99999997E-7 : f32
    %149 = vector.broadcast %cst_58 : f32 to vector<5x1xf32>
    %150 = arith.addf %146, %149 : vector<5x1xf32>
    %151 = math.rsqrt %150 : vector<5x1xf32>
    %152 = vector.broadcast %151 : vector<5x1xf32> to vector<5x256xf32>
    %153 = arith.mulf %148, %152 : vector<5x256xf32>
    %154 = vector.broadcast %134 : vector<1x256xf32> to vector<5x256xf32>
    %155 = arith.mulf %153, %154 : vector<5x256xf32>
    %156 = vector.broadcast %135 : vector<1x256xf32> to vector<5x256xf32>
    %157 = arith.addf %155, %156 : vector<5x256xf32>
    %158 = arith.truncf %157 : vector<5x256xf32> to vector<5x256xbf16>
    %c0_59 = arith.constant 0 : index
    %c0_60 = arith.constant 0 : index
    %159 = vector.load %arg14[%c0_59, %c0_60] : memref<256x512xbf16, #tpu.memory_space<vmem>>, vector<256x512xbf16>
    %cst_61 = arith.constant dense<0.000000e+00> : vector<5x512xf32>
    %160 = tpu.matmul %158, %159, %cst_61 {dimension_numbers = #tpu.dot_dimension_numbers<[1], [0], [0], [1], [0, 0, 1, 1], [], []>} : vector<5x256xbf16>, vector<256x512xbf16>, vector<5x512xf32> -> vector<5x512xf32>
    %c0_62 = arith.constant 0 : index
    %c0_63 = arith.constant 0 : index
    %161 = vector.load %arg15[%c0_62, %c0_63] : memref<1x512xf32, #tpu.memory_space<vmem>>, vector<1x512xf32>
    %162 = vector.broadcast %161 : vector<1x512xf32> to vector<5x512xf32>
    %163 = arith.addf %160, %162 : vector<5x512xf32>
    %164 = arith.mulf %163, %163 : vector<5x512xf32>
    %165 = arith.mulf %163, %164 : vector<5x512xf32>
    %cst_64 = arith.constant 4.471500e-02 : f32
    %166 = vector.broadcast %cst_64 : f32 to vector<5x512xf32>
    %167 = arith.mulf %166, %165 : vector<5x512xf32>
    %168 = arith.addf %163, %167 : vector<5x512xf32>
    %cst_65 = arith.constant 0.797884583 : f32
    %169 = vector.broadcast %cst_65 : f32 to vector<5x512xf32>
    %170 = arith.mulf %169, %168 : vector<5x512xf32>
    %171 = math.tanh %170 : vector<5x512xf32>
    %cst_66 = arith.constant 1.000000e+00 : f32
    %172 = vector.broadcast %cst_66 : f32 to vector<5x512xf32>
    %173 = arith.addf %172, %171 : vector<5x512xf32>
    %cst_67 = arith.constant 5.000000e-01 : f32
    %174 = vector.broadcast %cst_67 : f32 to vector<5x512xf32>
    %175 = arith.mulf %174, %173 : vector<5x512xf32>
    %176 = arith.mulf %163, %175 : vector<5x512xf32>
    %177 = arith.truncf %176 : vector<5x512xf32> to vector<5x512xbf16>
    %c0_68 = arith.constant 0 : index
    %c0_69 = arith.constant 0 : index
    %178 = vector.load %arg16[%c0_68, %c0_69] : memref<512x256xbf16, #tpu.memory_space<vmem>>, vector<512x256xbf16>
    %cst_70 = arith.constant dense<0.000000e+00> : vector<5x256xf32>
    %179 = tpu.matmul %177, %178, %cst_70 {dimension_numbers = #tpu.dot_dimension_numbers<[1], [0], [0], [1], [0, 0, 1, 1], [], []>} : vector<5x512xbf16>, vector<512x256xbf16>, vector<5x256xf32> -> vector<5x256xf32>
    %180 = arith.addf %133, %179 : vector<5x256xf32>
    %c0_71 = arith.constant 0 : index
    %c0_72 = arith.constant 0 : index
    %181 = vector.load %arg17[%c0_71, %c0_72] : memref<1x256xf32, #tpu.memory_space<vmem>>, vector<1x256xf32>
    %182 = vector.broadcast %181 : vector<1x256xf32> to vector<5x256xf32>
    %183 = arith.addf %180, %182 : vector<5x256xf32>
    %c0_73 = arith.constant 0 : index
    %c0_74 = arith.constant 0 : index
    %c0_75 = arith.constant 0 : index
    %184 = vector.load %arg18[%c0_73, %c0_74, %c0_75] : memref<1x5x256xf32, #tpu.memory_space<vmem>>, vector<1x5x256xf32>
    %185 = vector.shape_cast %184 : vector<1x5x256xf32> to vector<5x256xf32>
    %186 = vector.shape_cast %183 : vector<5x256xf32> to vector<1x5x256xf32>
    tpu.vector_store %arg18[%c0_73, %c0_74, %c0_75], %186 {strides = array<i32>} : memref<1x5x256xf32, #tpu.memory_space<vmem>>, vector<1x5x256xf32>,
    return
  }
  func.func @transform_0(%arg0: i32) -> (i32, i32, i32) {
    %c0_i32 = arith.constant 0 : i32
    %c0_i32_0 = arith.constant 0 : i32
    %c0_i32_1 = arith.constant 0 : i32
    return %arg0, %c0_i32, %c0_i32_0 : i32, i32, i32
  }
  func.func @transform_1(%arg0: i32) -> (i32, i32) {
    %c0_i32 = arith.constant 0 : i32
    %c0_i32_0 = arith.constant 0 : i32
    %c0_i32_1 = arith.constant 0 : i32
    return %c0_i32, %c0_i32_0 : i32, i32
  }
  func.func @transform_2(%arg0: i32) -> (i32, i32) {
    %c0_i32 = arith.constant 0 : i32
    %c0_i32_0 = arith.constant 0 : i32
    %c0_i32_1 = arith.constant 0 : i32
    return %c0_i32, %c0_i32_0 : i32, i32
  }
  func.func @transform_3(%arg0: i32) -> (i32, i32) {
    %c0_i32 = arith.constant 0 : i32
    %c0_i32_0 = arith.constant 0 : i32
    %c0_i32_1 = arith.constant 0 : i32
    return %c0_i32, %c0_i32_0 : i32, i32
  }
  func.func @transform_4(%arg0: i32) -> (i32, i32) {
    %c0_i32 = arith.constant 0 : i32
    %c0_i32_0 = arith.constant 0 : i32
    %c0_i32_1 = arith.constant 0 : i32
    return %c0_i32, %c0_i32_0 : i32, i32
  }
  func.func @transform_5(%arg0: i32) -> (i32, i32) {
    %c0_i32 = arith.constant 0 : i32
    %c0_i32_0 = arith.constant 0 : i32
    %c0_i32_1 = arith.constant 0 : i32
    return %c0_i32, %c0_i32_0 : i32, i32
  }
  func.func @transform_6(%arg0: i32) -> (i32, i32) {
    %c0_i32 = arith.constant 0 : i32
    %c0_i32_0 = arith.constant 0 : i32
    %c0_i32_1 = arith.constant 0 : i32
    return %c0_i32, %c0_i32_0 : i32, i32
  }
  func.func @transform_7(%arg0: i32) -> (i32, i32) {
    %c0_i32 = arith.constant 0 : i32
    %c0_i32_0 = arith.constant 0 : i32
    %c0_i32_1 = arith.constant 0 : i32
    return %c0_i32, %c0_i32_0 : i32, i32
  }
  func.func @transform_8(%arg0: i32) -> (i32, i32) {
    %c0_i32 = arith.constant 0 : i32
    %c0_i32_0 = arith.constant 0 : i32
    %c0_i32_1 = arith.constant 0 : i32
    return %c0_i32, %c0_i32_0 : i32, i32
  }
  func.func @transform_9(%arg0: i32) -> (i32, i32) {
    %c0_i32 = arith.constant 0 : i32
    %c0_i32_0 = arith.constant 0 : i32
    %c0_i32_1 = arith.constant 0 : i32
    return %c0_i32, %c0_i32_0 : i32, i32
  }
  func.func @transform_10(%arg0: i32) -> (i32, i32) {
    %c0_i32 = arith.constant 0 : i32
    %c0_i32_0 = arith.constant 0 : i32
    %c0_i32_1 = arith.constant 0 : i32
    return %c0_i32, %c0_i32_0 : i32, i32
  }
  func.func @transform_11(%arg0: i32) -> (i32, i32) {
    %c0_i32 = arith.constant 0 : i32
    %c0_i32_0 = arith.constant 0 : i32
    %c0_i32_1 = arith.constant 0 : i32
    return %c0_i32, %c0_i32_0 : i32, i32
  }
  func.func @transform_12(%arg0: i32) -> (i32, i32) {
    %c0_i32 = arith.constant 0 : i32
    %c0_i32_0 = arith.constant 0 : i32
    %c0_i32_1 = arith.constant 0 : i32
    return %c0_i32, %c0_i32_0 : i32, i32
  }
  func.func @transform_13(%arg0: i32) -> (i32, i32) {
    %c0_i32 = arith.constant 0 : i32
    %c0_i32_0 = arith.constant 0 : i32
    %c0_i32_1 = arith.constant 0 : i32
    return %c0_i32, %c0_i32_0 : i32, i32
  }
  func.func @transform_14(%arg0: i32) -> (i32, i32) {
    %c0_i32 = arith.constant 0 : i32
    %c0_i32_0 = arith.constant 0 : i32
    %c0_i32_1 = arith.constant 0 : i32
    return %c0_i32, %c0_i32_0 : i32, i32
  }
  func.func @transform_15(%arg0: i32) -> (i32, i32) {
    %c0_i32 = arith.constant 0 : i32
    %c0_i32_0 = arith.constant 0 : i32
    %c0_i32_1 = arith.constant 0 : i32
    return %c0_i32, %c0_i32_0 : i32, i32
  }
  func.func @transform_16(%arg0: i32) -> (i32, i32) {
    %c0_i32 = arith.constant 0 : i32
    %c0_i32_0 = arith.constant 0 : i32
    %c0_i32_1 = arith.constant 0 : i32
    return %c0_i32, %c0_i32_0 : i32, i32
  }
  func.func @transform_17(%arg0: i32) -> (i32, i32, i32) {
    %c0_i32 = arith.constant 0 : i32
    %c0_i32_0 = arith.constant 0 : i32
    %c0_i32_1 = arith.constant 0 : i32
    return %arg0, %c0_i32, %c0_i32_0 : i32, i32, i32
  }
}

module attributes {stable_mosaic.version = 11 : i64} {
  func.func @_head_kernel(%arg0: i32, %arg1: memref<2x5x256xf32, #tpu.memory_space<vmem>>, %arg2: memref<1x256xf32, #tpu.memory_space<vmem>>, %arg3: memref<1x256xf32, #tpu.memory_space<vmem>>, %arg4: memref<256x128xbf16, #tpu.memory_space<vmem>>, %arg5: memref<1x128xf32, #tpu.memory_space<vmem>>, %arg6: memref<2x128xf32, #tpu.memory_space<vmem>>) attributes {dimension_semantics = [#tpu.dimension_semantics<arbitrary>], iteration_bounds = array<i64: 1>, scalar_prefetch = 0 : i64, scratch_operands = 0 : i64, tpu.core_type = #tpu.core_type<tc>, window_params = [{pipeline_mode = #tpu.pipeline_mode<synchronous>, transform_indices = @transform_0, window_bounds = array<i64: 2, 5, 256>}, {pipeline_mode = #tpu.pipeline_mode<synchronous>, transform_indices = @transform_1, window_bounds = array<i64: 1, 256>}, {pipeline_mode = #tpu.pipeline_mode<synchronous>, transform_indices = @transform_2, window_bounds = array<i64: 1, 256>}, {pipeline_mode = #tpu.pipeline_mode<synchronous>, transform_indices = @transform_3, window_bounds = array<i64: 256, 128>}, {pipeline_mode = #tpu.pipeline_mode<synchronous>, transform_indices = @transform_4, window_bounds = array<i64: 1, 128>}, {pipeline_mode = #tpu.pipeline_mode<synchronous>, transform_indices = @transform_5, window_bounds = array<i64: 2, 128>}]} {
    %c0 = arith.constant 0 : index
    %c0_0 = arith.constant 0 : index
    %c0_1 = arith.constant 0 : index
    %0 = vector.load %arg1[%c0, %c0_0, %c0_1] : memref<2x5x256xf32, #tpu.memory_space<vmem>>, vector<2x5x256xf32>
    %1 = vector.extract_strided_slice %0 {offsets = [0, 0, 0], sizes = [2, 1, 256], strides = [1, 1, 1]} : vector<2x5x256xf32> to vector<2x1x256xf32>
    %2 = vector.shape_cast %1 : vector<2x1x256xf32> to vector<2x256xf32>
    %c0_2 = arith.constant 0 : index
    %c0_3 = arith.constant 0 : index
    %3 = vector.load %arg2[%c0_2, %c0_3] : memref<1x256xf32, #tpu.memory_space<vmem>>, vector<1x256xf32>
    %c0_4 = arith.constant 0 : index
    %c0_5 = arith.constant 0 : index
    %4 = vector.load %arg3[%c0_4, %c0_5] : memref<1x256xf32, #tpu.memory_space<vmem>>, vector<1x256xf32>
    %cst = arith.constant dense<0.000000e+00> : vector<2xf32>
    %5 = vector.multi_reduction <add>, %2, %cst [1] : vector<2x256xf32> to vector<2xf32>
    %6 = vector.shape_cast %5 : vector<2xf32> to vector<2x1xf32>
    %cst_6 = arith.constant 2.560000e+02 : f32
    %7 = vector.broadcast %cst_6 : f32 to vector<2x1xf32>
    %8 = arith.divf %6, %7 : vector<2x1xf32>
    %9 = vector.broadcast %8 : vector<2x1xf32> to vector<2x256xf32>
    %10 = arith.subf %2, %9 : vector<2x256xf32>
    %11 = arith.mulf %10, %10 : vector<2x256xf32>
    %cst_7 = arith.constant dense<0.000000e+00> : vector<2xf32>
    %12 = vector.multi_reduction <add>, %11, %cst_7 [1] : vector<2x256xf32> to vector<2xf32>
    %13 = vector.shape_cast %12 : vector<2xf32> to vector<2x1xf32>
    %cst_8 = arith.constant 2.560000e+02 : f32
    %14 = vector.broadcast %cst_8 : f32 to vector<2x1xf32>
    %15 = arith.divf %13, %14 : vector<2x1xf32>
    %16 = vector.broadcast %8 : vector<2x1xf32> to vector<2x256xf32>
    %17 = arith.subf %2, %16 : vector<2x256xf32>
    %cst_9 = arith.constant 9.99999997E-7 : f32
    %18 = vector.broadcast %cst_9 : f32 to vector<2x1xf32>
    %19 = arith.addf %15, %18 : vector<2x1xf32>
    %20 = math.rsqrt %19 : vector<2x1xf32>
    %21 = vector.broadcast %20 : vector<2x1xf32> to vector<2x256xf32>
    %22 = arith.mulf %17, %21 : vector<2x256xf32>
    %23 = vector.broadcast %3 : vector<1x256xf32> to vector<2x256xf32>
    %24 = arith.mulf %22, %23 : vector<2x256xf32>
    %25 = vector.broadcast %4 : vector<1x256xf32> to vector<2x256xf32>
    %26 = arith.addf %24, %25 : vector<2x256xf32>
    %27 = arith.truncf %26 : vector<2x256xf32> to vector<2x256xbf16>
    %c0_10 = arith.constant 0 : index
    %c0_11 = arith.constant 0 : index
    %28 = vector.load %arg4[%c0_10, %c0_11] : memref<256x128xbf16, #tpu.memory_space<vmem>>, vector<256x128xbf16>
    %cst_12 = arith.constant dense<0.000000e+00> : vector<2x128xf32>
    %29 = tpu.matmul %27, %28, %cst_12 {dimension_numbers = #tpu.dot_dimension_numbers<[1], [0], [0], [1], [0, 0, 1, 1], [], []>} : vector<2x256xbf16>, vector<256x128xbf16>, vector<2x128xf32> -> vector<2x128xf32>
    %c0_13 = arith.constant 0 : index
    %c0_14 = arith.constant 0 : index
    %30 = vector.load %arg5[%c0_13, %c0_14] : memref<1x128xf32, #tpu.memory_space<vmem>>, vector<1x128xf32>
    %31 = vector.broadcast %30 : vector<1x128xf32> to vector<2x128xf32>
    %32 = arith.addf %29, %31 : vector<2x128xf32>
    %c0_15 = arith.constant 0 : index
    %c0_16 = arith.constant 0 : index
    %33 = vector.load %arg6[%c0_15, %c0_16] : memref<2x128xf32, #tpu.memory_space<vmem>>, vector<2x128xf32>
    tpu.vector_store %arg6[%c0_15, %c0_16], %32 {strides = array<i32>} : memref<2x128xf32, #tpu.memory_space<vmem>>, vector<2x128xf32>,
    return
  }
  func.func @transform_0(%arg0: i32) -> (i32, i32, i32) {
    %c0_i32 = arith.constant 0 : i32
    %c0_i32_0 = arith.constant 0 : i32
    %c0_i32_1 = arith.constant 0 : i32
    %c0_i32_2 = arith.constant 0 : i32
    return %c0_i32, %c0_i32_0, %c0_i32_1 : i32, i32, i32
  }
  func.func @transform_1(%arg0: i32) -> (i32, i32) {
    %c0_i32 = arith.constant 0 : i32
    %c0_i32_0 = arith.constant 0 : i32
    %c0_i32_1 = arith.constant 0 : i32
    return %c0_i32, %c0_i32_0 : i32, i32
  }
  func.func @transform_2(%arg0: i32) -> (i32, i32) {
    %c0_i32 = arith.constant 0 : i32
    %c0_i32_0 = arith.constant 0 : i32
    %c0_i32_1 = arith.constant 0 : i32
    return %c0_i32, %c0_i32_0 : i32, i32
  }
  func.func @transform_3(%arg0: i32) -> (i32, i32) {
    %c0_i32 = arith.constant 0 : i32
    %c0_i32_0 = arith.constant 0 : i32
    %c0_i32_1 = arith.constant 0 : i32
    return %c0_i32, %c0_i32_0 : i32, i32
  }
  func.func @transform_4(%arg0: i32) -> (i32, i32) {
    %c0_i32 = arith.constant 0 : i32
    %c0_i32_0 = arith.constant 0 : i32
    %c0_i32_1 = arith.constant 0 : i32
    return %c0_i32, %c0_i32_0 : i32, i32
  }
  func.func @transform_5(%arg0: i32) -> (i32, i32) {
    %c0_i32 = arith.constant 0 : i32
    %c0_i32_0 = arith.constant 0 : i32
    %c0_i32_1 = arith.constant 0 : i32
    return %c0_i32, %c0_i32_0 : i32, i32
  }
}

</mosaic_0001>

<llo_original>
// kernel: _lambda_.4
$region0: #{_lambda_.4}
  #allocation0 [shape = 'u32[]', space=smem, size = 0x4, offset = 0x4, fixed_abs, tag = 'smem constant byte address 0x4 - core index']
  #allocation1 [shape = 'u32[144,128]{1,0:T(1,128)}', space=vmem, size = 0x12000, scoped, tag = 'internal scratch']
  %s0 = inlined_call_operand.vmem [shape: f32[2,4,768], index: 0, kind: input, shape index: {}]
  %s1 = inlined_call_operand.vmem [shape: bf16[768,256], index: 1, kind: input, shape index: {}]
  %s2 = inlined_call_operand.vmem [shape: f32[1,256], index: 2, kind: input, shape index: {}]
  %s3 = inlined_call_operand.vmem [shape: f32[1,256], index: 3, kind: input, shape index: {}]
  %s4 = inlined_call_operand.vmem [shape: f32[5,256], index: 4, kind: input, shape index: {}]
  %s5 = inlined_call_operand.vmem [shape: f32[2,5,256], index: 5, kind: output, shape index: {}]
  %s6 = sld [smem:[#allocation0]]
  $region53: #{_lambda_.4} parent=0
    _
  %s8 = ssub.s32 1, %s6
  %s9 = scalar_select 0, %s8, %s6
  loop: start=0, step=1, limit=4
  $region2: #{_lambda_.4} parent=0 // loop_pre_header
    _
  $region3: #{_lambda_.4} parent=0 // loop_header
    %s11 = sphi 0, %s15
    %p12 = scmp.ge.s32.totalorder %s11, 4
    %s21 = sphi 0, %s23
    %s24 = sphi 0, %s21
    %s25 = sphi 0, %s24
    %s41 = sphi 0, %s25
    %s45 = sphi 0, %s45
    %s47 = sphi 0, %s45
    %s48 = sphi 0, %s47
    %s62 = sphi 0, %s48
    %s66 = sphi 0, %s66
    %s68 = sphi 0, %s66
    %s69 = sphi 0, %s68
    %s83 = sphi 0, %s69
    %s87 = sphi 0, %s87
    %s89 = sphi 0, %s87
    %s90 = sphi 0, %s89
    %s104 = sphi 0, %s90
    %s108 = sphi 0, %s108
    %s110 = sphi 0, %s108
    %s111 = sphi 0, %s110
    %s125 = sphi 0, %s111
    %s131 = sphi 0, %s133
    %s134 = sphi 0, %s131
    %s135 = sphi 0, %s134
    %s151 = sphi 0, %s135
  $region4: #{_lambda_.4} parent=0 // loop_header_branch
    %14 = sbr.rel (%p12) target = $region8
  $region5: #{_lambda_.4} parent=0 // loop_body
    %s16 = ssub.s32 %s11, 1
    %s17 = ssub.s32 %s11, 2
    %s18 = sadd.s32 %s11, 1
    %s19 = ssub.s32 %s11, %s18
    %p20 = scmp.eq.s32.totalorder %s19, 0
    %s22 = sadd.s32 %s21, 1
    %s23 = scalar_select %p20, %s21, %s22
    %p26 = pneg %p20
    %p27 = scmp.eq.s32.totalorder %s11, 1
    %p28 = por %p26, %p27
    %p29 = scmp.ne.s32.totalorder %s21, %s24
    %p30 = scmp.eq.s32.totalorder %s11, 0
    %p31 = por %p29, %p30
    %p32 = scmp.ne.s32.totalorder %s21, %s24
    %p33 = scmp.eq.s32.totalorder %s16, 1
    %p34 = por %p32, %p33
    %p35 = scmp.ne.s32.totalorder %s24, %s25
    %p36 = scmp.eq.s32.totalorder %s16, 0
    %p37 = por %p35, %p36
    %p38 = scmp.ne.s32.totalorder %s24, %s25
    %p39 = scmp.eq.s32.totalorder %s17, 1
    %p40 = por %p38, %p39
    %p42 = scmp.ne.s32.totalorder %s25, %s41
    %p43 = scmp.eq.s32.totalorder %s17, 0
    %p44 = por %p42, %p43
    %s46 = sadd.s32 %s45, 1
    %p49 = scmp.eq.s32.totalorder %s11, 1
    %p50 = scmp.ne.s32.totalorder %s45, %s47
    %p51 = scmp.eq.s32.totalorder %s11, 0
    %p52 = por %p50, %p51
    %p53 = scmp.ne.s32.totalorder %s45, %s47
    %p54 = scmp.eq.s32.totalorder %s16, 1
    %p55 = por %p53, %p54
    %p56 = scmp.ne.s32.totalorder %s47, %s48
    %p57 = scmp.eq.s32.totalorder %s16, 0
    %p58 = por %p56, %p57
    %p59 = scmp.ne.s32.totalorder %s47, %s48
    %p60 = scmp.eq.s32.totalorder %s17, 1
    %p61 = por %p59, %p60
    %p63 = scmp.ne.s32.totalorder %s48, %s62
    %p64 = scmp.eq.s32.totalorder %s17, 0
    %p65 = por %p63, %p64
    %s67 = sadd.s32 %s66, 1
    %p70 = scmp.eq.s32.totalorder %s11, 1
    %p71 = scmp.ne.s32.totalorder %s66, %s68
    %p72 = scmp.eq.s32.totalorder %s11, 0
    %p73 = por %p71, %p72
    %p74 = scmp.ne.s32.totalorder %s66, %s68
    %p75 = scmp.eq.s32.totalorder %s16, 1
    %p76 = por %p74, %p75
    %p77 = scmp.ne.s32.totalorder %s68, %s69
    %p78 = scmp.eq.s32.totalorder %s16, 0
    %p79 = por %p77, %p78
    %p80 = scmp.ne.s32.totalorder %s68, %s69
    %p81 = scmp.eq.s32.totalorder %s17, 1
    %p82 = por %p80, %p81
    %p84 = scmp.ne.s32.totalorder %s69, %s83
    %p85 = scmp.eq.s32.totalorder %s17, 0
    %p86 = por %p84, %p85
    %s88 = sadd.s32 %s87, 1
    %p91 = scmp.eq.s32.totalorder %s11, 1
    %p92 = scmp.ne.s32.totalorder %s87, %s89
    %p93 = scmp.eq.s32.totalorder %s11, 0
    %p94 = por %p92, %p93
    %p95 = scmp.ne.s32.totalorder %s87, %s89
    %p96 = scmp.eq.s32.totalorder %s16, 1
    %p97 = por %p95, %p96
    %p98 = scmp.ne.s32.totalorder %s89, %s90
    %p99 = scmp.eq.s32.totalorder %s16, 0
    %p100 = por %p98, %p99
    %p101 = scmp.ne.s32.totalorder %s89, %s90
    %p102 = scmp.eq.s32.totalorder %s17, 1
    %p103 = por %p101, %p102
    %p105 = scmp.ne.s32.totalorder %s90, %s104
    %p106 = scmp.eq.s32.totalorder %s17, 0
    %p107 = por %p105, %p106
    %s109 = sadd.s32 %s108, 1
    %p112 = scmp.eq.s32.totalorder %s11, 1
    %p113 = scmp.ne.s32.totalorder %s108, %s110
    %p114 = scmp.eq.s32.totalorder %s11, 0
    %p115 = por %p113, %p114
    %p116 = scmp.ne.s32.totalorder %s108, %s110
    %p117 = scmp.eq.s32.totalorder %s16, 1
    %p118 = por %p116, %p117
    %p119 = scmp.ne.s32.totalorder %s110, %s111
    %p120 = scmp.eq.s32.totalorder %s16, 0
    %p121 = por %p119, %p120
    %p122 = scmp.ne.s32.totalorder %s110, %s111
    %p123 = scmp.eq.s32.totalorder %s17, 1
    %p124 = por %p122, %p123
    %p126 = scmp.ne.s32.totalorder %s111, %s125
    %p127 = scmp.eq.s32.totalorder %s17, 0
    %p128 = por %p126, %p127
    %s129 = ssub.s32 %s11, %s18
    %p130 = scmp.eq.s32.totalorder %s129, 0
    %s132 = sadd.s32 %s131, 1
    %s133 = scalar_select %p130, %s131, %s132
    %p136 = pneg %p130
    %p137 = scmp.eq.s32.totalorder %s11, 1
    %p138 = por %p136, %p137
    %p139 = scmp.ne.s32.totalorder %s131, %s134
    %p140 = scmp.eq.s32.totalorder %s11, 0
    %p141 = por %p139, %p140
    %p142 = scmp.ne.s32.totalorder %s131, %s134
    %p143 = scmp.eq.s32.totalorder %s16, 1
    %p144 = por %p142, %p143
    %p145 = scmp.ne.s32.totalorder %s134, %s135
    %p146 = scmp.eq.s32.totalorder %s16, 0
    %p147 = por %p145, %p146
    %p148 = scmp.ne.s32.totalorder %s134, %s135
    %p149 = scmp.eq.s32.totalorder %s17, 1
    %p150 = por %p148, %p149
    %p152 = scmp.ne.s32.totalorder %s135, %s151
    %p153 = scmp.eq.s32.totalorder %s17, 0
    %p154 = por %p152, %p153
    %p155 = scmp.le.s32.totalorder 1, %s11
    %p156 = scmp.lt.s32.totalorder %s11, 3
    %p157 = pnand %p155, %p156
    %p158 = pneg %p157
    // Predicated region
    $region9: #{_lambda_.4} parent=5 // pred_check
      _
    $region10: #{_lambda_.4} parent=5 // pred_check_branch
      %160 = sbr.rel (%p157) target = $region12
    $region11: #{_lambda_.4} parent=5 // pred_region
      %s161 = ssub.s32 %s11, 1
      // Predicated region
      $region13: #{_lambda_.4} parent=11 // pred_check
        %p162 = pneg %p58
      $region14: #{_lambda_.4} parent=11 // pred_check_branch
        %164 = sbr.rel (%p162) target = $region16
      $region15: #{_lambda_.4} parent=11 // pred_region
        _
      $region16: #{_lambda_.4} parent=11 // pred_fallthru
        _
      // Predicated region
      $region17: #{_lambda_.4} parent=11 // pred_check
        %p165 = pneg %p79
      $region18: #{_lambda_.4} parent=11 // pred_check_branch
        %167 = sbr.rel (%p165) target = $region20
      $region19: #{_lambda_.4} parent=11 // pred_region
        _
      $region20: #{_lambda_.4} parent=11 // pred_fallthru
        _
      // Predicated region
      $region21: #{_lambda_.4} parent=11 // pred_check
        %p168 = pneg %p100
      $region22: #{_lambda_.4} parent=11 // pred_check_branch
        %170 = sbr.rel (%p168) target = $region24
      $region23: #{_lambda_.4} parent=11 // pred_region
        _
      $region24: #{_lambda_.4} parent=11 // pred_fallthru
        _
      // Predicated region
      $region25: #{_lambda_.4} parent=11 // pred_check
        %p171 = pneg %p121
      $region26: #{_lambda_.4} parent=11 // pred_check_branch
        %173 = sbr.rel (%p171) target = $region28
      $region27: #{_lambda_.4} parent=11 // pred_region
        _
      $region28: #{_lambda_.4} parent=11 // pred_fallthru
        _
    $region12: #{_lambda_.4} parent=5 // pred_fallthru
      _
    %p174 = scmp.lt.s32.totalorder %s11, 2
    // Predicated region
    $region29: #{_lambda_.4} parent=5 // pred_check
      %p175 = pneg %p174
    $region30: #{_lambda_.4} parent=5 // pred_check_branch
      %177 = sbr.rel (%p175) target = $region32
    $region31: #{_lambda_.4} parent=5 // pred_region
      // Predicated region
      $region33: #{_lambda_.4} parent=31 // pred_check
        %p178 = pneg %p31
      $region34: #{_lambda_.4} parent=31 // pred_check_branch
        %180 = sbr.rel (%p178) target = $region36
      $region35: #{_lambda_.4} parent=31 // pred_region
        %p181 = scmp.lt.s32.totalorder %s11, 1
        %s182 = scalar_select %p181, %s11, 1
        %s183 = smul.addr %s182, 6
        %s184 = smul.addr %s183, 4
        %s185 = scalar_lea.vmem %s0, %s184
      $region36: #{_lambda_.4} parent=31 // pred_fallthru
        _
    $region32: #{_lambda_.4} parent=5 // pred_fallthru
      _
    %p186 = scmp.le.s32.totalorder 1, %s11
    %p187 = scmp.lt.s32.totalorder %s11, 3
    %p188 = pnand %p186, %p187
    %p189 = pneg %p188
    // Predicated region
    $region37: #{_lambda_.4} parent=5 // pred_check
      _
    $region38: #{_lambda_.4} parent=5 // pred_check_branch
      %191 = sbr.rel (%p188) target = $region40
    $region39: #{_lambda_.4} parent=5 // pred_region
      %s192 = ssub.s32 %s11, 1
      %p193 = scmp.lt.s32.totalorder %s16, 1
      %s194 = scalar_select %p193, %s16, 1
      %s195 = smul.addr %s194, 6
      %s196 = smul.addr %s195, 4
      %s197 = scalar_lea.vmem %s0, %s196
      %p198 = pneg %p37
      %p199 = pneg %p34
      %p200 = pneg %p58
      %p201 = pneg %p55
      %p202 = pneg %p79
      %p203 = pneg %p76
      %p204 = pneg %p100
      %p205 = pneg %p97
      %p206 = pneg %p121
      %p207 = pneg %p118
      %p208 = pneg %p147
      %p209 = pneg %p144
      %p210 = scmp.lt.s32.totalorder %s16, 1
      %s211 = scalar_select %p210, %s16, 1
      %s212 = smul.addr %s211, 2
      %s213 = smul.addr %s212, 8
      %s214 = scalar_lea.vmem %s5, %s213
      %p215 = scmp.lt.s32.totalorder %s16, 1
      %s216 = scalar_select %p215, %s16, 1
      %s217 = smul.addr %s216, 6
      %s218 = smul.addr %s217, 4
      %s219 = scalar_lea.vmem %s0, %s218
      %p220 = scmp.lt.s32.totalorder %s16, 1
      %s221 = scalar_select %p220, %s16, 1
      %s222 = smul.addr %s221, 2
      %s223 = smul.addr %s222, 8
      %s224 = scalar_lea.vmem %s5, %s223
      %v225 = vld [vmem:[%s219] sm:$0xff]
      %v226 = vld [vmem:[%s219 + $0x8] sm:$0xff]
      %v227 = vld [vmem:[%s219 + $0x10] sm:$0xff]
      %v231 = vcombine.high %v225, %v225
      %v232 = vcombine.high %v226, %v226
      %v233 = vcombine.high %v227, %v227
      %v237 = vpack.c.bf16 %v225, %v225
      %v238 = vpack.c.bf16 %v231, %v231
      %v239 = vpack.c.bf16 %v226, %v226
      %v240 = vpack.c.bf16 %v232, %v232
      %v241 = vpack.c.bf16 %v227, %v227
      %v242 = vpack.c.bf16 %v233, %v233
      %v243 = vld [vmem:[%s1] sm:$0xff]
      %v244 = vld [vmem:[%s1 + $0x8] sm:$0xff]
      %v245 = vld [vmem:[%s1 + $0x10] sm:$0xff]
      %v246 = vld [vmem:[%s1 + $0x18] sm:$0xff]
      %v247 = vld [vmem:[%s1 + $0x20] sm:$0xff]
      %v248 = vld [vmem:[%s1 + $0x28] sm:$0xff]
      %v249 = vld [vmem:[%s1 + $0x30] sm:$0xff]
      %v250 = vld [vmem:[%s1 + $0x38] sm:$0xff]
      %v251 = vld [vmem:[%s1 + $0x40] sm:$0xff]
      %v252 = vld [vmem:[%s1 + $0x48] sm:$0xff]
      %v253 = vld [vmem:[%s1 + $0x50] sm:$0xff]
      %v254 = vld [vmem:[%s1 + $0x58] sm:$0xff]
      %v255 = vld [vmem:[%s1 + $0x60] sm:$0xff]
      %v256 = vld [vmem:[%s1 + $0x68] sm:$0xff]
      %v257 = vld [vmem:[%s1 + $0x70] sm:$0xff]
      %v258 = vld [vmem:[%s1 + $0x78] sm:$0xff]
      %v259 = vld [vmem:[%s1 + $0x80] sm:$0xff]
      %v260 = vld [vmem:[%s1 + $0x88] sm:$0xff]
      %v261 = vld [vmem:[%s1 + $0x90] sm:$0xff]
      %v262 = vld [vmem:[%s1 + $0x98] sm:$0xff]
      %v263 = vld [vmem:[%s1 + $0xa0] sm:$0xff]
      %v264 = vld [vmem:[%s1 + $0xa8] sm:$0xff]
      %v265 = vld [vmem:[%s1 + $0xb0] sm:$0xff]
      %v266 = vld [vmem:[%s1 + $0xb8] sm:$0xff]
      %v267 = vld [vmem:[%s1 + $0xc0] sm:$0xff]
      %v268 = vld [vmem:[%s1 + $0xc8] sm:$0xff]
      %v269 = vld [vmem:[%s1 + $0xd0] sm:$0xff]
      %v270 = vld [vmem:[%s1 + $0xd8] sm:$0xff]
      %v271 = vld [vmem:[%s1 + $0xe0] sm:$0xff]
      %v272 = vld [vmem:[%s1 + $0xe8] sm:$0xff]
      %v273 = vld [vmem:[%s1 + $0xf0] sm:$0xff]
      %v274 = vld [vmem:[%s1 + $0xf8] sm:$0xff]
      %v275 = vld [vmem:[%s1 + $0x100] sm:$0xff]
      %v276 = vld [vmem:[%s1 + $0x108] sm:$0xff]
      %v277 = vld [vmem:[%s1 + $0x110] sm:$0xff]
      %v278 = vld [vmem:[%s1 + $0x118] sm:$0xff]
      %v279 = vld [vmem:[%s1 + $0x120] sm:$0xff]
      %v280 = vld [vmem:[%s1 + $0x128] sm:$0xff]
      %v281 = vld [vmem:[%s1 + $0x130] sm:$0xff]
      %v282 = vld [vmem:[%s1 + $0x138] sm:$0xff]
      %v283 = vld [vmem:[%s1 + $0x140] sm:$0xff]
      %v284 = vld [vmem:[%s1 + $0x148] sm:$0xff]
      %v285 = vld [vmem:[%s1 + $0x150] sm:$0xff]
      %v286 = vld [vmem:[%s1 + $0x158] sm:$0xff]
      %v287 = vld [vmem:[%s1 + $0x160] sm:$0xff]
      %v288 = vld [vmem:[%s1 + $0x168] sm:$0xff]
      %v289 = vld [vmem:[%s1 + $0x170] sm:$0xff]
      %v290 = vld [vmem:[%s1 + $0x178] sm:$0xff]
      %v291 = vld [vmem:[%s1 + $0x180] sm:$0xff]
      %v292 = vld [vmem:[%s1 + $0x188] sm:$0xff]
      %v293 = vld [vmem:[%s1 + $0x190] sm:$0xff]
      %v294 = vld [vmem:[%s1 + $0x198] sm:$0xff]
      %v295 = vld [vmem:[%s1 + $0x1a0] sm:$0xff]
      %v296 = vld [vmem:[%s1 + $0x1a8] sm:$0xff]
      %v297 = vld [vmem:[%s1 + $0x1b0] sm:$0xff]
      %v298 = vld [vmem:[%s1 + $0x1b8] sm:$0xff]
      %v299 = vld [vmem:[%s1 + $0x1c0] sm:$0xff]
      %v300 = vld [vmem:[%s1 + $0x1c8] sm:$0xff]
      %v301 = vld [vmem:[%s1 + $0x1d0] sm:$0xff]
      %v302 = vld [vmem:[%s1 + $0x1d8] sm:$0xff]
      %v303 = vld [vmem:[%s1 + $0x1e0] sm:$0xff]
      %v304 = vld [vmem:[%s1 + $0x1e8] sm:$0xff]
      %v305 = vld [vmem:[%s1 + $0x1f0] sm:$0xff]
      %v306 = vld [vmem:[%s1 + $0x1f8] sm:$0xff]
      %v307 = vld [vmem:[%s1 + $0x200] sm:$0xff]
      %v308 = vld [vmem:[%s1 + $0x208] sm:$0xff]
      %v309 = vld [vmem:[%s1 + $0x210] sm:$0xff]
      %v310 = vld [vmem:[%s1 + $0x218] sm:$0xff]
      %v311 = vld [vmem:[%s1 + $0x220] sm:$0xff]
      %v312 = vld [vmem:[%s1 + $0x228] sm:$0xff]
      %v313 = vld [vmem:[%s1 + $0x230] sm:$0xff]
      %v314 = vld [vmem:[%s1 + $0x238] sm:$0xff]
      %v315 = vld [vmem:[%s1 + $0x240] sm:$0xff]
      %v316 = vld [vmem:[%s1 + $0x248] sm:$0xff]
      %v317 = vld [vmem:[%s1 + $0x250] sm:$0xff]
      %v318 = vld [vmem:[%s1 + $0x258] sm:$0xff]
      %v319 = vld [vmem:[%s1 + $0x260] sm:$0xff]
      %v320 = vld [vmem:[%s1 + $0x268] sm:$0xff]
      %v321 = vld [vmem:[%s1 + $0x270] sm:$0xff]
      %v322 = vld [vmem:[%s1 + $0x278] sm:$0xff]
      %v323 = vld [vmem:[%s1 + $0x280] sm:$0xff]
      %v324 = vld [vmem:[%s1 + $0x288] sm:$0xff]
      %v325 = vld [vmem:[%s1 + $0x290] sm:$0xff]
      %v326 = vld [vmem:[%s1 + $0x298] sm:$0xff]
      %v327 = vld [vmem:[%s1 + $0x2a0] sm:$0xff]
      %v328 = vld [vmem:[%s1 + $0x2a8] sm:$0xff]
      %v329 = vld [vmem:[%s1 + $0x2b0] sm:$0xff]
      %v330 = vld [vmem:[%s1 + $0x2b8] sm:$0xff]
      %v331 = vld [vmem:[%s1 + $0x2c0] sm:$0xff]
      %v332 = vld [vmem:[%s1 + $0x2c8] sm:$0xff]
      %v333 = vld [vmem:[%s1 + $0x2d0] sm:$0xff]
      %v334 = vld [vmem:[%s1 + $0x2d8] sm:$0xff]
      %v335 = vld [vmem:[%s1 + $0x2e0] sm:$0xff]
      %v336 = vld [vmem:[%s1 + $0x2e8] sm:$0xff]
      %v337 = vld [vmem:[%s1 + $0x2f0] sm:$0xff]
      %v338 = vld [vmem:[%s1 + $0x2f8] sm:$0xff]
      %v339 = vld [vmem:[%s2] sm:$0x3]
      %v341 = vlaneseq
      %v342 = vshrl.u32 %v341, 7
      %v343 = vsub.s32 0, %v342
      %v344 = vrot.slane %v339, %v343
      %v345 = vlaneseq
      %v346 = vshrl.u32 %v345, 7
      %v347 = vsub.s32 1, %v346
      %v348 = vrot.slane %v339, %v347
      %v447 = vunpack.c.l.b16 %v243
      %v448 = vunpack.c.h.b16 %v243
      %v449 = vunpack.c.l.b16 %v244
      %v450 = vunpack.c.h.b16 %v244
      %v451 = vunpack.c.l.b16 %v245
      %v452 = vunpack.c.h.b16 %v245
      %v453 = vunpack.c.l.b16 %v246
      %v454 = vunpack.c.h.b16 %v246
      %v455 = vunpack.c.l.b16 %v247
      %v456 = vunpack.c.h.b16 %v247
      %v457 = vunpack.c.l.b16 %v248
      %v458 = vunpack.c.h.b16 %v248
      %v459 = vunpack.c.l.b16 %v249
      %v460 = vunpack.c.h.b16 %v249
      %v461 = vunpack.c.l.b16 %v250
      %v462 = vunpack.c.h.b16 %v250
      %v463 = vunpack.c.l.b16 %v251
      %v464 = vunpack.c.h.b16 %v251
      %v465 = vunpack.c.l.b16 %v252
      %v466 = vunpack.c.h.b16 %v252
      %v467 = vunpack.c.l.b16 %v253
      %v468 = vunpack.c.h.b16 %v253
      %v469 = vunpack.c.l.b16 %v254
      %v470 = vunpack.c.h.b16 %v254
      %v471 = vunpack.c.l.b16 %v255
      %v472 = vunpack.c.h.b16 %v255
      %v473 = vunpack.c.l.b16 %v256
      %v474 = vunpack.c.h.b16 %v256
      %v475 = vunpack.c.l.b16 %v257
      %v476 = vunpack.c.h.b16 %v257
      %v477 = vunpack.c.l.b16 %v258
      %v478 = vunpack.c.h.b16 %v258
      %v479 = vunpack.c.l.b16 %v259
      %v480 = vunpack.c.h.b16 %v259
      %v481 = vunpack.c.l.b16 %v260
      %v482 = vunpack.c.h.b16 %v260
      %v483 = vunpack.c.l.b16 %v261
      %v484 = vunpack.c.h.b16 %v261
      %v485 = vunpack.c.l.b16 %v262
      %v486 = vunpack.c.h.b16 %v262
      %v487 = vunpack.c.l.b16 %v263
      %v488 = vunpack.c.h.b16 %v263
      %v489 = vunpack.c.l.b16 %v264
      %v490 = vunpack.c.h.b16 %v264
      %v491 = vunpack.c.l.b16 %v265
      %v492 = vunpack.c.h.b16 %v265
      %v493 = vunpack.c.l.b16 %v266
      %v494 = vunpack.c.h.b16 %v266
      %v495 = vunpack.c.l.b16 %v267
      %v496 = vunpack.c.h.b16 %v267
      %v497 = vunpack.c.l.b16 %v268
      %v498 = vunpack.c.h.b16 %v268
      %v499 = vunpack.c.l.b16 %v269
      %v500 = vunpack.c.h.b16 %v269
      %v501 = vunpack.c.l.b16 %v270
      %v502 = vunpack.c.h.b16 %v270
      %v503 = vunpack.c.l.b16 %v271
      %v504 = vunpack.c.h.b16 %v271
      %v505 = vunpack.c.l.b16 %v272
      %v506 = vunpack.c.h.b16 %v272
      %v507 = vunpack.c.l.b16 %v273
      %v508 = vunpack.c.h.b16 %v273
      %v509 = vunpack.c.l.b16 %v274
      %v510 = vunpack.c.h.b16 %v274
      %v511 = vunpack.c.l.b16 %v275
      %v512 = vunpack.c.h.b16 %v275
      %v513 = vunpack.c.l.b16 %v276
      %v514 = vunpack.c.h.b16 %v276
      %v515 = vunpack.c.l.b16 %v277
      %v516 = vunpack.c.h.b16 %v277
      %v517 = vunpack.c.l.b16 %v278
      %v518 = vunpack.c.h.b16 %v278
      %v519 = vunpack.c.l.b16 %v279
      %v520 = vunpack.c.h.b16 %v279
      %v521 = vunpack.c.l.b16 %v280
      %v522 = vunpack.c.h.b16 %v280
      %v523 = vunpack.c.l.b16 %v281
      %v524 = vunpack.c.h.b16 %v281
      %v525 = vunpack.c.l.b16 %v282
      %v526 = vunpack.c.h.b16 %v282
      %v527 = vunpack.c.l.b16 %v283
      %v528 = vunpack.c.h.b16 %v283
      %v529 = vunpack.c.l.b16 %v284
      %v530 = vunpack.c.h.b16 %v284
      %v531 = vunpack.c.l.b16 %v285
      %v532 = vunpack.c.h.b16 %v285
      %v533 = vunpack.c.l.b16 %v286
      %v534 = vunpack.c.h.b16 %v286
      %v535 = vunpack.c.l.b16 %v287
      %v536 = vunpack.c.h.b16 %v287
      %v537 = vunpack.c.l.b16 %v288
      %v538 = vunpack.c.h.b16 %v288
      %v539 = vunpack.c.l.b16 %v289
      %v540 = vunpack.c.h.b16 %v289
      %v541 = vunpack.c.l.b16 %v290
      %v542 = vunpack.c.h.b16 %v290
      %v543 = vunpack.c.l.b16 %v291
      %v544 = vunpack.c.h.b16 %v291
      %v545 = vunpack.c.l.b16 %v292
      %v546 = vunpack.c.h.b16 %v292
      %v547 = vunpack.c.l.b16 %v293
      %v548 = vunpack.c.h.b16 %v293
      %v549 = vunpack.c.l.b16 %v294
      %v550 = vunpack.c.h.b16 %v294
      %v551 = vunpack.c.l.b16 %v295
      %v552 = vunpack.c.h.b16 %v295
      %v553 = vunpack.c.l.b16 %v296
      %v554 = vunpack.c.h.b16 %v296
      %v555 = vunpack.c.l.b16 %v297
      %v556 = vunpack.c.h.b16 %v297
      %v557 = vunpack.c.l.b16 %v298
      %v558 = vunpack.c.h.b16 %v298
      %v559 = vunpack.c.l.b16 %v299
      %v560 = vunpack.c.h.b16 %v299
      %v561 = vunpack.c.l.b16 %v300
      %v562 = vunpack.c.h.b16 %v300
      %v563 = vunpack.c.l.b16 %v301
      %v564 = vunpack.c.h.b16 %v301
      %v565 = vunpack.c.l.b16 %v302
      %v566 = vunpack.c.h.b16 %v302
      %v567 = vunpack.c.l.b16 %v303
      %v568 = vunpack.c.h.b16 %v303
      %v569 = vunpack.c.l.b16 %v304
      %v570 = vunpack.c.h.b16 %v304
      %v571 = vunpack.c.l.b16 %v305
      %v572 = vunpack.c.h.b16 %v305
      %v573 = vunpack.c.l.b16 %v306
      %v574 = vunpack.c.h.b16 %v306
      %v575 = vunpack.c.l.b16 %v307
      %v576 = vunpack.c.h.b16 %v307
      %v577 = vunpack.c.l.b16 %v308
      %v578 = vunpack.c.h.b16 %v308
      %v579 = vunpack.c.l.b16 %v309
      %v580 = vunpack.c.h.b16 %v309
      %v581 = vunpack.c.l.b16 %v310
      %v582 = vunpack.c.h.b16 %v310
      %v583 = vunpack.c.l.b16 %v311
      %v584 = vunpack.c.h.b16 %v311
      %v585 = vunpack.c.l.b16 %v312
      %v586 = vunpack.c.h.b16 %v312
      %v587 = vunpack.c.l.b16 %v313
      %v588 = vunpack.c.h.b16 %v313
      %v589 = vunpack.c.l.b16 %v314
      %v590 = vunpack.c.h.b16 %v314
      %v591 = vunpack.c.l.b16 %v315
      %v592 = vunpack.c.h.b16 %v315
      %v593 = vunpack.c.l.b16 %v316
      %v594 = vunpack.c.h.b16 %v316
      %v595 = vunpack.c.l.b16 %v317
      %v596 = vunpack.c.h.b16 %v317
      %v597 = vunpack.c.l.b16 %v318
      %v598 = vunpack.c.h.b16 %v318
      %v599 = vunpack.c.l.b16 %v319
      %v600 = vunpack.c.h.b16 %v319
      %v601 = vunpack.c.l.b16 %v320
      %v602 = vunpack.c.h.b16 %v320
      %v603 = vunpack.c.l.b16 %v321
      %v604 = vunpack.c.h.b16 %v321
      %v605 = vunpack.c.l.b16 %v322
      %v606 = vunpack.c.h.b16 %v322
      %v607 = vunpack.c.l.b16 %v323
      %v608 = vunpack.c.h.b16 %v323
      %v609 = vunpack.c.l.b16 %v324
      %v610 = vunpack.c.h.b16 %v324
      %v611 = vunpack.c.l.b16 %v325
      %v612 = vunpack.c.h.b16 %v325
      %v613 = vunpack.c.l.b16 %v326
      %v614 = vunpack.c.h.b16 %v326
      %v615 = vunpack.c.l.b16 %v327
      %v616 = vunpack.c.h.b16 %v327
      %v617 = vunpack.c.l.b16 %v328
      %v618 = vunpack.c.h.b16 %v328
      %v619 = vunpack.c.l.b16 %v329
      %v620 = vunpack.c.h.b16 %v329
      %v621 = vunpack.c.l.b16 %v330
      %v622 = vunpack.c.h.b16 %v330
      %v623 = vunpack.c.l.b16 %v331
      %v624 = vunpack.c.h.b16 %v331
      %v625 = vunpack.c.l.b16 %v332
      %v626 = vunpack.c.h.b16 %v332
      %v627 = vunpack.c.l.b16 %v333
      %v628 = vunpack.c.h.b16 %v333
      %v629 = vunpack.c.l.b16 %v334
      %v630 = vunpack.c.h.b16 %v334
      %v631 = vunpack.c.l.b16 %v335
      %v632 = vunpack.c.h.b16 %v335
      %v633 = vunpack.c.l.b16 %v336
      %v634 = vunpack.c.h.b16 %v336
      %v635 = vunpack.c.l.b16 %v337
      %v636 = vunpack.c.h.b16 %v337
      %v637 = vunpack.c.l.b16 %v338
      %v638 = vunpack.c.h.b16 %v338
      %v639 = vpack.c.b16 %v449, %v447
      %v640 = vpack.c.b16 %v450, %v448
      %v641 = vpack.c.b16 %v453, %v451
      %v642 = vpack.c.b16 %v454, %v452
      %v643 = vpack.c.b16 %v457, %v455
      %v644 = vpack.c.b16 %v458, %v456
      %v645 = vpack.c.b16 %v461, %v459
      %v646 = vpack.c.b16 %v462, %v460
      %v647 = vpack.c.b16 %v465, %v463
      %v648 = vpack.c.b16 %v466, %v464
      %v649 = vpack.c.b16 %v469, %v467
      %v650 = vpack.c.b16 %v470, %v468
      %v651 = vpack.c.b16 %v473, %v471
      %v652 = vpack.c.b16 %v474, %v472
      %v653 = vpack.c.b16 %v477, %v475
      %v654 = vpack.c.b16 %v478, %v476
      %v655 = vpack.c.b16 %v481, %v479
      %v656 = vpack.c.b16 %v482, %v480
      %v657 = vpack.c.b16 %v485, %v483
      %v658 = vpack.c.b16 %v486, %v484
      %v659 = vpack.c.b16 %v489, %v487
      %v660 = vpack.c.b16 %v490, %v488
      %v661 = vpack.c.b16 %v493, %v491
      %v662 = vpack.c.b16 %v494, %v492
      %v663 = vpack.c.b16 %v497, %v495
      %v664 = vpack.c.b16 %v498, %v496
      %v665 = vpack.c.b16 %v501, %v499
      %v666 = vpack.c.b16 %v502, %v500
      %v667 = vpack.c.b16 %v505, %v503
      %v668 = vpack.c.b16 %v506, %v504
      %v669 = vpack.c.b16 %v509, %v507
      %v670 = vpack.c.b16 %v510, %v508
      %v671 = vpack.c.b16 %v513, %v511
      %v672 = vpack.c.b16 %v514, %v512
      %v673 = vpack.c.b16 %v517, %v515
      %v674 = vpack.c.b16 %v518, %v516
      %v675 = vpack.c.b16 %v521, %v519
      %v676 = vpack.c.b16 %v522, %v520
      %v677 = vpack.c.b16 %v525, %v523
      %v678 = vpack.c.b16 %v526, %v524
      %v679 = vpack.c.b16 %v529, %v527
      %v680 = vpack.c.b16 %v530, %v528
      %v681 = vpack.c.b16 %v533, %v531
      %v682 = vpack.c.b16 %v534, %v532
      %v683 = vpack.c.b16 %v537, %v535
      %v684 = vpack.c.b16 %v538, %v536
      %v685 = vpack.c.b16 %v541, %v539
      %v686 = vpack.c.b16 %v542, %v540
      %v687 = vpack.c.b16 %v545, %v543
      %v688 = vpack.c.b16 %v546, %v544
      %v689 = vpack.c.b16 %v549, %v547
      %v690 = vpack.c.b16 %v550, %v548
      %v691 = vpack.c.b16 %v553, %v551
      %v692 = vpack.c.b16 %v554, %v552
      %v693 = vpack.c.b16 %v557, %v555
      %v694 = vpack.c.b16 %v558, %v556
      %v695 = vpack.c.b16 %v561, %v559
      %v696 = vpack.c.b16 %v562, %v560
      %v697 = vpack.c.b16 %v565, %v563
      %v698 = vpack.c.b16 %v566, %v564
      %v699 = vpack.c.b16 %v569, %v567
      %v700 = vpack.c.b16 %v570, %v568
      %v701 = vpack.c.b16 %v573, %v571
      %v702 = vpack.c.b16 %v574, %v572
      %v703 = vpack.c.b16 %v577, %v575
      %v704 = vpack.c.b16 %v578, %v576
      %v705 = vpack.c.b16 %v581, %v579
      %v706 = vpack.c.b16 %v582, %v580
      %v707 = vpack.c.b16 %v585, %v583
      %v708 = vpack.c.b16 %v586, %v584
      %v709 = vpack.c.b16 %v589, %v587
      %v710 = vpack.c.b16 %v590, %v588
      %v711 = vpack.c.b16 %v593, %v591
      %v712 = vpack.c.b16 %v594, %v592
      %v713 = vpack.c.b16 %v597, %v595
      %v714 = vpack.c.b16 %v598, %v596
      %v715 = vpack.c.b16 %v601, %v599
      %v716 = vpack.c.b16 %v602, %v600
      %v717 = vpack.c.b16 %v605, %v603
      %v718 = vpack.c.b16 %v606, %v604
      %v719 = vpack.c.b16 %v609, %v607
      %v720 = vpack.c.b16 %v610, %v608
      %v721 = vpack.c.b16 %v613, %v611
      %v722 = vpack.c.b16 %v614, %v612
      %v723 = vpack.c.b16 %v617, %v615
      %v724 = vpack.c.b16 %v618, %v616
      %v725 = vpack.c.b16 %v621, %v619
      %v726 = vpack.c.b16 %v622, %v620
      %v727 = vpack.c.b16 %v625, %v623
      %v728 = vpack.c.b16 %v626, %v624
      %v729 = vpack.c.b16 %v629, %v627
      %v730 = vpack.c.b16 %v630, %v628
      %v731 = vpack.c.b16 %v633, %v631
      %v732 = vpack.c.b16 %v634, %v632
      %v733 = vpack.c.b16 %v637, %v635
      %v734 = vpack.c.b16 %v638, %v636
      %831 = vmatprep.subr.bf16.mxu0 %v640
      %832 = vmatpush1.bf16.msra.mxu0 %v639
      %833 = vmatprep.subr.bf16.mxu0 %v642
      %834 = vmatpush1.bf16.msra.mxu0 %v641
      %835 = vmatprep.subr.bf16.mxu0 %v644
      %836 = vmatpush1.bf16.msra.mxu0 %v643
      %837 = vmatprep.subr.bf16.mxu0 %v646
      %838 = vmatpush1.bf16.msra.mxu0 %v645
      %839 = vmatprep.subr.bf16.mxu0 %v648
      %840 = vmatpush1.bf16.msra.mxu0 %v647
      %841 = vmatprep.subr.bf16.mxu0 %v650
      %842 = vmatpush1.bf16.msra.mxu0 %v649
      %843 = vmatprep.subr.bf16.mxu0 %v652
      %844 = vmatpush1.bf16.msra.mxu0 %v651
      %845 = vmatprep.subr.bf16.mxu0 %v654
      %846 = vmatpush1.bf16.msra.mxu0 %v653
      %847 = vmatprep.subr.bf16.mxu0 %v656
      %848 = vmatpush1.bf16.msra.mxu0 %v655
      %849 = vmatprep.subr.bf16.mxu0 %v658
      %850 = vmatpush1.bf16.msra.mxu0 %v657
      %851 = vmatprep.subr.bf16.mxu0 %v660
      %852 = vmatpush1.bf16.msra.mxu0 %v659
      %853 = vmatprep.subr.bf16.mxu0 %v662
      %854 = vmatpush1.bf16.msra.mxu0 %v661
      %855 = vmatprep.subr.bf16.mxu0 %v664
      %856 = vmatpush1.bf16.msra.mxu0 %v663
      %857 = vmatprep.subr.bf16.mxu0 %v666
      %858 = vmatpush1.bf16.msra.mxu0 %v665
      %859 = vmatprep.subr.bf16.mxu0 %v668
      %860 = vmatpush1.bf16.msra.mxu0 %v667
      %861 = vmatprep.subr.bf16.mxu0 %v670
      %862 = vmatpush1.bf16.msra.mxu0 %v669
      %863 = vmatprep.mubr.bf16.mxu0 %v238
      %864 = vmatmul.mubr.bf16.gmra.mrb[0].mxu0 %v237
      %v865 = vpop.f32.mrb[0].mxu0
      %v866 = vadd.f32 %v344, %v865
      %v867 = vpop.f32.mrb[0].mxu0
      %v868 = vadd.f32 %v348, %v867
      %v869 = vpop.f32.mrb[0].mxu0
      %v870 = vpop.f32.mrb[0].mxu0
      %871 = vdwg.mxu0
      %872 = vmatprep.subr.bf16.mxu0 %v672
      %873 = vmatpush1.bf16.msra.mxu0 %v671
      %874 = vmatprep.subr.bf16.mxu0 %v674
      %875 = vmatpush1.bf16.msra.mxu0 %v673
      %876 = vmatprep.subr.bf16.mxu0 %v676
      %877 = vmatpush1.bf16.msra.mxu0 %v675
      %878 = vmatprep.subr.bf16.mxu0 %v678
      %879 = vmatpush1.bf16.msra.mxu0 %v677
      %880 = vmatprep.subr.bf16.mxu0 %v680
      %881 = vmatpush1.bf16.msra.mxu0 %v679
      %882 = vmatprep.subr.bf16.mxu0 %v682
      %883 = vmatpush1.bf16.msra.mxu0 %v681
      %884 = vmatprep.subr.bf16.mxu0 %v684
      %885 = vmatpush1.bf16.msra.mxu0 %v683
      %886 = vmatprep.subr.bf16.mxu0 %v686
      %887 = vmatpush1.bf16.msra.mxu0 %v685
      %888 = vmatprep.subr.bf16.mxu0 %v688
      %889 = vmatpush1.bf16.msra.mxu0 %v687
      %890 = vmatprep.subr.bf16.mxu0 %v690
      %891 = vmatpush1.bf16.msra.mxu0 %v689
      %892 = vmatprep.subr.bf16.mxu0 %v692
      %893 = vmatpush1.bf16.msra.mxu0 %v691
      %894 = vmatprep.subr.bf16.mxu0 %v694
      %895 = vmatpush1.bf16.msra.mxu0 %v693
      %896 = vmatprep.subr.bf16.mxu0 %v696
      %897 = vmatpush1.bf16.msra.mxu0 %v695
      %898 = vmatprep.subr.bf16.mxu0 %v698
      %899 = vmatpush1.bf16.msra.mxu0 %v697
      %900 = vmatprep.subr.bf16.mxu0 %v700
      %901 = vmatpush1.bf16.msra.mxu0 %v699
      %902 = vmatprep.subr.bf16.mxu0 %v702
      %903 = vmatpush1.bf16.msra.mxu0 %v701
      %904 = vmatprep.mubr.bf16.mxu0 %v240
      %905 = vmatmul.mubr.bf16.gmra.mrb[0].mxu0 %v239
      %v906 = vpop.f32.mrb[0].mxu0
      %v907 = vadd.f32 %v866, %v906
      %v908 = vpop.f32.mrb[0].mxu0
      %v909 = vadd.f32 %v868, %v908
      %v910 = vpop.f32.mrb[0].mxu0
      %v911 = vpop.f32.mrb[0].mxu0
      %912 = vdwg.mxu0
      %913 = vmatprep.subr.bf16.mxu0 %v704
      %914 = vmatpush1.bf16.msra.mxu0 %v703
      %915 = vmatprep.subr.bf16.mxu0 %v706
      %916 = vmatpush1.bf16.msra.mxu0 %v705
      %917 = vmatprep.subr.bf16.mxu0 %v708
      %918 = vmatpush1.bf16.msra.mxu0 %v707
      %919 = vmatprep.subr.bf16.mxu0 %v710
      %920 = vmatpush1.bf16.msra.mxu0 %v709
      %921 = vmatprep.subr.bf16.mxu0 %v712
      %922 = vmatpush1.bf16.msra.mxu0 %v711
      %923 = vmatprep.subr.bf16.mxu0 %v714
      %924 = vmatpush1.bf16.msra.mxu0 %v713
      %925 = vmatprep.subr.bf16.mxu0 %v716
      %926 = vmatpush1.bf16.msra.mxu0 %v715
      %927 = vmatprep.subr.bf16.mxu0 %v718
      %928 = vmatpush1.bf16.msra.mxu0 %v717
      %929 = vmatprep.subr.bf16.mxu0 %v720
      %930 = vmatpush1.bf16.msra.mxu0 %v719
      %931 = vmatprep.subr.bf16.mxu0 %v722
      %932 = vmatpush1.bf16.msra.mxu0 %v721
      %933 = vmatprep.subr.bf16.mxu0 %v724
      %934 = vmatpush1.bf16.msra.mxu0 %v723
      %935 = vmatprep.subr.bf16.mxu0 %v726
      %936 = vmatpush1.bf16.msra.mxu0 %v725
      %937 = vmatprep.subr.bf16.mxu0 %v728
      %938 = vmatpush1.bf16.msra.mxu0 %v727
      %939 = vmatprep.subr.bf16.mxu0 %v730
      %940 = vmatpush1.bf16.msra.mxu0 %v729
      %941 = vmatprep.subr.bf16.mxu0 %v732
      %942 = vmatpush1.bf16.msra.mxu0 %v731
      %943 = vmatprep.subr.bf16.mxu0 %v734
      %944 = vmatpush1.bf16.msra.mxu0 %v733
      %945 = vmatprep.mubr.bf16.mxu0 %v242
      %946 = vmatmul.mubr.bf16.gmra.mrb[0].mxu0 %v241
      %v947 = vpop.f32.mrb[0].mxu0
      %v948 = vadd.f32 %v907, %v947
      %v949 = vpop.f32.mrb[0].mxu0
      %v950 = vadd.f32 %v909, %v949
      %v951 = vpop.f32.mrb[0].mxu0
      %v952 = vpop.f32.mrb[0].mxu0
      %953 = vdwg.mxu0
      %v954 = vld [vmem:[%s3] sm:$0x3]
      %v956 = vlaneseq
      %v957 = vshrl.u32 %v956, 7
      %v958 = vsub.s32 0, %v957
      %v959 = vrot.slane %v954, %v958
      %v960 = vlaneseq
      %v961 = vshrl.u32 %v960, 7
      %v962 = vsub.s32 1, %v961
      %v963 = vrot.slane %v954, %v962
      %v968 = vrot.slane %v948, 7
      %v969 = vrot.slane %v950, 7
      %vm972 = vcmask 1040384
      %v973 = vsel %vm972, %v959, %v968
      %v974 = vsel %vm972, %v963, %v969
      %v975 = vld [vmem:[%s4] sm:$0x1f]
      %v976 = vld [vmem:[%s4 + $0x8] sm:$0x1f]
      %v977 = vadd.f32 %v973, %v975
      %v978 = vadd.f32 %v974, %v976
      %979 = vst [vmem:[%s224] sm:$0x1f] %v977
      %980 = vst [vmem:[%s224 + $0x8] sm:$0x1f] %v978
      %p981 = scmp.lt.s32.totalorder %s16, 1
      %s982 = scalar_select %p981, %s16, 1
      %s983 = smul.addr %s982, 2
      %s984 = smul.addr %s983, 8
      %s985 = scalar_lea.vmem %s5, %s984
      // Predicated region
      $region41: #{_lambda_.4} parent=39 // pred_check
        %p986 = pneg %p144
      $region42: #{_lambda_.4} parent=39 // pred_check_branch
        %988 = sbr.rel (%p986) target = $region44
      $region43: #{_lambda_.4} parent=39 // pred_region
        _
      $region44: #{_lambda_.4} parent=39 // pred_fallthru
        _
    $region40: #{_lambda_.4} parent=5 // pred_fallthru
      _
    %p989 = scmp.le.s32.totalorder 2, %s11
    // Predicated region
    $region45: #{_lambda_.4} parent=5 // pred_check
      %p990 = pneg %p989
    $region46: #{_lambda_.4} parent=5 // pred_check_branch
      %992 = sbr.rel (%p990) target = $region48
    $region47: #{_lambda_.4} parent=5 // pred_region
      %s993 = ssub.s32 %s11, 2
      // Predicated region
      $region49: #{_lambda_.4} parent=47 // pred_check
        %p994 = pneg %p150
      $region50: #{_lambda_.4} parent=47 // pred_check_branch
        %996 = sbr.rel (%p994) target = $region52
      $region51: #{_lambda_.4} parent=47 // pred_region
        %p997 = scmp.lt.s32.totalorder %s17, 1
        %s998 = scalar_select %p997, %s17, 1
        %s999 = smul.addr %s998, 2
        %s1000 = smul.addr %s999, 8
        %s1001 = scalar_lea.vmem %s5, %s1000
      $region52: #{_lambda_.4} parent=47 // pred_fallthru
        _
    $region48: #{_lambda_.4} parent=5 // pred_fallthru
      _
  $region6: #{_lambda_.4} parent=0 // loop_footer
    %s15 = sadd.s32 1, %s11
  $region7: #{_lambda_.4} parent=0 // loop_footer_branch
    %10 = sbr.rel target = $region3
  $region8: #{_lambda_.4} parent=0 // loop_exit
    _

// kernel: _lambda_.7
$region0: #{_lambda_.7}
  #allocation0 [shape = 'u32[]', space=smem, size = 0x4, offset = 0x4, fixed_abs, tag = 'smem constant byte address 0x4 - core index']
  #allocation1 [shape = 'u32[144,128]{1,0:T(1,128)}', space=vmem, size = 0x12000, scoped, tag = 'internal scratch']
  %s0 = inlined_call_operand.vmem [shape: f32[2,5,256], index: 0, kind: input, shape index: {}]
  %s1 = inlined_call_operand.vmem [shape: f32[1,256], index: 1, kind: input, shape index: {}]
  %s2 = inlined_call_operand.vmem [shape: f32[1,256], index: 2, kind: input, shape index: {}]
  %s3 = inlined_call_operand.vmem [shape: bf16[256,128], index: 3, kind: input, shape index: {}]
  %s4 = inlined_call_operand.vmem [shape: f32[1,128], index: 4, kind: input, shape index: {}]
  %s5 = inlined_call_operand.hbm [shape: f32[2,128], index: 5, kind: output, shape index: {}]
  %s6 = sld [smem:[#allocation0]]
  $region30: #{_lambda_.7} parent=0
    _
  %s8 = ssub.s32 1, %s6
  %s9 = scalar_select 0, %s8, %s6
  $region1: #{_lambda_.7} parent=0
    #allocation2 [shape = 'u8[1024]{0}', space=vmem, size = 0x400, scoped, tag = 'output window, operand 0, single buffered']
    #allocation3 [shape = 's32[1]{0}', space=sflag, size = 0x4, scoped, tag = 'scoped memory for _lambda_.7']
    %10 = vsyncpa [#allocation3], 0
    // Predicated region
    $region2: #{_lambda_.7} parent=1 // pred_check
      _
    $region3: #{_lambda_.7} parent=1 // pred_check_branch
      %12 = sbr.rel (0) target = $region5
    $region4: #{_lambda_.7} parent=1 // pred_region
      _
    $region5: #{_lambda_.7} parent=1 // pred_fallthru
      _
    // Predicated region
    $region6: #{_lambda_.7} parent=1 // pred_check
      _
    $region7: #{_lambda_.7} parent=1 // pred_check_branch
      %14 = sbr.rel (0) target = $region9
    $region8: #{_lambda_.7} parent=1 // pred_region
      _
    $region9: #{_lambda_.7} parent=1 // pred_fallthru
      _
    // Predicated region
    $region10: #{_lambda_.7} parent=1 // pred_check
      _
    $region11: #{_lambda_.7} parent=1 // pred_check_branch
      %16 = sbr.rel (0) target = $region13
    $region12: #{_lambda_.7} parent=1 // pred_region
      _
    $region13: #{_lambda_.7} parent=1 // pred_fallthru
      _
    // Predicated region
    $region14: #{_lambda_.7} parent=1 // pred_check
      _
    $region15: #{_lambda_.7} parent=1 // pred_check_branch
      %18 = sbr.rel (0) target = $region17
    $region16: #{_lambda_.7} parent=1 // pred_region
      _
    $region17: #{_lambda_.7} parent=1 // pred_fallthru
      _
    // Predicated region
    $region18: #{_lambda_.7} parent=1 // pred_check
      _
    $region19: #{_lambda_.7} parent=1 // pred_check_branch
      %20 = sbr.rel (0) target = $region21
    $region20: #{_lambda_.7} parent=1 // pred_region
      _
    $region21: #{_lambda_.7} parent=1 // pred_fallthru
      _
    %v22 = vld [vmem:[%s0] sm:$0x1f]
    %v23 = vld [vmem:[%s0 + $0x8] sm:$0x1f]
    %v24 = vld [vmem:[%s0 + $0x10] sm:$0x1f]
    %v25 = vld [vmem:[%s0 + $0x18] sm:$0x1f]
    %v26 = vld [vmem:[%s1] sm:$0x3]
    %v27 = vld [vmem:[%s2] sm:$0x3]
    %v32 = vrot.slane %v24, 7
    %vm33 = vcmask 1041409
    %v34 = vsel %vm33, %v32, %v22
    %v35 = vrot.slane %v25, 7
    %v36 = vsel %vm33, %v35, %v23
    %vm39 = vcmask 1041408
    %v40 = vsel %vm39, %v34, 0.0
    %v41 = vsel %vm39, %v36, 0.0
    %v42 = vadd.f32 %v40, %v41
    %43 = vadd.xlane.f32.xlu0 %v42
    %v44 = vpop.xlane.xlu0 %43
    %v45 = vrcp.pop 256.0
    %v46 = vmul.f32 %v44, %v45
    %v48 = vrot.slane %v46, 1
    %v51 = vsub.f32 %v22, %v46
    %v52 = vsub.f32 %v23, %v46
    %v53 = vsub.f32 %v24, %v48
    %v54 = vsub.f32 %v25, %v48
    %v55 = vmul.f32 %v51, %v51
    %v56 = vmul.f32 %v52, %v52
    %v57 = vmul.f32 %v53, %v53
    %v58 = vmul.f32 %v54, %v54
    %v63 = vrot.slane %v57, 7
    %v64 = vsel %vm33, %v63, %v55
    %v65 = vrot.slane %v58, 7
    %v66 = vsel %vm33, %v65, %v56
    %v69 = vsel %vm39, %v64, 0.0
    %v70 = vsel %vm39, %v66, 0.0
    %v71 = vadd.f32 %v69, %v70
    %72 = vadd.xlane.f32.xlu0 %v71
    %v73 = vpop.xlane.xlu0 %72
    %v74 = vmul.f32 %v73, %v45
    %v75 = vadd.f32 %v74, 1e-06
    %v76 = vrsqrt.pop %v75
    %v78 = vrot.slane %v76, 1
    %v81 = vmul.f32 %v51, %v76
    %v82 = vmul.f32 %v52, %v76
    %v83 = vmul.f32 %v53, %v78
    %v84 = vmul.f32 %v54, %v78
    %v86 = vlaneseq
    %v87 = vshrl.u32 %v86, 7
    %v88 = vsub.s32 0, %v87
    %v89 = vrot.slane %v26, %v88
    %v90 = vlaneseq
    %v91 = vshrl.u32 %v90, 7
    %v92 = vsub.s32 1, %v91
    %v93 = vrot.slane %v26, %v92
    %v96 = vmul.f32 %v81, %v89
    %v97 = vmul.f32 %v82, %v93
    %v98 = vmul.f32 %v83, %v89
    %v99 = vmul.f32 %v84, %v93
    %v101 = vlaneseq
    %v102 = vshrl.u32 %v101, 7
    %v103 = vsub.s32 0, %v102
    %v104 = vrot.slane %v27, %v103
    %v105 = vlaneseq
    %v106 = vshrl.u32 %v105, 7
    %v107 = vsub.s32 1, %v106
    %v108 = vrot.slane %v27, %v107
    %v111 = vadd.f32 %v96, %v104
    %v112 = vadd.f32 %v97, %v108
    %v113 = vadd.f32 %v98, %v104
    %v114 = vadd.f32 %v99, %v108
    %v115 = vpack.c.bf16 %v111, %v111
    %v116 = vpack.c.bf16 %v112, %v112
    %v117 = vpack.c.bf16 %v113, %v113
    %v118 = vpack.c.bf16 %v114, %v114
    %v119 = vld [vmem:[%s3] sm:$0xf]
    %v120 = vld [vmem:[%s3 + $0x4] sm:$0xf]
    %v121 = vld [vmem:[%s3 + $0x8] sm:$0xf]
    %v122 = vld [vmem:[%s3 + $0xc] sm:$0xf]
    %v123 = vld [vmem:[%s3 + $0x10] sm:$0xf]
    %v124 = vld [vmem:[%s3 + $0x14] sm:$0xf]
    %v125 = vld [vmem:[%s3 + $0x18] sm:$0xf]
    %v126 = vld [vmem:[%s3 + $0x1c] sm:$0xf]
    %v127 = vld [vmem:[%s3 + $0x20] sm:$0xf]
    %v128 = vld [vmem:[%s3 + $0x24] sm:$0xf]
    %v129 = vld [vmem:[%s3 + $0x28] sm:$0xf]
    %v130 = vld [vmem:[%s3 + $0x2c] sm:$0xf]
    %v131 = vld [vmem:[%s3 + $0x30] sm:$0xf]
    %v132 = vld [vmem:[%s3 + $0x34] sm:$0xf]
    %v133 = vld [vmem:[%s3 + $0x38] sm:$0xf]
    %v134 = vld [vmem:[%s3 + $0x3c] sm:$0xf]
    %v135 = vld [vmem:[%s3 + $0x40] sm:$0xf]
    %v136 = vld [vmem:[%s3 + $0x44] sm:$0xf]
    %v137 = vld [vmem:[%s3 + $0x48] sm:$0xf]
    %v138 = vld [vmem:[%s3 + $0x4c] sm:$0xf]
    %v139 = vld [vmem:[%s3 + $0x50] sm:$0xf]
    %v140 = vld [vmem:[%s3 + $0x54] sm:$0xf]
    %v141 = vld [vmem:[%s3 + $0x58] sm:$0xf]
    %v142 = vld [vmem:[%s3 + $0x5c] sm:$0xf]
    %v143 = vld [vmem:[%s3 + $0x60] sm:$0xf]
    %v144 = vld [vmem:[%s3 + $0x64] sm:$0xf]
    %v145 = vld [vmem:[%s3 + $0x68] sm:$0xf]
    %v146 = vld [vmem:[%s3 + $0x6c] sm:$0xf]
    %v147 = vld [vmem:[%s3 + $0x70] sm:$0xf]
    %v148 = vld [vmem:[%s3 + $0x74] sm:$0xf]
    %v149 = vld [vmem:[%s3 + $0x78] sm:$0xf]
    %v150 = vld [vmem:[%s3 + $0x7c] sm:$0xf]
    %v151 = vld [vmem:[%s4] sm:$0x1]
    %v153 = vlaneseq
    %v154 = vshrl.u32 %v153, 7
    %v155 = vsub.s32 0, %v154
    %v156 = vrot.slane %v151, %v155
    %v162 = vunpack.c.l.b16 %v115
    %v163 = vunpack.c.l.b16 %v116
    %v164 = vunpack.c.l.b16 %v117
    %v165 = vunpack.c.l.b16 %v118
    %v166 = vrot.slane %v164, 7
    %v167 = vsel %vm33, %v166, %v162
    %v168 = vrot.slane %v165, 7
    %v169 = vsel %vm33, %v168, %v163
    %v170 = vpack.c.b16 %v167, %v167
    %v171 = vpack.c.b16 %v169, %v169
    %v206 = vunpack.c.l.b16 %v119
    %v207 = vunpack.c.l.b16 %v120
    %v208 = vunpack.c.l.b16 %v121
    %v209 = vunpack.c.l.b16 %v122
    %v210 = vunpack.c.l.b16 %v123
    %v211 = vunpack.c.l.b16 %v124
    %v212 = vunpack.c.l.b16 %v125
    %v213 = vunpack.c.l.b16 %v126
    %v214 = vunpack.c.l.b16 %v127
    %v215 = vunpack.c.l.b16 %v128
    %v216 = vunpack.c.l.b16 %v129
    %v217 = vunpack.c.l.b16 %v130
    %v218 = vunpack.c.l.b16 %v131
    %v219 = vunpack.c.l.b16 %v132
    %v220 = vunpack.c.l.b16 %v133
    %v221 = vunpack.c.l.b16 %v134
    %v222 = vunpack.c.l.b16 %v135
    %v223 = vunpack.c.l.b16 %v136
    %v224 = vunpack.c.l.b16 %v137
    %v225 = vunpack.c.l.b16 %v138
    %v226 = vunpack.c.l.b16 %v139
    %v227 = vunpack.c.l.b16 %v140
    %v228 = vunpack.c.l.b16 %v141
    %v229 = vunpack.c.l.b16 %v142
    %v230 = vunpack.c.l.b16 %v143
    %v231 = vunpack.c.l.b16 %v144
    %v232 = vunpack.c.l.b16 %v145
    %v233 = vunpack.c.l.b16 %v146
    %v234 = vunpack.c.l.b16 %v147
    %v235 = vunpack.c.l.b16 %v148
    %v236 = vunpack.c.l.b16 %v149
    %v237 = vunpack.c.l.b16 %v150
    %v238 = vpack.c.b16 %v207, %v206
    %v239 = vpack.c.b16 %v209, %v208
    %v240 = vpack.c.b16 %v211, %v210
    %v241 = vpack.c.b16 %v213, %v212
    %v242 = vpack.c.b16 %v215, %v214
    %v243 = vpack.c.b16 %v217, %v216
    %v244 = vpack.c.b16 %v219, %v218
    %v245 = vpack.c.b16 %v221, %v220
    %v246 = vpack.c.b16 %v223, %v222
    %v247 = vpack.c.b16 %v225, %v224
    %v248 = vpack.c.b16 %v227, %v226
    %v249 = vpack.c.b16 %v229, %v228
    %v250 = vpack.c.b16 %v231, %v230
    %v251 = vpack.c.b16 %v233, %v232
    %v252 = vpack.c.b16 %v235, %v234
    %v253 = vpack.c.b16 %v237, %v236
    %270 = vmatprep.subr.bf16.mxu0 0
    %271 = vmatpush1.bf16.msra.mxu0 %v238
    %272 = vmatprep.subr.bf16.mxu0 0
    %273 = vmatpush1.bf16.msra.mxu0 %v239
    %274 = vmatprep.subr.bf16.mxu0 0
    %275 = vmatpush1.bf16.msra.mxu0 %v240
    %276 = vmatprep.subr.bf16.mxu0 0
    %277 = vmatpush1.bf16.msra.mxu0 %v241
    %278 = vmatprep.subr.bf16.mxu0 0
    %279 = vmatpush1.bf16.msra.mxu0 %v242
    %280 = vmatprep.subr.bf16.mxu0 0
    %281 = vmatpush1.bf16.msra.mxu0 %v243
    %282 = vmatprep.subr.bf16.mxu0 0
    %283 = vmatpush1.bf16.msra.mxu0 %v244
    %284 = vmatprep.subr.bf16.mxu0 0
    %285 = vmatpush1.bf16.msra.mxu0 %v245
    %286 = vmatprep.subr.bf16.mxu0 0
    %287 = vmatpush1.bf16.msra.mxu0 %v246
    %288 = vmatprep.subr.bf16.mxu0 0
    %289 = vmatpush1.bf16.msra.mxu0 %v247
    %290 = vmatprep.subr.bf16.mxu0 0
    %291 = vmatpush1.bf16.msra.mxu0 %v248
    %292 = vmatprep.subr.bf16.mxu0 0
    %293 = vmatpush1.bf16.msra.mxu0 %v249
    %294 = vmatprep.subr.bf16.mxu0 0
    %295 = vmatpush1.bf16.msra.mxu0 %v250
    %296 = vmatprep.subr.bf16.mxu0 0
    %297 = vmatpush1.bf16.msra.mxu0 %v251
    %298 = vmatprep.subr.bf16.mxu0 0
    %299 = vmatpush1.bf16.msra.mxu0 %v252
    %300 = vmatprep.subr.bf16.mxu0 0
    %301 = vmatpush1.bf16.msra.mxu0 %v253
    %302 = vmatprep.mubr.bf16.mxu0 %v171
    %303 = vmatmul.mubr.bf16.gmra.mrb[0].mxu0 %v170
    %v304 = vpop.f32.mrb[0].mxu0
    %v305 = vadd.f32 %v156, %v304
    %v306 = vpop.f32.mrb[0].mxu0
    %v307 = vpop.f32.mrb[0].mxu0
    %v308 = vpop.f32.mrb[0].mxu0
    %309 = vdwg.mxu0
    %310 = vst [vmem:[#allocation2] sm:$0x3] %v305
    // Predicated region
    $region22: #{_lambda_.7} parent=1 // pred_check
      _
    $region23: #{_lambda_.7} parent=1 // pred_check_branch
      %312 = sbr.rel (0) target = $region25
    $region24: #{_lambda_.7} parent=1 // pred_region
      %s314 = ssub.s32 32, 32
      %315 = vsyncadd [#allocation3], %s314
      %s317 = sshll.u32 [#allocation2], 4
      %s318 = int_to_ptr.vmem [resolvable:$true] %s317
      %320 = dma.vmem_to_hbm [thread:$0]  %s318, 32, %s5, [#allocation3]
    $region25: #{_lambda_.7} parent=1 // pred_fallthru
      _
    // Predicated region
    $region26: #{_lambda_.7} parent=1 // pred_check
      _
    $region27: #{_lambda_.7} parent=1 // pred_check_branch
      %322 = sbr.rel (0) target = $region29
    $region28: #{_lambda_.7} parent=1 // pred_region
      %323 = dma.done [#allocation3], 32
    $region29: #{_lambda_.7} parent=1 // pred_fallthru
      _
    %324 = vsyncpa [#allocation3], 1

// kernel: _lambda_.5
$region0: #{_lambda_.5}
  #allocation0 [shape = 'u32[]', space=smem, size = 0x4, offset = 0x4, fixed_abs, tag = 'smem constant byte address 0x4 - core index']
  #allocation1 [shape = 'u32[144,128]{1,0:T(1,128)}', space=vmem, size = 0x12000, scoped, tag = 'internal scratch']
  %s0 = inlined_call_operand.vmem [shape: f32[2,5,256], index: 0, kind: input, shape index: {}, may-alias: {0,17}]
  %s1 = inlined_call_operand.vmem [shape: f32[1,256], index: 1, kind: input, shape index: {}]
  %s2 = inlined_call_operand.vmem [shape: f32[1,256], index: 2, kind: input, shape index: {}]
  %s3 = inlined_call_operand.vmem [shape: bf16[256,256], index: 3, kind: input, shape index: {}]
  %s4 = inlined_call_operand.vmem [shape: bf16[256,256], index: 4, kind: input, shape index: {}]
  %s5 = inlined_call_operand.vmem [shape: bf16[256,256], index: 5, kind: input, shape index: {}]
  %s6 = inlined_call_operand.vmem [shape: f32[1,256], index: 6, kind: input, shape index: {}]
  %s7 = inlined_call_operand.vmem [shape: f32[1,256], index: 7, kind: input, shape index: {}]
  %s8 = inlined_call_operand.vmem [shape: f32[1,256], index: 8, kind: input, shape index: {}]
  %s9 = inlined_call_operand.hbm [shape: bf16[256,256], index: 9, kind: input, shape index: {}]
  %s10 = inlined_call_operand.vmem [shape: f32[1,256], index: 10, kind: input, shape index: {}]
  %s11 = inlined_call_operand.vmem [shape: f32[1,256], index: 11, kind: input, shape index: {}]
  %s12 = inlined_call_operand.vmem [shape: f32[1,256], index: 12, kind: input, shape index: {}]
  %s13 = inlined_call_operand.vmem [shape: bf16[256,512], index: 13, kind: input, shape index: {}]
  %s14 = inlined_call_operand.vmem [shape: f32[1,512], index: 14, kind: input, shape index: {}]
  %s15 = inlined_call_operand.vmem [shape: bf16[512,256], index: 15, kind: input, shape index: {}]
  %s16 = inlined_call_operand.vmem [shape: f32[1,256], index: 16, kind: input, shape index: {}]
  %s17 = inlined_call_operand.vmem [shape: f32[2,5,256], index: 17, kind: output, shape index: {}, may-alias: {0,17}]
  %s18 = sld [smem:[#allocation0]]
  $region105: #{_lambda_.5} parent=0
    _
  %s20 = ssub.s32 1, %s18
  %s21 = scalar_select 0, %s20, %s18
  $region1: #{_lambda_.5} parent=0
    #allocation2 [shape = 'u8[131072]{0}', space=vmem, size = 0x20000, scoped, tag = 'input window, operand 9, single buffered']
    #allocation3 [shape = 's32[2]{0}', space=sflag, size = 0x8, scoped, tag = 'scoped memory for _lambda_.5']
    %22 = vsyncpa [#allocation3], 0
    loop: start=0, step=1, limit=4
    $region2: #{_lambda_.5} parent=1 // loop_pre_header
      _
    $region3: #{_lambda_.5} parent=1 // loop_header
      %s24 = sphi 0, %s28
      %p25 = scmp.ge.s32.totalorder %s24, 4
      %s34 = sphi 0, %s36
      %s37 = sphi 0, %s34
      %s38 = sphi 0, %s37
      %s54 = sphi 0, %s38
      %s58 = sphi 0, %s58
      %s60 = sphi 0, %s58
      %s61 = sphi 0, %s60
      %s75 = sphi 0, %s61
      %s79 = sphi 0, %s79
      %s81 = sphi 0, %s79
      %s82 = sphi 0, %s81
      %s96 = sphi 0, %s82
      %s100 = sphi 0, %s100
      %s102 = sphi 0, %s100
      %s103 = sphi 0, %s102
      %s117 = sphi 0, %s103
      %s121 = sphi 0, %s121
      %s123 = sphi 0, %s121
      %s124 = sphi 0, %s123
      %s138 = sphi 0, %s124
      %s142 = sphi 0, %s142
      %s144 = sphi 0, %s142
      %s145 = sphi 0, %s144
      %s159 = sphi 0, %s145
      %s163 = sphi 0, %s163
      %s165 = sphi 0, %s163
      %s166 = sphi 0, %s165
      %s180 = sphi 0, %s166
      %s184 = sphi 0, %s184
      %s186 = sphi 0, %s184
      %s187 = sphi 0, %s186
      %s201 = sphi 0, %s187
      %s205 = sphi 0, %s205
      %s207 = sphi 0, %s205
      %s208 = sphi 0, %s207
      %s222 = sphi 0, %s208
      %s226 = sphi 0, %s226
      %s228 = sphi 0, %s226
      %s229 = sphi 0, %s228
      %s243 = sphi 0, %s229
      %s247 = sphi 0, %s247
      %s249 = sphi 0, %s247
      %s250 = sphi 0, %s249
      %s264 = sphi 0, %s250
      %s268 = sphi 0, %s268
      %s270 = sphi 0, %s268
      %s271 = sphi 0, %s270
      %s285 = sphi 0, %s271
      %s289 = sphi 0, %s289
      %s291 = sphi 0, %s289
      %s292 = sphi 0, %s291
      %s306 = sphi 0, %s292
      %s310 = sphi 0, %s310
      %s312 = sphi 0, %s310
      %s313 = sphi 0, %s312
      %s327 = sphi 0, %s313
      %s331 = sphi 0, %s331
      %s333 = sphi 0, %s331
      %s334 = sphi 0, %s333
      %s348 = sphi 0, %s334
      %s352 = sphi 0, %s352
      %s354 = sphi 0, %s352
      %s355 = sphi 0, %s354
      %s369 = sphi 0, %s355
      %s373 = sphi 0, %s373
      %s375 = sphi 0, %s373
      %s376 = sphi 0, %s375
      %s390 = sphi 0, %s376
      %s396 = sphi 0, %s398
      %s399 = sphi 0, %s396
      %s400 = sphi 0, %s399
      %s416 = sphi 0, %s400
    $region4: #{_lambda_.5} parent=1 // loop_header_branch
      %27 = sbr.rel (%p25) target = $region8
    $region5: #{_lambda_.5} parent=1 // loop_body
      %s29 = ssub.s32 %s24, 1
      %s30 = ssub.s32 %s24, 2
      %s31 = sadd.s32 %s24, 1
      %s32 = ssub.s32 %s24, %s31
      %p33 = scmp.eq.s32.totalorder %s32, 0
      %s35 = sadd.s32 %s34, 1
      %s36 = scalar_select %p33, %s34, %s35
      %p39 = pneg %p33
      %p40 = scmp.eq.s32.totalorder %s24, 1
      %p41 = por %p39, %p40
      %p42 = scmp.ne.s32.totalorder %s34, %s37
      %p43 = scmp.eq.s32.totalorder %s24, 0
      %p44 = por %p42, %p43
      %p45 = scmp.ne.s32.totalorder %s34, %s37
      %p46 = scmp.eq.s32.totalorder %s29, 1
      %p47 = por %p45, %p46
      %p48 = scmp.ne.s32.totalorder %s37, %s38
      %p49 = scmp.eq.s32.totalorder %s29, 0
      %p50 = por %p48, %p49
      %p51 = scmp.ne.s32.totalorder %s37, %s38
      %p52 = scmp.eq.s32.totalorder %s30, 1
      %p53 = por %p51, %p52
      %p55 = scmp.ne.s32.totalorder %s38, %s54
      %p56 = scmp.eq.s32.totalorder %s30, 0
      %p57 = por %p55, %p56
      %s59 = sadd.s32 %s58, 1
      %p62 = scmp.eq.s32.totalorder %s24, 1
      %p63 = scmp.ne.s32.totalorder %s58, %s60
      %p64 = scmp.eq.s32.totalorder %s24, 0
      %p65 = por %p63, %p64
      %p66 = scmp.ne.s32.totalorder %s58, %s60
      %p67 = scmp.eq.s32.totalorder %s29, 1
      %p68 = por %p66, %p67
      %p69 = scmp.ne.s32.totalorder %s60, %s61
      %p70 = scmp.eq.s32.totalorder %s29, 0
      %p71 = por %p69, %p70
      %p72 = scmp.ne.s32.totalorder %s60, %s61
      %p73 = scmp.eq.s32.totalorder %s30, 1
      %p74 = por %p72, %p73
      %p76 = scmp.ne.s32.totalorder %s61, %s75
      %p77 = scmp.eq.s32.totalorder %s30, 0
      %p78 = por %p76, %p77
      %s80 = sadd.s32 %s79, 1
      %p83 = scmp.eq.s32.totalorder %s24, 1
      %p84 = scmp.ne.s32.totalorder %s79, %s81
      %p85 = scmp.eq.s32.totalorder %s24, 0
      %p86 = por %p84, %p85
      %p87 = scmp.ne.s32.totalorder %s79, %s81
      %p88 = scmp.eq.s32.totalorder %s29, 1
      %p89 = por %p87, %p88
      %p90 = scmp.ne.s32.totalorder %s81, %s82
      %p91 = scmp.eq.s32.totalorder %s29, 0
      %p92 = por %p90, %p91
      %p93 = scmp.ne.s32.totalorder %s81, %s82
      %p94 = scmp.eq.s32.totalorder %s30, 1
      %p95 = por %p93, %p94
      %p97 = scmp.ne.s32.totalorder %s82, %s96
      %p98 = scmp.eq.s32.totalorder %s30, 0
      %p99 = por %p97, %p98
      %s101 = sadd.s32 %s100, 1
      %p104 = scmp.eq.s32.totalorder %s24, 1
      %p105 = scmp.ne.s32.totalorder %s100, %s102
      %p106 = scmp.eq.s32.totalorder %s24, 0
      %p107 = por %p105, %p106
      %p108 = scmp.ne.s32.totalorder %s100, %s102
      %p109 = scmp.eq.s32.totalorder %s29, 1
      %p110 = por %p108, %p109
      %p111 = scmp.ne.s32.totalorder %s102, %s103
      %p112 = scmp.eq.s32.totalorder %s29, 0
      %p113 = por %p111, %p112
      %p114 = scmp.ne.s32.totalorder %s102, %s103
      %p115 = scmp.eq.s32.totalorder %s30, 1
      %p116 = por %p114, %p115
      %p118 = scmp.ne.s32.totalorder %s103, %s117
      %p119 = scmp.eq.s32.totalorder %s30, 0
      %p120 = por %p118, %p119
      %s122 = sadd.s32 %s121, 1
      %p125 = scmp.eq.s32.totalorder %s24, 1
      %p126 = scmp.ne.s32.totalorder %s121, %s123
      %p127 = scmp.eq.s32.totalorder %s24, 0
      %p128 = por %p126, %p127
      %p129 = scmp.ne.s32.totalorder %s121, %s123
      %p130 = scmp.eq.s32.totalorder %s29, 1
      %p131 = por %p129, %p130
      %p132 = scmp.ne.s32.totalorder %s123, %s124
      %p133 = scmp.eq.s32.totalorder %s29, 0
      %p134 = por %p132, %p133
      %p135 = scmp.ne.s32.totalorder %s123, %s124
      %p136 = scmp.eq.s32.totalorder %s30, 1
      %p137 = por %p135, %p136
      %p139 = scmp.ne.s32.totalorder %s124, %s138
      %p140 = scmp.eq.s32.totalorder %s30, 0
      %p141 = por %p139, %p140
      %s143 = sadd.s32 %s142, 1
      %p146 = scmp.eq.s32.totalorder %s24, 1
      %p147 = scmp.ne.s32.totalorder %s142, %s144
      %p148 = scmp.eq.s32.totalorder %s24, 0
      %p149 = por %p147, %p148
      %p150 = scmp.ne.s32.totalorder %s142, %s144
      %p151 = scmp.eq.s32.totalorder %s29, 1
      %p152 = por %p150, %p151
      %p153 = scmp.ne.s32.totalorder %s144, %s145
      %p154 = scmp.eq.s32.totalorder %s29, 0
      %p155 = por %p153, %p154
      %p156 = scmp.ne.s32.totalorder %s144, %s145
      %p157 = scmp.eq.s32.totalorder %s30, 1
      %p158 = por %p156, %p157
      %p160 = scmp.ne.s32.totalorder %s145, %s159
      %p161 = scmp.eq.s32.totalorder %s30, 0
      %p162 = por %p160, %p161
      %s164 = sadd.s32 %s163, 1
      %p167 = scmp.eq.s32.totalorder %s24, 1
      %p168 = scmp.ne.s32.totalorder %s163, %s165
      %p169 = scmp.eq.s32.totalorder %s24, 0
      %p170 = por %p168, %p169
      %p171 = scmp.ne.s32.totalorder %s163, %s165
      %p172 = scmp.eq.s32.totalorder %s29, 1
      %p173 = por %p171, %p172
      %p174 = scmp.ne.s32.totalorder %s165, %s166
      %p175 = scmp.eq.s32.totalorder %s29, 0
      %p176 = por %p174, %p175
      %p177 = scmp.ne.s32.totalorder %s165, %s166
      %p178 = scmp.eq.s32.totalorder %s30, 1
      %p179 = por %p177, %p178
      %p181 = scmp.ne.s32.totalorder %s166, %s180
      %p182 = scmp.eq.s32.totalorder %s30, 0
      %p183 = por %p181, %p182
      %s185 = sadd.s32 %s184, 1
      %p188 = scmp.eq.s32.totalorder %s24, 1
      %p189 = scmp.ne.s32.totalorder %s184, %s186
      %p190 = scmp.eq.s32.totalorder %s24, 0
      %p191 = por %p189, %p190
      %p192 = scmp.ne.s32.totalorder %s184, %s186
      %p193 = scmp.eq.s32.totalorder %s29, 1
      %p194 = por %p192, %p193
      %p195 = scmp.ne.s32.totalorder %s186, %s187
      %p196 = scmp.eq.s32.totalorder %s29, 0
      %p197 = por %p195, %p196
      %p198 = scmp.ne.s32.totalorder %s186, %s187
      %p199 = scmp.eq.s32.totalorder %s30, 1
      %p200 = por %p198, %p199
      %p202 = scmp.ne.s32.totalorder %s187, %s201
      %p203 = scmp.eq.s32.totalorder %s30, 0
      %p204 = por %p202, %p203
      %s206 = sadd.s32 %s205, 1
      %p209 = scmp.eq.s32.totalorder %s24, 1
      %p210 = scmp.ne.s32.totalorder %s205, %s207
      %p211 = scmp.eq.s32.totalorder %s24, 0
      %p212 = por %p210, %p211
      %p213 = scmp.ne.s32.totalorder %s205, %s207
      %p214 = scmp.eq.s32.totalorder %s29, 1
      %p215 = por %p213, %p214
      %p216 = scmp.ne.s32.totalorder %s207, %s208
      %p217 = scmp.eq.s32.totalorder %s29, 0
      %p218 = por %p216, %p217
      %p219 = scmp.ne.s32.totalorder %s207, %s208
      %p220 = scmp.eq.s32.totalorder %s30, 1
      %p221 = por %p219, %p220
      %p223 = scmp.ne.s32.totalorder %s208, %s222
      %p224 = scmp.eq.s32.totalorder %s30, 0
      %p225 = por %p223, %p224
      %s227 = sadd.s32 %s226, 1
      %p230 = scmp.eq.s32.totalorder %s24, 1
      %p231 = scmp.ne.s32.totalorder %s226, %s228
      %p232 = scmp.eq.s32.totalorder %s24, 0
      %p233 = por %p231, %p232
      %p234 = scmp.ne.s32.totalorder %s226, %s228
      %p235 = scmp.eq.s32.totalorder %s29, 1
      %p236 = por %p234, %p235
      %p237 = scmp.ne.s32.totalorder %s228, %s229
      %p238 = scmp.eq.s32.totalorder %s29, 0
      %p239 = por %p237, %p238
      %p240 = scmp.ne.s32.totalorder %s228, %s229
      %p241 = scmp.eq.s32.totalorder %s30, 1
      %p242 = por %p240, %p241
      %p244 = scmp.ne.s32.totalorder %s229, %s243
      %p245 = scmp.eq.s32.totalorder %s30, 0
      %p246 = por %p244, %p245
      %s248 = sadd.s32 %s247, 1
      %p251 = scmp.eq.s32.totalorder %s24, 1
      %p252 = scmp.ne.s32.totalorder %s247, %s249
      %p253 = scmp.eq.s32.totalorder %s24, 0
      %p254 = por %p252, %p253
      %p255 = scmp.ne.s32.totalorder %s247, %s249
      %p256 = scmp.eq.s32.totalorder %s29, 1
      %p257 = por %p255, %p256
      %p258 = scmp.ne.s32.totalorder %s249, %s250
      %p259 = scmp.eq.s32.totalorder %s29, 0
      %p260 = por %p258, %p259
      %p261 = scmp.ne.s32.totalorder %s249, %s250
      %p262 = scmp.eq.s32.totalorder %s30, 1
      %p263 = por %p261, %p262
      %p265 = scmp.ne.s32.totalorder %s250, %s264
      %p266 = scmp.eq.s32.totalorder %s30, 0
      %p267 = por %p265, %p266
      %s269 = sadd.s32 %s268, 1
      %p272 = scmp.eq.s32.totalorder %s24, 1
      %p273 = scmp.ne.s32.totalorder %s268, %s270
      %p274 = scmp.eq.s32.totalorder %s24, 0
      %p275 = por %p273, %p274
      %p276 = scmp.ne.s32.totalorder %s268, %s270
      %p277 = scmp.eq.s32.totalorder %s29, 1
      %p278 = por %p276, %p277
      %p279 = scmp.ne.s32.totalorder %s270, %s271
      %p280 = scmp.eq.s32.totalorder %s29, 0
      %p281 = por %p279, %p280
      %p282 = scmp.ne.s32.totalorder %s270, %s271
      %p283 = scmp.eq.s32.totalorder %s30, 1
      %p284 = por %p282, %p283
      %p286 = scmp.ne.s32.totalorder %s271, %s285
      %p287 = scmp.eq.s32.totalorder %s30, 0
      %p288 = por %p286, %p287
      %s290 = sadd.s32 %s289, 1
      %p293 = scmp.eq.s32.totalorder %s24, 1
      %p294 = scmp.ne.s32.totalorder %s289, %s291
      %p295 = scmp.eq.s32.totalorder %s24, 0
      %p296 = por %p294, %p295
      %p297 = scmp.ne.s32.totalorder %s289, %s291
      %p298 = scmp.eq.s32.totalorder %s29, 1
      %p299 = por %p297, %p298
      %p300 = scmp.ne.s32.totalorder %s291, %s292
      %p301 = scmp.eq.s32.totalorder %s29, 0
      %p302 = por %p300, %p301
      %p303 = scmp.ne.s32.totalorder %s291, %s292
      %p304 = scmp.eq.s32.totalorder %s30, 1
      %p305 = por %p303, %p304
      %p307 = scmp.ne.s32.totalorder %s292, %s306
      %p308 = scmp.eq.s32.totalorder %s30, 0
      %p309 = por %p307, %p308
      %s311 = sadd.s32 %s310, 1
      %p314 = scmp.eq.s32.totalorder %s24, 1
      %p315 = scmp.ne.s32.totalorder %s310, %s312
      %p316 = scmp.eq.s32.totalorder %s24, 0
      %p317 = por %p315, %p316
      %p318 = scmp.ne.s32.totalorder %s310, %s312
      %p319 = scmp.eq.s32.totalorder %s29, 1
      %p320 = por %p318, %p319
      %p321 = scmp.ne.s32.totalorder %s312, %s313
      %p322 = scmp.eq.s32.totalorder %s29, 0
      %p323 = por %p321, %p322
      %p324 = scmp.ne.s32.totalorder %s312, %s313
      %p325 = scmp.eq.s32.totalorder %s30, 1
      %p326 = por %p324, %p325
      %p328 = scmp.ne.s32.totalorder %s313, %s327
      %p329 = scmp.eq.s32.totalorder %s30, 0
      %p330 = por %p328, %p329
      %s332 = sadd.s32 %s331, 1
      %p335 = scmp.eq.s32.totalorder %s24, 1
      %p336 = scmp.ne.s32.totalorder %s331, %s333
      %p337 = scmp.eq.s32.totalorder %s24, 0
      %p338 = por %p336, %p337
      %p339 = scmp.ne.s32.totalorder %s331, %s333
      %p340 = scmp.eq.s32.totalorder %s29, 1
      %p341 = por %p339, %p340
      %p342 = scmp.ne.s32.totalorder %s333, %s334
      %p343 = scmp.eq.s32.totalorder %s29, 0
      %p344 = por %p342, %p343
      %p345 = scmp.ne.s32.totalorder %s333, %s334
      %p346 = scmp.eq.s32.totalorder %s30, 1
      %p347 = por %p345, %p346
      %p349 = scmp.ne.s32.totalorder %s334, %s348
      %p350 = scmp.eq.s32.totalorder %s30, 0
      %p351 = por %p349, %p350
      %s353 = sadd.s32 %s352, 1
      %p356 = scmp.eq.s32.totalorder %s24, 1
      %p357 = scmp.ne.s32.totalorder %s352, %s354
      %p358 = scmp.eq.s32.totalorder %s24, 0
      %p359 = por %p357, %p358
      %p360 = scmp.ne.s32.totalorder %s352, %s354
      %p361 = scmp.eq.s32.totalorder %s29, 1
      %p362 = por %p360, %p361
      %p363 = scmp.ne.s32.totalorder %s354, %s355
      %p364 = scmp.eq.s32.totalorder %s29, 0
      %p365 = por %p363, %p364
      %p366 = scmp.ne.s32.totalorder %s354, %s355
      %p367 = scmp.eq.s32.totalorder %s30, 1
      %p368 = por %p366, %p367
      %p370 = scmp.ne.s32.totalorder %s355, %s369
      %p371 = scmp.eq.s32.totalorder %s30, 0
      %p372 = por %p370, %p371
      %s374 = sadd.s32 %s373, 1
      %p377 = scmp.eq.s32.totalorder %s24, 1
      %p378 = scmp.ne.s32.totalorder %s373, %s375
      %p379 = scmp.eq.s32.totalorder %s24, 0
      %p380 = por %p378, %p379
      %p381 = scmp.ne.s32.totalorder %s373, %s375
      %p382 = scmp.eq.s32.totalorder %s29, 1
      %p383 = por %p381, %p382
      %p384 = scmp.ne.s32.totalorder %s375, %s376
      %p385 = scmp.eq.s32.totalorder %s29, 0
      %p386 = por %p384, %p385
      %p387 = scmp.ne.s32.totalorder %s375, %s376
      %p388 = scmp.eq.s32.totalorder %s30, 1
      %p389 = por %p387, %p388
      %p391 = scmp.ne.s32.totalorder %s376, %s390
      %p392 = scmp.eq.s32.totalorder %s30, 0
      %p393 = por %p391, %p392
      %s394 = ssub.s32 %s24, %s31
      %p395 = scmp.eq.s32.totalorder %s394, 0
      %s397 = sadd.s32 %s396, 1
      %s398 = scalar_select %p395, %s396, %s397
      %p401 = pneg %p395
      %p402 = scmp.eq.s32.totalorder %s24, 1
      %p403 = por %p401, %p402
      %p404 = scmp.ne.s32.totalorder %s396, %s399
      %p405 = scmp.eq.s32.totalorder %s24, 0
      %p406 = por %p404, %p405
      %p407 = scmp.ne.s32.totalorder %s396, %s399
      %p408 = scmp.eq.s32.totalorder %s29, 1
      %p409 = por %p407, %p408
      %p410 = scmp.ne.s32.totalorder %s399, %s400
      %p411 = scmp.eq.s32.totalorder %s29, 0
      %p412 = por %p410, %p411
      %p413 = scmp.ne.s32.totalorder %s399, %s400
      %p414 = scmp.eq.s32.totalorder %s30, 1
      %p415 = por %p413, %p414
      %p417 = scmp.ne.s32.totalorder %s400, %s416
      %p418 = scmp.eq.s32.totalorder %s30, 0
      %p419 = por %p417, %p418
      %p420 = scmp.le.s32.totalorder 1, %s24
      %p421 = scmp.lt.s32.totalorder %s24, 3
      %p422 = pnand %p420, %p421
      %p423 = pneg %p422
      // Predicated region
      $region9: #{_lambda_.5} parent=5 // pred_check
        _
      $region10: #{_lambda_.5} parent=5 // pred_check_branch
        %425 = sbr.rel (%p422) target = $region12
      $region11: #{_lambda_.5} parent=5 // pred_region
        %s426 = ssub.s32 %s24, 1
        // Predicated region
        $region13: #{_lambda_.5} parent=11 // pred_check
          %p427 = pneg %p71
        $region14: #{_lambda_.5} parent=11 // pred_check_branch
          %429 = sbr.rel (%p427) target = $region16
        $region15: #{_lambda_.5} parent=11 // pred_region
          _
        $region16: #{_lambda_.5} parent=11 // pred_fallthru
          _
        // Predicated region
        $region17: #{_lambda_.5} parent=11 // pred_check
          %p430 = pneg %p92
        $region18: #{_lambda_.5} parent=11 // pred_check_branch
          %432 = sbr.rel (%p430) target = $region20
        $region19: #{_lambda_.5} parent=11 // pred_region
          _
        $region20: #{_lambda_.5} parent=11 // pred_fallthru
          _
        // Predicated region
        $region21: #{_lambda_.5} parent=11 // pred_check
          %p433 = pneg %p113
        $region22: #{_lambda_.5} parent=11 // pred_check_branch
          %435 = sbr.rel (%p433) target = $region24
        $region23: #{_lambda_.5} parent=11 // pred_region
          _
        $region24: #{_lambda_.5} parent=11 // pred_fallthru
          _
        // Predicated region
        $region25: #{_lambda_.5} parent=11 // pred_check
          %p436 = pneg %p134
        $region26: #{_lambda_.5} parent=11 // pred_check_branch
          %438 = sbr.rel (%p436) target = $region28
        $region27: #{_lambda_.5} parent=11 // pred_region
          _
        $region28: #{_lambda_.5} parent=11 // pred_fallthru
          _
        // Predicated region
        $region29: #{_lambda_.5} parent=11 // pred_check
          %p439 = pneg %p155
        $region30: #{_lambda_.5} parent=11 // pred_check_branch
          %441 = sbr.rel (%p439) target = $region32
        $region31: #{_lambda_.5} parent=11 // pred_region
          _
        $region32: #{_lambda_.5} parent=11 // pred_fallthru
          _
        // Predicated region
        $region33: #{_lambda_.5} parent=11 // pred_check
          %p442 = pneg %p176
        $region34: #{_lambda_.5} parent=11 // pred_check_branch
          %444 = sbr.rel (%p442) target = $region36
        $region35: #{_lambda_.5} parent=11 // pred_region
          _
        $region36: #{_lambda_.5} parent=11 // pred_fallthru
          _
        // Predicated region
        $region37: #{_lambda_.5} parent=11 // pred_check
          %p445 = pneg %p197
        $region38: #{_lambda_.5} parent=11 // pred_check_branch
          %447 = sbr.rel (%p445) target = $region40
        $region39: #{_lambda_.5} parent=11 // pred_region
          _
        $region40: #{_lambda_.5} parent=11 // pred_fallthru
          _
        // Predicated region
        $region41: #{_lambda_.5} parent=11 // pred_check
          %p448 = pneg %p218
        $region42: #{_lambda_.5} parent=11 // pred_check_branch
          %450 = sbr.rel (%p448) target = $region44
        $region43: #{_lambda_.5} parent=11 // pred_region
          _
        $region44: #{_lambda_.5} parent=11 // pred_fallthru
          _
        // Predicated region
        $region45: #{_lambda_.5} parent=11 // pred_check
          %p451 = pneg %p239
        $region46: #{_lambda_.5} parent=11 // pred_check_branch
          %453 = sbr.rel (%p451) target = $region48
        $region47: #{_lambda_.5} parent=11 // pred_region
          %s455 = ssub.s32 4096, 4096
          %456 = vsyncadd [#allocation3], %s455
          %s457 = sshll.u32 [#allocation2], 4
          %s458 = int_to_ptr.vmem [resolvable:$true] %s457
          %463 = dma.hbm_to_vmem [thread:$0]  %s9, 4096, %s458, [#allocation3], 128, 128, 8
        $region48: #{_lambda_.5} parent=11 // pred_fallthru
          _
        // Predicated region
        $region49: #{_lambda_.5} parent=11 // pred_check
          %p464 = pneg %p260
        $region50: #{_lambda_.5} parent=11 // pred_check_branch
          %466 = sbr.rel (%p464) target = $region52
        $region51: #{_lambda_.5} parent=11 // pred_region
          _
        $region52: #{_lambda_.5} parent=11 // pred_fallthru
          _
        // Predicated region
        $region53: #{_lambda_.5} parent=11 // pred_check
          %p467 = pneg %p281
        $region54: #{_lambda_.5} parent=11 // pred_check_branch
          %469 = sbr.rel (%p467) target = $region56
        $region55: #{_lambda_.5} parent=11 // pred_region
          _
        $region56: #{_lambda_.5} parent=11 // pred_fallthru
          _
        // Predicated region
        $region57: #{_lambda_.5} parent=11 // pred_check
          %p470 = pneg %p302
        $region58: #{_lambda_.5} parent=11 // pred_check_branch
          %472 = sbr.rel (%p470) target = $region60
        $region59: #{_lambda_.5} parent=11 // pred_region
          _
        $region60: #{_lambda_.5} parent=11 // pred_fallthru
          _
        // Predicated region
        $region61: #{_lambda_.5} parent=11 // pred_check
          %p473 = pneg %p323
        $region62: #{_lambda_.5} parent=11 // pred_check_branch
          %475 = sbr.rel (%p473) target = $region64
        $region63: #{_lambda_.5} parent=11 // pred_region
          _
        $region64: #{_lambda_.5} parent=11 // pred_fallthru
          _
        // Predicated region
        $region65: #{_lambda_.5} parent=11 // pred_check
          %p476 = pneg %p344
        $region66: #{_lambda_.5} parent=11 // pred_check_branch
          %478 = sbr.rel (%p476) target = $region68
        $region67: #{_lambda_.5} parent=11 // pred_region
          _
        $region68: #{_lambda_.5} parent=11 // pred_fallthru
          _
        // Predicated region
        $region69: #{_lambda_.5} parent=11 // pred_check
          %p479 = pneg %p365
        $region70: #{_lambda_.5} parent=11 // pred_check_branch
          %481 = sbr.rel (%p479) target = $region72
        $region71: #{_lambda_.5} parent=11 // pred_region
          _
        $region72: #{_lambda_.5} parent=11 // pred_fallthru
          _
        // Predicated region
        $region73: #{_lambda_.5} parent=11 // pred_check
          %p482 = pneg %p386
        $region74: #{_lambda_.5} parent=11 // pred_check_branch
          %484 = sbr.rel (%p482) target = $region76
        $region75: #{_lambda_.5} parent=11 // pred_region
          _
        $region76: #{_lambda_.5} parent=11 // pred_fallthru
          _
      $region12: #{_lambda_.5} parent=5 // pred_fallthru
        _
      %p485 = scmp.lt.s32.totalorder %s24, 2
      // Predicated region
      $region77: #{_lambda_.5} parent=5 // pred_check
        %p486 = pneg %p485
      $region78: #{_lambda_.5} parent=5 // pred_check_branch
        %488 = sbr.rel (%p486) target = $region80
      $region79: #{_lambda_.5} parent=5 // pred_region
        // Predicated region
        $region81: #{_lambda_.5} parent=79 // pred_check
          %p489 = pneg %p44
        $region82: #{_lambda_.5} parent=79 // pred_check_branch
          %491 = sbr.rel (%p489) target = $region84
        $region83: #{_lambda_.5} parent=79 // pred_region
          %p492 = scmp.lt.s32.totalorder %s24, 1
          %s493 = scalar_select %p492, %s24, 1
          %s494 = smul.addr %s493, 2
          %s495 = smul.addr %s494, 8
          %s496 = scalar_lea.vmem %s0, %s495
        $region84: #{_lambda_.5} parent=79 // pred_fallthru
          _
      $region80: #{_lambda_.5} parent=5 // pred_fallthru
        _
      %p497 = scmp.le.s32.totalorder 1, %s24
      %p498 = scmp.lt.s32.totalorder %s24, 3
      %p499 = pnand %p497, %p498
      %p500 = pneg %p499
      // Predicated region
      $region85: #{_lambda_.5} parent=5 // pred_check
        _
      $region86: #{_lambda_.5} parent=5 // pred_check_branch
        %502 = sbr.rel (%p499) target = $region88
      $region87: #{_lambda_.5} parent=5 // pred_region
        %s503 = ssub.s32 %s24, 1
        // Predicated region
        $region89: #{_lambda_.5} parent=87 // pred_check
          %p504 = pneg %p239
        $region90: #{_lambda_.5} parent=87 // pred_check_branch
          %506 = sbr.rel (%p504) target = $region92
        $region91: #{_lambda_.5} parent=87 // pred_region
          %507 = dma.done [#allocation3], 4096
        $region92: #{_lambda_.5} parent=87 // pred_fallthru
          _
        %p508 = scmp.lt.s32.totalorder %s29, 1
        %s509 = scalar_select %p508, %s29, 1
        %s510 = smul.addr %s509, 2
        %s511 = smul.addr %s510, 8
        %s512 = scalar_lea.vmem %s0, %s511
        %p513 = pneg %p50
        %p514 = pneg %p47
        %p515 = pneg %p71
        %p516 = pneg %p68
        %p517 = pneg %p92
        %p518 = pneg %p89
        %p519 = pneg %p113
        %p520 = pneg %p110
        %p521 = pneg %p134
        %p522 = pneg %p131
        %p523 = pneg %p155
        %p524 = pneg %p152
        %p525 = pneg %p176
        %p526 = pneg %p173
        %p527 = pneg %p197
        %p528 = pneg %p194
        %p529 = pneg %p218
        %p530 = pneg %p215
        %p531 = pneg %p239
        %p532 = pneg %p236
        %p533 = pneg %p260
        %p534 = pneg %p257
        %p535 = pneg %p281
        %p536 = pneg %p278
        %p537 = pneg %p302
        %p538 = pneg %p299
        %p539 = pneg %p323
        %p540 = pneg %p320
        %p541 = pneg %p344
        %p542 = pneg %p341
        %p543 = pneg %p365
        %p544 = pneg %p362
        %p545 = pneg %p386
        %p546 = pneg %p383
        %p547 = pneg %p412
        %p548 = pneg %p409
        %p549 = scmp.lt.s32.totalorder %s29, 1
        %s550 = scalar_select %p549, %s29, 1
        %s551 = smul.addr %s550, 2
        %s552 = smul.addr %s551, 8
        %s553 = scalar_lea.vmem %s17, %s552
        %p554 = scmp.lt.s32.totalorder %s29, 1
        %s555 = scalar_select %p554, %s29, 1
        %s556 = smul.addr %s555, 2
        %s557 = smul.addr %s556, 8
        %s558 = scalar_lea.vmem %s0, %s557
        %p559 = scmp.lt.s32.totalorder %s29, 1
        %s560 = scalar_select %p559, %s29, 1
        %s561 = smul.addr %s560, 2
        %s562 = smul.addr %s561, 8
        %s563 = scalar_lea.vmem %s17, %s562
        %v565 = vld [vmem:[%s558] sm:$0x1f]
        %v566 = vld [vmem:[%s558 + $0x8] sm:$0x1f]
        %v567 = vld [vmem:[%s1] sm:$0x3]
        %v568 = vld [vmem:[%s2] sm:$0x3]
        %vm569 = vcmask 1044480
        %v570 = vsel %vm569, %v565, 0.0
        %v571 = vsel %vm569, %v566, 0.0
        %v572 = vadd.f32 %v570, %v571
        %573 = vadd.xlane.f32.xlu0 %v572
        %v574 = vpop.xlane.xlu0 %573
        %v575 = vrcp.pop 256.0
        %v576 = vmul.f32 %v574, %v575
        %v577 = vsub.f32 %v565, %v576
        %v578 = vsub.f32 %v566, %v576
        %v579 = vmul.f32 %v577, %v577
        %v580 = vmul.f32 %v578, %v578
        %v581 = vsel %vm569, %v579, 0.0
        %v582 = vsel %vm569, %v580, 0.0
        %v583 = vadd.f32 %v581, %v582
        %584 = vadd.xlane.f32.xlu0 %v583
        %v585 = vpop.xlane.xlu0 %584
        %v586 = vmul.f32 %v585, %v575
        %v587 = vadd.f32 %v586, 1e-06
        %v588 = vrsqrt.pop %v587
        %v589 = vmul.f32 %v577, %v588
        %v590 = vmul.f32 %v578, %v588
        %v592 = vlaneseq
        %v593 = vshrl.u32 %v592, 7
        %v594 = vsub.s32 0, %v593
        %v595 = vrot.slane %v567, %v594
        %v596 = vlaneseq
        %v597 = vshrl.u32 %v596, 7
        %v598 = vsub.s32 1, %v597
        %v599 = vrot.slane %v567, %v598
        %v602 = vmul.f32 %v589, %v595
        %v603 = vmul.f32 %v590, %v599
        %v605 = vlaneseq
        %v606 = vshrl.u32 %v605, 7
        %v607 = vsub.s32 0, %v606
        %v608 = vrot.slane %v568, %v607
        %v609 = vlaneseq
        %v610 = vshrl.u32 %v609, 7
        %v611 = vsub.s32 1, %v610
        %v612 = vrot.slane %v568, %v611
        %v615 = vadd.f32 %v602, %v608
        %v616 = vadd.f32 %v603, %v612
        %v617 = vpack.c.bf16 %v615, %v615
        %v618 = vpack.c.bf16 %v616, %v616
        %v619 = vld [vmem:[%s3] sm:$0xff]
        %v620 = vld [vmem:[%s3 + $0x8] sm:$0xff]
        %v621 = vld [vmem:[%s3 + $0x10] sm:$0xff]
        %v622 = vld [vmem:[%s3 + $0x18] sm:$0xff]
        %v623 = vld [vmem:[%s3 + $0x20] sm:$0xff]
        %v624 = vld [vmem:[%s3 + $0x28] sm:$0xff]
        %v625 = vld [vmem:[%s3 + $0x30] sm:$0xff]
        %v626 = vld [vmem:[%s3 + $0x38] sm:$0xff]
        %v627 = vld [vmem:[%s3 + $0x40] sm:$0xff]
        %v628 = vld [vmem:[%s3 + $0x48] sm:$0xff]
        %v629 = vld [vmem:[%s3 + $0x50] sm:$0xff]
        %v630 = vld [vmem:[%s3 + $0x58] sm:$0xff]
        %v631 = vld [vmem:[%s3 + $0x60] sm:$0xff]
        %v632 = vld [vmem:[%s3 + $0x68] sm:$0xff]
        %v633 = vld [vmem:[%s3 + $0x70] sm:$0xff]
        %v634 = vld [vmem:[%s3 + $0x78] sm:$0xff]
        %v635 = vld [vmem:[%s3 + $0x80] sm:$0xff]
        %v636 = vld [vmem:[%s3 + $0x88] sm:$0xff]
        %v637 = vld [vmem:[%s3 + $0x90] sm:$0xff]
        %v638 = vld [vmem:[%s3 + $0x98] sm:$0xff]
        %v639 = vld [vmem:[%s3 + $0xa0] sm:$0xff]
        %v640 = vld [vmem:[%s3 + $0xa8] sm:$0xff]
        %v641 = vld [vmem:[%s3 + $0xb0] sm:$0xff]
        %v642 = vld [vmem:[%s3 + $0xb8] sm:$0xff]
        %v643 = vld [vmem:[%s3 + $0xc0] sm:$0xff]
        %v644 = vld [vmem:[%s3 + $0xc8] sm:$0xff]
        %v645 = vld [vmem:[%s3 + $0xd0] sm:$0xff]
        %v646 = vld [vmem:[%s3 + $0xd8] sm:$0xff]
        %v647 = vld [vmem:[%s3 + $0xe0] sm:$0xff]
        %v648 = vld [vmem:[%s3 + $0xe8] sm:$0xff]
        %v649 = vld [vmem:[%s3 + $0xf0] sm:$0xff]
        %v650 = vld [vmem:[%s3 + $0xf8] sm:$0xff]
        %v651 = vld [vmem:[%s6] sm:$0x3]
        %v653 = vlaneseq
        %v654 = vshrl.u32 %v653, 7
        %v655 = vsub.s32 0, %v654
        %v656 = vrot.slane %v651, %v655
        %v657 = vlaneseq
        %v658 = vshrl.u32 %v657, 7
        %v659 = vsub.s32 1, %v658
        %v660 = vrot.slane %v651, %v659
        %v695 = vunpack.c.l.b16 %v619
        %v696 = vunpack.c.h.b16 %v619
        %v697 = vunpack.c.l.b16 %v620
        %v698 = vunpack.c.h.b16 %v620
        %v699 = vunpack.c.l.b16 %v621
        %v700 = vunpack.c.h.b16 %v621
        %v701 = vunpack.c.l.b16 %v622
        %v702 = vunpack.c.h.b16 %v622
        %v703 = vunpack.c.l.b16 %v623
        %v704 = vunpack.c.h.b16 %v623
        %v705 = vunpack.c.l.b16 %v624
        %v706 = vunpack.c.h.b16 %v624
        %v707 = vunpack.c.l.b16 %v625
        %v708 = vunpack.c.h.b16 %v625
        %v709 = vunpack.c.l.b16 %v626
        %v710 = vunpack.c.h.b16 %v626
        %v711 = vunpack.c.l.b16 %v627
        %v712 = vunpack.c.h.b16 %v627
        %v713 = vunpack.c.l.b16 %v628
        %v714 = vunpack.c.h.b16 %v628
        %v715 = vunpack.c.l.b16 %v629
        %v716 = vunpack.c.h.b16 %v629
        %v717 = vunpack.c.l.b16 %v630
        %v718 = vunpack.c.h.b16 %v630
        %v719 = vunpack.c.l.b16 %v631
        %v720 = vunpack.c.h.b16 %v631
        %v721 = vunpack.c.l.b16 %v632
        %v722 = vunpack.c.h.b16 %v632
        %v723 = vunpack.c.l.b16 %v633
        %v724 = vunpack.c.h.b16 %v633
        %v725 = vunpack.c.l.b16 %v634
        %v726 = vunpack.c.h.b16 %v634
        %v727 = vunpack.c.l.b16 %v635
        %v728 = vunpack.c.h.b16 %v635
        %v729 = vunpack.c.l.b16 %v636
        %v730 = vunpack.c.h.b16 %v636
        %v731 = vunpack.c.l.b16 %v637
        %v732 = vunpack.c.h.b16 %v637
        %v733 = vunpack.c.l.b16 %v638
        %v734 = vunpack.c.h.b16 %v638
        %v735 = vunpack.c.l.b16 %v639
        %v736 = vunpack.c.h.b16 %v639
        %v737 = vunpack.c.l.b16 %v640
        %v738 = vunpack.c.h.b16 %v640
        %v739 = vunpack.c.l.b16 %v641
        %v740 = vunpack.c.h.b16 %v641
        %v741 = vunpack.c.l.b16 %v642
        %v742 = vunpack.c.h.b16 %v642
        %v743 = vunpack.c.l.b16 %v643
        %v744 = vunpack.c.h.b16 %v643
        %v745 = vunpack.c.l.b16 %v644
        %v746 = vunpack.c.h.b16 %v644
        %v747 = vunpack.c.l.b16 %v645
        %v748 = vunpack.c.h.b16 %v645
        %v749 = vunpack.c.l.b16 %v646
        %v750 = vunpack.c.h.b16 %v646
        %v751 = vunpack.c.l.b16 %v647
        %v752 = vunpack.c.h.b16 %v647
        %v753 = vunpack.c.l.b16 %v648
        %v754 = vunpack.c.h.b16 %v648
        %v755 = vunpack.c.l.b16 %v649
        %v756 = vunpack.c.h.b16 %v649
        %v757 = vunpack.c.l.b16 %v650
        %v758 = vunpack.c.h.b16 %v650
        %v759 = vpack.c.b16 %v697, %v695
        %v760 = vpack.c.b16 %v698, %v696
        %v761 = vpack.c.b16 %v701, %v699
        %v762 = vpack.c.b16 %v702, %v700
        %v763 = vpack.c.b16 %v705, %v703
        %v764 = vpack.c.b16 %v706, %v704
        %v765 = vpack.c.b16 %v709, %v707
        %v766 = vpack.c.b16 %v710, %v708
        %v767 = vpack.c.b16 %v713, %v711
        %v768 = vpack.c.b16 %v714, %v712
        %v769 = vpack.c.b16 %v717, %v715
        %v770 = vpack.c.b16 %v718, %v716
        %v771 = vpack.c.b16 %v721, %v719
        %v772 = vpack.c.b16 %v722, %v720
        %v773 = vpack.c.b16 %v725, %v723
        %v774 = vpack.c.b16 %v726, %v724
        %v775 = vpack.c.b16 %v729, %v727
        %v776 = vpack.c.b16 %v730, %v728
        %v777 = vpack.c.b16 %v733, %v731
        %v778 = vpack.c.b16 %v734, %v732
        %v779 = vpack.c.b16 %v737, %v735
        %v780 = vpack.c.b16 %v738, %v736
        %v781 = vpack.c.b16 %v741, %v739
        %v782 = vpack.c.b16 %v742, %v740
        %v783 = vpack.c.b16 %v745, %v743
        %v784 = vpack.c.b16 %v746, %v744
        %v785 = vpack.c.b16 %v749, %v747
        %v786 = vpack.c.b16 %v750, %v748
        %v787 = vpack.c.b16 %v753, %v751
        %v788 = vpack.c.b16 %v754, %v752
        %v789 = vpack.c.b16 %v757, %v755
        %v790 = vpack.c.b16 %v758, %v756
        %823 = vmatprep.subr.bf16.mxu0 %v760
        %824 = vmatpush1.bf16.msra.mxu0 %v759
        %825 = vmatprep.subr.bf16.mxu0 %v762
        %826 = vmatpush1.bf16.msra.mxu0 %v761
        %827 = vmatprep.subr.bf16.mxu0 %v764
        %828 = vmatpush1.bf16.msra.mxu0 %v763
        %829 = vmatprep.subr.bf16.mxu0 %v766
        %830 = vmatpush1.bf16.msra.mxu0 %v765
        %831 = vmatprep.subr.bf16.mxu0 %v768
        %832 = vmatpush1.bf16.msra.mxu0 %v767
        %833 = vmatprep.subr.bf16.mxu0 %v770
        %834 = vmatpush1.bf16.msra.mxu0 %v769
        %835 = vmatprep.subr.bf16.mxu0 %v772
        %836 = vmatpush1.bf16.msra.mxu0 %v771
        %837 = vmatprep.subr.bf16.mxu0 %v774
        %838 = vmatpush1.bf16.msra.mxu0 %v773
        %839 = vmatprep.subr.bf16.mxu0 %v776
        %840 = vmatpush1.bf16.msra.mxu0 %v775
        %841 = vmatprep.subr.bf16.mxu0 %v778
        %842 = vmatpush1.bf16.msra.mxu0 %v777
        %843 = vmatprep.subr.bf16.mxu0 %v780
        %844 = vmatpush1.bf16.msra.mxu0 %v779
        %845 = vmatprep.subr.bf16.mxu0 %v782
        %846 = vmatpush1.bf16.msra.mxu0 %v781
        %847 = vmatprep.subr.bf16.mxu0 %v784
        %848 = vmatpush1.bf16.msra.mxu0 %v783
        %849 = vmatprep.subr.bf16.mxu0 %v786
        %850 = vmatpush1.bf16.msra.mxu0 %v785
        %851 = vmatprep.subr.bf16.mxu0 %v788
        %852 = vmatpush1.bf16.msra.mxu0 %v787
        %853 = vmatprep.subr.bf16.mxu0 %v790
        %854 = vmatpush1.bf16.msra.mxu0 %v789
        %855 = vmatprep.mubr.bf16.mxu0 %v618
        %856 = vmatmul.mubr.bf16.gmra.mrb[0].mxu0 %v617
        %v857 = vpop.f32.mrb[0].mxu0
        %v858 = vadd.f32 %v656, %v857
        %v859 = vpop.f32.mrb[0].mxu0
        %v860 = vadd.f32 %v660, %v859
        %v861 = vpop.f32.mrb[0].mxu0
        %v862 = vpop.f32.mrb[0].mxu0
        %863 = vdwg.mxu0
        %v864 = vld [vmem:[%s4] sm:$0xff]
        %v865 = vld [vmem:[%s4 + $0x8] sm:$0xff]
        %v866 = vld [vmem:[%s4 + $0x10] sm:$0xff]
        %v867 = vld [vmem:[%s4 + $0x18] sm:$0xff]
        %v868 = vld [vmem:[%s4 + $0x20] sm:$0xff]
        %v869 = vld [vmem:[%s4 + $0x28] sm:$0xff]
        %v870 = vld [vmem:[%s4 + $0x30] sm:$0xff]
        %v871 = vld [vmem:[%s4 + $0x38] sm:$0xff]
        %v872 = vld [vmem:[%s4 + $0x40] sm:$0xff]
        %v873 = vld [vmem:[%s4 + $0x48] sm:$0xff]
        %v874 = vld [vmem:[%s4 + $0x50] sm:$0xff]
        %v875 = vld [vmem:[%s4 + $0x58] sm:$0xff]
        %v876 = vld [vmem:[%s4 + $0x60] sm:$0xff]
        %v877 = vld [vmem:[%s4 + $0x68] sm:$0xff]
        %v878 = vld [vmem:[%s4 + $0x70] sm:$0xff]
        %v879 = vld [vmem:[%s4 + $0x78] sm:$0xff]
        %v880 = vld [vmem:[%s4 + $0x80] sm:$0xff]
        %v881 = vld [vmem:[%s4 + $0x88] sm:$0xff]
        %v882 = vld [vmem:[%s4 + $0x90] sm:$0xff]
        %v883 = vld [vmem:[%s4 + $0x98] sm:$0xff]
        %v884 = vld [vmem:[%s4 + $0xa0] sm:$0xff]
        %v885 = vld [vmem:[%s4 + $0xa8] sm:$0xff]
        %v886 = vld [vmem:[%s4 + $0xb0] sm:$0xff]
        %v887 = vld [vmem:[%s4 + $0xb8] sm:$0xff]
        %v888 = vld [vmem:[%s4 + $0xc0] sm:$0xff]
        %v889 = vld [vmem:[%s4 + $0xc8] sm:$0xff]
        %v890 = vld [vmem:[%s4 + $0xd0] sm:$0xff]
        %v891 = vld [vmem:[%s4 + $0xd8] sm:$0xff]
        %v892 = vld [vmem:[%s4 + $0xe0] sm:$0xff]
        %v893 = vld [vmem:[%s4 + $0xe8] sm:$0xff]
        %v894 = vld [vmem:[%s4 + $0xf0] sm:$0xff]
        %v895 = vld [vmem:[%s4 + $0xf8] sm:$0xff]
        %v896 = vld [vmem:[%s7] sm:$0x3]
        %v898 = vlaneseq
        %v899 = vshrl.u32 %v898, 7
        %v900 = vsub.s32 0, %v899
        %v901 = vrot.slane %v896, %v900
        %v902 = vlaneseq
        %v903 = vshrl.u32 %v902, 7
        %v904 = vsub.s32 1, %v903
        %v905 = vrot.slane %v896, %v904
        %v940 = vunpack.c.l.b16 %v864
        %v941 = vunpack.c.h.b16 %v864
        %v942 = vunpack.c.l.b16 %v865
        %v943 = vunpack.c.h.b16 %v865
        %v944 = vunpack.c.l.b16 %v866
        %v945 = vunpack.c.h.b16 %v866
        %v946 = vunpack.c.l.b16 %v867
        %v947 = vunpack.c.h.b16 %v867
        %v948 = vunpack.c.l.b16 %v868
        %v949 = vunpack.c.h.b16 %v868
        %v950 = vunpack.c.l.b16 %v869
        %v951 = vunpack.c.h.b16 %v869
        %v952 = vunpack.c.l.b16 %v870
        %v953 = vunpack.c.h.b16 %v870
        %v954 = vunpack.c.l.b16 %v871
        %v955 = vunpack.c.h.b16 %v871
        %v956 = vunpack.c.l.b16 %v872
        %v957 = vunpack.c.h.b16 %v872
        %v958 = vunpack.c.l.b16 %v873
        %v959 = vunpack.c.h.b16 %v873
        %v960 = vunpack.c.l.b16 %v874
        %v961 = vunpack.c.h.b16 %v874
        %v962 = vunpack.c.l.b16 %v875
        %v963 = vunpack.c.h.b16 %v875
        %v964 = vunpack.c.l.b16 %v876
        %v965 = vunpack.c.h.b16 %v876
        %v966 = vunpack.c.l.b16 %v877
        %v967 = vunpack.c.h.b16 %v877
        %v968 = vunpack.c.l.b16 %v878
        %v969 = vunpack.c.h.b16 %v878
        %v970 = vunpack.c.l.b16 %v879
        %v971 = vunpack.c.h.b16 %v879
        %v972 = vunpack.c.l.b16 %v880
        %v973 = vunpack.c.h.b16 %v880
        %v974 = vunpack.c.l.b16 %v881
        %v975 = vunpack.c.h.b16 %v881
        %v976 = vunpack.c.l.b16 %v882
        %v977 = vunpack.c.h.b16 %v882
        %v978 = vunpack.c.l.b16 %v883
        %v979 = vunpack.c.h.b16 %v883
        %v980 = vunpack.c.l.b16 %v884
        %v981 = vunpack.c.h.b16 %v884
        %v982 = vunpack.c.l.b16 %v885
        %v983 = vunpack.c.h.b16 %v885
        %v984 = vunpack.c.l.b16 %v886
        %v985 = vunpack.c.h.b16 %v886
        %v986 = vunpack.c.l.b16 %v887
        %v987 = vunpack.c.h.b16 %v887
        %v988 = vunpack.c.l.b16 %v888
        %v989 = vunpack.c.h.b16 %v888
        %v990 = vunpack.c.l.b16 %v889
        %v991 = vunpack.c.h.b16 %v889
        %v992 = vunpack.c.l.b16 %v890
        %v993 = vunpack.c.h.b16 %v890
        %v994 = vunpack.c.l.b16 %v891
        %v995 = vunpack.c.h.b16 %v891
        %v996 = vunpack.c.l.b16 %v892
        %v997 = vunpack.c.h.b16 %v892
        %v998 = vunpack.c.l.b16 %v893
        %v999 = vunpack.c.h.b16 %v893
        %v1000 = vunpack.c.l.b16 %v894
        %v1001 = vunpack.c.h.b16 %v894
        %v1002 = vunpack.c.l.b16 %v895
        %v1003 = vunpack.c.h.b16 %v895
        %v1004 = vpack.c.b16 %v942, %v940
        %v1005 = vpack.c.b16 %v943, %v941
        %v1006 = vpack.c.b16 %v946, %v944
        %v1007 = vpack.c.b16 %v947, %v945
        %v1008 = vpack.c.b16 %v950, %v948
        %v1009 = vpack.c.b16 %v951, %v949
        %v1010 = vpack.c.b16 %v954, %v952
        %v1011 = vpack.c.b16 %v955, %v953
        %v1012 = vpack.c.b16 %v958, %v956
        %v1013 = vpack.c.b16 %v959, %v957
        %v1014 = vpack.c.b16 %v962, %v960
        %v1015 = vpack.c.b16 %v963, %v961
        %v1016 = vpack.c.b16 %v966, %v964
        %v1017 = vpack.c.b16 %v967, %v965
        %v1018 = vpack.c.b16 %v970, %v968
        %v1019 = vpack.c.b16 %v971, %v969
        %v1020 = vpack.c.b16 %v974, %v972
        %v1021 = vpack.c.b16 %v975, %v973
        %v1022 = vpack.c.b16 %v978, %v976
        %v1023 = vpack.c.b16 %v979, %v977
        %v1024 = vpack.c.b16 %v982, %v980
        %v1025 = vpack.c.b16 %v983, %v981
        %v1026 = vpack.c.b16 %v986, %v984
        %v1027 = vpack.c.b16 %v987, %v985
        %v1028 = vpack.c.b16 %v990, %v988
        %v1029 = vpack.c.b16 %v991, %v989
        %v1030 = vpack.c.b16 %v994, %v992
        %v1031 = vpack.c.b16 %v995, %v993
        %v1032 = vpack.c.b16 %v998, %v996
        %v1033 = vpack.c.b16 %v999, %v997
        %v1034 = vpack.c.b16 %v1002, %v1000
        %v1035 = vpack.c.b16 %v1003, %v1001
        %1068 = vmatprep.subr.bf16.mxu0 %v1005
        %1069 = vmatpush1.bf16.msra.mxu0 %v1004
        %1070 = vmatprep.subr.bf16.mxu0 %v1007
        %1071 = vmatpush1.bf16.msra.mxu0 %v1006
        %1072 = vmatprep.subr.bf16.mxu0 %v1009
        %1073 = vmatpush1.bf16.msra.mxu0 %v1008
        %1074 = vmatprep.subr.bf16.mxu0 %v1011
        %1075 = vmatpush1.bf16.msra.mxu0 %v1010
        %1076 = vmatprep.subr.bf16.mxu0 %v1013
        %1077 = vmatpush1.bf16.msra.mxu0 %v1012
        %1078 = vmatprep.subr.bf16.mxu0 %v1015
        %1079 = vmatpush1.bf16.msra.mxu0 %v1014
        %1080 = vmatprep.subr.bf16.mxu0 %v1017
        %1081 = vmatpush1.bf16.msra.mxu0 %v1016
        %1082 = vmatprep.subr.bf16.mxu0 %v1019
        %1083 = vmatpush1.bf16.msra.mxu0 %v1018
        %1084 = vmatprep.subr.bf16.mxu0 %v1021
        %1085 = vmatpush1.bf16.msra.mxu0 %v1020
        %1086 = vmatprep.subr.bf16.mxu0 %v1023
        %1087 = vmatpush1.bf16.msra.mxu0 %v1022
        %1088 = vmatprep.subr.bf16.mxu0 %v1025
        %1089 = vmatpush1.bf16.msra.mxu0 %v1024
        %1090 = vmatprep.subr.bf16.mxu0 %v1027
        %1091 = vmatpush1.bf16.msra.mxu0 %v1026
        %1092 = vmatprep.subr.bf16.mxu0 %v1029
        %1093 = vmatpush1.bf16.msra.mxu0 %v1028
        %1094 = vmatprep.subr.bf16.mxu0 %v1031
        %1095 = vmatpush1.bf16.msra.mxu0 %v1030
        %1096 = vmatprep.subr.bf16.mxu0 %v1033
        %1097 = vmatpush1.bf16.msra.mxu0 %v1032
        %1098 = vmatprep.subr.bf16.mxu0 %v1035
        %1099 = vmatpush1.bf16.msra.mxu0 %v1034
        %1100 = vmatprep.mubr.bf16.mxu0 %v618
        %1101 = vmatmul.mubr.bf16.gmra.mrb[0].mxu0 %v617
        %v1102 = vpop.f32.mrb[0].mxu0
        %v1103 = vadd.f32 %v901, %v1102
        %v1104 = vpop.f32.mrb[0].mxu0
        %v1105 = vadd.f32 %v905, %v1104
        %v1106 = vpop.f32.mrb[0].mxu0
        %v1107 = vpop.f32.mrb[0].mxu0
        %1108 = vdwg.mxu0
        %v1109 = vld [vmem:[%s5] sm:$0xff]
        %v1110 = vld [vmem:[%s5 + $0x8] sm:$0xff]
        %v1111 = vld [vmem:[%s5 + $0x10] sm:$0xff]
        %v1112 = vld [vmem:[%s5 + $0x18] sm:$0xff]
        %v1113 = vld [vmem:[%s5 + $0x20] sm:$0xff]
        %v1114 = vld [vmem:[%s5 + $0x28] sm:$0xff]
        %v1115 = vld [vmem:[%s5 + $0x30] sm:$0xff]
        %v1116 = vld [vmem:[%s5 + $0x38] sm:$0xff]
        %v1117 = vld [vmem:[%s5 + $0x40] sm:$0xff]
        %v1118 = vld [vmem:[%s5 + $0x48] sm:$0xff]
        %v1119 = vld [vmem:[%s5 + $0x50] sm:$0xff]
        %v1120 = vld [vmem:[%s5 + $0x58] sm:$0xff]
        %v1121 = vld [vmem:[%s5 + $0x60] sm:$0xff]
        %v1122 = vld [vmem:[%s5 + $0x68] sm:$0xff]
        %v1123 = vld [vmem:[%s5 + $0x70] sm:$0xff]
        %v1124 = vld [vmem:[%s5 + $0x78] sm:$0xff]
        %v1125 = vld [vmem:[%s5 + $0x80] sm:$0xff]
        %v1126 = vld [vmem:[%s5 + $0x88] sm:$0xff]
        %v1127 = vld [vmem:[%s5 + $0x90] sm:$0xff]
        %v1128 = vld [vmem:[%s5 + $0x98] sm:$0xff]
        %v1129 = vld [vmem:[%s5 + $0xa0] sm:$0xff]
        %v1130 = vld [vmem:[%s5 + $0xa8] sm:$0xff]
        %v1131 = vld [vmem:[%s5 + $0xb0] sm:$0xff]
        %v1132 = vld [vmem:[%s5 + $0xb8] sm:$0xff]
        %v1133 = vld [vmem:[%s5 + $0xc0] sm:$0xff]
        %v1134 = vld [vmem:[%s5 + $0xc8] sm:$0xff]
        %v1135 = vld [vmem:[%s5 + $0xd0] sm:$0xff]
        %v1136 = vld [vmem:[%s5 + $0xd8] sm:$0xff]
        %v1137 = vld [vmem:[%s5 + $0xe0] sm:$0xff]
        %v1138 = vld [vmem:[%s5 + $0xe8] sm:$0xff]
        %v1139 = vld [vmem:[%s5 + $0xf0] sm:$0xff]
        %v1140 = vld [vmem:[%s5 + $0xf8] sm:$0xff]
        %v1141 = vld [vmem:[%s8] sm:$0x3]
        %v1143 = vlaneseq
        %v1144 = vshrl.u32 %v1143, 7
        %v1145 = vsub.s32 0, %v1144
        %v1146 = vrot.slane %v1141, %v1145
        %v1147 = vlaneseq
        %v1148 = vshrl.u32 %v1147, 7
        %v1149 = vsub.s32 1, %v1148
        %v1150 = vrot.slane %v1141, %v1149
        %v1185 = vunpack.c.l.b16 %v1109
        %v1186 = vunpack.c.h.b16 %v1109
        %v1187 = vunpack.c.l.b16 %v1110
        %v1188 = vunpack.c.h.b16 %v1110
        %v1189 = vunpack.c.l.b16 %v1111
        %v1190 = vunpack.c.h.b16 %v1111
        %v1191 = vunpack.c.l.b16 %v1112
        %v1192 = vunpack.c.h.b16 %v1112
        %v1193 = vunpack.c.l.b16 %v1113
        %v1194 = vunpack.c.h.b16 %v1113
        %v1195 = vunpack.c.l.b16 %v1114
        %v1196 = vunpack.c.h.b16 %v1114
        %v1197 = vunpack.c.l.b16 %v1115
        %v1198 = vunpack.c.h.b16 %v1115
        %v1199 = vunpack.c.l.b16 %v1116
        %v1200 = vunpack.c.h.b16 %v1116
        %v1201 = vunpack.c.l.b16 %v1117
        %v1202 = vunpack.c.h.b16 %v1117
        %v1203 = vunpack.c.l.b16 %v1118
        %v1204 = vunpack.c.h.b16 %v1118
        %v1205 = vunpack.c.l.b16 %v1119
        %v1206 = vunpack.c.h.b16 %v1119
        %v1207 = vunpack.c.l.b16 %v1120
        %v1208 = vunpack.c.h.b16 %v1120
        %v1209 = vunpack.c.l.b16 %v1121
        %v1210 = vunpack.c.h.b16 %v1121
        %v1211 = vunpack.c.l.b16 %v1122
        %v1212 = vunpack.c.h.b16 %v1122
        %v1213 = vunpack.c.l.b16 %v1123
        %v1214 = vunpack.c.h.b16 %v1123
        %v1215 = vunpack.c.l.b16 %v1124
        %v1216 = vunpack.c.h.b16 %v1124
        %v1217 = vunpack.c.l.b16 %v1125
        %v1218 = vunpack.c.h.b16 %v1125
        %v1219 = vunpack.c.l.b16 %v1126
        %v1220 = vunpack.c.h.b16 %v1126
        %v1221 = vunpack.c.l.b16 %v1127
        %v1222 = vunpack.c.h.b16 %v1127
        %v1223 = vunpack.c.l.b16 %v1128
        %v1224 = vunpack.c.h.b16 %v1128
        %v1225 = vunpack.c.l.b16 %v1129
        %v1226 = vunpack.c.h.b16 %v1129
        %v1227 = vunpack.c.l.b16 %v1130
        %v1228 = vunpack.c.h.b16 %v1130
        %v1229 = vunpack.c.l.b16 %v1131
        %v1230 = vunpack.c.h.b16 %v1131
        %v1231 = vunpack.c.l.b16 %v1132
        %v1232 = vunpack.c.h.b16 %v1132
        %v1233 = vunpack.c.l.b16 %v1133
        %v1234 = vunpack.c.h.b16 %v1133
        %v1235 = vunpack.c.l.b16 %v1134
        %v1236 = vunpack.c.h.b16 %v1134
        %v1237 = vunpack.c.l.b16 %v1135
        %v1238 = vunpack.c.h.b16 %v1135
        %v1239 = vunpack.c.l.b16 %v1136
        %v1240 = vunpack.c.h.b16 %v1136
        %v1241 = vunpack.c.l.b16 %v1137
        %v1242 = vunpack.c.h.b16 %v1137
        %v1243 = vunpack.c.l.b16 %v1138
        %v1244 = vunpack.c.h.b16 %v1138
        %v1245 = vunpack.c.l.b16 %v1139
        %v1246 = vunpack.c.h.b16 %v1139
        %v1247 = vunpack.c.l.b16 %v1140
        %v1248 = vunpack.c.h.b16 %v1140
        %v1249 = vpack.c.b16 %v1187, %v1185
        %v1250 = vpack.c.b16 %v1188, %v1186
        %v1251 = vpack.c.b16 %v1191, %v1189
        %v1252 = vpack.c.b16 %v1192, %v1190
        %v1253 = vpack.c.b16 %v1195, %v1193
        %v1254 = vpack.c.b16 %v1196, %v1194
        %v1255 = vpack.c.b16 %v1199, %v1197
        %v1256 = vpack.c.b16 %v1200, %v1198
        %v1257 = vpack.c.b16 %v1203, %v1201
        %v1258 = vpack.c.b16 %v1204, %v1202
        %v1259 = vpack.c.b16 %v1207, %v1205
        %v1260 = vpack.c.b16 %v1208, %v1206
        %v1261 = vpack.c.b16 %v1211, %v1209
        %v1262 = vpack.c.b16 %v1212, %v1210
        %v1263 = vpack.c.b16 %v1215, %v1213
        %v1264 = vpack.c.b16 %v1216, %v1214
        %v1265 = vpack.c.b16 %v1219, %v1217
        %v1266 = vpack.c.b16 %v1220, %v1218
        %v1267 = vpack.c.b16 %v1223, %v1221
        %v1268 = vpack.c.b16 %v1224, %v1222
        %v1269 = vpack.c.b16 %v1227, %v1225
        %v1270 = vpack.c.b16 %v1228, %v1226
        %v1271 = vpack.c.b16 %v1231, %v1229
        %v1272 = vpack.c.b16 %v1232, %v1230
        %v1273 = vpack.c.b16 %v1235, %v1233
        %v1274 = vpack.c.b16 %v1236, %v1234
        %v1275 = vpack.c.b16 %v1239, %v1237
        %v1276 = vpack.c.b16 %v1240, %v1238
        %v1277 = vpack.c.b16 %v1243, %v1241
        %v1278 = vpack.c.b16 %v1244, %v1242
        %v1279 = vpack.c.b16 %v1247, %v1245
        %v1280 = vpack.c.b16 %v1248, %v1246
        %1313 = vmatprep.subr.bf16.mxu0 %v1250
        %1314 = vmatpush1.bf16.msra.mxu0 %v1249
        %1315 = vmatprep.subr.bf16.mxu0 %v1252
        %1316 = vmatpush1.bf16.msra.mxu0 %v1251
        %1317 = vmatprep.subr.bf16.mxu0 %v1254
        %1318 = vmatpush1.bf16.msra.mxu0 %v1253
        %1319 = vmatprep.subr.bf16.mxu0 %v1256
        %1320 = vmatpush1.bf16.msra.mxu0 %v1255
        %1321 = vmatprep.subr.bf16.mxu0 %v1258
        %1322 = vmatpush1.bf16.msra.mxu0 %v1257
        %1323 = vmatprep.subr.bf16.mxu0 %v1260
        %1324 = vmatpush1.bf16.msra.mxu0 %v1259
        %1325 = vmatprep.subr.bf16.mxu0 %v1262
        %1326 = vmatpush1.bf16.msra.mxu0 %v1261
        %1327 = vmatprep.subr.bf16.mxu0 %v1264
        %1328 = vmatpush1.bf16.msra.mxu0 %v1263
        %1329 = vmatprep.subr.bf16.mxu0 %v1266
        %1330 = vmatpush1.bf16.msra.mxu0 %v1265
        %1331 = vmatprep.subr.bf16.mxu0 %v1268
        %1332 = vmatpush1.bf16.msra.mxu0 %v1267
        %1333 = vmatprep.subr.bf16.mxu0 %v1270
        %1334 = vmatpush1.bf16.msra.mxu0 %v1269
        %1335 = vmatprep.subr.bf16.mxu0 %v1272
        %1336 = vmatpush1.bf16.msra.mxu0 %v1271
        %1337 = vmatprep.subr.bf16.mxu0 %v1274
        %1338 = vmatpush1.bf16.msra.mxu0 %v1273
        %1339 = vmatprep.subr.bf16.mxu0 %v1276
        %1340 = vmatpush1.bf16.msra.mxu0 %v1275
        %1341 = vmatprep.subr.bf16.mxu0 %v1278
        %1342 = vmatpush1.bf16.msra.mxu0 %v1277
        %1343 = vmatprep.subr.bf16.mxu0 %v1280
        %1344 = vmatpush1.bf16.msra.mxu0 %v1279
        %1345 = vmatprep.mubr.bf16.mxu0 %v618
        %1346 = vmatmul.mubr.bf16.gmra.mrb[0].mxu0 %v617
        %v1347 = vpop.f32.mrb[0].mxu0
        %v1348 = vadd.f32 %v1146, %v1347
        %v1349 = vpop.f32.mrb[0].mxu0
        %v1350 = vadd.f32 %v1150, %v1349
        %v1351 = vpop.f32.mrb[0].mxu0
        %v1352 = vpop.f32.mrb[0].mxu0
        %1353 = vdwg.mxu0
        %v1354 = vmul.f32 %v858, 0.125
        %v1355 = vpack.c.bf16 %v1354, %v1354
        %v1356 = vpack.c.bf16 %v1103, %v1103
        %v1357 = vpack.c.bf16 %v1348, %v1348
        %vm1358 = vcmask 523264
        %v1360 = vsel %vm1358, %v1355, 0
        %v1363 = vsel %vm1358, %v1356, 0
        %1365 = vmatprep.subr.bf16.mxu0 0
        %1366 = vmatpush1.bf16.xpose.msra.mxu0 %v1363
        %1367 = vmatprep.subr.bf16.mxu0 0
        %1368 = vmatpush1.bf16.xpose.msra.mxu0 0
        %1369 = vmatprep.subr.bf16.mxu0 0
        %1370 = vmatpush1.bf16.xpose.msra.mxu0 0
        %1371 = vmatprep.subr.bf16.mxu0 0
        %1372 = vmatpush1.bf16.xpose.msra.mxu0 0
        %1373 = vmatprep.subr.bf16.mxu0 0
        %1374 = vmatpush1.bf16.xpose.msra.mxu0 0
        %1375 = vmatprep.subr.bf16.mxu0 0
        %1376 = vmatpush1.bf16.xpose.msra.mxu0 0
        %1377 = vmatprep.subr.bf16.mxu0 0
        %1378 = vmatpush1.bf16.xpose.msra.mxu0 0
        %1379 = vmatprep.subr.bf16.mxu0 0
        %1380 = vmatpush1.bf16.xpose.msra.mxu0 0
        %1381 = vmatprep.subr.bf16.mxu0 0
        %1382 = vmatpush1.bf16.xpose.msra.mxu0 0
        %1383 = vmatprep.subr.bf16.mxu0 0
        %1384 = vmatpush1.bf16.xpose.msra.mxu0 0
        %1385 = vmatprep.subr.bf16.mxu0 0
        %1386 = vmatpush1.bf16.xpose.msra.mxu0 0
        %1387 = vmatprep.subr.bf16.mxu0 0
        %1388 = vmatpush1.bf16.xpose.msra.mxu0 0
        %1389 = vmatprep.subr.bf16.mxu0 0
        %1390 = vmatpush1.bf16.xpose.msra.mxu0 0
        %1391 = vmatprep.subr.bf16.mxu0 0
        %1392 = vmatpush1.bf16.xpose.msra.mxu0 0
        %1393 = vmatprep.subr.bf16.mxu0 0
        %1394 = vmatpush1.bf16.xpose.msra.mxu0 0
        %1395 = vmatprep.subr.bf16.mxu0 0
        %1396 = vmatpush1.bf16.xpose.msra.mxu0 0
        %1397 = vmatprep.mubr.bf16.mxu0 0
        %1398 = vmatmul.mubr.bf16.gmra.mrb[0].mxu0 %v1360
        %v1399 = vpop.f32.mrb[0].mxu0
        %v1400 = vadd.f32 0.0, %v1399
        %v1401 = vpop.f32.mrb[0].mxu0
        %v1402 = vpop.f32.mrb[0].mxu0
        %v1403 = vpop.f32.mrb[0].mxu0
        %1404 = vdwg.mxu0
        %vm1405 = vcmask 36864
        %v1406 = vsel %vm1405, %v1400, -inf
        %1407 = vmax.xlane.f32.xlu0 %v1406
        %v1408 = vpop.xlane.xlu0 %1407
        %v1409 = vsub.f32 %v1400, %v1408
        %v1410 = vmul.f32 %v1409, 1.442695
        %v1411 = vpow.pop %v1410
        %v1412 = vsel %vm1405, %v1411, 0.0
        %1413 = vadd.xlane.f32.xlu0 %v1412
        %v1414 = vpop.xlane.xlu0 %1413
        %v1415 = vrcp.pop %v1414
        %v1416 = vmul.f32 %v1411, %v1415
        %v1417 = vpack.c.bf16 %v1416, %v1416
        %vm1418 = vcmask 39936
        %v1420 = vsel %vm1418, %v1417, 0
        %vm1422 = vcmask 1041408
        %vm1423 = vcmask 1042432
        %v1424 = vsel %vm1422, 4294967295, 65535
        %v1425 = vsel %vm1423, %v1424, 0
        %v1427 = vand.u32 %v1357, %v1425
        %1429 = vmatprep.subr.bf16.mxu0 0
        %1430 = vmatpush1.bf16.msra.mxu0 %v1427
        %1431 = vmatprep.subr.bf16.mxu0 0
        %1432 = vmatpush1.bf16.msra.mxu0 0
        %1433 = vmatprep.subr.bf16.mxu0 0
        %1434 = vmatpush1.bf16.msra.mxu0 0
        %1435 = vmatprep.subr.bf16.mxu0 0
        %1436 = vmatpush1.bf16.msra.mxu0 0
        %1437 = vmatprep.subr.bf16.mxu0 0
        %1438 = vmatpush1.bf16.msra.mxu0 0
        %1439 = vmatprep.subr.bf16.mxu0 0
        %1440 = vmatpush1.bf16.msra.mxu0 0
        %1441 = vmatprep.subr.bf16.mxu0 0
        %1442 = vmatpush1.bf16.msra.mxu0 0
        %1443 = vmatprep.subr.bf16.mxu0 0
        %1444 = vmatpush1.bf16.msra.mxu0 0
        %1445 = vmatprep.subr.bf16.mxu0 0
        %1446 = vmatpush1.bf16.msra.mxu0 0
        %1447 = vmatprep.subr.bf16.mxu0 0
        %1448 = vmatpush1.bf16.msra.mxu0 0
        %1449 = vmatprep.subr.bf16.mxu0 0
        %1450 = vmatpush1.bf16.msra.mxu0 0
        %1451 = vmatprep.subr.bf16.mxu0 0
        %1452 = vmatpush1.bf16.msra.mxu0 0
        %1453 = vmatprep.subr.bf16.mxu0 0
        %1454 = vmatpush1.bf16.msra.mxu0 0
        %1455 = vmatprep.subr.bf16.mxu0 0
        %1456 = vmatpush1.bf16.msra.mxu0 0
        %1457 = vmatprep.subr.bf16.mxu0 0
        %1458 = vmatpush1.bf16.msra.mxu0 0
        %1459 = vmatprep.subr.bf16.mxu0 0
        %1460 = vmatpush1.bf16.msra.mxu0 0
        %1461 = vmatprep.mubr.bf16.mxu0 0
        %1462 = vmatmul.mubr.bf16.gmra.mrb[0].mxu0 %v1420
        %v1463 = vpop.f32.mrb[0].mxu0
        %v1464 = vadd.f32 0.0, %v1463
        %v1465 = vpop.f32.mrb[0].mxu0
        %v1466 = vpop.f32.mrb[0].mxu0
        %v1467 = vpop.f32.mrb[0].mxu0
        %1468 = vdwg.mxu0
        %1470 = vrot.lane.b32.xlu0 %v1355, 64
        %v1471 = vpop.permute.xlu0 %1470
        %1473 = vrot.lane.b32.xlu0 %v1356, 64
        %v1474 = vpop.permute.xlu0 %1473
        %v1476 = vsel %vm1358, %v1471, 0
        %v1479 = vsel %vm1358, %v1474, 0
        %1481 = vmatprep.subr.bf16.mxu0 0
        %1482 = vmatpush1.bf16.xpose.msra.mxu0 %v1479
        %1483 = vmatprep.subr.bf16.mxu0 0
        %1484 = vmatpush1.bf16.xpose.msra.mxu0 0
        %1485 = vmatprep.subr.bf16.mxu0 0
        %1486 = vmatpush1.bf16.xpose.msra.mxu0 0
        %1487 = vmatprep.subr.bf16.mxu0 0
        %1488 = vmatpush1.bf16.xpose.msra.mxu0 0
        %1489 = vmatprep.subr.bf16.mxu0 0
        %1490 = vmatpush1.bf16.xpose.msra.mxu0 0
        %1491 = vmatprep.subr.bf16.mxu0 0
        %1492 = vmatpush1.bf16.xpose.msra.mxu0 0
        %1493 = vmatprep.subr.bf16.mxu0 0
        %1494 = vmatpush1.bf16.xpose.msra.mxu0 0
        %1495 = vmatprep.subr.bf16.mxu0 0
        %1496 = vmatpush1.bf16.xpose.msra.mxu0 0
        %1497 = vmatprep.subr.bf16.mxu0 0
        %1498 = vmatpush1.bf16.xpose.msra.mxu0 0
        %1499 = vmatprep.subr.bf16.mxu0 0
        %1500 = vmatpush1.bf16.xpose.msra.mxu0 0
        %1501 = vmatprep.subr.bf16.mxu0 0
        %1502 = vmatpush1.bf16.xpose.msra.mxu0 0
        %1503 = vmatprep.subr.bf16.mxu0 0
        %1504 = vmatpush1.bf16.xpose.msra.mxu0 0
        %1505 = vmatprep.subr.bf16.mxu0 0
        %1506 = vmatpush1.bf16.xpose.msra.mxu0 0
        %1507 = vmatprep.subr.bf16.mxu0 0
        %1508 = vmatpush1.bf16.xpose.msra.mxu0 0
        %1509 = vmatprep.subr.bf16.mxu0 0
        %1510 = vmatpush1.bf16.xpose.msra.mxu0 0
        %1511 = vmatprep.subr.bf16.mxu0 0
        %1512 = vmatpush1.bf16.xpose.msra.mxu0 0
        %1513 = vmatprep.mubr.bf16.mxu0 0
        %1514 = vmatmul.mubr.bf16.gmra.mrb[0].mxu0 %v1476
        %v1515 = vpop.f32.mrb[0].mxu0
        %v1516 = vadd.f32 0.0, %v1515
        %v1517 = vpop.f32.mrb[0].mxu0
        %v1518 = vpop.f32.mrb[0].mxu0
        %v1519 = vpop.f32.mrb[0].mxu0
        %1520 = vdwg.mxu0
        %v1521 = vsel %vm1405, %v1516, -inf
        %1522 = vmax.xlane.f32.xlu0 %v1521
        %v1523 = vpop.xlane.xlu0 %1522
        %v1524 = vsub.f32 %v1516, %v1523
        %v1525 = vmul.f32 %v1524, 1.442695
        %v1526 = vpow.pop %v1525
        %v1527 = vsel %vm1405, %v1526, 0.0
        %1528 = vadd.xlane.f32.xlu0 %v1527
        %v1529 = vpop.xlane.xlu0 %1528
        %v1530 = vrcp.pop %v1529
        %v1531 = vmul.f32 %v1526, %v1530
        %v1532 = vpack.c.bf16 %v1531, %v1531
        %1534 = vrot.lane.b32.xlu0 %v1357, 64
        %v1535 = vpop.permute.xlu0 %1534
        %v1537 = vsel %vm1418, %v1532, 0
        %v1540 = vand.u32 %v1535, %v1425
        %1542 = vmatprep.subr.bf16.mxu0 0
        %1543 = vmatpush1.bf16.msra.mxu0 %v1540
        %1544 = vmatprep.subr.bf16.mxu0 0
        %1545 = vmatpush1.bf16.msra.mxu0 0
        %1546 = vmatprep.subr.bf16.mxu0 0
        %1547 = vmatpush1.bf16.msra.mxu0 0
        %1548 = vmatprep.subr.bf16.mxu0 0
        %1549 = vmatpush1.bf16.msra.mxu0 0
        %1550 = vmatprep.subr.bf16.mxu0 0
        %1551 = vmatpush1.bf16.msra.mxu0 0
        %1552 = vmatprep.subr.bf16.mxu0 0
        %1553 = vmatpush1.bf16.msra.mxu0 0
        %1554 = vmatprep.subr.bf16.mxu0 0
        %1555 = vmatpush1.bf16.msra.mxu0 0
        %1556 = vmatprep.subr.bf16.mxu0 0
        %1557 = vmatpush1.bf16.msra.mxu0 0
        %1558 = vmatprep.subr.bf16.mxu0 0
        %1559 = vmatpush1.bf16.msra.mxu0 0
        %1560 = vmatprep.subr.bf16.mxu0 0
        %1561 = vmatpush1.bf16.msra.mxu0 0
        %1562 = vmatprep.subr.bf16.mxu0 0
        %1563 = vmatpush1.bf16.msra.mxu0 0
        %1564 = vmatprep.subr.bf16.mxu0 0
        %1565 = vmatpush1.bf16.msra.mxu0 0
        %1566 = vmatprep.subr.bf16.mxu0 0
        %1567 = vmatpush1.bf16.msra.mxu0 0
        %1568 = vmatprep.subr.bf16.mxu0 0
        %1569 = vmatpush1.bf16.msra.mxu0 0
        %1570 = vmatprep.subr.bf16.mxu0 0
        %1571 = vmatpush1.bf16.msra.mxu0 0
        %1572 = vmatprep.subr.bf16.mxu0 0
        %1573 = vmatpush1.bf16.msra.mxu0 0
        %1574 = vmatprep.mubr.bf16.mxu0 0
        %1575 = vmatmul.mubr.bf16.gmra.mrb[0].mxu0 %v1537
        %v1576 = vpop.f32.mrb[0].mxu0
        %v1577 = vadd.f32 0.0, %v1576
        %v1578 = vpop.f32.mrb[0].mxu0
        %v1579 = vpop.f32.mrb[0].mxu0
        %v1580 = vpop.f32.mrb[0].mxu0
        %1581 = vdwg.mxu0
        %v1582 = vmul.f32 %v860, 0.125
        %v1583 = vpack.c.bf16 %v1582, %v1582
        %v1584 = vpack.c.bf16 %v1105, %v1105
        %v1585 = vpack.c.bf16 %v1350, %v1350
        %v1587 = vsel %vm1358, %v1583, 0
        %v1590 = vsel %vm1358, %v1584, 0
        %1592 = vmatprep.subr.bf16.mxu0 0
        %1593 = vmatpush1.bf16.xpose.msra.mxu0 %v1590
        %1594 = vmatprep.subr.bf16.mxu0 0
        %1595 = vmatpush1.bf16.xpose.msra.mxu0 0
        %1596 = vmatprep.subr.bf16.mxu0 0
        %1597 = vmatpush1.bf16.xpose.msra.mxu0 0
        %1598 = vmatprep.subr.bf16.mxu0 0
        %1599 = vmatpush1.bf16.xpose.msra.mxu0 0
        %1600 = vmatprep.subr.bf16.mxu0 0
        %1601 = vmatpush1.bf16.xpose.msra.mxu0 0
        %1602 = vmatprep.subr.bf16.mxu0 0
        %1603 = vmatpush1.bf16.xpose.msra.mxu0 0
        %1604 = vmatprep.subr.bf16.mxu0 0
        %1605 = vmatpush1.bf16.xpose.msra.mxu0 0
        %1606 = vmatprep.subr.bf16.mxu0 0
        %1607 = vmatpush1.bf16.xpose.msra.mxu0 0
        %1608 = vmatprep.subr.bf16.mxu0 0
        %1609 = vmatpush1.bf16.xpose.msra.mxu0 0
        %1610 = vmatprep.subr.bf16.mxu0 0
        %1611 = vmatpush1.bf16.xpose.msra.mxu0 0
        %1612 = vmatprep.subr.bf16.mxu0 0
        %1613 = vmatpush1.bf16.xpose.msra.mxu0 0
        %1614 = vmatprep.subr.bf16.mxu0 0
        %1615 = vmatpush1.bf16.xpose.msra.mxu0 0
        %1616 = vmatprep.subr.bf16.mxu0 0
        %1617 = vmatpush1.bf16.xpose.msra.mxu0 0
        %1618 = vmatprep.subr.bf16.mxu0 0
        %1619 = vmatpush1.bf16.xpose.msra.mxu0 0
        %1620 = vmatprep.subr.bf16.mxu0 0
        %1621 = vmatpush1.bf16.xpose.msra.mxu0 0
        %1622 = vmatprep.subr.bf16.mxu0 0
        %1623 = vmatpush1.bf16.xpose.msra.mxu0 0
        %1624 = vmatprep.mubr.bf16.mxu0 0
        %1625 = vmatmul.mubr.bf16.gmra.mrb[0].mxu0 %v1587
        %v1626 = vpop.f32.mrb[0].mxu0
        %v1627 = vadd.f32 0.0, %v1626
        %v1628 = vpop.f32.mrb[0].mxu0
        %v1629 = vpop.f32.mrb[0].mxu0
        %v1630 = vpop.f32.mrb[0].mxu0
        %1631 = vdwg.mxu0
        %v1632 = vsel %vm1405, %v1627, -inf
        %1633 = vmax.xlane.f32.xlu0 %v1632
        %v1634 = vpop.xlane.xlu0 %1633
        %v1635 = vsub.f32 %v1627, %v1634
        %v1636 = vmul.f32 %v1635, 1.442695
        %v1637 = vpow.pop %v1636
        %v1638 = vsel %vm1405, %v1637, 0.0
        %1639 = vadd.xlane.f32.xlu0 %v1638
        %v1640 = vpop.xlane.xlu0 %1639
        %v1641 = vrcp.pop %v1640
        %v1642 = vmul.f32 %v1637, %v1641
        %v1643 = vpack.c.bf16 %v1642, %v1642
        %v1645 = vsel %vm1418, %v1643, 0
        %v1648 = vand.u32 %v1585, %v1425
        %1650 = vmatprep.subr.bf16.mxu0 0
        %1651 = vmatpush1.bf16.msra.mxu0 %v1648
        %1652 = vmatprep.subr.bf16.mxu0 0
        %1653 = vmatpush1.bf16.msra.mxu0 0
        %1654 = vmatprep.subr.bf16.mxu0 0
        %1655 = vmatpush1.bf16.msra.mxu0 0
        %1656 = vmatprep.subr.bf16.mxu0 0
        %1657 = vmatpush1.bf16.msra.mxu0 0
        %1658 = vmatprep.subr.bf16.mxu0 0
        %1659 = vmatpush1.bf16.msra.mxu0 0
        %1660 = vmatprep.subr.bf16.mxu0 0
        %1661 = vmatpush1.bf16.msra.mxu0 0
        %1662 = vmatprep.subr.bf16.mxu0 0
        %1663 = vmatpush1.bf16.msra.mxu0 0
        %1664 = vmatprep.subr.bf16.mxu0 0
        %1665 = vmatpush1.bf16.msra.mxu0 0
        %1666 = vmatprep.subr.bf16.mxu0 0
        %1667 = vmatpush1.bf16.msra.mxu0 0
        %1668 = vmatprep.subr.bf16.mxu0 0
        %1669 = vmatpush1.bf16.msra.mxu0 0
        %1670 = vmatprep.subr.bf16.mxu0 0
        %1671 = vmatpush1.bf16.msra.mxu0 0
        %1672 = vmatprep.subr.bf16.mxu0 0
        %1673 = vmatpush1.bf16.msra.mxu0 0
        %1674 = vmatprep.subr.bf16.mxu0 0
        %1675 = vmatpush1.bf16.msra.mxu0 0
        %1676 = vmatprep.subr.bf16.mxu0 0
        %1677 = vmatpush1.bf16.msra.mxu0 0
        %1678 = vmatprep.subr.bf16.mxu0 0
        %1679 = vmatpush1.bf16.msra.mxu0 0
        %1680 = vmatprep.subr.bf16.mxu0 0
        %1681 = vmatpush1.bf16.msra.mxu0 0
        %1682 = vmatprep.mubr.bf16.mxu0 0
        %1683 = vmatmul.mubr.bf16.gmra.mrb[0].mxu0 %v1645
        %v1684 = vpop.f32.mrb[0].mxu0
        %v1685 = vadd.f32 0.0, %v1684
        %v1686 = vpop.f32.mrb[0].mxu0
        %v1687 = vpop.f32.mrb[0].mxu0
        %v1688 = vpop.f32.mrb[0].mxu0
        %1689 = vdwg.mxu0
        %1691 = vrot.lane.b32.xlu0 %v1583, 64
        %v1692 = vpop.permute.xlu0 %1691
        %1694 = vrot.lane.b32.xlu0 %v1584, 64
        %v1695 = vpop.permute.xlu0 %1694
        %v1697 = vsel %vm1358, %v1692, 0
        %v1700 = vsel %vm1358, %v1695, 0
        %1702 = vmatprep.subr.bf16.mxu0 0
        %1703 = vmatpush1.bf16.xpose.msra.mxu0 %v1700
        %1704 = vmatprep.subr.bf16.mxu0 0
        %1705 = vmatpush1.bf16.xpose.msra.mxu0 0
        %1706 = vmatprep.subr.bf16.mxu0 0
        %1707 = vmatpush1.bf16.xpose.msra.mxu0 0
        %1708 = vmatprep.subr.bf16.mxu0 0
        %1709 = vmatpush1.bf16.xpose.msra.mxu0 0
        %1710 = vmatprep.subr.bf16.mxu0 0
        %1711 = vmatpush1.bf16.xpose.msra.mxu0 0
        %1712 = vmatprep.subr.bf16.mxu0 0
        %1713 = vmatpush1.bf16.xpose.msra.mxu0 0
        %1714 = vmatprep.subr.bf16.mxu0 0
        %1715 = vmatpush1.bf16.xpose.msra.mxu0 0
        %1716 = vmatprep.subr.bf16.mxu0 0
        %1717 = vmatpush1.bf16.xpose.msra.mxu0 0
        %1718 = vmatprep.subr.bf16.mxu0 0
        %1719 = vmatpush1.bf16.xpose.msra.mxu0 0
        %1720 = vmatprep.subr.bf16.mxu0 0
        %1721 = vmatpush1.bf16.xpose.msra.mxu0 0
        %1722 = vmatprep.subr.bf16.mxu0 0
        %1723 = vmatpush1.bf16.xpose.msra.mxu0 0
        %1724 = vmatprep.subr.bf16.mxu0 0
        %1725 = vmatpush1.bf16.xpose.msra.mxu0 0
        %1726 = vmatprep.subr.bf16.mxu0 0
        %1727 = vmatpush1.bf16.xpose.msra.mxu0 0
        %1728 = vmatprep.subr.bf16.mxu0 0
        %1729 = vmatpush1.bf16.xpose.msra.mxu0 0
        %1730 = vmatprep.subr.bf16.mxu0 0
        %1731 = vmatpush1.bf16.xpose.msra.mxu0 0
        %1732 = vmatprep.subr.bf16.mxu0 0
        %1733 = vmatpush1.bf16.xpose.msra.mxu0 0
        %1734 = vmatprep.mubr.bf16.mxu0 0
        %1735 = vmatmul.mubr.bf16.gmra.mrb[0].mxu0 %v1697
        %v1736 = vpop.f32.mrb[0].mxu0
        %v1737 = vadd.f32 0.0, %v1736
        %v1738 = vpop.f32.mrb[0].mxu0
        %v1739 = vpop.f32.mrb[0].mxu0
        %v1740 = vpop.f32.mrb[0].mxu0
        %1741 = vdwg.mxu0
        %v1742 = vsel %vm1405, %v1737, -inf
        %1743 = vmax.xlane.f32.xlu0 %v1742
        %v1744 = vpop.xlane.xlu0 %1743
        %v1745 = vsub.f32 %v1737, %v1744
        %v1746 = vmul.f32 %v1745, 1.442695
        %v1747 = vpow.pop %v1746
        %v1748 = vsel %vm1405, %v1747, 0.0
        %1749 = vadd.xlane.f32.xlu0 %v1748
        %v1750 = vpop.xlane.xlu0 %1749
        %v1751 = vrcp.pop %v1750
        %v1752 = vmul.f32 %v1747, %v1751
        %v1753 = vpack.c.bf16 %v1752, %v1752
        %1755 = vrot.lane.b32.xlu0 %v1585, 64
        %v1756 = vpop.permute.xlu0 %1755
        %v1758 = vsel %vm1418, %v1753, 0
        %v1761 = vand.u32 %v1756, %v1425
        %1763 = vmatprep.subr.bf16.mxu0 0
        %1764 = vmatpush1.bf16.msra.mxu0 %v1761
        %1765 = vmatprep.subr.bf16.mxu0 0
        %1766 = vmatpush1.bf16.msra.mxu0 0
        %1767 = vmatprep.subr.bf16.mxu0 0
        %1768 = vmatpush1.bf16.msra.mxu0 0
        %1769 = vmatprep.subr.bf16.mxu0 0
        %1770 = vmatpush1.bf16.msra.mxu0 0
        %1771 = vmatprep.subr.bf16.mxu0 0
        %1772 = vmatpush1.bf16.msra.mxu0 0
        %1773 = vmatprep.subr.bf16.mxu0 0
        %1774 = vmatpush1.bf16.msra.mxu0 0
        %1775 = vmatprep.subr.bf16.mxu0 0
        %1776 = vmatpush1.bf16.msra.mxu0 0
        %1777 = vmatprep.subr.bf16.mxu0 0
        %1778 = vmatpush1.bf16.msra.mxu0 0
        %1779 = vmatprep.subr.bf16.mxu0 0
        %1780 = vmatpush1.bf16.msra.mxu0 0
        %1781 = vmatprep.subr.bf16.mxu0 0
        %1782 = vmatpush1.bf16.msra.mxu0 0
        %1783 = vmatprep.subr.bf16.mxu0 0
        %1784 = vmatpush1.bf16.msra.mxu0 0
        %1785 = vmatprep.subr.bf16.mxu0 0
        %1786 = vmatpush1.bf16.msra.mxu0 0
        %1787 = vmatprep.subr.bf16.mxu0 0
        %1788 = vmatpush1.bf16.msra.mxu0 0
        %1789 = vmatprep.subr.bf16.mxu0 0
        %1790 = vmatpush1.bf16.msra.mxu0 0
        %1791 = vmatprep.subr.bf16.mxu0 0
        %1792 = vmatpush1.bf16.msra.mxu0 0
        %1793 = vmatprep.subr.bf16.mxu0 0
        %1794 = vmatpush1.bf16.msra.mxu0 0
        %1795 = vmatprep.mubr.bf16.mxu0 0
        %1796 = vmatmul.mubr.bf16.gmra.mrb[0].mxu0 %v1758
        %v1797 = vpop.f32.mrb[0].mxu0
        %v1798 = vadd.f32 0.0, %v1797
        %v1799 = vpop.f32.mrb[0].mxu0
        %v1800 = vpop.f32.mrb[0].mxu0
        %v1801 = vpop.f32.mrb[0].mxu0
        %1802 = vdwg.mxu0
        %1804 = vrot.lane.b32.xlu0 %v1577, 64
        %v1805 = vpop.permute.xlu0 %1804
        %1808 = vrot.lane.b32.xlu0 %v1798, 64
        %v1809 = vpop.permute.xlu0 %1808
        %v1811 = vsel %vm1358, %v1464, %v1805
        %v1812 = vsel %vm1358, %v1685, %v1809
        %v1813 = vpack.c.bf16 %v1811, %v1811
        %v1814 = vpack.c.bf16 %v1812, %v1812
        %v1815 = vld [vmem:[#allocation2] sm:$0xff]
        %v1816 = vld [vmem:[#allocation2 + $0x8] sm:$0xff]
        %v1817 = vld [vmem:[#allocation2 + $0x10] sm:$0xff]
        %v1818 = vld [vmem:[#allocation2 + $0x18] sm:$0xff]
        %v1819 = vld [vmem:[#allocation2 + $0x20] sm:$0xff]
        %v1820 = vld [vmem:[#allocation2 + $0x28] sm:$0xff]
        %v1821 = vld [vmem:[#allocation2 + $0x30] sm:$0xff]
        %v1822 = vld [vmem:[#allocation2 + $0x38] sm:$0xff]
        %v1823 = vld [vmem:[#allocation2 + $0x40] sm:$0xff]
        %v1824 = vld [vmem:[#allocation2 + $0x48] sm:$0xff]
        %v1825 = vld [vmem:[#allocation2 + $0x50] sm:$0xff]
        %v1826 = vld [vmem:[#allocation2 + $0x58] sm:$0xff]
        %v1827 = vld [vmem:[#allocation2 + $0x60] sm:$0xff]
        %v1828 = vld [vmem:[#allocation2 + $0x68] sm:$0xff]
        %v1829 = vld [vmem:[#allocation2 + $0x70] sm:$0xff]
        %v1830 = vld [vmem:[#allocation2 + $0x78] sm:$0xff]
        %v1831 = vld [vmem:[#allocation2 + $0x80] sm:$0xff]
        %v1832 = vld [vmem:[#allocation2 + $0x88] sm:$0xff]
        %v1833 = vld [vmem:[#allocation2 + $0x90] sm:$0xff]
        %v1834 = vld [vmem:[#allocation2 + $0x98] sm:$0xff]
        %v1835 = vld [vmem:[#allocation2 + $0xa0] sm:$0xff]
        %v1836 = vld [vmem:[#allocation2 + $0xa8] sm:$0xff]
        %v1837 = vld [vmem:[#allocation2 + $0xb0] sm:$0xff]
        %v1838 = vld [vmem:[#allocation2 + $0xb8] sm:$0xff]
        %v1839 = vld [vmem:[#allocation2 + $0xc0] sm:$0xff]
        %v1840 = vld [vmem:[#allocation2 + $0xc8] sm:$0xff]
        %v1841 = vld [vmem:[#allocation2 + $0xd0] sm:$0xff]
        %v1842 = vld [vmem:[#allocation2 + $0xd8] sm:$0xff]
        %v1843 = vld [vmem:[#allocation2 + $0xe0] sm:$0xff]
        %v1844 = vld [vmem:[#allocation2 + $0xe8] sm:$0xff]
        %v1845 = vld [vmem:[#allocation2 + $0xf0] sm:$0xff]
        %v1846 = vld [vmem:[#allocation2 + $0xf8] sm:$0xff]
        %v1879 = vunpack.c.l.b16 %v1815
        %v1880 = vunpack.c.h.b16 %v1815
        %v1881 = vunpack.c.l.b16 %v1816
        %v1882 = vunpack.c.h.b16 %v1816
        %v1883 = vunpack.c.l.b16 %v1817
        %v1884 = vunpack.c.h.b16 %v1817
        %v1885 = vunpack.c.l.b16 %v1818
        %v1886 = vunpack.c.h.b16 %v1818
        %v1887 = vunpack.c.l.b16 %v1819
        %v1888 = vunpack.c.h.b16 %v1819
        %v1889 = vunpack.c.l.b16 %v1820
        %v1890 = vunpack.c.h.b16 %v1820
        %v1891 = vunpack.c.l.b16 %v1821
        %v1892 = vunpack.c.h.b16 %v1821
        %v1893 = vunpack.c.l.b16 %v1822
        %v1894 = vunpack.c.h.b16 %v1822
        %v1895 = vunpack.c.l.b16 %v1823
        %v1896 = vunpack.c.h.b16 %v1823
        %v1897 = vunpack.c.l.b16 %v1824
        %v1898 = vunpack.c.h.b16 %v1824
        %v1899 = vunpack.c.l.b16 %v1825
        %v1900 = vunpack.c.h.b16 %v1825
        %v1901 = vunpack.c.l.b16 %v1826
        %v1902 = vunpack.c.h.b16 %v1826
        %v1903 = vunpack.c.l.b16 %v1827
        %v1904 = vunpack.c.h.b16 %v1827
        %v1905 = vunpack.c.l.b16 %v1828
        %v1906 = vunpack.c.h.b16 %v1828
        %v1907 = vunpack.c.l.b16 %v1829
        %v1908 = vunpack.c.h.b16 %v1829
        %v1909 = vunpack.c.l.b16 %v1830
        %v1910 = vunpack.c.h.b16 %v1830
        %v1911 = vunpack.c.l.b16 %v1831
        %v1912 = vunpack.c.h.b16 %v1831
        %v1913 = vunpack.c.l.b16 %v1832
        %v1914 = vunpack.c.h.b16 %v1832
        %v1915 = vunpack.c.l.b16 %v1833
        %v1916 = vunpack.c.h.b16 %v1833
        %v1917 = vunpack.c.l.b16 %v1834
        %v1918 = vunpack.c.h.b16 %v1834
        %v1919 = vunpack.c.l.b16 %v1835
        %v1920 = vunpack.c.h.b16 %v1835
        %v1921 = vunpack.c.l.b16 %v1836
        %v1922 = vunpack.c.h.b16 %v1836
        %v1923 = vunpack.c.l.b16 %v1837
        %v1924 = vunpack.c.h.b16 %v1837
        %v1925 = vunpack.c.l.b16 %v1838
        %v1926 = vunpack.c.h.b16 %v1838
        %v1927 = vunpack.c.l.b16 %v1839
        %v1928 = vunpack.c.h.b16 %v1839
        %v1929 = vunpack.c.l.b16 %v1840
        %v1930 = vunpack.c.h.b16 %v1840
        %v1931 = vunpack.c.l.b16 %v1841
        %v1932 = vunpack.c.h.b16 %v1841
        %v1933 = vunpack.c.l.b16 %v1842
        %v1934 = vunpack.c.h.b16 %v1842
        %v1935 = vunpack.c.l.b16 %v1843
        %v1936 = vunpack.c.h.b16 %v1843
        %v1937 = vunpack.c.l.b16 %v1844
        %v1938 = vunpack.c.h.b16 %v1844
        %v1939 = vunpack.c.l.b16 %v1845
        %v1940 = vunpack.c.h.b16 %v1845
        %v1941 = vunpack.c.l.b16 %v1846
        %v1942 = vunpack.c.h.b16 %v1846
        %v1943 = vpack.c.b16 %v1881, %v1879
        %v1944 = vpack.c.b16 %v1882, %v1880
        %v1945 = vpack.c.b16 %v1885, %v1883
        %v1946 = vpack.c.b16 %v1886, %v1884
        %v1947 = vpack.c.b16 %v1889, %v1887
        %v1948 = vpack.c.b16 %v1890, %v1888
        %v1949 = vpack.c.b16 %v1893, %v1891
        %v1950 = vpack.c.b16 %v1894, %v1892
        %v1951 = vpack.c.b16 %v1897, %v1895
        %v1952 = vpack.c.b16 %v1898, %v1896
        %v1953 = vpack.c.b16 %v1901, %v1899
        %v1954 = vpack.c.b16 %v1902, %v1900
        %v1955 = vpack.c.b16 %v1905, %v1903
        %v1956 = vpack.c.b16 %v1906, %v1904
        %v1957 = vpack.c.b16 %v1909, %v1907
        %v1958 = vpack.c.b16 %v1910, %v1908
        %v1959 = vpack.c.b16 %v1913, %v1911
        %v1960 = vpack.c.b16 %v1914, %v1912
        %v1961 = vpack.c.b16 %v1917, %v1915
        %v1962 = vpack.c.b16 %v1918, %v1916
        %v1963 = vpack.c.b16 %v1921, %v1919
        %v1964 = vpack.c.b16 %v1922, %v1920
        %v1965 = vpack.c.b16 %v1925, %v1923
        %v1966 = vpack.c.b16 %v1926, %v1924
        %v1967 = vpack.c.b16 %v1929, %v1927
        %v1968 = vpack.c.b16 %v1930, %v1928
        %v1969 = vpack.c.b16 %v1933, %v1931
        %v1970 = vpack.c.b16 %v1934, %v1932
        %v1971 = vpack.c.b16 %v1937, %v1935
        %v1972 = vpack.c.b16 %v1938, %v1936
        %v1973 = vpack.c.b16 %v1941, %v1939
        %v1974 = vpack.c.b16 %v1942, %v1940
        %2007 = vmatprep.subr.bf16.mxu0 %v1944
        %2008 = vmatpush1.bf16.msra.mxu0 %v1943
        %2009 = vmatprep.subr.bf16.mxu0 %v1946
        %2010 = vmatpush1.bf16.msra.mxu0 %v1945
        %2011 = vmatprep.subr.bf16.mxu0 %v1948
        %2012 = vmatpush1.bf16.msra.mxu0 %v1947
        %2013 = vmatprep.subr.bf16.mxu0 %v1950
        %2014 = vmatpush1.bf16.msra.mxu0 %v1949
        %2015 = vmatprep.subr.bf16.mxu0 %v1952
        %2016 = vmatpush1.bf16.msra.mxu0 %v1951
        %2017 = vmatprep.subr.bf16.mxu0 %v1954
        %2018 = vmatpush1.bf16.msra.mxu0 %v1953
        %2019 = vmatprep.subr.bf16.mxu0 %v1956
        %2020 = vmatpush1.bf16.msra.mxu0 %v1955
        %2021 = vmatprep.subr.bf16.mxu0 %v1958
        %2022 = vmatpush1.bf16.msra.mxu0 %v1957
        %2023 = vmatprep.subr.bf16.mxu0 %v1960
        %2024 = vmatpush1.bf16.msra.mxu0 %v1959
        %2025 = vmatprep.subr.bf16.mxu0 %v1962
        %2026 = vmatpush1.bf16.msra.mxu0 %v1961
        %2027 = vmatprep.subr.bf16.mxu0 %v1964
        %2028 = vmatpush1.bf16.msra.mxu0 %v1963
        %2029 = vmatprep.subr.bf16.mxu0 %v1966
        %2030 = vmatpush1.bf16.msra.mxu0 %v1965
        %2031 = vmatprep.subr.bf16.mxu0 %v1968
        %2032 = vmatpush1.bf16.msra.mxu0 %v1967
        %2033 = vmatprep.subr.bf16.mxu0 %v1970
        %2034 = vmatpush1.bf16.msra.mxu0 %v1969
        %2035 = vmatprep.subr.bf16.mxu0 %v1972
        %2036 = vmatpush1.bf16.msra.mxu0 %v1971
        %2037 = vmatprep.subr.bf16.mxu0 %v1974
        %2038 = vmatpush1.bf16.msra.mxu0 %v1973
        %2039 = vmatprep.mubr.bf16.mxu0 %v1814
        %2040 = vmatmul.mubr.bf16.gmra.mrb[0].mxu0 %v1813
        %v2041 = vpop.f32.mrb[0].mxu0
        %v2042 = vadd.f32 0.0, %v2041
        %v2043 = vpop.f32.mrb[0].mxu0
        %v2044 = vadd.f32 0.0, %v2043
        %v2045 = vpop.f32.mrb[0].mxu0
        %v2046 = vpop.f32.mrb[0].mxu0
        %2047 = vdwg.mxu0
        %v2048 = vadd.f32 %v565, %v2042
        %v2049 = vadd.f32 %v566, %v2044
        %v2050 = vld [vmem:[%s10] sm:$0x3]
        %v2052 = vlaneseq
        %v2053 = vshrl.u32 %v2052, 7
        %v2054 = vsub.s32 0, %v2053
        %v2055 = vrot.slane %v2050, %v2054
        %v2056 = vlaneseq
        %v2057 = vshrl.u32 %v2056, 7
        %v2058 = vsub.s32 1, %v2057
        %v2059 = vrot.slane %v2050, %v2058
        %v2062 = vadd.f32 %v2048, %v2055
        %v2063 = vadd.f32 %v2049, %v2059
        %v2064 = vld [vmem:[%s11] sm:$0x3]
        %v2065 = vld [vmem:[%s12] sm:$0x3]
        %v2066 = vsel %vm569, %v2062, 0.0
        %v2067 = vsel %vm569, %v2063, 0.0
        %v2068 = vadd.f32 %v2066, %v2067
        %2069 = vadd.xlane.f32.xlu0 %v2068
        %v2070 = vpop.xlane.xlu0 %2069
        %v2071 = vmul.f32 %v2070, %v575
        %v2072 = vsub.f32 %v2062, %v2071
        %v2073 = vsub.f32 %v2063, %v2071
        %v2074 = vmul.f32 %v2072, %v2072
        %v2075 = vmul.f32 %v2073, %v2073
        %v2076 = vsel %vm569, %v2074, 0.0
        %v2077 = vsel %vm569, %v2075, 0.0
        %v2078 = vadd.f32 %v2076, %v2077
        %2079 = vadd.xlane.f32.xlu0 %v2078
        %v2080 = vpop.xlane.xlu0 %2079
        %v2081 = vmul.f32 %v2080, %v575
        %v2082 = vadd.f32 %v2081, 1e-06
        %v2083 = vrsqrt.pop %v2082
        %v2084 = vmul.f32 %v2072, %v2083
        %v2085 = vmul.f32 %v2073, %v2083
        %v2087 = vlaneseq
        %v2088 = vshrl.u32 %v2087, 7
        %v2089 = vsub.s32 0, %v2088
        %v2090 = vrot.slane %v2064, %v2089
        %v2091 = vlaneseq
        %v2092 = vshrl.u32 %v2091, 7
        %v2093 = vsub.s32 1, %v2092
        %v2094 = vrot.slane %v2064, %v2093
        %v2097 = vmul.f32 %v2084, %v2090
        %v2098 = vmul.f32 %v2085, %v2094
        %v2100 = vlaneseq
        %v2101 = vshrl.u32 %v2100, 7
        %v2102 = vsub.s32 0, %v2101
        %v2103 = vrot.slane %v2065, %v2102
        %v2104 = vlaneseq
        %v2105 = vshrl.u32 %v2104, 7
        %v2106 = vsub.s32 1, %v2105
        %v2107 = vrot.slane %v2065, %v2106
        %v2110 = vadd.f32 %v2097, %v2103
        %v2111 = vadd.f32 %v2098, %v2107
        %v2112 = vpack.c.bf16 %v2110, %v2110
        %v2113 = vpack.c.bf16 %v2111, %v2111
        %v2114 = vld [vmem:[%s13] sm:$0xff]
        %v2115 = vld [vmem:[%s13 + $0x8] sm:$0xff]
        %v2116 = vld [vmem:[%s13 + $0x10] sm:$0xff]
        %v2117 = vld [vmem:[%s13 + $0x18] sm:$0xff]
        %v2118 = vld [vmem:[%s13 + $0x20] sm:$0xff]
        %v2119 = vld [vmem:[%s13 + $0x28] sm:$0xff]
        %v2120 = vld [vmem:[%s13 + $0x30] sm:$0xff]
        %v2121 = vld [vmem:[%s13 + $0x38] sm:$0xff]
        %v2122 = vld [vmem:[%s13 + $0x40] sm:$0xff]
        %v2123 = vld [vmem:[%s13 + $0x48] sm:$0xff]
        %v2124 = vld [vmem:[%s13 + $0x50] sm:$0xff]
        %v2125 = vld [vmem:[%s13 + $0x58] sm:$0xff]
        %v2126 = vld [vmem:[%s13 + $0x60] sm:$0xff]
        %v2127 = vld [vmem:[%s13 + $0x68] sm:$0xff]
        %v2128 = vld [vmem:[%s13 + $0x70] sm:$0xff]
        %v2129 = vld [vmem:[%s13 + $0x78] sm:$0xff]
        %v2130 = vld [vmem:[%s13 + $0x80] sm:$0xff]
        %v2131 = vld [vmem:[%s13 + $0x88] sm:$0xff]
        %v2132 = vld [vmem:[%s13 + $0x90] sm:$0xff]
        %v2133 = vld [vmem:[%s13 + $0x98] sm:$0xff]
        %v2134 = vld [vmem:[%s13 + $0xa0] sm:$0xff]
        %v2135 = vld [vmem:[%s13 + $0xa8] sm:$0xff]
        %v2136 = vld [vmem:[%s13 + $0xb0] sm:$0xff]
        %v2137 = vld [vmem:[%s13 + $0xb8] sm:$0xff]
        %v2138 = vld [vmem:[%s13 + $0xc0] sm:$0xff]
        %v2139 = vld [vmem:[%s13 + $0xc8] sm:$0xff]
        %v2140 = vld [vmem:[%s13 + $0xd0] sm:$0xff]
        %v2141 = vld [vmem:[%s13 + $0xd8] sm:$0xff]
        %v2142 = vld [vmem:[%s13 + $0xe0] sm:$0xff]
        %v2143 = vld [vmem:[%s13 + $0xe8] sm:$0xff]
        %v2144 = vld [vmem:[%s13 + $0xf0] sm:$0xff]
        %v2145 = vld [vmem:[%s13 + $0xf8] sm:$0xff]
        %v2146 = vld [vmem:[%s13 + $0x100] sm:$0xff]
        %v2147 = vld [vmem:[%s13 + $0x108] sm:$0xff]
        %v2148 = vld [vmem:[%s13 + $0x110] sm:$0xff]
        %v2149 = vld [vmem:[%s13 + $0x118] sm:$0xff]
        %v2150 = vld [vmem:[%s13 + $0x120] sm:$0xff]
        %v2151 = vld [vmem:[%s13 + $0x128] sm:$0xff]
        %v2152 = vld [vmem:[%s13 + $0x130] sm:$0xff]
        %v2153 = vld [vmem:[%s13 + $0x138] sm:$0xff]
        %v2154 = vld [vmem:[%s13 + $0x140] sm:$0xff]
        %v2155 = vld [vmem:[%s13 + $0x148] sm:$0xff]
        %v2156 = vld [vmem:[%s13 + $0x150] sm:$0xff]
        %v2157 = vld [vmem:[%s13 + $0x158] sm:$0xff]
        %v2158 = vld [vmem:[%s13 + $0x160] sm:$0xff]
        %v2159 = vld [vmem:[%s13 + $0x168] sm:$0xff]
        %v2160 = vld [vmem:[%s13 + $0x170] sm:$0xff]
        %v2161 = vld [vmem:[%s13 + $0x178] sm:$0xff]
        %v2162 = vld [vmem:[%s13 + $0x180] sm:$0xff]
        %v2163 = vld [vmem:[%s13 + $0x188] sm:$0xff]
        %v2164 = vld [vmem:[%s13 + $0x190] sm:$0xff]
        %v2165 = vld [vmem:[%s13 + $0x198] sm:$0xff]
        %v2166 = vld [vmem:[%s13 + $0x1a0] sm:$0xff]
        %v2167 = vld [vmem:[%s13 + $0x1a8] sm:$0xff]
        %v2168 = vld [vmem:[%s13 + $0x1b0] sm:$0xff]
        %v2169 = vld [vmem:[%s13 + $0x1b8] sm:$0xff]
        %v2170 = vld [vmem:[%s13 + $0x1c0] sm:$0xff]
        %v2171 = vld [vmem:[%s13 + $0x1c8] sm:$0xff]
        %v2172 = vld [vmem:[%s13 + $0x1d0] sm:$0xff]
        %v2173 = vld [vmem:[%s13 + $0x1d8] sm:$0xff]
        %v2174 = vld [vmem:[%s13 + $0x1e0] sm:$0xff]
        %v2175 = vld [vmem:[%s13 + $0x1e8] sm:$0xff]
        %v2176 = vld [vmem:[%s13 + $0x1f0] sm:$0xff]
        %v2177 = vld [vmem:[%s13 + $0x1f8] sm:$0xff]
        %v2178 = vld [vmem:[%s14] sm:$0xf]
        %v2180 = vlaneseq
        %v2181 = vshrl.u32 %v2180, 7
        %v2182 = vsub.s32 0, %v2181
        %v2183 = vrot.slane %v2178, %v2182
        %v2184 = vlaneseq
        %v2185 = vshrl.u32 %v2184, 7
        %v2186 = vsub.s32 1, %v2185
        %v2187 = vrot.slane %v2178, %v2186
        %v2188 = vlaneseq
        %v2189 = vshrl.u32 %v2188, 7
        %v2190 = vsub.s32 2, %v2189
        %v2191 = vrot.slane %v2178, %v2190
        %v2192 = vlaneseq
        %v2193 = vshrl.u32 %v2192, 7
        %v2194 = vsub.s32 3, %v2193
        %v2195 = vrot.slane %v2178, %v2194
        %v2264 = vunpack.c.l.b16 %v2114
        %v2265 = vunpack.c.h.b16 %v2114
        %v2266 = vunpack.c.l.b16 %v2115
        %v2267 = vunpack.c.h.b16 %v2115
        %v2268 = vunpack.c.l.b16 %v2116
        %v2269 = vunpack.c.h.b16 %v2116
        %v2270 = vunpack.c.l.b16 %v2117
        %v2271 = vunpack.c.h.b16 %v2117
        %v2272 = vunpack.c.l.b16 %v2118
        %v2273 = vunpack.c.h.b16 %v2118
        %v2274 = vunpack.c.l.b16 %v2119
        %v2275 = vunpack.c.h.b16 %v2119
        %v2276 = vunpack.c.l.b16 %v2120
        %v2277 = vunpack.c.h.b16 %v2120
        %v2278 = vunpack.c.l.b16 %v2121
        %v2279 = vunpack.c.h.b16 %v2121
        %v2280 = vunpack.c.l.b16 %v2122
        %v2281 = vunpack.c.h.b16 %v2122
        %v2282 = vunpack.c.l.b16 %v2123
        %v2283 = vunpack.c.h.b16 %v2123
        %v2284 = vunpack.c.l.b16 %v2124
        %v2285 = vunpack.c.h.b16 %v2124
        %v2286 = vunpack.c.l.b16 %v2125
        %v2287 = vunpack.c.h.b16 %v2125
        %v2288 = vunpack.c.l.b16 %v2126
        %v2289 = vunpack.c.h.b16 %v2126
        %v2290 = vunpack.c.l.b16 %v2127
        %v2291 = vunpack.c.h.b16 %v2127
        %v2292 = vunpack.c.l.b16 %v2128
        %v2293 = vunpack.c.h.b16 %v2128
        %v2294 = vunpack.c.l.b16 %v2129
        %v2295 = vunpack.c.h.b16 %v2129
        %v2296 = vunpack.c.l.b16 %v2130
        %v2297 = vunpack.c.h.b16 %v2130
        %v2298 = vunpack.c.l.b16 %v2131
        %v2299 = vunpack.c.h.b16 %v2131
        %v2300 = vunpack.c.l.b16 %v2132
        %v2301 = vunpack.c.h.b16 %v2132
        %v2302 = vunpack.c.l.b16 %v2133
        %v2303 = vunpack.c.h.b16 %v2133
        %v2304 = vunpack.c.l.b16 %v2134
        %v2305 = vunpack.c.h.b16 %v2134
        %v2306 = vunpack.c.l.b16 %v2135
        %v2307 = vunpack.c.h.b16 %v2135
        %v2308 = vunpack.c.l.b16 %v2136
        %v2309 = vunpack.c.h.b16 %v2136
        %v2310 = vunpack.c.l.b16 %v2137
        %v2311 = vunpack.c.h.b16 %v2137
        %v2312 = vunpack.c.l.b16 %v2138
        %v2313 = vunpack.c.h.b16 %v2138
        %v2314 = vunpack.c.l.b16 %v2139
        %v2315 = vunpack.c.h.b16 %v2139
        %v2316 = vunpack.c.l.b16 %v2140
        %v2317 = vunpack.c.h.b16 %v2140
        %v2318 = vunpack.c.l.b16 %v2141
        %v2319 = vunpack.c.h.b16 %v2141
        %v2320 = vunpack.c.l.b16 %v2142
        %v2321 = vunpack.c.h.b16 %v2142
        %v2322 = vunpack.c.l.b16 %v2143
        %v2323 = vunpack.c.h.b16 %v2143
        %v2324 = vunpack.c.l.b16 %v2144
        %v2325 = vunpack.c.h.b16 %v2144
        %v2326 = vunpack.c.l.b16 %v2145
        %v2327 = vunpack.c.h.b16 %v2145
        %v2328 = vunpack.c.l.b16 %v2146
        %v2329 = vunpack.c.h.b16 %v2146
        %v2330 = vunpack.c.l.b16 %v2147
        %v2331 = vunpack.c.h.b16 %v2147
        %v2332 = vunpack.c.l.b16 %v2148
        %v2333 = vunpack.c.h.b16 %v2148
        %v2334 = vunpack.c.l.b16 %v2149
        %v2335 = vunpack.c.h.b16 %v2149
        %v2336 = vunpack.c.l.b16 %v2150
        %v2337 = vunpack.c.h.b16 %v2150
        %v2338 = vunpack.c.l.b16 %v2151
        %v2339 = vunpack.c.h.b16 %v2151
        %v2340 = vunpack.c.l.b16 %v2152
        %v2341 = vunpack.c.h.b16 %v2152
        %v2342 = vunpack.c.l.b16 %v2153
        %v2343 = vunpack.c.h.b16 %v2153
        %v2344 = vunpack.c.l.b16 %v2154
        %v2345 = vunpack.c.h.b16 %v2154
        %v2346 = vunpack.c.l.b16 %v2155
        %v2347 = vunpack.c.h.b16 %v2155
        %v2348 = vunpack.c.l.b16 %v2156
        %v2349 = vunpack.c.h.b16 %v2156
        %v2350 = vunpack.c.l.b16 %v2157
        %v2351 = vunpack.c.h.b16 %v2157
        %v2352 = vunpack.c.l.b16 %v2158
        %v2353 = vunpack.c.h.b16 %v2158
        %v2354 = vunpack.c.l.b16 %v2159
        %v2355 = vunpack.c.h.b16 %v2159
        %v2356 = vunpack.c.l.b16 %v2160
        %v2357 = vunpack.c.h.b16 %v2160
        %v2358 = vunpack.c.l.b16 %v2161
        %v2359 = vunpack.c.h.b16 %v2161
        %v2360 = vunpack.c.l.b16 %v2162
        %v2361 = vunpack.c.h.b16 %v2162
        %v2362 = vunpack.c.l.b16 %v2163
        %v2363 = vunpack.c.h.b16 %v2163
        %v2364 = vunpack.c.l.b16 %v2164
        %v2365 = vunpack.c.h.b16 %v2164
        %v2366 = vunpack.c.l.b16 %v2165
        %v2367 = vunpack.c.h.b16 %v2165
        %v2368 = vunpack.c.l.b16 %v2166
        %v2369 = vunpack.c.h.b16 %v2166
        %v2370 = vunpack.c.l.b16 %v2167
        %v2371 = vunpack.c.h.b16 %v2167
        %v2372 = vunpack.c.l.b16 %v2168
        %v2373 = vunpack.c.h.b16 %v2168
        %v2374 = vunpack.c.l.b16 %v2169
        %v2375 = vunpack.c.h.b16 %v2169
        %v2376 = vunpack.c.l.b16 %v2170
        %v2377 = vunpack.c.h.b16 %v2170
        %v2378 = vunpack.c.l.b16 %v2171
        %v2379 = vunpack.c.h.b16 %v2171
        %v2380 = vunpack.c.l.b16 %v2172
        %v2381 = vunpack.c.h.b16 %v2172
        %v2382 = vunpack.c.l.b16 %v2173
        %v2383 = vunpack.c.h.b16 %v2173
        %v2384 = vunpack.c.l.b16 %v2174
        %v2385 = vunpack.c.h.b16 %v2174
        %v2386 = vunpack.c.l.b16 %v2175
        %v2387 = vunpack.c.h.b16 %v2175
        %v2388 = vunpack.c.l.b16 %v2176
        %v2389 = vunpack.c.h.b16 %v2176
        %v2390 = vunpack.c.l.b16 %v2177
        %v2391 = vunpack.c.h.b16 %v2177
        %v2392 = vpack.c.b16 %v2268, %v2264
        %v2393 = vpack.c.b16 %v2269, %v2265
        %v2394 = vpack.c.b16 %v2270, %v2266
        %v2395 = vpack.c.b16 %v2271, %v2267
        %v2396 = vpack.c.b16 %v2276, %v2272
        %v2397 = vpack.c.b16 %v2277, %v2273
        %v2398 = vpack.c.b16 %v2278, %v2274
        %v2399 = vpack.c.b16 %v2279, %v2275
        %v2400 = vpack.c.b16 %v2284, %v2280
        %v2401 = vpack.c.b16 %v2285, %v2281
        %v2402 = vpack.c.b16 %v2286, %v2282
        %v2403 = vpack.c.b16 %v2287, %v2283
        %v2404 = vpack.c.b16 %v2292, %v2288
        %v2405 = vpack.c.b16 %v2293, %v2289
        %v2406 = vpack.c.b16 %v2294, %v2290
        %v2407 = vpack.c.b16 %v2295, %v2291
        %v2408 = vpack.c.b16 %v2300, %v2296
        %v2409 = vpack.c.b16 %v2301, %v2297
        %v2410 = vpack.c.b16 %v2302, %v2298
        %v2411 = vpack.c.b16 %v2303, %v2299
        %v2412 = vpack.c.b16 %v2308, %v2304
        %v2413 = vpack.c.b16 %v2309, %v2305
        %v2414 = vpack.c.b16 %v2310, %v2306
        %v2415 = vpack.c.b16 %v2311, %v2307
        %v2416 = vpack.c.b16 %v2316, %v2312
        %v2417 = vpack.c.b16 %v2317, %v2313
        %v2418 = vpack.c.b16 %v2318, %v2314
        %v2419 = vpack.c.b16 %v2319, %v2315
        %v2420 = vpack.c.b16 %v2324, %v2320
        %v2421 = vpack.c.b16 %v2325, %v2321
        %v2422 = vpack.c.b16 %v2326, %v2322
        %v2423 = vpack.c.b16 %v2327, %v2323
        %v2424 = vpack.c.b16 %v2332, %v2328
        %v2425 = vpack.c.b16 %v2333, %v2329
        %v2426 = vpack.c.b16 %v2334, %v2330
        %v2427 = vpack.c.b16 %v2335, %v2331
        %v2428 = vpack.c.b16 %v2340, %v2336
        %v2429 = vpack.c.b16 %v2341, %v2337
        %v2430 = vpack.c.b16 %v2342, %v2338
        %v2431 = vpack.c.b16 %v2343, %v2339
        %v2432 = vpack.c.b16 %v2348, %v2344
        %v2433 = vpack.c.b16 %v2349, %v2345
        %v2434 = vpack.c.b16 %v2350, %v2346
        %v2435 = vpack.c.b16 %v2351, %v2347
        %v2436 = vpack.c.b16 %v2356, %v2352
        %v2437 = vpack.c.b16 %v2357, %v2353
        %v2438 = vpack.c.b16 %v2358, %v2354
        %v2439 = vpack.c.b16 %v2359, %v2355
        %v2440 = vpack.c.b16 %v2364, %v2360
        %v2441 = vpack.c.b16 %v2365, %v2361
        %v2442 = vpack.c.b16 %v2366, %v2362
        %v2443 = vpack.c.b16 %v2367, %v2363
        %v2444 = vpack.c.b16 %v2372, %v2368
        %v2445 = vpack.c.b16 %v2373, %v2369
        %v2446 = vpack.c.b16 %v2374, %v2370
        %v2447 = vpack.c.b16 %v2375, %v2371
        %v2448 = vpack.c.b16 %v2380, %v2376
        %v2449 = vpack.c.b16 %v2381, %v2377
        %v2450 = vpack.c.b16 %v2382, %v2378
        %v2451 = vpack.c.b16 %v2383, %v2379
        %v2452 = vpack.c.b16 %v2388, %v2384
        %v2453 = vpack.c.b16 %v2389, %v2385
        %v2454 = vpack.c.b16 %v2390, %v2386
        %v2455 = vpack.c.b16 %v2391, %v2387
        %2520 = vmatprep.subr.bf16.mxu0 %v2393
        %2521 = vmatpush1.bf16.msra.mxu0 %v2392
        %2522 = vmatprep.subr.bf16.mxu0 %v2397
        %2523 = vmatpush1.bf16.msra.mxu0 %v2396
        %2524 = vmatprep.subr.bf16.mxu0 %v2401
        %2525 = vmatpush1.bf16.msra.mxu0 %v2400
        %2526 = vmatprep.subr.bf16.mxu0 %v2405
        %2527 = vmatpush1.bf16.msra.mxu0 %v2404
        %2528 = vmatprep.subr.bf16.mxu0 %v2409
        %2529 = vmatpush1.bf16.msra.mxu0 %v2408
        %2530 = vmatprep.subr.bf16.mxu0 %v2413
        %2531 = vmatpush1.bf16.msra.mxu0 %v2412
        %2532 = vmatprep.subr.bf16.mxu0 %v2417
        %2533 = vmatpush1.bf16.msra.mxu0 %v2416
        %2534 = vmatprep.subr.bf16.mxu0 %v2421
        %2535 = vmatpush1.bf16.msra.mxu0 %v2420
        %2536 = vmatprep.subr.bf16.mxu0 %v2425
        %2537 = vmatpush1.bf16.msra.mxu0 %v2424
        %2538 = vmatprep.subr.bf16.mxu0 %v2429
        %2539 = vmatpush1.bf16.msra.mxu0 %v2428
        %2540 = vmatprep.subr.bf16.mxu0 %v2433
        %2541 = vmatpush1.bf16.msra.mxu0 %v2432
        %2542 = vmatprep.subr.bf16.mxu0 %v2437
        %2543 = vmatpush1.bf16.msra.mxu0 %v2436
        %2544 = vmatprep.subr.bf16.mxu0 %v2441
        %2545 = vmatpush1.bf16.msra.mxu0 %v2440
        %2546 = vmatprep.subr.bf16.mxu0 %v2445
        %2547 = vmatpush1.bf16.msra.mxu0 %v2444
        %2548 = vmatprep.subr.bf16.mxu0 %v2449
        %2549 = vmatpush1.bf16.msra.mxu0 %v2448
        %2550 = vmatprep.subr.bf16.mxu0 %v2453
        %2551 = vmatpush1.bf16.msra.mxu0 %v2452
        %2552 = vmatprep.mubr.bf16.mxu0 %v2113
        %2553 = vmatmul.mubr.bf16.gmra.mrb[0].mxu0 %v2112
        %v2554 = vpop.f32.mrb[0].mxu0
        %v2555 = vadd.f32 %v2183, %v2554
        %v2556 = vpop.f32.mrb[0].mxu0
        %v2557 = vadd.f32 %v2187, %v2556
        %v2558 = vpop.f32.mrb[0].mxu0
        %v2559 = vpop.f32.mrb[0].mxu0
        %2560 = vdwg.mxu0
        %2561 = vmatprep.subr.bf16.mxu0 %v2395
        %2562 = vmatpush1.bf16.msra.mxu0 %v2394
        %2563 = vmatprep.subr.bf16.mxu0 %v2399
        %2564 = vmatpush1.bf16.msra.mxu0 %v2398
        %2565 = vmatprep.subr.bf16.mxu0 %v2403
        %2566 = vmatpush1.bf16.msra.mxu0 %v2402
        %2567 = vmatprep.subr.bf16.mxu0 %v2407
        %2568 = vmatpush1.bf16.msra.mxu0 %v2406
        %2569 = vmatprep.subr.bf16.mxu0 %v2411
        %2570 = vmatpush1.bf16.msra.mxu0 %v2410
        %2571 = vmatprep.subr.bf16.mxu0 %v2415
        %2572 = vmatpush1.bf16.msra.mxu0 %v2414
        %2573 = vmatprep.subr.bf16.mxu0 %v2419
        %2574 = vmatpush1.bf16.msra.mxu0 %v2418
        %2575 = vmatprep.subr.bf16.mxu0 %v2423
        %2576 = vmatpush1.bf16.msra.mxu0 %v2422
        %2577 = vmatprep.subr.bf16.mxu0 %v2427
        %2578 = vmatpush1.bf16.msra.mxu0 %v2426
        %2579 = vmatprep.subr.bf16.mxu0 %v2431
        %2580 = vmatpush1.bf16.msra.mxu0 %v2430
        %2581 = vmatprep.subr.bf16.mxu0 %v2435
        %2582 = vmatpush1.bf16.msra.mxu0 %v2434
        %2583 = vmatprep.subr.bf16.mxu0 %v2439
        %2584 = vmatpush1.bf16.msra.mxu0 %v2438
        %2585 = vmatprep.subr.bf16.mxu0 %v2443
        %2586 = vmatpush1.bf16.msra.mxu0 %v2442
        %2587 = vmatprep.subr.bf16.mxu0 %v2447
        %2588 = vmatpush1.bf16.msra.mxu0 %v2446
        %2589 = vmatprep.subr.bf16.mxu0 %v2451
        %2590 = vmatpush1.bf16.msra.mxu0 %v2450
        %2591 = vmatprep.subr.bf16.mxu0 %v2455
        %2592 = vmatpush1.bf16.msra.mxu0 %v2454
        %2593 = vmatprep.mubr.bf16.mxu0 %v2113
        %2594 = vmatmul.mubr.bf16.gmra.mrb[0].mxu0 %v2112
        %v2595 = vpop.f32.mrb[0].mxu0
        %v2596 = vadd.f32 %v2191, %v2595
        %v2597 = vpop.f32.mrb[0].mxu0
        %v2598 = vadd.f32 %v2195, %v2597
        %v2599 = vpop.f32.mrb[0].mxu0
        %v2600 = vpop.f32.mrb[0].mxu0
        %2601 = vdwg.mxu0
        %v2602 = vmul.f32 %v2555, %v2555
        %v2603 = vmul.f32 %v2557, %v2557
        %v2604 = vmul.f32 %v2596, %v2596
        %v2605 = vmul.f32 %v2598, %v2598
        %v2606 = vmul.f32 %v2555, %v2602
        %v2607 = vmul.f32 %v2557, %v2603
        %v2608 = vmul.f32 %v2596, %v2604
        %v2609 = vmul.f32 %v2598, %v2605
        %v2610 = vmul.f32 %v2606, 0.044715
        %v2611 = vmul.f32 %v2607, 0.044715
        %v2612 = vmul.f32 %v2608, 0.044715
        %v2613 = vmul.f32 %v2609, 0.044715
        %v2614 = vadd.f32 %v2555, %v2610
        %v2615 = vadd.f32 %v2557, %v2611
        %v2616 = vadd.f32 %v2596, %v2612
        %v2617 = vadd.f32 %v2598, %v2613
        %v2618 = vmul.f32 %v2614, 0.7978846
        %v2619 = vmul.f32 %v2615, 0.7978846
        %v2620 = vmul.f32 %v2616, 0.7978846
        %v2621 = vmul.f32 %v2617, 0.7978846
        %v2622 = vtanh.pop %v2618
        %v2623 = vtanh.pop %v2619
        %v2624 = vtanh.pop %v2620
        %v2625 = vtanh.pop %v2621
        %v2626 = vadd.f32 %v2622, 1.0
        %v2627 = vadd.f32 %v2623, 1.0
        %v2628 = vadd.f32 %v2624, 1.0
        %v2629 = vadd.f32 %v2625, 1.0
        %v2630 = vmul.f32 %v2626, 0.5
        %v2631 = vmul.f32 %v2627, 0.5
        %v2632 = vmul.f32 %v2628, 0.5
        %v2633 = vmul.f32 %v2629, 0.5
        %v2634 = vmul.f32 %v2555, %v2630
        %v2635 = vmul.f32 %v2557, %v2631
        %v2636 = vmul.f32 %v2596, %v2632
        %v2637 = vmul.f32 %v2598, %v2633
        %v2638 = vpack.c.bf16 %v2634, %v2634
        %v2639 = vpack.c.bf16 %v2635, %v2635
        %v2640 = vpack.c.bf16 %v2636, %v2636
        %v2641 = vpack.c.bf16 %v2637, %v2637
        %v2642 = vld [vmem:[%s15] sm:$0xff]
        %v2643 = vld [vmem:[%s15 + $0x8] sm:$0xff]
        %v2644 = vld [vmem:[%s15 + $0x10] sm:$0xff]
        %v2645 = vld [vmem:[%s15 + $0x18] sm:$0xff]
        %v2646 = vld [vmem:[%s15 + $0x20] sm:$0xff]
        %v2647 = vld [vmem:[%s15 + $0x28] sm:$0xff]
        %v2648 = vld [vmem:[%s15 + $0x30] sm:$0xff]
        %v2649 = vld [vmem:[%s15 + $0x38] sm:$0xff]
        %v2650 = vld [vmem:[%s15 + $0x40] sm:$0xff]
        %v2651 = vld [vmem:[%s15 + $0x48] sm:$0xff]
        %v2652 = vld [vmem:[%s15 + $0x50] sm:$0xff]
        %v2653 = vld [vmem:[%s15 + $0x58] sm:$0xff]
        %v2654 = vld [vmem:[%s15 + $0x60] sm:$0xff]
        %v2655 = vld [vmem:[%s15 + $0x68] sm:$0xff]
        %v2656 = vld [vmem:[%s15 + $0x70] sm:$0xff]
        %v2657 = vld [vmem:[%s15 + $0x78] sm:$0xff]
        %v2658 = vld [vmem:[%s15 + $0x80] sm:$0xff]
        %v2659 = vld [vmem:[%s15 + $0x88] sm:$0xff]
        %v2660 = vld [vmem:[%s15 + $0x90] sm:$0xff]
        %v2661 = vld [vmem:[%s15 + $0x98] sm:$0xff]
        %v2662 = vld [vmem:[%s15 + $0xa0] sm:$0xff]
        %v2663 = vld [vmem:[%s15 + $0xa8] sm:$0xff]
        %v2664 = vld [vmem:[%s15 + $0xb0] sm:$0xff]
        %v2665 = vld [vmem:[%s15 + $0xb8] sm:$0xff]
        %v2666 = vld [vmem:[%s15 + $0xc0] sm:$0xff]
        %v2667 = vld [vmem:[%s15 + $0xc8] sm:$0xff]
        %v2668 = vld [vmem:[%s15 + $0xd0] sm:$0xff]
        %v2669 = vld [vmem:[%s15 + $0xd8] sm:$0xff]
        %v2670 = vld [vmem:[%s15 + $0xe0] sm:$0xff]
        %v2671 = vld [vmem:[%s15 + $0xe8] sm:$0xff]
        %v2672 = vld [vmem:[%s15 + $0xf0] sm:$0xff]
        %v2673 = vld [vmem:[%s15 + $0xf8] sm:$0xff]
        %v2674 = vld [vmem:[%s15 + $0x100] sm:$0xff]
        %v2675 = vld [vmem:[%s15 + $0x108] sm:$0xff]
        %v2676 = vld [vmem:[%s15 + $0x110] sm:$0xff]
        %v2677 = vld [vmem:[%s15 + $0x118] sm:$0xff]
        %v2678 = vld [vmem:[%s15 + $0x120] sm:$0xff]
        %v2679 = vld [vmem:[%s15 + $0x128] sm:$0xff]
        %v2680 = vld [vmem:[%s15 + $0x130] sm:$0xff]
        %v2681 = vld [vmem:[%s15 + $0x138] sm:$0xff]
        %v2682 = vld [vmem:[%s15 + $0x140] sm:$0xff]
        %v2683 = vld [vmem:[%s15 + $0x148] sm:$0xff]
        %v2684 = vld [vmem:[%s15 + $0x150] sm:$0xff]
        %v2685 = vld [vmem:[%s15 + $0x158] sm:$0xff]
        %v2686 = vld [vmem:[%s15 + $0x160] sm:$0xff]
        %v2687 = vld [vmem:[%s15 + $0x168] sm:$0xff]
        %v2688 = vld [vmem:[%s15 + $0x170] sm:$0xff]
        %v2689 = vld [vmem:[%s15 + $0x178] sm:$0xff]
        %v2690 = vld [vmem:[%s15 + $0x180] sm:$0xff]
        %v2691 = vld [vmem:[%s15 + $0x188] sm:$0xff]
        %v2692 = vld [vmem:[%s15 + $0x190] sm:$0xff]
        %v2693 = vld [vmem:[%s15 + $0x198] sm:$0xff]
        %v2694 = vld [vmem:[%s15 + $0x1a0] sm:$0xff]
        %v2695 = vld [vmem:[%s15 + $0x1a8] sm:$0xff]
        %v2696 = vld [vmem:[%s15 + $0x1b0] sm:$0xff]
        %v2697 = vld [vmem:[%s15 + $0x1b8] sm:$0xff]
        %v2698 = vld [vmem:[%s15 + $0x1c0] sm:$0xff]
        %v2699 = vld [vmem:[%s15 + $0x1c8] sm:$0xff]
        %v2700 = vld [vmem:[%s15 + $0x1d0] sm:$0xff]
        %v2701 = vld [vmem:[%s15 + $0x1d8] sm:$0xff]
        %v2702 = vld [vmem:[%s15 + $0x1e0] sm:$0xff]
        %v2703 = vld [vmem:[%s15 + $0x1e8] sm:$0xff]
        %v2704 = vld [vmem:[%s15 + $0x1f0] sm:$0xff]
        %v2705 = vld [vmem:[%s15 + $0x1f8] sm:$0xff]
        %v2770 = vunpack.c.l.b16 %v2642
        %v2771 = vunpack.c.h.b16 %v2642
        %v2772 = vunpack.c.l.b16 %v2643
        %v2773 = vunpack.c.h.b16 %v2643
        %v2774 = vunpack.c.l.b16 %v2644
        %v2775 = vunpack.c.h.b16 %v2644
        %v2776 = vunpack.c.l.b16 %v2645
        %v2777 = vunpack.c.h.b16 %v2645
        %v2778 = vunpack.c.l.b16 %v2646
        %v2779 = vunpack.c.h.b16 %v2646
        %v2780 = vunpack.c.l.b16 %v2647
        %v2781 = vunpack.c.h.b16 %v2647
        %v2782 = vunpack.c.l.b16 %v2648
        %v2783 = vunpack.c.h.b16 %v2648
        %v2784 = vunpack.c.l.b16 %v2649
        %v2785 = vunpack.c.h.b16 %v2649
        %v2786 = vunpack.c.l.b16 %v2650
        %v2787 = vunpack.c.h.b16 %v2650
        %v2788 = vunpack.c.l.b16 %v2651
        %v2789 = vunpack.c.h.b16 %v2651
        %v2790 = vunpack.c.l.b16 %v2652
        %v2791 = vunpack.c.h.b16 %v2652
        %v2792 = vunpack.c.l.b16 %v2653
        %v2793 = vunpack.c.h.b16 %v2653
        %v2794 = vunpack.c.l.b16 %v2654
        %v2795 = vunpack.c.h.b16 %v2654
        %v2796 = vunpack.c.l.b16 %v2655
        %v2797 = vunpack.c.h.b16 %v2655
        %v2798 = vunpack.c.l.b16 %v2656
        %v2799 = vunpack.c.h.b16 %v2656
        %v2800 = vunpack.c.l.b16 %v2657
        %v2801 = vunpack.c.h.b16 %v2657
        %v2802 = vunpack.c.l.b16 %v2658
        %v2803 = vunpack.c.h.b16 %v2658
        %v2804 = vunpack.c.l.b16 %v2659
        %v2805 = vunpack.c.h.b16 %v2659
        %v2806 = vunpack.c.l.b16 %v2660
        %v2807 = vunpack.c.h.b16 %v2660
        %v2808 = vunpack.c.l.b16 %v2661
        %v2809 = vunpack.c.h.b16 %v2661
        %v2810 = vunpack.c.l.b16 %v2662
        %v2811 = vunpack.c.h.b16 %v2662
        %v2812 = vunpack.c.l.b16 %v2663
        %v2813 = vunpack.c.h.b16 %v2663
        %v2814 = vunpack.c.l.b16 %v2664
        %v2815 = vunpack.c.h.b16 %v2664
        %v2816 = vunpack.c.l.b16 %v2665
        %v2817 = vunpack.c.h.b16 %v2665
        %v2818 = vunpack.c.l.b16 %v2666
        %v2819 = vunpack.c.h.b16 %v2666
        %v2820 = vunpack.c.l.b16 %v2667
        %v2821 = vunpack.c.h.b16 %v2667
        %v2822 = vunpack.c.l.b16 %v2668
        %v2823 = vunpack.c.h.b16 %v2668
        %v2824 = vunpack.c.l.b16 %v2669
        %v2825 = vunpack.c.h.b16 %v2669
        %v2826 = vunpack.c.l.b16 %v2670
        %v2827 = vunpack.c.h.b16 %v2670
        %v2828 = vunpack.c.l.b16 %v2671
        %v2829 = vunpack.c.h.b16 %v2671
        %v2830 = vunpack.c.l.b16 %v2672
        %v2831 = vunpack.c.h.b16 %v2672
        %v2832 = vunpack.c.l.b16 %v2673
        %v2833 = vunpack.c.h.b16 %v2673
        %v2834 = vunpack.c.l.b16 %v2674
        %v2835 = vunpack.c.h.b16 %v2674
        %v2836 = vunpack.c.l.b16 %v2675
        %v2837 = vunpack.c.h.b16 %v2675
        %v2838 = vunpack.c.l.b16 %v2676
        %v2839 = vunpack.c.h.b16 %v2676
        %v2840 = vunpack.c.l.b16 %v2677
        %v2841 = vunpack.c.h.b16 %v2677
        %v2842 = vunpack.c.l.b16 %v2678
        %v2843 = vunpack.c.h.b16 %v2678
        %v2844 = vunpack.c.l.b16 %v2679
        %v2845 = vunpack.c.h.b16 %v2679
        %v2846 = vunpack.c.l.b16 %v2680
        %v2847 = vunpack.c.h.b16 %v2680
        %v2848 = vunpack.c.l.b16 %v2681
        %v2849 = vunpack.c.h.b16 %v2681
        %v2850 = vunpack.c.l.b16 %v2682
        %v2851 = vunpack.c.h.b16 %v2682
        %v2852 = vunpack.c.l.b16 %v2683
        %v2853 = vunpack.c.h.b16 %v2683
        %v2854 = vunpack.c.l.b16 %v2684
        %v2855 = vunpack.c.h.b16 %v2684
        %v2856 = vunpack.c.l.b16 %v2685
        %v2857 = vunpack.c.h.b16 %v2685
        %v2858 = vunpack.c.l.b16 %v2686
        %v2859 = vunpack.c.h.b16 %v2686
        %v2860 = vunpack.c.l.b16 %v2687
        %v2861 = vunpack.c.h.b16 %v2687
        %v2862 = vunpack.c.l.b16 %v2688
        %v2863 = vunpack.c.h.b16 %v2688
        %v2864 = vunpack.c.l.b16 %v2689
        %v2865 = vunpack.c.h.b16 %v2689
        %v2866 = vunpack.c.l.b16 %v2690
        %v2867 = vunpack.c.h.b16 %v2690
        %v2868 = vunpack.c.l.b16 %v2691
        %v2869 = vunpack.c.h.b16 %v2691
        %v2870 = vunpack.c.l.b16 %v2692
        %v2871 = vunpack.c.h.b16 %v2692
        %v2872 = vunpack.c.l.b16 %v2693
        %v2873 = vunpack.c.h.b16 %v2693
        %v2874 = vunpack.c.l.b16 %v2694
        %v2875 = vunpack.c.h.b16 %v2694
        %v2876 = vunpack.c.l.b16 %v2695
        %v2877 = vunpack.c.h.b16 %v2695
        %v2878 = vunpack.c.l.b16 %v2696
        %v2879 = vunpack.c.h.b16 %v2696
        %v2880 = vunpack.c.l.b16 %v2697
        %v2881 = vunpack.c.h.b16 %v2697
        %v2882 = vunpack.c.l.b16 %v2698
        %v2883 = vunpack.c.h.b16 %v2698
        %v2884 = vunpack.c.l.b16 %v2699
        %v2885 = vunpack.c.h.b16 %v2699
        %v2886 = vunpack.c.l.b16 %v2700
        %v2887 = vunpack.c.h.b16 %v2700
        %v2888 = vunpack.c.l.b16 %v2701
        %v2889 = vunpack.c.h.b16 %v2701
        %v2890 = vunpack.c.l.b16 %v2702
        %v2891 = vunpack.c.h.b16 %v2702
        %v2892 = vunpack.c.l.b16 %v2703
        %v2893 = vunpack.c.h.b16 %v2703
        %v2894 = vunpack.c.l.b16 %v2704
        %v2895 = vunpack.c.h.b16 %v2704
        %v2896 = vunpack.c.l.b16 %v2705
        %v2897 = vunpack.c.h.b16 %v2705
        %v2898 = vpack.c.b16 %v2772, %v2770
        %v2899 = vpack.c.b16 %v2773, %v2771
        %v2900 = vpack.c.b16 %v2776, %v2774
        %v2901 = vpack.c.b16 %v2777, %v2775
        %v2902 = vpack.c.b16 %v2780, %v2778
        %v2903 = vpack.c.b16 %v2781, %v2779
        %v2904 = vpack.c.b16 %v2784, %v2782
        %v2905 = vpack.c.b16 %v2785, %v2783
        %v2906 = vpack.c.b16 %v2788, %v2786
        %v2907 = vpack.c.b16 %v2789, %v2787
        %v2908 = vpack.c.b16 %v2792, %v2790
        %v2909 = vpack.c.b16 %v2793, %v2791
        %v2910 = vpack.c.b16 %v2796, %v2794
        %v2911 = vpack.c.b16 %v2797, %v2795
        %v2912 = vpack.c.b16 %v2800, %v2798
        %v2913 = vpack.c.b16 %v2801, %v2799
        %v2914 = vpack.c.b16 %v2804, %v2802
        %v2915 = vpack.c.b16 %v2805, %v2803
        %v2916 = vpack.c.b16 %v2808, %v2806
        %v2917 = vpack.c.b16 %v2809, %v2807
        %v2918 = vpack.c.b16 %v2812, %v2810
        %v2919 = vpack.c.b16 %v2813, %v2811
        %v2920 = vpack.c.b16 %v2816, %v2814
        %v2921 = vpack.c.b16 %v2817, %v2815
        %v2922 = vpack.c.b16 %v2820, %v2818
        %v2923 = vpack.c.b16 %v2821, %v2819
        %v2924 = vpack.c.b16 %v2824, %v2822
        %v2925 = vpack.c.b16 %v2825, %v2823
        %v2926 = vpack.c.b16 %v2828, %v2826
        %v2927 = vpack.c.b16 %v2829, %v2827
        %v2928 = vpack.c.b16 %v2832, %v2830
        %v2929 = vpack.c.b16 %v2833, %v2831
        %v2930 = vpack.c.b16 %v2836, %v2834
        %v2931 = vpack.c.b16 %v2837, %v2835
        %v2932 = vpack.c.b16 %v2840, %v2838
        %v2933 = vpack.c.b16 %v2841, %v2839
        %v2934 = vpack.c.b16 %v2844, %v2842
        %v2935 = vpack.c.b16 %v2845, %v2843
        %v2936 = vpack.c.b16 %v2848, %v2846
        %v2937 = vpack.c.b16 %v2849, %v2847
        %v2938 = vpack.c.b16 %v2852, %v2850
        %v2939 = vpack.c.b16 %v2853, %v2851
        %v2940 = vpack.c.b16 %v2856, %v2854
        %v2941 = vpack.c.b16 %v2857, %v2855
        %v2942 = vpack.c.b16 %v2860, %v2858
        %v2943 = vpack.c.b16 %v2861, %v2859
        %v2944 = vpack.c.b16 %v2864, %v2862
        %v2945 = vpack.c.b16 %v2865, %v2863
        %v2946 = vpack.c.b16 %v2868, %v2866
        %v2947 = vpack.c.b16 %v2869, %v2867
        %v2948 = vpack.c.b16 %v2872, %v2870
        %v2949 = vpack.c.b16 %v2873, %v2871
        %v2950 = vpack.c.b16 %v2876, %v2874
        %v2951 = vpack.c.b16 %v2877, %v2875
        %v2952 = vpack.c.b16 %v2880, %v2878
        %v2953 = vpack.c.b16 %v2881, %v2879
        %v2954 = vpack.c.b16 %v2884, %v2882
        %v2955 = vpack.c.b16 %v2885, %v2883
        %v2956 = vpack.c.b16 %v2888, %v2886
        %v2957 = vpack.c.b16 %v2889, %v2887
        %v2958 = vpack.c.b16 %v2892, %v2890
        %v2959 = vpack.c.b16 %v2893, %v2891
        %v2960 = vpack.c.b16 %v2896, %v2894
        %v2961 = vpack.c.b16 %v2897, %v2895
        %3026 = vmatprep.subr.bf16.mxu0 %v2899
        %3027 = vmatpush1.bf16.msra.mxu0 %v2898
        %3028 = vmatprep.subr.bf16.mxu0 %v2901
        %3029 = vmatpush1.bf16.msra.mxu0 %v2900
        %3030 = vmatprep.subr.bf16.mxu0 %v2903
        %3031 = vmatpush1.bf16.msra.mxu0 %v2902
        %3032 = vmatprep.subr.bf16.mxu0 %v2905
        %3033 = vmatpush1.bf16.msra.mxu0 %v2904
        %3034 = vmatprep.subr.bf16.mxu0 %v2907
        %3035 = vmatpush1.bf16.msra.mxu0 %v2906
        %3036 = vmatprep.subr.bf16.mxu0 %v2909
        %3037 = vmatpush1.bf16.msra.mxu0 %v2908
        %3038 = vmatprep.subr.bf16.mxu0 %v2911
        %3039 = vmatpush1.bf16.msra.mxu0 %v2910
        %3040 = vmatprep.subr.bf16.mxu0 %v2913
        %3041 = vmatpush1.bf16.msra.mxu0 %v2912
        %3042 = vmatprep.subr.bf16.mxu0 %v2915
        %3043 = vmatpush1.bf16.msra.mxu0 %v2914
        %3044 = vmatprep.subr.bf16.mxu0 %v2917
        %3045 = vmatpush1.bf16.msra.mxu0 %v2916
        %3046 = vmatprep.subr.bf16.mxu0 %v2919
        %3047 = vmatpush1.bf16.msra.mxu0 %v2918
        %3048 = vmatprep.subr.bf16.mxu0 %v2921
        %3049 = vmatpush1.bf16.msra.mxu0 %v2920
        %3050 = vmatprep.subr.bf16.mxu0 %v2923
        %3051 = vmatpush1.bf16.msra.mxu0 %v2922
        %3052 = vmatprep.subr.bf16.mxu0 %v2925
        %3053 = vmatpush1.bf16.msra.mxu0 %v2924
        %3054 = vmatprep.subr.bf16.mxu0 %v2927
        %3055 = vmatpush1.bf16.msra.mxu0 %v2926
        %3056 = vmatprep.subr.bf16.mxu0 %v2929
        %3057 = vmatpush1.bf16.msra.mxu0 %v2928
        %3058 = vmatprep.mubr.bf16.mxu0 %v2639
        %3059 = vmatmul.mubr.bf16.gmra.mrb[0].mxu0 %v2638
        %v3060 = vpop.f32.mrb[0].mxu0
        %v3061 = vadd.f32 0.0, %v3060
        %v3062 = vpop.f32.mrb[0].mxu0
        %v3063 = vadd.f32 0.0, %v3062
        %v3064 = vpop.f32.mrb[0].mxu0
        %v3065 = vpop.f32.mrb[0].mxu0
        %3066 = vdwg.mxu0
        %3067 = vmatprep.subr.bf16.mxu0 %v2931
        %3068 = vmatpush1.bf16.msra.mxu0 %v2930
        %3069 = vmatprep.subr.bf16.mxu0 %v2933
        %3070 = vmatpush1.bf16.msra.mxu0 %v2932
        %3071 = vmatprep.subr.bf16.mxu0 %v2935
        %3072 = vmatpush1.bf16.msra.mxu0 %v2934
        %3073 = vmatprep.subr.bf16.mxu0 %v2937
        %3074 = vmatpush1.bf16.msra.mxu0 %v2936
        %3075 = vmatprep.subr.bf16.mxu0 %v2939
        %3076 = vmatpush1.bf16.msra.mxu0 %v2938
        %3077 = vmatprep.subr.bf16.mxu0 %v2941
        %3078 = vmatpush1.bf16.msra.mxu0 %v2940
        %3079 = vmatprep.subr.bf16.mxu0 %v2943
        %3080 = vmatpush1.bf16.msra.mxu0 %v2942
        %3081 = vmatprep.subr.bf16.mxu0 %v2945
        %3082 = vmatpush1.bf16.msra.mxu0 %v2944
        %3083 = vmatprep.subr.bf16.mxu0 %v2947
        %3084 = vmatpush1.bf16.msra.mxu0 %v2946
        %3085 = vmatprep.subr.bf16.mxu0 %v2949
        %3086 = vmatpush1.bf16.msra.mxu0 %v2948
        %3087 = vmatprep.subr.bf16.mxu0 %v2951
        %3088 = vmatpush1.bf16.msra.mxu0 %v2950
        %3089 = vmatprep.subr.bf16.mxu0 %v2953
        %3090 = vmatpush1.bf16.msra.mxu0 %v2952
        %3091 = vmatprep.subr.bf16.mxu0 %v2955
        %3092 = vmatpush1.bf16.msra.mxu0 %v2954
        %3093 = vmatprep.subr.bf16.mxu0 %v2957
        %3094 = vmatpush1.bf16.msra.mxu0 %v2956
        %3095 = vmatprep.subr.bf16.mxu0 %v2959
        %3096 = vmatpush1.bf16.msra.mxu0 %v2958
        %3097 = vmatprep.subr.bf16.mxu0 %v2961
        %3098 = vmatpush1.bf16.msra.mxu0 %v2960
        %3099 = vmatprep.mubr.bf16.mxu0 %v2641
        %3100 = vmatmul.mubr.bf16.gmra.mrb[0].mxu0 %v2640
        %v3101 = vpop.f32.mrb[0].mxu0
        %v3102 = vadd.f32 %v3061, %v3101
        %v3103 = vpop.f32.mrb[0].mxu0
        %v3104 = vadd.f32 %v3063, %v3103
        %v3105 = vpop.f32.mrb[0].mxu0
        %v3106 = vpop.f32.mrb[0].mxu0
        %3107 = vdwg.mxu0
        %v3108 = vadd.f32 %v2062, %v3102
        %v3109 = vadd.f32 %v2063, %v3104
        %v3110 = vld [vmem:[%s16] sm:$0x3]
        %v3112 = vlaneseq
        %v3113 = vshrl.u32 %v3112, 7
        %v3114 = vsub.s32 0, %v3113
        %v3115 = vrot.slane %v3110, %v3114
        %v3116 = vlaneseq
        %v3117 = vshrl.u32 %v3116, 7
        %v3118 = vsub.s32 1, %v3117
        %v3119 = vrot.slane %v3110, %v3118
        %v3122 = vadd.f32 %v3108, %v3115
        %v3123 = vadd.f32 %v3109, %v3119
        %3124 = vst [vmem:[%s563] sm:$0x1f] %v3122
        %3125 = vst [vmem:[%s563 + $0x8] sm:$0x1f] %v3123
        %p3126 = scmp.lt.s32.totalorder %s29, 1
        %s3127 = scalar_select %p3126, %s29, 1
        %s3128 = smul.addr %s3127, 2
        %s3129 = smul.addr %s3128, 8
        %s3130 = scalar_lea.vmem %s17, %s3129
        // Predicated region
        $region93: #{_lambda_.5} parent=87 // pred_check
          %p3131 = pneg %p409
        $region94: #{_lambda_.5} parent=87 // pred_check_branch
          %3133 = sbr.rel (%p3131) target = $region96
        $region95: #{_lambda_.5} parent=87 // pred_region
          _
        $region96: #{_lambda_.5} parent=87 // pred_fallthru
          _
      $region88: #{_lambda_.5} parent=5 // pred_fallthru
        _
      %p3134 = scmp.le.s32.totalorder 2, %s24
      // Predicated region
      $region97: #{_lambda_.5} parent=5 // pred_check
        %p3135 = pneg %p3134
      $region98: #{_lambda_.5} parent=5 // pred_check_branch
        %3137 = sbr.rel (%p3135) target = $region100
      $region99: #{_lambda_.5} parent=5 // pred_region
        %s3138 = ssub.s32 %s24, 2
        // Predicated region
        $region101: #{_lambda_.5} parent=99 // pred_check
          %p3139 = pneg %p415
        $region102: #{_lambda_.5} parent=99 // pred_check_branch
          %3141 = sbr.rel (%p3139) target = $region104
        $region103: #{_lambda_.5} parent=99 // pred_region
          %p3142 = scmp.lt.s32.totalorder %s30, 1
          %s3143 = scalar_select %p3142, %s30, 1
          %s3144 = smul.addr %s3143, 2
          %s3145 = smul.addr %s3144, 8
          %s3146 = scalar_lea.vmem %s17, %s3145
        $region104: #{_lambda_.5} parent=99 // pred_fallthru
          _
      $region100: #{_lambda_.5} parent=5 // pred_fallthru
        _
    $region6: #{_lambda_.5} parent=1 // loop_footer
      %s28 = sadd.s32 1, %s24
    $region7: #{_lambda_.5} parent=1 // loop_footer_branch
      %23 = sbr.rel target = $region3
    $region8: #{_lambda_.5} parent=1 // loop_exit
      _
    %3147 = vsyncpa [#allocation3], 1
    %s3148 = scalar_lea.sflag [#allocation3], 1
    %3149 = vsyncpa %s3148, 1

// kernel: _lambda_.6
$region0: #{_lambda_.6}
  #allocation0 [shape = 'u32[]', space=smem, size = 0x4, offset = 0x4, fixed_abs, tag = 'smem constant byte address 0x4 - core index']
  #allocation1 [shape = 'u32[144,128]{1,0:T(1,128)}', space=vmem, size = 0x12000, scoped, tag = 'internal scratch']
  %s0 = inlined_call_operand.vmem [shape: f32[2,5,256], index: 0, kind: input, shape index: {}, may-alias: {0,17}]
  %s1 = inlined_call_operand.vmem [shape: f32[1,256], index: 1, kind: input, shape index: {}]
  %s2 = inlined_call_operand.vmem [shape: f32[1,256], index: 2, kind: input, shape index: {}]
  %s3 = inlined_call_operand.vmem [shape: bf16[256,256], index: 3, kind: input, shape index: {}]
  %s4 = inlined_call_operand.vmem [shape: bf16[256,256], index: 4, kind: input, shape index: {}]
  %s5 = inlined_call_operand.vmem [shape: bf16[256,256], index: 5, kind: input, shape index: {}]
  %s6 = inlined_call_operand.vmem [shape: f32[1,256], index: 6, kind: input, shape index: {}]
  %s7 = inlined_call_operand.vmem [shape: f32[1,256], index: 7, kind: input, shape index: {}]
  %s8 = inlined_call_operand.vmem [shape: f32[1,256], index: 8, kind: input, shape index: {}]
  %s9 = inlined_call_operand.vmem [shape: bf16[256,256], index: 9, kind: input, shape index: {}]
  %s10 = inlined_call_operand.vmem [shape: f32[1,256], index: 10, kind: input, shape index: {}]
  %s11 = inlined_call_operand.vmem [shape: f32[1,256], index: 11, kind: input, shape index: {}]
  %s12 = inlined_call_operand.vmem [shape: f32[1,256], index: 12, kind: input, shape index: {}]
  %s13 = inlined_call_operand.vmem [shape: bf16[256,512], index: 13, kind: input, shape index: {}]
  %s14 = inlined_call_operand.vmem [shape: f32[1,512], index: 14, kind: input, shape index: {}]
  %s15 = inlined_call_operand.vmem [shape: bf16[512,256], index: 15, kind: input, shape index: {}]
  %s16 = inlined_call_operand.vmem [shape: f32[1,256], index: 16, kind: input, shape index: {}]
  %s17 = inlined_call_operand.vmem [shape: f32[2,5,256], index: 17, kind: output, shape index: {}, may-alias: {0,17}]
  %s18 = sld [smem:[#allocation0]]
  $region101: #{_lambda_.6} parent=0
    _
  %s20 = ssub.s32 1, %s18
  %s21 = scalar_select 0, %s20, %s18
  loop: start=0, step=1, limit=4
  $region2: #{_lambda_.6} parent=0 // loop_pre_header
    _
  $region3: #{_lambda_.6} parent=0 // loop_header
    %s23 = sphi 0, %s27
    %p24 = scmp.ge.s32.totalorder %s23, 4
    %s33 = sphi 0, %s35
    %s36 = sphi 0, %s33
    %s37 = sphi 0, %s36
    %s53 = sphi 0, %s37
    %s57 = sphi 0, %s57
    %s59 = sphi 0, %s57
    %s60 = sphi 0, %s59
    %s74 = sphi 0, %s60
    %s78 = sphi 0, %s78
    %s80 = sphi 0, %s78
    %s81 = sphi 0, %s80
    %s95 = sphi 0, %s81
    %s99 = sphi 0, %s99
    %s101 = sphi 0, %s99
    %s102 = sphi 0, %s101
    %s116 = sphi 0, %s102
    %s120 = sphi 0, %s120
    %s122 = sphi 0, %s120
    %s123 = sphi 0, %s122
    %s137 = sphi 0, %s123
    %s141 = sphi 0, %s141
    %s143 = sphi 0, %s141
    %s144 = sphi 0, %s143
    %s158 = sphi 0, %s144
    %s162 = sphi 0, %s162
    %s164 = sphi 0, %s162
    %s165 = sphi 0, %s164
    %s179 = sphi 0, %s165
    %s183 = sphi 0, %s183
    %s185 = sphi 0, %s183
    %s186 = sphi 0, %s185
    %s200 = sphi 0, %s186
    %s204 = sphi 0, %s204
    %s206 = sphi 0, %s204
    %s207 = sphi 0, %s206
    %s221 = sphi 0, %s207
    %s225 = sphi 0, %s225
    %s227 = sphi 0, %s225
    %s228 = sphi 0, %s227
    %s242 = sphi 0, %s228
    %s246 = sphi 0, %s246
    %s248 = sphi 0, %s246
    %s249 = sphi 0, %s248
    %s263 = sphi 0, %s249
    %s267 = sphi 0, %s267
    %s269 = sphi 0, %s267
    %s270 = sphi 0, %s269
    %s284 = sphi 0, %s270
    %s288 = sphi 0, %s288
    %s290 = sphi 0, %s288
    %s291 = sphi 0, %s290
    %s305 = sphi 0, %s291
    %s309 = sphi 0, %s309
    %s311 = sphi 0, %s309
    %s312 = sphi 0, %s311
    %s326 = sphi 0, %s312
    %s330 = sphi 0, %s330
    %s332 = sphi 0, %s330
    %s333 = sphi 0, %s332
    %s347 = sphi 0, %s333
    %s351 = sphi 0, %s351
    %s353 = sphi 0, %s351
    %s354 = sphi 0, %s353
    %s368 = sphi 0, %s354
    %s372 = sphi 0, %s372
    %s374 = sphi 0, %s372
    %s375 = sphi 0, %s374
    %s389 = sphi 0, %s375
    %s395 = sphi 0, %s397
    %s398 = sphi 0, %s395
    %s399 = sphi 0, %s398
    %s415 = sphi 0, %s399
  $region4: #{_lambda_.6} parent=0 // loop_header_branch
    %26 = sbr.rel (%p24) target = $region8
  $region5: #{_lambda_.6} parent=0 // loop_body
    %s28 = ssub.s32 %s23, 1
    %s29 = ssub.s32 %s23, 2
    %s30 = sadd.s32 %s23, 1
    %s31 = ssub.s32 %s23, %s30
    %p32 = scmp.eq.s32.totalorder %s31, 0
    %s34 = sadd.s32 %s33, 1
    %s35 = scalar_select %p32, %s33, %s34
    %p38 = pneg %p32
    %p39 = scmp.eq.s32.totalorder %s23, 1
    %p40 = por %p38, %p39
    %p41 = scmp.ne.s32.totalorder %s33, %s36
    %p42 = scmp.eq.s32.totalorder %s23, 0
    %p43 = por %p41, %p42
    %p44 = scmp.ne.s32.totalorder %s33, %s36
    %p45 = scmp.eq.s32.totalorder %s28, 1
    %p46 = por %p44, %p45
    %p47 = scmp.ne.s32.totalorder %s36, %s37
    %p48 = scmp.eq.s32.totalorder %s28, 0
    %p49 = por %p47, %p48
    %p50 = scmp.ne.s32.totalorder %s36, %s37
    %p51 = scmp.eq.s32.totalorder %s29, 1
    %p52 = por %p50, %p51
    %p54 = scmp.ne.s32.totalorder %s37, %s53
    %p55 = scmp.eq.s32.totalorder %s29, 0
    %p56 = por %p54, %p55
    %s58 = sadd.s32 %s57, 1
    %p61 = scmp.eq.s32.totalorder %s23, 1
    %p62 = scmp.ne.s32.totalorder %s57, %s59
    %p63 = scmp.eq.s32.totalorder %s23, 0
    %p64 = por %p62, %p63
    %p65 = scmp.ne.s32.totalorder %s57, %s59
    %p66 = scmp.eq.s32.totalorder %s28, 1
    %p67 = por %p65, %p66
    %p68 = scmp.ne.s32.totalorder %s59, %s60
    %p69 = scmp.eq.s32.totalorder %s28, 0
    %p70 = por %p68, %p69
    %p71 = scmp.ne.s32.totalorder %s59, %s60
    %p72 = scmp.eq.s32.totalorder %s29, 1
    %p73 = por %p71, %p72
    %p75 = scmp.ne.s32.totalorder %s60, %s74
    %p76 = scmp.eq.s32.totalorder %s29, 0
    %p77 = por %p75, %p76
    %s79 = sadd.s32 %s78, 1
    %p82 = scmp.eq.s32.totalorder %s23, 1
    %p83 = scmp.ne.s32.totalorder %s78, %s80
    %p84 = scmp.eq.s32.totalorder %s23, 0
    %p85 = por %p83, %p84
    %p86 = scmp.ne.s32.totalorder %s78, %s80
    %p87 = scmp.eq.s32.totalorder %s28, 1
    %p88 = por %p86, %p87
    %p89 = scmp.ne.s32.totalorder %s80, %s81
    %p90 = scmp.eq.s32.totalorder %s28, 0
    %p91 = por %p89, %p90
    %p92 = scmp.ne.s32.totalorder %s80, %s81
    %p93 = scmp.eq.s32.totalorder %s29, 1
    %p94 = por %p92, %p93
    %p96 = scmp.ne.s32.totalorder %s81, %s95
    %p97 = scmp.eq.s32.totalorder %s29, 0
    %p98 = por %p96, %p97
    %s100 = sadd.s32 %s99, 1
    %p103 = scmp.eq.s32.totalorder %s23, 1
    %p104 = scmp.ne.s32.totalorder %s99, %s101
    %p105 = scmp.eq.s32.totalorder %s23, 0
    %p106 = por %p104, %p105
    %p107 = scmp.ne.s32.totalorder %s99, %s101
    %p108 = scmp.eq.s32.totalorder %s28, 1
    %p109 = por %p107, %p108
    %p110 = scmp.ne.s32.totalorder %s101, %s102
    %p111 = scmp.eq.s32.totalorder %s28, 0
    %p112 = por %p110, %p111
    %p113 = scmp.ne.s32.totalorder %s101, %s102
    %p114 = scmp.eq.s32.totalorder %s29, 1
    %p115 = por %p113, %p114
    %p117 = scmp.ne.s32.totalorder %s102, %s116
    %p118 = scmp.eq.s32.totalorder %s29, 0
    %p119 = por %p117, %p118
    %s121 = sadd.s32 %s120, 1
    %p124 = scmp.eq.s32.totalorder %s23, 1
    %p125 = scmp.ne.s32.totalorder %s120, %s122
    %p126 = scmp.eq.s32.totalorder %s23, 0
    %p127 = por %p125, %p126
    %p128 = scmp.ne.s32.totalorder %s120, %s122
    %p129 = scmp.eq.s32.totalorder %s28, 1
    %p130 = por %p128, %p129
    %p131 = scmp.ne.s32.totalorder %s122, %s123
    %p132 = scmp.eq.s32.totalorder %s28, 0
    %p133 = por %p131, %p132
    %p134 = scmp.ne.s32.totalorder %s122, %s123
    %p135 = scmp.eq.s32.totalorder %s29, 1
    %p136 = por %p134, %p135
    %p138 = scmp.ne.s32.totalorder %s123, %s137
    %p139 = scmp.eq.s32.totalorder %s29, 0
    %p140 = por %p138, %p139
    %s142 = sadd.s32 %s141, 1
    %p145 = scmp.eq.s32.totalorder %s23, 1
    %p146 = scmp.ne.s32.totalorder %s141, %s143
    %p147 = scmp.eq.s32.totalorder %s23, 0
    %p148 = por %p146, %p147
    %p149 = scmp.ne.s32.totalorder %s141, %s143
    %p150 = scmp.eq.s32.totalorder %s28, 1
    %p151 = por %p149, %p150
    %p152 = scmp.ne.s32.totalorder %s143, %s144
    %p153 = scmp.eq.s32.totalorder %s28, 0
    %p154 = por %p152, %p153
    %p155 = scmp.ne.s32.totalorder %s143, %s144
    %p156 = scmp.eq.s32.totalorder %s29, 1
    %p157 = por %p155, %p156
    %p159 = scmp.ne.s32.totalorder %s144, %s158
    %p160 = scmp.eq.s32.totalorder %s29, 0
    %p161 = por %p159, %p160
    %s163 = sadd.s32 %s162, 1
    %p166 = scmp.eq.s32.totalorder %s23, 1
    %p167 = scmp.ne.s32.totalorder %s162, %s164
    %p168 = scmp.eq.s32.totalorder %s23, 0
    %p169 = por %p167, %p168
    %p170 = scmp.ne.s32.totalorder %s162, %s164
    %p171 = scmp.eq.s32.totalorder %s28, 1
    %p172 = por %p170, %p171
    %p173 = scmp.ne.s32.totalorder %s164, %s165
    %p174 = scmp.eq.s32.totalorder %s28, 0
    %p175 = por %p173, %p174
    %p176 = scmp.ne.s32.totalorder %s164, %s165
    %p177 = scmp.eq.s32.totalorder %s29, 1
    %p178 = por %p176, %p177
    %p180 = scmp.ne.s32.totalorder %s165, %s179
    %p181 = scmp.eq.s32.totalorder %s29, 0
    %p182 = por %p180, %p181
    %s184 = sadd.s32 %s183, 1
    %p187 = scmp.eq.s32.totalorder %s23, 1
    %p188 = scmp.ne.s32.totalorder %s183, %s185
    %p189 = scmp.eq.s32.totalorder %s23, 0
    %p190 = por %p188, %p189
    %p191 = scmp.ne.s32.totalorder %s183, %s185
    %p192 = scmp.eq.s32.totalorder %s28, 1
    %p193 = por %p191, %p192
    %p194 = scmp.ne.s32.totalorder %s185, %s186
    %p195 = scmp.eq.s32.totalorder %s28, 0
    %p196 = por %p194, %p195
    %p197 = scmp.ne.s32.totalorder %s185, %s186
    %p198 = scmp.eq.s32.totalorder %s29, 1
    %p199 = por %p197, %p198
    %p201 = scmp.ne.s32.totalorder %s186, %s200
    %p202 = scmp.eq.s32.totalorder %s29, 0
    %p203 = por %p201, %p202
    %s205 = sadd.s32 %s204, 1
    %p208 = scmp.eq.s32.totalorder %s23, 1
    %p209 = scmp.ne.s32.totalorder %s204, %s206
    %p210 = scmp.eq.s32.totalorder %s23, 0
    %p211 = por %p209, %p210
    %p212 = scmp.ne.s32.totalorder %s204, %s206
    %p213 = scmp.eq.s32.totalorder %s28, 1
    %p214 = por %p212, %p213
    %p215 = scmp.ne.s32.totalorder %s206, %s207
    %p216 = scmp.eq.s32.totalorder %s28, 0
    %p217 = por %p215, %p216
    %p218 = scmp.ne.s32.totalorder %s206, %s207
    %p219 = scmp.eq.s32.totalorder %s29, 1
    %p220 = por %p218, %p219
    %p222 = scmp.ne.s32.totalorder %s207, %s221
    %p223 = scmp.eq.s32.totalorder %s29, 0
    %p224 = por %p222, %p223
    %s226 = sadd.s32 %s225, 1
    %p229 = scmp.eq.s32.totalorder %s23, 1
    %p230 = scmp.ne.s32.totalorder %s225, %s227
    %p231 = scmp.eq.s32.totalorder %s23, 0
    %p232 = por %p230, %p231
    %p233 = scmp.ne.s32.totalorder %s225, %s227
    %p234 = scmp.eq.s32.totalorder %s28, 1
    %p235 = por %p233, %p234
    %p236 = scmp.ne.s32.totalorder %s227, %s228
    %p237 = scmp.eq.s32.totalorder %s28, 0
    %p238 = por %p236, %p237
    %p239 = scmp.ne.s32.totalorder %s227, %s228
    %p240 = scmp.eq.s32.totalorder %s29, 1
    %p241 = por %p239, %p240
    %p243 = scmp.ne.s32.totalorder %s228, %s242
    %p244 = scmp.eq.s32.totalorder %s29, 0
    %p245 = por %p243, %p244
    %s247 = sadd.s32 %s246, 1
    %p250 = scmp.eq.s32.totalorder %s23, 1
    %p251 = scmp.ne.s32.totalorder %s246, %s248
    %p252 = scmp.eq.s32.totalorder %s23, 0
    %p253 = por %p251, %p252
    %p254 = scmp.ne.s32.totalorder %s246, %s248
    %p255 = scmp.eq.s32.totalorder %s28, 1
    %p256 = por %p254, %p255
    %p257 = scmp.ne.s32.totalorder %s248, %s249
    %p258 = scmp.eq.s32.totalorder %s28, 0
    %p259 = por %p257, %p258
    %p260 = scmp.ne.s32.totalorder %s248, %s249
    %p261 = scmp.eq.s32.totalorder %s29, 1
    %p262 = por %p260, %p261
    %p264 = scmp.ne.s32.totalorder %s249, %s263
    %p265 = scmp.eq.s32.totalorder %s29, 0
    %p266 = por %p264, %p265
    %s268 = sadd.s32 %s267, 1
    %p271 = scmp.eq.s32.totalorder %s23, 1
    %p272 = scmp.ne.s32.totalorder %s267, %s269
    %p273 = scmp.eq.s32.totalorder %s23, 0
    %p274 = por %p272, %p273
    %p275 = scmp.ne.s32.totalorder %s267, %s269
    %p276 = scmp.eq.s32.totalorder %s28, 1
    %p277 = por %p275, %p276
    %p278 = scmp.ne.s32.totalorder %s269, %s270
    %p279 = scmp.eq.s32.totalorder %s28, 0
    %p280 = por %p278, %p279
    %p281 = scmp.ne.s32.totalorder %s269, %s270
    %p282 = scmp.eq.s32.totalorder %s29, 1
    %p283 = por %p281, %p282
    %p285 = scmp.ne.s32.totalorder %s270, %s284
    %p286 = scmp.eq.s32.totalorder %s29, 0
    %p287 = por %p285, %p286
    %s289 = sadd.s32 %s288, 1
    %p292 = scmp.eq.s32.totalorder %s23, 1
    %p293 = scmp.ne.s32.totalorder %s288, %s290
    %p294 = scmp.eq.s32.totalorder %s23, 0
    %p295 = por %p293, %p294
    %p296 = scmp.ne.s32.totalorder %s288, %s290
    %p297 = scmp.eq.s32.totalorder %s28, 1
    %p298 = por %p296, %p297
    %p299 = scmp.ne.s32.totalorder %s290, %s291
    %p300 = scmp.eq.s32.totalorder %s28, 0
    %p301 = por %p299, %p300
    %p302 = scmp.ne.s32.totalorder %s290, %s291
    %p303 = scmp.eq.s32.totalorder %s29, 1
    %p304 = por %p302, %p303
    %p306 = scmp.ne.s32.totalorder %s291, %s305
    %p307 = scmp.eq.s32.totalorder %s29, 0
    %p308 = por %p306, %p307
    %s310 = sadd.s32 %s309, 1
    %p313 = scmp.eq.s32.totalorder %s23, 1
    %p314 = scmp.ne.s32.totalorder %s309, %s311
    %p315 = scmp.eq.s32.totalorder %s23, 0
    %p316 = por %p314, %p315
    %p317 = scmp.ne.s32.totalorder %s309, %s311
    %p318 = scmp.eq.s32.totalorder %s28, 1
    %p319 = por %p317, %p318
    %p320 = scmp.ne.s32.totalorder %s311, %s312
    %p321 = scmp.eq.s32.totalorder %s28, 0
    %p322 = por %p320, %p321
    %p323 = scmp.ne.s32.totalorder %s311, %s312
    %p324 = scmp.eq.s32.totalorder %s29, 1
    %p325 = por %p323, %p324
    %p327 = scmp.ne.s32.totalorder %s312, %s326
    %p328 = scmp.eq.s32.totalorder %s29, 0
    %p329 = por %p327, %p328
    %s331 = sadd.s32 %s330, 1
    %p334 = scmp.eq.s32.totalorder %s23, 1
    %p335 = scmp.ne.s32.totalorder %s330, %s332
    %p336 = scmp.eq.s32.totalorder %s23, 0
    %p337 = por %p335, %p336
    %p338 = scmp.ne.s32.totalorder %s330, %s332
    %p339 = scmp.eq.s32.totalorder %s28, 1
    %p340 = por %p338, %p339
    %p341 = scmp.ne.s32.totalorder %s332, %s333
    %p342 = scmp.eq.s32.totalorder %s28, 0
    %p343 = por %p341, %p342
    %p344 = scmp.ne.s32.totalorder %s332, %s333
    %p345 = scmp.eq.s32.totalorder %s29, 1
    %p346 = por %p344, %p345
    %p348 = scmp.ne.s32.totalorder %s333, %s347
    %p349 = scmp.eq.s32.totalorder %s29, 0
    %p350 = por %p348, %p349
    %s352 = sadd.s32 %s351, 1
    %p355 = scmp.eq.s32.totalorder %s23, 1
    %p356 = scmp.ne.s32.totalorder %s351, %s353
    %p357 = scmp.eq.s32.totalorder %s23, 0
    %p358 = por %p356, %p357
    %p359 = scmp.ne.s32.totalorder %s351, %s353
    %p360 = scmp.eq.s32.totalorder %s28, 1
    %p361 = por %p359, %p360
    %p362 = scmp.ne.s32.totalorder %s353, %s354
    %p363 = scmp.eq.s32.totalorder %s28, 0
    %p364 = por %p362, %p363
    %p365 = scmp.ne.s32.totalorder %s353, %s354
    %p366 = scmp.eq.s32.totalorder %s29, 1
    %p367 = por %p365, %p366
    %p369 = scmp.ne.s32.totalorder %s354, %s368
    %p370 = scmp.eq.s32.totalorder %s29, 0
    %p371 = por %p369, %p370
    %s373 = sadd.s32 %s372, 1
    %p376 = scmp.eq.s32.totalorder %s23, 1
    %p377 = scmp.ne.s32.totalorder %s372, %s374
    %p378 = scmp.eq.s32.totalorder %s23, 0
    %p379 = por %p377, %p378
    %p380 = scmp.ne.s32.totalorder %s372, %s374
    %p381 = scmp.eq.s32.totalorder %s28, 1
    %p382 = por %p380, %p381
    %p383 = scmp.ne.s32.totalorder %s374, %s375
    %p384 = scmp.eq.s32.totalorder %s28, 0
    %p385 = por %p383, %p384
    %p386 = scmp.ne.s32.totalorder %s374, %s375
    %p387 = scmp.eq.s32.totalorder %s29, 1
    %p388 = por %p386, %p387
    %p390 = scmp.ne.s32.totalorder %s375, %s389
    %p391 = scmp.eq.s32.totalorder %s29, 0
    %p392 = por %p390, %p391
    %s393 = ssub.s32 %s23, %s30
    %p394 = scmp.eq.s32.totalorder %s393, 0
    %s396 = sadd.s32 %s395, 1
    %s397 = scalar_select %p394, %s395, %s396
    %p400 = pneg %p394
    %p401 = scmp.eq.s32.totalorder %s23, 1
    %p402 = por %p400, %p401
    %p403 = scmp.ne.s32.totalorder %s395, %s398
    %p404 = scmp.eq.s32.totalorder %s23, 0
    %p405 = por %p403, %p404
    %p406 = scmp.ne.s32.totalorder %s395, %s398
    %p407 = scmp.eq.s32.totalorder %s28, 1
    %p408 = por %p406, %p407
    %p409 = scmp.ne.s32.totalorder %s398, %s399
    %p410 = scmp.eq.s32.totalorder %s28, 0
    %p411 = por %p409, %p410
    %p412 = scmp.ne.s32.totalorder %s398, %s399
    %p413 = scmp.eq.s32.totalorder %s29, 1
    %p414 = por %p412, %p413
    %p416 = scmp.ne.s32.totalorder %s399, %s415
    %p417 = scmp.eq.s32.totalorder %s29, 0
    %p418 = por %p416, %p417
    %p419 = scmp.le.s32.totalorder 1, %s23
    %p420 = scmp.lt.s32.totalorder %s23, 3
    %p421 = pnand %p419, %p420
    %p422 = pneg %p421
    // Predicated region
    $region9: #{_lambda_.6} parent=5 // pred_check
      _
    $region10: #{_lambda_.6} parent=5 // pred_check_branch
      %424 = sbr.rel (%p421) target = $region12
    $region11: #{_lambda_.6} parent=5 // pred_region
      %s425 = ssub.s32 %s23, 1
      // Predicated region
      $region13: #{_lambda_.6} parent=11 // pred_check
        %p426 = pneg %p70
      $region14: #{_lambda_.6} parent=11 // pred_check_branch
        %428 = sbr.rel (%p426) target = $region16
      $region15: #{_lambda_.6} parent=11 // pred_region
        _
      $region16: #{_lambda_.6} parent=11 // pred_fallthru
        _
      // Predicated region
      $region17: #{_lambda_.6} parent=11 // pred_check
        %p429 = pneg %p91
      $region18: #{_lambda_.6} parent=11 // pred_check_branch
        %431 = sbr.rel (%p429) target = $region20
      $region19: #{_lambda_.6} parent=11 // pred_region
        _
      $region20: #{_lambda_.6} parent=11 // pred_fallthru
        _
      // Predicated region
      $region21: #{_lambda_.6} parent=11 // pred_check
        %p432 = pneg %p112
      $region22: #{_lambda_.6} parent=11 // pred_check_branch
        %434 = sbr.rel (%p432) target = $region24
      $region23: #{_lambda_.6} parent=11 // pred_region
        _
      $region24: #{_lambda_.6} parent=11 // pred_fallthru
        _
      // Predicated region
      $region25: #{_lambda_.6} parent=11 // pred_check
        %p435 = pneg %p133
      $region26: #{_lambda_.6} parent=11 // pred_check_branch
        %437 = sbr.rel (%p435) target = $region28
      $region27: #{_lambda_.6} parent=11 // pred_region
        _
      $region28: #{_lambda_.6} parent=11 // pred_fallthru
        _
      // Predicated region
      $region29: #{_lambda_.6} parent=11 // pred_check
        %p438 = pneg %p154
      $region30: #{_lambda_.6} parent=11 // pred_check_branch
        %440 = sbr.rel (%p438) target = $region32
      $region31: #{_lambda_.6} parent=11 // pred_region
        _
      $region32: #{_lambda_.6} parent=11 // pred_fallthru
        _
      // Predicated region
      $region33: #{_lambda_.6} parent=11 // pred_check
        %p441 = pneg %p175
      $region34: #{_lambda_.6} parent=11 // pred_check_branch
        %443 = sbr.rel (%p441) target = $region36
      $region35: #{_lambda_.6} parent=11 // pred_region
        _
      $region36: #{_lambda_.6} parent=11 // pred_fallthru
        _
      // Predicated region
      $region37: #{_lambda_.6} parent=11 // pred_check
        %p444 = pneg %p196
      $region38: #{_lambda_.6} parent=11 // pred_check_branch
        %446 = sbr.rel (%p444) target = $region40
      $region39: #{_lambda_.6} parent=11 // pred_region
        _
      $region40: #{_lambda_.6} parent=11 // pred_fallthru
        _
      // Predicated region
      $region41: #{_lambda_.6} parent=11 // pred_check
        %p447 = pneg %p217
      $region42: #{_lambda_.6} parent=11 // pred_check_branch
        %449 = sbr.rel (%p447) target = $region44
      $region43: #{_lambda_.6} parent=11 // pred_region
        _
      $region44: #{_lambda_.6} parent=11 // pred_fallthru
        _
      // Predicated region
      $region45: #{_lambda_.6} parent=11 // pred_check
        %p450 = pneg %p238
      $region46: #{_lambda_.6} parent=11 // pred_check_branch
        %452 = sbr.rel (%p450) target = $region48
      $region47: #{_lambda_.6} parent=11 // pred_region
        _
      $region48: #{_lambda_.6} parent=11 // pred_fallthru
        _
      // Predicated region
      $region49: #{_lambda_.6} parent=11 // pred_check
        %p453 = pneg %p259
      $region50: #{_lambda_.6} parent=11 // pred_check_branch
        %455 = sbr.rel (%p453) target = $region52
      $region51: #{_lambda_.6} parent=11 // pred_region
        _
      $region52: #{_lambda_.6} parent=11 // pred_fallthru
        _
      // Predicated region
      $region53: #{_lambda_.6} parent=11 // pred_check
        %p456 = pneg %p280
      $region54: #{_lambda_.6} parent=11 // pred_check_branch
        %458 = sbr.rel (%p456) target = $region56
      $region55: #{_lambda_.6} parent=11 // pred_region
        _
      $region56: #{_lambda_.6} parent=11 // pred_fallthru
        _
      // Predicated region
      $region57: #{_lambda_.6} parent=11 // pred_check
        %p459 = pneg %p301
      $region58: #{_lambda_.6} parent=11 // pred_check_branch
        %461 = sbr.rel (%p459) target = $region60
      $region59: #{_lambda_.6} parent=11 // pred_region
        _
      $region60: #{_lambda_.6} parent=11 // pred_fallthru
        _
      // Predicated region
      $region61: #{_lambda_.6} parent=11 // pred_check
        %p462 = pneg %p322
      $region62: #{_lambda_.6} parent=11 // pred_check_branch
        %464 = sbr.rel (%p462) target = $region64
      $region63: #{_lambda_.6} parent=11 // pred_region
        _
      $region64: #{_lambda_.6} parent=11 // pred_fallthru
        _
      // Predicated region
      $region65: #{_lambda_.6} parent=11 // pred_check
        %p465 = pneg %p343
      $region66: #{_lambda_.6} parent=11 // pred_check_branch
        %467 = sbr.rel (%p465) target = $region68
      $region67: #{_lambda_.6} parent=11 // pred_region
        _
      $region68: #{_lambda_.6} parent=11 // pred_fallthru
        _
      // Predicated region
      $region69: #{_lambda_.6} parent=11 // pred_check
        %p468 = pneg %p364
      $region70: #{_lambda_.6} parent=11 // pred_check_branch
        %470 = sbr.rel (%p468) target = $region72
      $region71: #{_lambda_.6} parent=11 // pred_region
        _
      $region72: #{_lambda_.6} parent=11 // pred_fallthru
        _
      // Predicated region
      $region73: #{_lambda_.6} parent=11 // pred_check
        %p471 = pneg %p385
      $region74: #{_lambda_.6} parent=11 // pred_check_branch
        %473 = sbr.rel (%p471) target = $region76
      $region75: #{_lambda_.6} parent=11 // pred_region
        _
      $region76: #{_lambda_.6} parent=11 // pred_fallthru
        _
    $region12: #{_lambda_.6} parent=5 // pred_fallthru
      _
    %p474 = scmp.lt.s32.totalorder %s23, 2
    // Predicated region
    $region77: #{_lambda_.6} parent=5 // pred_check
      %p475 = pneg %p474
    $region78: #{_lambda_.6} parent=5 // pred_check_branch
      %477 = sbr.rel (%p475) target = $region80
    $region79: #{_lambda_.6} parent=5 // pred_region
      // Predicated region
      $region81: #{_lambda_.6} parent=79 // pred_check
        %p478 = pneg %p43
      $region82: #{_lambda_.6} parent=79 // pred_check_branch
        %480 = sbr.rel (%p478) target = $region84
      $region83: #{_lambda_.6} parent=79 // pred_region
        %p481 = scmp.lt.s32.totalorder %s23, 1
        %s482 = scalar_select %p481, %s23, 1
        %s483 = smul.addr %s482, 2
        %s484 = smul.addr %s483, 8
        %s485 = scalar_lea.vmem %s0, %s484
      $region84: #{_lambda_.6} parent=79 // pred_fallthru
        _
    $region80: #{_lambda_.6} parent=5 // pred_fallthru
      _
    %p486 = scmp.le.s32.totalorder 1, %s23
    %p487 = scmp.lt.s32.totalorder %s23, 3
    %p488 = pnand %p486, %p487
    %p489 = pneg %p488
    // Predicated region
    $region85: #{_lambda_.6} parent=5 // pred_check
      _
    $region86: #{_lambda_.6} parent=5 // pred_check_branch
      %491 = sbr.rel (%p488) target = $region88
    $region87: #{_lambda_.6} parent=5 // pred_region
      %s492 = ssub.s32 %s23, 1
      %p493 = scmp.lt.s32.totalorder %s28, 1
      %s494 = scalar_select %p493, %s28, 1
      %s495 = smul.addr %s494, 2
      %s496 = smul.addr %s495, 8
      %s497 = scalar_lea.vmem %s0, %s496
      %p498 = pneg %p49
      %p499 = pneg %p46
      %p500 = pneg %p70
      %p501 = pneg %p67
      %p502 = pneg %p91
      %p503 = pneg %p88
      %p504 = pneg %p112
      %p505 = pneg %p109
      %p506 = pneg %p133
      %p507 = pneg %p130
      %p508 = pneg %p154
      %p509 = pneg %p151
      %p510 = pneg %p175
      %p511 = pneg %p172
      %p512 = pneg %p196
      %p513 = pneg %p193
      %p514 = pneg %p217
      %p515 = pneg %p214
      %p516 = pneg %p238
      %p517 = pneg %p235
      %p518 = pneg %p259
      %p519 = pneg %p256
      %p520 = pneg %p280
      %p521 = pneg %p277
      %p522 = pneg %p301
      %p523 = pneg %p298
      %p524 = pneg %p322
      %p525 = pneg %p319
      %p526 = pneg %p343
      %p527 = pneg %p340
      %p528 = pneg %p364
      %p529 = pneg %p361
      %p530 = pneg %p385
      %p531 = pneg %p382
      %p532 = pneg %p411
      %p533 = pneg %p408
      %p534 = scmp.lt.s32.totalorder %s28, 1
      %s535 = scalar_select %p534, %s28, 1
      %s536 = smul.addr %s535, 2
      %s537 = smul.addr %s536, 8
      %s538 = scalar_lea.vmem %s17, %s537
      %p539 = scmp.lt.s32.totalorder %s28, 1
      %s540 = scalar_select %p539, %s28, 1
      %s541 = smul.addr %s540, 2
      %s542 = smul.addr %s541, 8
      %s543 = scalar_lea.vmem %s0, %s542
      %p544 = scmp.lt.s32.totalorder %s28, 1
      %s545 = scalar_select %p544, %s28, 1
      %s546 = smul.addr %s545, 2
      %s547 = smul.addr %s546, 8
      %s548 = scalar_lea.vmem %s17, %s547
      %v550 = vld [vmem:[%s543] sm:$0x1f]
      %v551 = vld [vmem:[%s543 + $0x8] sm:$0x1f]
      %v552 = vld [vmem:[%s1] sm:$0x3]
      %v553 = vld [vmem:[%s2] sm:$0x3]
      %vm554 = vcmask 1044480
      %v555 = vsel %vm554, %v550, 0.0
      %v556 = vsel %vm554, %v551, 0.0
      %v557 = vadd.f32 %v555, %v556
      %558 = vadd.xlane.f32.xlu0 %v557
      %v559 = vpop.xlane.xlu0 %558
      %v560 = vrcp.pop 256.0
      %v561 = vmul.f32 %v559, %v560
      %v562 = vsub.f32 %v550, %v561
      %v563 = vsub.f32 %v551, %v561
      %v564 = vmul.f32 %v562, %v562
      %v565 = vmul.f32 %v563, %v563
      %v566 = vsel %vm554, %v564, 0.0
      %v567 = vsel %vm554, %v565, 0.0
      %v568 = vadd.f32 %v566, %v567
      %569 = vadd.xlane.f32.xlu0 %v568
      %v570 = vpop.xlane.xlu0 %569
      %v571 = vmul.f32 %v570, %v560
      %v572 = vadd.f32 %v571, 1e-06
      %v573 = vrsqrt.pop %v572
      %v574 = vmul.f32 %v562, %v573
      %v575 = vmul.f32 %v563, %v573
      %v577 = vlaneseq
      %v578 = vshrl.u32 %v577, 7
      %v579 = vsub.s32 0, %v578
      %v580 = vrot.slane %v552, %v579
      %v581 = vlaneseq
      %v582 = vshrl.u32 %v581, 7
      %v583 = vsub.s32 1, %v582
      %v584 = vrot.slane %v552, %v583
      %v587 = vmul.f32 %v574, %v580
      %v588 = vmul.f32 %v575, %v584
      %v590 = vlaneseq
      %v591 = vshrl.u32 %v590, 7
      %v592 = vsub.s32 0, %v591
      %v593 = vrot.slane %v553, %v592
      %v594 = vlaneseq
      %v595 = vshrl.u32 %v594, 7
      %v596 = vsub.s32 1, %v595
      %v597 = vrot.slane %v553, %v596
      %v600 = vadd.f32 %v587, %v593
      %v601 = vadd.f32 %v588, %v597
      %v602 = vpack.c.bf16 %v600, %v600
      %v603 = vpack.c.bf16 %v601, %v601
      %v604 = vld [vmem:[%s3] sm:$0xff]
      %v605 = vld [vmem:[%s3 + $0x8] sm:$0xff]
      %v606 = vld [vmem:[%s3 + $0x10] sm:$0xff]
      %v607 = vld [vmem:[%s3 + $0x18] sm:$0xff]
      %v608 = vld [vmem:[%s3 + $0x20] sm:$0xff]
      %v609 = vld [vmem:[%s3 + $0x28] sm:$0xff]
      %v610 = vld [vmem:[%s3 + $0x30] sm:$0xff]
      %v611 = vld [vmem:[%s3 + $0x38] sm:$0xff]
      %v612 = vld [vmem:[%s3 + $0x40] sm:$0xff]
      %v613 = vld [vmem:[%s3 + $0x48] sm:$0xff]
      %v614 = vld [vmem:[%s3 + $0x50] sm:$0xff]
      %v615 = vld [vmem:[%s3 + $0x58] sm:$0xff]
      %v616 = vld [vmem:[%s3 + $0x60] sm:$0xff]
      %v617 = vld [vmem:[%s3 + $0x68] sm:$0xff]
      %v618 = vld [vmem:[%s3 + $0x70] sm:$0xff]
      %v619 = vld [vmem:[%s3 + $0x78] sm:$0xff]
      %v620 = vld [vmem:[%s3 + $0x80] sm:$0xff]
      %v621 = vld [vmem:[%s3 + $0x88] sm:$0xff]
      %v622 = vld [vmem:[%s3 + $0x90] sm:$0xff]
      %v623 = vld [vmem:[%s3 + $0x98] sm:$0xff]
      %v624 = vld [vmem:[%s3 + $0xa0] sm:$0xff]
      %v625 = vld [vmem:[%s3 + $0xa8] sm:$0xff]
      %v626 = vld [vmem:[%s3 + $0xb0] sm:$0xff]
      %v627 = vld [vmem:[%s3 + $0xb8] sm:$0xff]
      %v628 = vld [vmem:[%s3 + $0xc0] sm:$0xff]
      %v629 = vld [vmem:[%s3 + $0xc8] sm:$0xff]
      %v630 = vld [vmem:[%s3 + $0xd0] sm:$0xff]
      %v631 = vld [vmem:[%s3 + $0xd8] sm:$0xff]
      %v632 = vld [vmem:[%s3 + $0xe0] sm:$0xff]
      %v633 = vld [vmem:[%s3 + $0xe8] sm:$0xff]
      %v634 = vld [vmem:[%s3 + $0xf0] sm:$0xff]
      %v635 = vld [vmem:[%s3 + $0xf8] sm:$0xff]
      %v636 = vld [vmem:[%s6] sm:$0x3]
      %v638 = vlaneseq
      %v639 = vshrl.u32 %v638, 7
      %v640 = vsub.s32 0, %v639
      %v641 = vrot.slane %v636, %v640
      %v642 = vlaneseq
      %v643 = vshrl.u32 %v642, 7
      %v644 = vsub.s32 1, %v643
      %v645 = vrot.slane %v636, %v644
      %v680 = vunpack.c.l.b16 %v604
      %v681 = vunpack.c.h.b16 %v604
      %v682 = vunpack.c.l.b16 %v605
      %v683 = vunpack.c.h.b16 %v605
      %v684 = vunpack.c.l.b16 %v606
      %v685 = vunpack.c.h.b16 %v606
      %v686 = vunpack.c.l.b16 %v607
      %v687 = vunpack.c.h.b16 %v607
      %v688 = vunpack.c.l.b16 %v608
      %v689 = vunpack.c.h.b16 %v608
      %v690 = vunpack.c.l.b16 %v609
      %v691 = vunpack.c.h.b16 %v609
      %v692 = vunpack.c.l.b16 %v610
      %v693 = vunpack.c.h.b16 %v610
      %v694 = vunpack.c.l.b16 %v611
      %v695 = vunpack.c.h.b16 %v611
      %v696 = vunpack.c.l.b16 %v612
      %v697 = vunpack.c.h.b16 %v612
      %v698 = vunpack.c.l.b16 %v613
      %v699 = vunpack.c.h.b16 %v613
      %v700 = vunpack.c.l.b16 %v614
      %v701 = vunpack.c.h.b16 %v614
      %v702 = vunpack.c.l.b16 %v615
      %v703 = vunpack.c.h.b16 %v615
      %v704 = vunpack.c.l.b16 %v616
      %v705 = vunpack.c.h.b16 %v616
      %v706 = vunpack.c.l.b16 %v617
      %v707 = vunpack.c.h.b16 %v617
      %v708 = vunpack.c.l.b16 %v618
      %v709 = vunpack.c.h.b16 %v618
      %v710 = vunpack.c.l.b16 %v619
      %v711 = vunpack.c.h.b16 %v619
      %v712 = vunpack.c.l.b16 %v620
      %v713 = vunpack.c.h.b16 %v620
      %v714 = vunpack.c.l.b16 %v621
      %v715 = vunpack.c.h.b16 %v621
      %v716 = vunpack.c.l.b16 %v622
      %v717 = vunpack.c.h.b16 %v622
      %v718 = vunpack.c.l.b16 %v623
      %v719 = vunpack.c.h.b16 %v623
      %v720 = vunpack.c.l.b16 %v624
      %v721 = vunpack.c.h.b16 %v624
      %v722 = vunpack.c.l.b16 %v625
      %v723 = vunpack.c.h.b16 %v625
      %v724 = vunpack.c.l.b16 %v626
      %v725 = vunpack.c.h.b16 %v626
      %v726 = vunpack.c.l.b16 %v627
      %v727 = vunpack.c.h.b16 %v627
      %v728 = vunpack.c.l.b16 %v628
      %v729 = vunpack.c.h.b16 %v628
      %v730 = vunpack.c.l.b16 %v629
      %v731 = vunpack.c.h.b16 %v629
      %v732 = vunpack.c.l.b16 %v630
      %v733 = vunpack.c.h.b16 %v630
      %v734 = vunpack.c.l.b16 %v631
      %v735 = vunpack.c.h.b16 %v631
      %v736 = vunpack.c.l.b16 %v632
      %v737 = vunpack.c.h.b16 %v632
      %v738 = vunpack.c.l.b16 %v633
      %v739 = vunpack.c.h.b16 %v633
      %v740 = vunpack.c.l.b16 %v634
      %v741 = vunpack.c.h.b16 %v634
      %v742 = vunpack.c.l.b16 %v635
      %v743 = vunpack.c.h.b16 %v635
      %v744 = vpack.c.b16 %v682, %v680
      %v745 = vpack.c.b16 %v683, %v681
      %v746 = vpack.c.b16 %v686, %v684
      %v747 = vpack.c.b16 %v687, %v685
      %v748 = vpack.c.b16 %v690, %v688
      %v749 = vpack.c.b16 %v691, %v689
      %v750 = vpack.c.b16 %v694, %v692
      %v751 = vpack.c.b16 %v695, %v693
      %v752 = vpack.c.b16 %v698, %v696
      %v753 = vpack.c.b16 %v699, %v697
      %v754 = vpack.c.b16 %v702, %v700
      %v755 = vpack.c.b16 %v703, %v701
      %v756 = vpack.c.b16 %v706, %v704
      %v757 = vpack.c.b16 %v707, %v705
      %v758 = vpack.c.b16 %v710, %v708
      %v759 = vpack.c.b16 %v711, %v709
      %v760 = vpack.c.b16 %v714, %v712
      %v761 = vpack.c.b16 %v715, %v713
      %v762 = vpack.c.b16 %v718, %v716
      %v763 = vpack.c.b16 %v719, %v717
      %v764 = vpack.c.b16 %v722, %v720
      %v765 = vpack.c.b16 %v723, %v721
      %v766 = vpack.c.b16 %v726, %v724
      %v767 = vpack.c.b16 %v727, %v725
      %v768 = vpack.c.b16 %v730, %v728
      %v769 = vpack.c.b16 %v731, %v729
      %v770 = vpack.c.b16 %v734, %v732
      %v771 = vpack.c.b16 %v735, %v733
      %v772 = vpack.c.b16 %v738, %v736
      %v773 = vpack.c.b16 %v739, %v737
      %v774 = vpack.c.b16 %v742, %v740
      %v775 = vpack.c.b16 %v743, %v741
      %808 = vmatprep.subr.bf16.mxu0 %v745
      %809 = vmatpush1.bf16.msra.mxu0 %v744
      %810 = vmatprep.subr.bf16.mxu0 %v747
      %811 = vmatpush1.bf16.msra.mxu0 %v746
      %812 = vmatprep.subr.bf16.mxu0 %v749
      %813 = vmatpush1.bf16.msra.mxu0 %v748
      %814 = vmatprep.subr.bf16.mxu0 %v751
      %815 = vmatpush1.bf16.msra.mxu0 %v750
      %816 = vmatprep.subr.bf16.mxu0 %v753
      %817 = vmatpush1.bf16.msra.mxu0 %v752
      %818 = vmatprep.subr.bf16.mxu0 %v755
      %819 = vmatpush1.bf16.msra.mxu0 %v754
      %820 = vmatprep.subr.bf16.mxu0 %v757
      %821 = vmatpush1.bf16.msra.mxu0 %v756
      %822 = vmatprep.subr.bf16.mxu0 %v759
      %823 = vmatpush1.bf16.msra.mxu0 %v758
      %824 = vmatprep.subr.bf16.mxu0 %v761
      %825 = vmatpush1.bf16.msra.mxu0 %v760
      %826 = vmatprep.subr.bf16.mxu0 %v763
      %827 = vmatpush1.bf16.msra.mxu0 %v762
      %828 = vmatprep.subr.bf16.mxu0 %v765
      %829 = vmatpush1.bf16.msra.mxu0 %v764
      %830 = vmatprep.subr.bf16.mxu0 %v767
      %831 = vmatpush1.bf16.msra.mxu0 %v766
      %832 = vmatprep.subr.bf16.mxu0 %v769
      %833 = vmatpush1.bf16.msra.mxu0 %v768
      %834 = vmatprep.subr.bf16.mxu0 %v771
      %835 = vmatpush1.bf16.msra.mxu0 %v770
      %836 = vmatprep.subr.bf16.mxu0 %v773
      %837 = vmatpush1.bf16.msra.mxu0 %v772
      %838 = vmatprep.subr.bf16.mxu0 %v775
      %839 = vmatpush1.bf16.msra.mxu0 %v774
      %840 = vmatprep.mubr.bf16.mxu0 %v603
      %841 = vmatmul.mubr.bf16.gmra.mrb[0].mxu0 %v602
      %v842 = vpop.f32.mrb[0].mxu0
      %v843 = vadd.f32 %v641, %v842
      %v844 = vpop.f32.mrb[0].mxu0
      %v845 = vadd.f32 %v645, %v844
      %v846 = vpop.f32.mrb[0].mxu0
      %v847 = vpop.f32.mrb[0].mxu0
      %848 = vdwg.mxu0
      %v849 = vld [vmem:[%s4] sm:$0xff]
      %v850 = vld [vmem:[%s4 + $0x8] sm:$0xff]
      %v851 = vld [vmem:[%s4 + $0x10] sm:$0xff]
      %v852 = vld [vmem:[%s4 + $0x18] sm:$0xff]
      %v853 = vld [vmem:[%s4 + $0x20] sm:$0xff]
      %v854 = vld [vmem:[%s4 + $0x28] sm:$0xff]
      %v855 = vld [vmem:[%s4 + $0x30] sm:$0xff]
      %v856 = vld [vmem:[%s4 + $0x38] sm:$0xff]
      %v857 = vld [vmem:[%s4 + $0x40] sm:$0xff]
      %v858 = vld [vmem:[%s4 + $0x48] sm:$0xff]
      %v859 = vld [vmem:[%s4 + $0x50] sm:$0xff]
      %v860 = vld [vmem:[%s4 + $0x58] sm:$0xff]
      %v861 = vld [vmem:[%s4 + $0x60] sm:$0xff]
      %v862 = vld [vmem:[%s4 + $0x68] sm:$0xff]
      %v863 = vld [vmem:[%s4 + $0x70] sm:$0xff]
      %v864 = vld [vmem:[%s4 + $0x78] sm:$0xff]
      %v865 = vld [vmem:[%s4 + $0x80] sm:$0xff]
      %v866 = vld [vmem:[%s4 + $0x88] sm:$0xff]
      %v867 = vld [vmem:[%s4 + $0x90] sm:$0xff]
      %v868 = vld [vmem:[%s4 + $0x98] sm:$0xff]
      %v869 = vld [vmem:[%s4 + $0xa0] sm:$0xff]
      %v870 = vld [vmem:[%s4 + $0xa8] sm:$0xff]
      %v871 = vld [vmem:[%s4 + $0xb0] sm:$0xff]
      %v872 = vld [vmem:[%s4 + $0xb8] sm:$0xff]
      %v873 = vld [vmem:[%s4 + $0xc0] sm:$0xff]
      %v874 = vld [vmem:[%s4 + $0xc8] sm:$0xff]
      %v875 = vld [vmem:[%s4 + $0xd0] sm:$0xff]
      %v876 = vld [vmem:[%s4 + $0xd8] sm:$0xff]
      %v877 = vld [vmem:[%s4 + $0xe0] sm:$0xff]
      %v878 = vld [vmem:[%s4 + $0xe8] sm:$0xff]
      %v879 = vld [vmem:[%s4 + $0xf0] sm:$0xff]
      %v880 = vld [vmem:[%s4 + $0xf8] sm:$0xff]
      %v881 = vld [vmem:[%s7] sm:$0x3]
      %v883 = vlaneseq
      %v884 = vshrl.u32 %v883, 7
      %v885 = vsub.s32 0, %v884
      %v886 = vrot.slane %v881, %v885
      %v887 = vlaneseq
      %v888 = vshrl.u32 %v887, 7
      %v889 = vsub.s32 1, %v888
      %v890 = vrot.slane %v881, %v889
      %v925 = vunpack.c.l.b16 %v849
      %v926 = vunpack.c.h.b16 %v849
      %v927 = vunpack.c.l.b16 %v850
      %v928 = vunpack.c.h.b16 %v850
      %v929 = vunpack.c.l.b16 %v851
      %v930 = vunpack.c.h.b16 %v851
      %v931 = vunpack.c.l.b16 %v852
      %v932 = vunpack.c.h.b16 %v852
      %v933 = vunpack.c.l.b16 %v853
      %v934 = vunpack.c.h.b16 %v853
      %v935 = vunpack.c.l.b16 %v854
      %v936 = vunpack.c.h.b16 %v854
      %v937 = vunpack.c.l.b16 %v855
      %v938 = vunpack.c.h.b16 %v855
      %v939 = vunpack.c.l.b16 %v856
      %v940 = vunpack.c.h.b16 %v856
      %v941 = vunpack.c.l.b16 %v857
      %v942 = vunpack.c.h.b16 %v857
      %v943 = vunpack.c.l.b16 %v858
      %v944 = vunpack.c.h.b16 %v858
      %v945 = vunpack.c.l.b16 %v859
      %v946 = vunpack.c.h.b16 %v859
      %v947 = vunpack.c.l.b16 %v860
      %v948 = vunpack.c.h.b16 %v860
      %v949 = vunpack.c.l.b16 %v861
      %v950 = vunpack.c.h.b16 %v861
      %v951 = vunpack.c.l.b16 %v862
      %v952 = vunpack.c.h.b16 %v862
      %v953 = vunpack.c.l.b16 %v863
      %v954 = vunpack.c.h.b16 %v863
      %v955 = vunpack.c.l.b16 %v864
      %v956 = vunpack.c.h.b16 %v864
      %v957 = vunpack.c.l.b16 %v865
      %v958 = vunpack.c.h.b16 %v865
      %v959 = vunpack.c.l.b16 %v866
      %v960 = vunpack.c.h.b16 %v866
      %v961 = vunpack.c.l.b16 %v867
      %v962 = vunpack.c.h.b16 %v867
      %v963 = vunpack.c.l.b16 %v868
      %v964 = vunpack.c.h.b16 %v868
      %v965 = vunpack.c.l.b16 %v869
      %v966 = vunpack.c.h.b16 %v869
      %v967 = vunpack.c.l.b16 %v870
      %v968 = vunpack.c.h.b16 %v870
      %v969 = vunpack.c.l.b16 %v871
      %v970 = vunpack.c.h.b16 %v871
      %v971 = vunpack.c.l.b16 %v872
      %v972 = vunpack.c.h.b16 %v872
      %v973 = vunpack.c.l.b16 %v873
      %v974 = vunpack.c.h.b16 %v873
      %v975 = vunpack.c.l.b16 %v874
      %v976 = vunpack.c.h.b16 %v874
      %v977 = vunpack.c.l.b16 %v875
      %v978 = vunpack.c.h.b16 %v875
      %v979 = vunpack.c.l.b16 %v876
      %v980 = vunpack.c.h.b16 %v876
      %v981 = vunpack.c.l.b16 %v877
      %v982 = vunpack.c.h.b16 %v877
      %v983 = vunpack.c.l.b16 %v878
      %v984 = vunpack.c.h.b16 %v878
      %v985 = vunpack.c.l.b16 %v879
      %v986 = vunpack.c.h.b16 %v879
      %v987 = vunpack.c.l.b16 %v880
      %v988 = vunpack.c.h.b16 %v880
      %v989 = vpack.c.b16 %v927, %v925
      %v990 = vpack.c.b16 %v928, %v926
      %v991 = vpack.c.b16 %v931, %v929
      %v992 = vpack.c.b16 %v932, %v930
      %v993 = vpack.c.b16 %v935, %v933
      %v994 = vpack.c.b16 %v936, %v934
      %v995 = vpack.c.b16 %v939, %v937
      %v996 = vpack.c.b16 %v940, %v938
      %v997 = vpack.c.b16 %v943, %v941
      %v998 = vpack.c.b16 %v944, %v942
      %v999 = vpack.c.b16 %v947, %v945
      %v1000 = vpack.c.b16 %v948, %v946
      %v1001 = vpack.c.b16 %v951, %v949
      %v1002 = vpack.c.b16 %v952, %v950
      %v1003 = vpack.c.b16 %v955, %v953
      %v1004 = vpack.c.b16 %v956, %v954
      %v1005 = vpack.c.b16 %v959, %v957
      %v1006 = vpack.c.b16 %v960, %v958
      %v1007 = vpack.c.b16 %v963, %v961
      %v1008 = vpack.c.b16 %v964, %v962
      %v1009 = vpack.c.b16 %v967, %v965
      %v1010 = vpack.c.b16 %v968, %v966
      %v1011 = vpack.c.b16 %v971, %v969
      %v1012 = vpack.c.b16 %v972, %v970
      %v1013 = vpack.c.b16 %v975, %v973
      %v1014 = vpack.c.b16 %v976, %v974
      %v1015 = vpack.c.b16 %v979, %v977
      %v1016 = vpack.c.b16 %v980, %v978
      %v1017 = vpack.c.b16 %v983, %v981
      %v1018 = vpack.c.b16 %v984, %v982
      %v1019 = vpack.c.b16 %v987, %v985
      %v1020 = vpack.c.b16 %v988, %v986
      %1053 = vmatprep.subr.bf16.mxu0 %v990
      %1054 = vmatpush1.bf16.msra.mxu0 %v989
      %1055 = vmatprep.subr.bf16.mxu0 %v992
      %1056 = vmatpush1.bf16.msra.mxu0 %v991
      %1057 = vmatprep.subr.bf16.mxu0 %v994
      %1058 = vmatpush1.bf16.msra.mxu0 %v993
      %1059 = vmatprep.subr.bf16.mxu0 %v996
      %1060 = vmatpush1.bf16.msra.mxu0 %v995
      %1061 = vmatprep.subr.bf16.mxu0 %v998
      %1062 = vmatpush1.bf16.msra.mxu0 %v997
      %1063 = vmatprep.subr.bf16.mxu0 %v1000
      %1064 = vmatpush1.bf16.msra.mxu0 %v999
      %1065 = vmatprep.subr.bf16.mxu0 %v1002
      %1066 = vmatpush1.bf16.msra.mxu0 %v1001
      %1067 = vmatprep.subr.bf16.mxu0 %v1004
      %1068 = vmatpush1.bf16.msra.mxu0 %v1003
      %1069 = vmatprep.subr.bf16.mxu0 %v1006
      %1070 = vmatpush1.bf16.msra.mxu0 %v1005
      %1071 = vmatprep.subr.bf16.mxu0 %v1008
      %1072 = vmatpush1.bf16.msra.mxu0 %v1007
      %1073 = vmatprep.subr.bf16.mxu0 %v1010
      %1074 = vmatpush1.bf16.msra.mxu0 %v1009
      %1075 = vmatprep.subr.bf16.mxu0 %v1012
      %1076 = vmatpush1.bf16.msra.mxu0 %v1011
      %1077 = vmatprep.subr.bf16.mxu0 %v1014
      %1078 = vmatpush1.bf16.msra.mxu0 %v1013
      %1079 = vmatprep.subr.bf16.mxu0 %v1016
      %1080 = vmatpush1.bf16.msra.mxu0 %v1015
      %1081 = vmatprep.subr.bf16.mxu0 %v1018
      %1082 = vmatpush1.bf16.msra.mxu0 %v1017
      %1083 = vmatprep.subr.bf16.mxu0 %v1020
      %1084 = vmatpush1.bf16.msra.mxu0 %v1019
      %1085 = vmatprep.mubr.bf16.mxu0 %v603
      %1086 = vmatmul.mubr.bf16.gmra.mrb[0].mxu0 %v602
      %v1087 = vpop.f32.mrb[0].mxu0
      %v1088 = vadd.f32 %v886, %v1087
      %v1089 = vpop.f32.mrb[0].mxu0
      %v1090 = vadd.f32 %v890, %v1089
      %v1091 = vpop.f32.mrb[0].mxu0
      %v1092 = vpop.f32.mrb[0].mxu0
      %1093 = vdwg.mxu0
      %v1094 = vld [vmem:[%s5] sm:$0xff]
      %v1095 = vld [vmem:[%s5 + $0x8] sm:$0xff]
      %v1096 = vld [vmem:[%s5 + $0x10] sm:$0xff]
      %v1097 = vld [vmem:[%s5 + $0x18] sm:$0xff]
      %v1098 = vld [vmem:[%s5 + $0x20] sm:$0xff]
      %v1099 = vld [vmem:[%s5 + $0x28] sm:$0xff]
      %v1100 = vld [vmem:[%s5 + $0x30] sm:$0xff]
      %v1101 = vld [vmem:[%s5 + $0x38] sm:$0xff]
      %v1102 = vld [vmem:[%s5 + $0x40] sm:$0xff]
      %v1103 = vld [vmem:[%s5 + $0x48] sm:$0xff]
      %v1104 = vld [vmem:[%s5 + $0x50] sm:$0xff]
      %v1105 = vld [vmem:[%s5 + $0x58] sm:$0xff]
      %v1106 = vld [vmem:[%s5 + $0x60] sm:$0xff]
      %v1107 = vld [vmem:[%s5 + $0x68] sm:$0xff]
      %v1108 = vld [vmem:[%s5 + $0x70] sm:$0xff]
      %v1109 = vld [vmem:[%s5 + $0x78] sm:$0xff]
      %v1110 = vld [vmem:[%s5 + $0x80] sm:$0xff]
      %v1111 = vld [vmem:[%s5 + $0x88] sm:$0xff]
      %v1112 = vld [vmem:[%s5 + $0x90] sm:$0xff]
      %v1113 = vld [vmem:[%s5 + $0x98] sm:$0xff]
      %v1114 = vld [vmem:[%s5 + $0xa0] sm:$0xff]
      %v1115 = vld [vmem:[%s5 + $0xa8] sm:$0xff]
      %v1116 = vld [vmem:[%s5 + $0xb0] sm:$0xff]
      %v1117 = vld [vmem:[%s5 + $0xb8] sm:$0xff]
      %v1118 = vld [vmem:[%s5 + $0xc0] sm:$0xff]
      %v1119 = vld [vmem:[%s5 + $0xc8] sm:$0xff]
      %v1120 = vld [vmem:[%s5 + $0xd0] sm:$0xff]
      %v1121 = vld [vmem:[%s5 + $0xd8] sm:$0xff]
      %v1122 = vld [vmem:[%s5 + $0xe0] sm:$0xff]
      %v1123 = vld [vmem:[%s5 + $0xe8] sm:$0xff]
      %v1124 = vld [vmem:[%s5 + $0xf0] sm:$0xff]
      %v1125 = vld [vmem:[%s5 + $0xf8] sm:$0xff]
      %v1126 = vld [vmem:[%s8] sm:$0x3]
      %v1128 = vlaneseq
      %v1129 = vshrl.u32 %v1128, 7
      %v1130 = vsub.s32 0, %v1129
      %v1131 = vrot.slane %v1126, %v1130
      %v1132 = vlaneseq
      %v1133 = vshrl.u32 %v1132, 7
      %v1134 = vsub.s32 1, %v1133
      %v1135 = vrot.slane %v1126, %v1134
      %v1170 = vunpack.c.l.b16 %v1094
      %v1171 = vunpack.c.h.b16 %v1094
      %v1172 = vunpack.c.l.b16 %v1095
      %v1173 = vunpack.c.h.b16 %v1095
      %v1174 = vunpack.c.l.b16 %v1096
      %v1175 = vunpack.c.h.b16 %v1096
      %v1176 = vunpack.c.l.b16 %v1097
      %v1177 = vunpack.c.h.b16 %v1097
      %v1178 = vunpack.c.l.b16 %v1098
      %v1179 = vunpack.c.h.b16 %v1098
      %v1180 = vunpack.c.l.b16 %v1099
      %v1181 = vunpack.c.h.b16 %v1099
      %v1182 = vunpack.c.l.b16 %v1100
      %v1183 = vunpack.c.h.b16 %v1100
      %v1184 = vunpack.c.l.b16 %v1101
      %v1185 = vunpack.c.h.b16 %v1101
      %v1186 = vunpack.c.l.b16 %v1102
      %v1187 = vunpack.c.h.b16 %v1102
      %v1188 = vunpack.c.l.b16 %v1103
      %v1189 = vunpack.c.h.b16 %v1103
      %v1190 = vunpack.c.l.b16 %v1104
      %v1191 = vunpack.c.h.b16 %v1104
      %v1192 = vunpack.c.l.b16 %v1105
      %v1193 = vunpack.c.h.b16 %v1105
      %v1194 = vunpack.c.l.b16 %v1106
      %v1195 = vunpack.c.h.b16 %v1106
      %v1196 = vunpack.c.l.b16 %v1107
      %v1197 = vunpack.c.h.b16 %v1107
      %v1198 = vunpack.c.l.b16 %v1108
      %v1199 = vunpack.c.h.b16 %v1108
      %v1200 = vunpack.c.l.b16 %v1109
      %v1201 = vunpack.c.h.b16 %v1109
      %v1202 = vunpack.c.l.b16 %v1110
      %v1203 = vunpack.c.h.b16 %v1110
      %v1204 = vunpack.c.l.b16 %v1111
      %v1205 = vunpack.c.h.b16 %v1111
      %v1206 = vunpack.c.l.b16 %v1112
      %v1207 = vunpack.c.h.b16 %v1112
      %v1208 = vunpack.c.l.b16 %v1113
      %v1209 = vunpack.c.h.b16 %v1113
      %v1210 = vunpack.c.l.b16 %v1114
      %v1211 = vunpack.c.h.b16 %v1114
      %v1212 = vunpack.c.l.b16 %v1115
      %v1213 = vunpack.c.h.b16 %v1115
      %v1214 = vunpack.c.l.b16 %v1116
      %v1215 = vunpack.c.h.b16 %v1116
      %v1216 = vunpack.c.l.b16 %v1117
      %v1217 = vunpack.c.h.b16 %v1117
      %v1218 = vunpack.c.l.b16 %v1118
      %v1219 = vunpack.c.h.b16 %v1118
      %v1220 = vunpack.c.l.b16 %v1119
      %v1221 = vunpack.c.h.b16 %v1119
      %v1222 = vunpack.c.l.b16 %v1120
      %v1223 = vunpack.c.h.b16 %v1120
      %v1224 = vunpack.c.l.b16 %v1121
      %v1225 = vunpack.c.h.b16 %v1121
      %v1226 = vunpack.c.l.b16 %v1122
      %v1227 = vunpack.c.h.b16 %v1122
      %v1228 = vunpack.c.l.b16 %v1123
      %v1229 = vunpack.c.h.b16 %v1123
      %v1230 = vunpack.c.l.b16 %v1124
      %v1231 = vunpack.c.h.b16 %v1124
      %v1232 = vunpack.c.l.b16 %v1125
      %v1233 = vunpack.c.h.b16 %v1125
      %v1234 = vpack.c.b16 %v1172, %v1170
      %v1235 = vpack.c.b16 %v1173, %v1171
      %v1236 = vpack.c.b16 %v1176, %v1174
      %v1237 = vpack.c.b16 %v1177, %v1175
      %v1238 = vpack.c.b16 %v1180, %v1178
      %v1239 = vpack.c.b16 %v1181, %v1179
      %v1240 = vpack.c.b16 %v1184, %v1182
      %v1241 = vpack.c.b16 %v1185, %v1183
      %v1242 = vpack.c.b16 %v1188, %v1186
      %v1243 = vpack.c.b16 %v1189, %v1187
      %v1244 = vpack.c.b16 %v1192, %v1190
      %v1245 = vpack.c.b16 %v1193, %v1191
      %v1246 = vpack.c.b16 %v1196, %v1194
      %v1247 = vpack.c.b16 %v1197, %v1195
      %v1248 = vpack.c.b16 %v1200, %v1198
      %v1249 = vpack.c.b16 %v1201, %v1199
      %v1250 = vpack.c.b16 %v1204, %v1202
      %v1251 = vpack.c.b16 %v1205, %v1203
      %v1252 = vpack.c.b16 %v1208, %v1206
      %v1253 = vpack.c.b16 %v1209, %v1207
      %v1254 = vpack.c.b16 %v1212, %v1210
      %v1255 = vpack.c.b16 %v1213, %v1211
      %v1256 = vpack.c.b16 %v1216, %v1214
      %v1257 = vpack.c.b16 %v1217, %v1215
      %v1258 = vpack.c.b16 %v1220, %v1218
      %v1259 = vpack.c.b16 %v1221, %v1219
      %v1260 = vpack.c.b16 %v1224, %v1222
      %v1261 = vpack.c.b16 %v1225, %v1223
      %v1262 = vpack.c.b16 %v1228, %v1226
      %v1263 = vpack.c.b16 %v1229, %v1227
      %v1264 = vpack.c.b16 %v1232, %v1230
      %v1265 = vpack.c.b16 %v1233, %v1231
      %1298 = vmatprep.subr.bf16.mxu0 %v1235
      %1299 = vmatpush1.bf16.msra.mxu0 %v1234
      %1300 = vmatprep.subr.bf16.mxu0 %v1237
      %1301 = vmatpush1.bf16.msra.mxu0 %v1236
      %1302 = vmatprep.subr.bf16.mxu0 %v1239
      %1303 = vmatpush1.bf16.msra.mxu0 %v1238
      %1304 = vmatprep.subr.bf16.mxu0 %v1241
      %1305 = vmatpush1.bf16.msra.mxu0 %v1240
      %1306 = vmatprep.subr.bf16.mxu0 %v1243
      %1307 = vmatpush1.bf16.msra.mxu0 %v1242
      %1308 = vmatprep.subr.bf16.mxu0 %v1245
      %1309 = vmatpush1.bf16.msra.mxu0 %v1244
      %1310 = vmatprep.subr.bf16.mxu0 %v1247
      %1311 = vmatpush1.bf16.msra.mxu0 %v1246
      %1312 = vmatprep.subr.bf16.mxu0 %v1249
      %1313 = vmatpush1.bf16.msra.mxu0 %v1248
      %1314 = vmatprep.subr.bf16.mxu0 %v1251
      %1315 = vmatpush1.bf16.msra.mxu0 %v1250
      %1316 = vmatprep.subr.bf16.mxu0 %v1253
      %1317 = vmatpush1.bf16.msra.mxu0 %v1252
      %1318 = vmatprep.subr.bf16.mxu0 %v1255
      %1319 = vmatpush1.bf16.msra.mxu0 %v1254
      %1320 = vmatprep.subr.bf16.mxu0 %v1257
      %1321 = vmatpush1.bf16.msra.mxu0 %v1256
      %1322 = vmatprep.subr.bf16.mxu0 %v1259
      %1323 = vmatpush1.bf16.msra.mxu0 %v1258
      %1324 = vmatprep.subr.bf16.mxu0 %v1261
      %1325 = vmatpush1.bf16.msra.mxu0 %v1260
      %1326 = vmatprep.subr.bf16.mxu0 %v1263
      %1327 = vmatpush1.bf16.msra.mxu0 %v1262
      %1328 = vmatprep.subr.bf16.mxu0 %v1265
      %1329 = vmatpush1.bf16.msra.mxu0 %v1264
      %1330 = vmatprep.mubr.bf16.mxu0 %v603
      %1331 = vmatmul.mubr.bf16.gmra.mrb[0].mxu0 %v602
      %v1332 = vpop.f32.mrb[0].mxu0
      %v1333 = vadd.f32 %v1131, %v1332
      %v1334 = vpop.f32.mrb[0].mxu0
      %v1335 = vadd.f32 %v1135, %v1334
      %v1336 = vpop.f32.mrb[0].mxu0
      %v1337 = vpop.f32.mrb[0].mxu0
      %1338 = vdwg.mxu0
      %v1339 = vmul.f32 %v843, 0.125
      %v1340 = vpack.c.bf16 %v1339, %v1339
      %v1341 = vpack.c.bf16 %v1088, %v1088
      %v1342 = vpack.c.bf16 %v1333, %v1333
      %vm1343 = vcmask 523264
      %v1345 = vsel %vm1343, %v1340, 0
      %v1348 = vsel %vm1343, %v1341, 0
      %1350 = vmatprep.subr.bf16.mxu0 0
      %1351 = vmatpush1.bf16.xpose.msra.mxu0 %v1348
      %1352 = vmatprep.subr.bf16.mxu0 0
      %1353 = vmatpush1.bf16.xpose.msra.mxu0 0
      %1354 = vmatprep.subr.bf16.mxu0 0
      %1355 = vmatpush1.bf16.xpose.msra.mxu0 0
      %1356 = vmatprep.subr.bf16.mxu0 0
      %1357 = vmatpush1.bf16.xpose.msra.mxu0 0
      %1358 = vmatprep.subr.bf16.mxu0 0
      %1359 = vmatpush1.bf16.xpose.msra.mxu0 0
      %1360 = vmatprep.subr.bf16.mxu0 0
      %1361 = vmatpush1.bf16.xpose.msra.mxu0 0
      %1362 = vmatprep.subr.bf16.mxu0 0
      %1363 = vmatpush1.bf16.xpose.msra.mxu0 0
      %1364 = vmatprep.subr.bf16.mxu0 0
      %1365 = vmatpush1.bf16.xpose.msra.mxu0 0
      %1366 = vmatprep.subr.bf16.mxu0 0
      %1367 = vmatpush1.bf16.xpose.msra.mxu0 0
      %1368 = vmatprep.subr.bf16.mxu0 0
      %1369 = vmatpush1.bf16.xpose.msra.mxu0 0
      %1370 = vmatprep.subr.bf16.mxu0 0
      %1371 = vmatpush1.bf16.xpose.msra.mxu0 0
      %1372 = vmatprep.subr.bf16.mxu0 0
      %1373 = vmatpush1.bf16.xpose.msra.mxu0 0
      %1374 = vmatprep.subr.bf16.mxu0 0
      %1375 = vmatpush1.bf16.xpose.msra.mxu0 0
      %1376 = vmatprep.subr.bf16.mxu0 0
      %1377 = vmatpush1.bf16.xpose.msra.mxu0 0
      %1378 = vmatprep.subr.bf16.mxu0 0
      %1379 = vmatpush1.bf16.xpose.msra.mxu0 0
      %1380 = vmatprep.subr.bf16.mxu0 0
      %1381 = vmatpush1.bf16.xpose.msra.mxu0 0
      %1382 = vmatprep.mubr.bf16.mxu0 0
      %1383 = vmatmul.mubr.bf16.gmra.mrb[0].mxu0 %v1345
      %v1384 = vpop.f32.mrb[0].mxu0
      %v1385 = vadd.f32 0.0, %v1384
      %v1386 = vpop.f32.mrb[0].mxu0
      %v1387 = vpop.f32.mrb[0].mxu0
      %v1388 = vpop.f32.mrb[0].mxu0
      %1389 = vdwg.mxu0
      %vm1390 = vcmask 36864
      %v1391 = vsel %vm1390, %v1385, -inf
      %1392 = vmax.xlane.f32.xlu0 %v1391
      %v1393 = vpop.xlane.xlu0 %1392
      %v1394 = vsub.f32 %v1385, %v1393
      %v1395 = vmul.f32 %v1394, 1.442695
      %v1396 = vpow.pop %v1395
      %v1397 = vsel %vm1390, %v1396, 0.0
      %1398 = vadd.xlane.f32.xlu0 %v1397
      %v1399 = vpop.xlane.xlu0 %1398
      %v1400 = vrcp.pop %v1399
      %v1401 = vmul.f32 %v1396, %v1400
      %v1402 = vpack.c.bf16 %v1401, %v1401
      %vm1403 = vcmask 39936
      %v1405 = vsel %vm1403, %v1402, 0
      %vm1407 = vcmask 1041408
      %vm1408 = vcmask 1042432
      %v1409 = vsel %vm1407, 4294967295, 65535
      %v1410 = vsel %vm1408, %v1409, 0
      %v1412 = vand.u32 %v1342, %v1410
      %1414 = vmatprep.subr.bf16.mxu0 0
      %1415 = vmatpush1.bf16.msra.mxu0 %v1412
      %1416 = vmatprep.subr.bf16.mxu0 0
      %1417 = vmatpush1.bf16.msra.mxu0 0
      %1418 = vmatprep.subr.bf16.mxu0 0
      %1419 = vmatpush1.bf16.msra.mxu0 0
      %1420 = vmatprep.subr.bf16.mxu0 0
      %1421 = vmatpush1.bf16.msra.mxu0 0
      %1422 = vmatprep.subr.bf16.mxu0 0
      %1423 = vmatpush1.bf16.msra.mxu0 0
      %1424 = vmatprep.subr.bf16.mxu0 0
      %1425 = vmatpush1.bf16.msra.mxu0 0
      %1426 = vmatprep.subr.bf16.mxu0 0
      %1427 = vmatpush1.bf16.msra.mxu0 0
      %1428 = vmatprep.subr.bf16.mxu0 0
      %1429 = vmatpush1.bf16.msra.mxu0 0
      %1430 = vmatprep.subr.bf16.mxu0 0
      %1431 = vmatpush1.bf16.msra.mxu0 0
      %1432 = vmatprep.subr.bf16.mxu0 0
      %1433 = vmatpush1.bf16.msra.mxu0 0
      %1434 = vmatprep.subr.bf16.mxu0 0
      %1435 = vmatpush1.bf16.msra.mxu0 0
      %1436 = vmatprep.subr.bf16.mxu0 0
      %1437 = vmatpush1.bf16.msra.mxu0 0
      %1438 = vmatprep.subr.bf16.mxu0 0
      %1439 = vmatpush1.bf16.msra.mxu0 0
      %1440 = vmatprep.subr.bf16.mxu0 0
      %1441 = vmatpush1.bf16.msra.mxu0 0
      %1442 = vmatprep.subr.bf16.mxu0 0
      %1443 = vmatpush1.bf16.msra.mxu0 0
      %1444 = vmatprep.subr.bf16.mxu0 0
      %1445 = vmatpush1.bf16.msra.mxu0 0
      %1446 = vmatprep.mubr.bf16.mxu0 0
      %1447 = vmatmul.mubr.bf16.gmra.mrb[0].mxu0 %v1405
      %v1448 = vpop.f32.mrb[0].mxu0
      %v1449 = vadd.f32 0.0, %v1448
      %v1450 = vpop.f32.mrb[0].mxu0
      %v1451 = vpop.f32.mrb[0].mxu0
      %v1452 = vpop.f32.mrb[0].mxu0
      %1453 = vdwg.mxu0
      %1455 = vrot.lane.b32.xlu0 %v1340, 64
      %v1456 = vpop.permute.xlu0 %1455
      %1458 = vrot.lane.b32.xlu0 %v1341, 64
      %v1459 = vpop.permute.xlu0 %1458
      %v1461 = vsel %vm1343, %v1456, 0
      %v1464 = vsel %vm1343, %v1459, 0
      %1466 = vmatprep.subr.bf16.mxu0 0
      %1467 = vmatpush1.bf16.xpose.msra.mxu0 %v1464
      %1468 = vmatprep.subr.bf16.mxu0 0
      %1469 = vmatpush1.bf16.xpose.msra.mxu0 0
      %1470 = vmatprep.subr.bf16.mxu0 0
      %1471 = vmatpush1.bf16.xpose.msra.mxu0 0
      %1472 = vmatprep.subr.bf16.mxu0 0
      %1473 = vmatpush1.bf16.xpose.msra.mxu0 0
      %1474 = vmatprep.subr.bf16.mxu0 0
      %1475 = vmatpush1.bf16.xpose.msra.mxu0 0
      %1476 = vmatprep.subr.bf16.mxu0 0
      %1477 = vmatpush1.bf16.xpose.msra.mxu0 0
      %1478 = vmatprep.subr.bf16.mxu0 0
      %1479 = vmatpush1.bf16.xpose.msra.mxu0 0
      %1480 = vmatprep.subr.bf16.mxu0 0
      %1481 = vmatpush1.bf16.xpose.msra.mxu0 0
      %1482 = vmatprep.subr.bf16.mxu0 0
      %1483 = vmatpush1.bf16.xpose.msra.mxu0 0
      %1484 = vmatprep.subr.bf16.mxu0 0
      %1485 = vmatpush1.bf16.xpose.msra.mxu0 0
      %1486 = vmatprep.subr.bf16.mxu0 0
      %1487 = vmatpush1.bf16.xpose.msra.mxu0 0
      %1488 = vmatprep.subr.bf16.mxu0 0
      %1489 = vmatpush1.bf16.xpose.msra.mxu0 0
      %1490 = vmatprep.subr.bf16.mxu0 0
      %1491 = vmatpush1.bf16.xpose.msra.mxu0 0
      %1492 = vmatprep.subr.bf16.mxu0 0
      %1493 = vmatpush1.bf16.xpose.msra.mxu0 0
      %1494 = vmatprep.subr.bf16.mxu0 0
      %1495 = vmatpush1.bf16.xpose.msra.mxu0 0
      %1496 = vmatprep.subr.bf16.mxu0 0
      %1497 = vmatpush1.bf16.xpose.msra.mxu0 0
      %1498 = vmatprep.mubr.bf16.mxu0 0
      %1499 = vmatmul.mubr.bf16.gmra.mrb[0].mxu0 %v1461
      %v1500 = vpop.f32.mrb[0].mxu0
      %v1501 = vadd.f32 0.0, %v1500
      %v1502 = vpop.f32.mrb[0].mxu0
      %v1503 = vpop.f32.mrb[0].mxu0
      %v1504 = vpop.f32.mrb[0].mxu0
      %1505 = vdwg.mxu0
      %v1506 = vsel %vm1390, %v1501, -inf
      %1507 = vmax.xlane.f32.xlu0 %v1506
      %v1508 = vpop.xlane.xlu0 %1507
      %v1509 = vsub.f32 %v1501, %v1508
      %v1510 = vmul.f32 %v1509, 1.442695
      %v1511 = vpow.pop %v1510
      %v1512 = vsel %vm1390, %v1511, 0.0
      %1513 = vadd.xlane.f32.xlu0 %v1512
      %v1514 = vpop.xlane.xlu0 %1513
      %v1515 = vrcp.pop %v1514
      %v1516 = vmul.f32 %v1511, %v1515
      %v1517 = vpack.c.bf16 %v1516, %v1516
      %1519 = vrot.lane.b32.xlu0 %v1342, 64
      %v1520 = vpop.permute.xlu0 %1519
      %v1522 = vsel %vm1403, %v1517, 0
      %v1525 = vand.u32 %v1520, %v1410
      %1527 = vmatprep.subr.bf16.mxu0 0
      %1528 = vmatpush1.bf16.msra.mxu0 %v1525
      %1529 = vmatprep.subr.bf16.mxu0 0
      %1530 = vmatpush1.bf16.msra.mxu0 0
      %1531 = vmatprep.subr.bf16.mxu0 0
      %1532 = vmatpush1.bf16.msra.mxu0 0
      %1533 = vmatprep.subr.bf16.mxu0 0
      %1534 = vmatpush1.bf16.msra.mxu0 0
      %1535 = vmatprep.subr.bf16.mxu0 0
      %1536 = vmatpush1.bf16.msra.mxu0 0
      %1537 = vmatprep.subr.bf16.mxu0 0
      %1538 = vmatpush1.bf16.msra.mxu0 0
      %1539 = vmatprep.subr.bf16.mxu0 0
      %1540 = vmatpush1.bf16.msra.mxu0 0
      %1541 = vmatprep.subr.bf16.mxu0 0
      %1542 = vmatpush1.bf16.msra.mxu0 0
      %1543 = vmatprep.subr.bf16.mxu0 0
      %1544 = vmatpush1.bf16.msra.mxu0 0
      %1545 = vmatprep.subr.bf16.mxu0 0
      %1546 = vmatpush1.bf16.msra.mxu0 0
      %1547 = vmatprep.subr.bf16.mxu0 0
      %1548 = vmatpush1.bf16.msra.mxu0 0
      %1549 = vmatprep.subr.bf16.mxu0 0
      %1550 = vmatpush1.bf16.msra.mxu0 0
      %1551 = vmatprep.subr.bf16.mxu0 0
      %1552 = vmatpush1.bf16.msra.mxu0 0
      %1553 = vmatprep.subr.bf16.mxu0 0
      %1554 = vmatpush1.bf16.msra.mxu0 0
      %1555 = vmatprep.subr.bf16.mxu0 0
      %1556 = vmatpush1.bf16.msra.mxu0 0
      %1557 = vmatprep.subr.bf16.mxu0 0
      %1558 = vmatpush1.bf16.msra.mxu0 0
      %1559 = vmatprep.mubr.bf16.mxu0 0
      %1560 = vmatmul.mubr.bf16.gmra.mrb[0].mxu0 %v1522
      %v1561 = vpop.f32.mrb[0].mxu0
      %v1562 = vadd.f32 0.0, %v1561
      %v1563 = vpop.f32.mrb[0].mxu0
      %v1564 = vpop.f32.mrb[0].mxu0
      %v1565 = vpop.f32.mrb[0].mxu0
      %1566 = vdwg.mxu0
      %v1567 = vmul.f32 %v845, 0.125
      %v1568 = vpack.c.bf16 %v1567, %v1567
      %v1569 = vpack.c.bf16 %v1090, %v1090
      %v1570 = vpack.c.bf16 %v1335, %v1335
      %v1572 = vsel %vm1343, %v1568, 0
      %v1575 = vsel %vm1343, %v1569, 0
      %1577 = vmatprep.subr.bf16.mxu0 0
      %1578 = vmatpush1.bf16.xpose.msra.mxu0 %v1575
      %1579 = vmatprep.subr.bf16.mxu0 0
      %1580 = vmatpush1.bf16.xpose.msra.mxu0 0
      %1581 = vmatprep.subr.bf16.mxu0 0
      %1582 = vmatpush1.bf16.xpose.msra.mxu0 0
      %1583 = vmatprep.subr.bf16.mxu0 0
      %1584 = vmatpush1.bf16.xpose.msra.mxu0 0
      %1585 = vmatprep.subr.bf16.mxu0 0
      %1586 = vmatpush1.bf16.xpose.msra.mxu0 0
      %1587 = vmatprep.subr.bf16.mxu0 0
      %1588 = vmatpush1.bf16.xpose.msra.mxu0 0
      %1589 = vmatprep.subr.bf16.mxu0 0
      %1590 = vmatpush1.bf16.xpose.msra.mxu0 0
      %1591 = vmatprep.subr.bf16.mxu0 0
      %1592 = vmatpush1.bf16.xpose.msra.mxu0 0
      %1593 = vmatprep.subr.bf16.mxu0 0
      %1594 = vmatpush1.bf16.xpose.msra.mxu0 0
      %1595 = vmatprep.subr.bf16.mxu0 0
      %1596 = vmatpush1.bf16.xpose.msra.mxu0 0
      %1597 = vmatprep.subr.bf16.mxu0 0
      %1598 = vmatpush1.bf16.xpose.msra.mxu0 0
      %1599 = vmatprep.subr.bf16.mxu0 0
      %1600 = vmatpush1.bf16.xpose.msra.mxu0 0
      %1601 = vmatprep.subr.bf16.mxu0 0
      %1602 = vmatpush1.bf16.xpose.msra.mxu0 0
      %1603 = vmatprep.subr.bf16.mxu0 0
      %1604 = vmatpush1.bf16.xpose.msra.mxu0 0
      %1605 = vmatprep.subr.bf16.mxu0 0
      %1606 = vmatpush1.bf16.xpose.msra.mxu0 0
      %1607 = vmatprep.subr.bf16.mxu0 0
      %1608 = vmatpush1.bf16.xpose.msra.mxu0 0
      %1609 = vmatprep.mubr.bf16.mxu0 0
      %1610 = vmatmul.mubr.bf16.gmra.mrb[0].mxu0 %v1572
      %v1611 = vpop.f32.mrb[0].mxu0
      %v1612 = vadd.f32 0.0, %v1611
      %v1613 = vpop.f32.mrb[0].mxu0
      %v1614 = vpop.f32.mrb[0].mxu0
      %v1615 = vpop.f32.mrb[0].mxu0
      %1616 = vdwg.mxu0
      %v1617 = vsel %vm1390, %v1612, -inf
      %1618 = vmax.xlane.f32.xlu0 %v1617
      %v1619 = vpop.xlane.xlu0 %1618
      %v1620 = vsub.f32 %v1612, %v1619
      %v1621 = vmul.f32 %v1620, 1.442695
      %v1622 = vpow.pop %v1621
      %v1623 = vsel %vm1390, %v1622, 0.0
      %1624 = vadd.xlane.f32.xlu0 %v1623
      %v1625 = vpop.xlane.xlu0 %1624
      %v1626 = vrcp.pop %v1625
      %v1627 = vmul.f32 %v1622, %v1626
      %v1628 = vpack.c.bf16 %v1627, %v1627
      %v1630 = vsel %vm1403, %v1628, 0
      %v1633 = vand.u32 %v1570, %v1410
      %1635 = vmatprep.subr.bf16.mxu0 0
      %1636 = vmatpush1.bf16.msra.mxu0 %v1633
      %1637 = vmatprep.subr.bf16.mxu0 0
      %1638 = vmatpush1.bf16.msra.mxu0 0
      %1639 = vmatprep.subr.bf16.mxu0 0
      %1640 = vmatpush1.bf16.msra.mxu0 0
      %1641 = vmatprep.subr.bf16.mxu0 0
      %1642 = vmatpush1.bf16.msra.mxu0 0
      %1643 = vmatprep.subr.bf16.mxu0 0
      %1644 = vmatpush1.bf16.msra.mxu0 0
      %1645 = vmatprep.subr.bf16.mxu0 0
      %1646 = vmatpush1.bf16.msra.mxu0 0
      %1647 = vmatprep.subr.bf16.mxu0 0
      %1648 = vmatpush1.bf16.msra.mxu0 0
      %1649 = vmatprep.subr.bf16.mxu0 0
      %1650 = vmatpush1.bf16.msra.mxu0 0
      %1651 = vmatprep.subr.bf16.mxu0 0
      %1652 = vmatpush1.bf16.msra.mxu0 0
      %1653 = vmatprep.subr.bf16.mxu0 0
      %1654 = vmatpush1.bf16.msra.mxu0 0
      %1655 = vmatprep.subr.bf16.mxu0 0
      %1656 = vmatpush1.bf16.msra.mxu0 0
      %1657 = vmatprep.subr.bf16.mxu0 0
      %1658 = vmatpush1.bf16.msra.mxu0 0
      %1659 = vmatprep.subr.bf16.mxu0 0
      %1660 = vmatpush1.bf16.msra.mxu0 0
      %1661 = vmatprep.subr.bf16.mxu0 0
      %1662 = vmatpush1.bf16.msra.mxu0 0
      %1663 = vmatprep.subr.bf16.mxu0 0
      %1664 = vmatpush1.bf16.msra.mxu0 0
      %1665 = vmatprep.subr.bf16.mxu0 0
      %1666 = vmatpush1.bf16.msra.mxu0 0
      %1667 = vmatprep.mubr.bf16.mxu0 0
      %1668 = vmatmul.mubr.bf16.gmra.mrb[0].mxu0 %v1630
      %v1669 = vpop.f32.mrb[0].mxu0
      %v1670 = vadd.f32 0.0, %v1669
      %v1671 = vpop.f32.mrb[0].mxu0
      %v1672 = vpop.f32.mrb[0].mxu0
      %v1673 = vpop.f32.mrb[0].mxu0
      %1674 = vdwg.mxu0
      %1676 = vrot.lane.b32.xlu0 %v1568, 64
      %v1677 = vpop.permute.xlu0 %1676
      %1679 = vrot.lane.b32.xlu0 %v1569, 64
      %v1680 = vpop.permute.xlu0 %1679
      %v1682 = vsel %vm1343, %v1677, 0
      %v1685 = vsel %vm1343, %v1680, 0
      %1687 = vmatprep.subr.bf16.mxu0 0
      %1688 = vmatpush1.bf16.xpose.msra.mxu0 %v1685
      %1689 = vmatprep.subr.bf16.mxu0 0
      %1690 = vmatpush1.bf16.xpose.msra.mxu0 0
      %1691 = vmatprep.subr.bf16.mxu0 0
      %1692 = vmatpush1.bf16.xpose.msra.mxu0 0
      %1693 = vmatprep.subr.bf16.mxu0 0
      %1694 = vmatpush1.bf16.xpose.msra.mxu0 0
      %1695 = vmatprep.subr.bf16.mxu0 0
      %1696 = vmatpush1.bf16.xpose.msra.mxu0 0
      %1697 = vmatprep.subr.bf16.mxu0 0
      %1698 = vmatpush1.bf16.xpose.msra.mxu0 0
      %1699 = vmatprep.subr.bf16.mxu0 0
      %1700 = vmatpush1.bf16.xpose.msra.mxu0 0
      %1701 = vmatprep.subr.bf16.mxu0 0
      %1702 = vmatpush1.bf16.xpose.msra.mxu0 0
      %1703 = vmatprep.subr.bf16.mxu0 0
      %1704 = vmatpush1.bf16.xpose.msra.mxu0 0
      %1705 = vmatprep.subr.bf16.mxu0 0
      %1706 = vmatpush1.bf16.xpose.msra.mxu0 0
      %1707 = vmatprep.subr.bf16.mxu0 0
      %1708 = vmatpush1.bf16.xpose.msra.mxu0 0
      %1709 = vmatprep.subr.bf16.mxu0 0
      %1710 = vmatpush1.bf16.xpose.msra.mxu0 0
      %1711 = vmatprep.subr.bf16.mxu0 0
      %1712 = vmatpush1.bf16.xpose.msra.mxu0 0
      %1713 = vmatprep.subr.bf16.mxu0 0
      %1714 = vmatpush1.bf16.xpose.msra.mxu0 0
      %1715 = vmatprep.subr.bf16.mxu0 0
      %1716 = vmatpush1.bf16.xpose.msra.mxu0 0
      %1717 = vmatprep.subr.bf16.mxu0 0
      %1718 = vmatpush1.bf16.xpose.msra.mxu0 0
      %1719 = vmatprep.mubr.bf16.mxu0 0
      %1720 = vmatmul.mubr.bf16.gmra.mrb[0].mxu0 %v1682
      %v1721 = vpop.f32.mrb[0].mxu0
      %v1722 = vadd.f32 0.0, %v1721
      %v1723 = vpop.f32.mrb[0].mxu0
      %v1724 = vpop.f32.mrb[0].mxu0
      %v1725 = vpop.f32.mrb[0].mxu0
      %1726 = vdwg.mxu0
      %v1727 = vsel %vm1390, %v1722, -inf
      %1728 = vmax.xlane.f32.xlu0 %v1727
      %v1729 = vpop.xlane.xlu0 %1728
      %v1730 = vsub.f32 %v1722, %v1729
      %v1731 = vmul.f32 %v1730, 1.442695
      %v1732 = vpow.pop %v1731
      %v1733 = vsel %vm1390, %v1732, 0.0
      %1734 = vadd.xlane.f32.xlu0 %v1733
      %v1735 = vpop.xlane.xlu0 %1734
      %v1736 = vrcp.pop %v1735
      %v1737 = vmul.f32 %v1732, %v1736
      %v1738 = vpack.c.bf16 %v1737, %v1737
      %1740 = vrot.lane.b32.xlu0 %v1570, 64
      %v1741 = vpop.permute.xlu0 %1740
      %v1743 = vsel %vm1403, %v1738, 0
      %v1746 = vand.u32 %v1741, %v1410
      %1748 = vmatprep.subr.bf16.mxu0 0
      %1749 = vmatpush1.bf16.msra.mxu0 %v1746
      %1750 = vmatprep.subr.bf16.mxu0 0
      %1751 = vmatpush1.bf16.msra.mxu0 0
      %1752 = vmatprep.subr.bf16.mxu0 0
      %1753 = vmatpush1.bf16.msra.mxu0 0
      %1754 = vmatprep.subr.bf16.mxu0 0
      %1755 = vmatpush1.bf16.msra.mxu0 0
      %1756 = vmatprep.subr.bf16.mxu0 0
      %1757 = vmatpush1.bf16.msra.mxu0 0
      %1758 = vmatprep.subr.bf16.mxu0 0
      %1759 = vmatpush1.bf16.msra.mxu0 0
      %1760 = vmatprep.subr.bf16.mxu0 0
      %1761 = vmatpush1.bf16.msra.mxu0 0
      %1762 = vmatprep.subr.bf16.mxu0 0
      %1763 = vmatpush1.bf16.msra.mxu0 0
      %1764 = vmatprep.subr.bf16.mxu0 0
      %1765 = vmatpush1.bf16.msra.mxu0 0
      %1766 = vmatprep.subr.bf16.mxu0 0
      %1767 = vmatpush1.bf16.msra.mxu0 0
      %1768 = vmatprep.subr.bf16.mxu0 0
      %1769 = vmatpush1.bf16.msra.mxu0 0
      %1770 = vmatprep.subr.bf16.mxu0 0
      %1771 = vmatpush1.bf16.msra.mxu0 0
      %1772 = vmatprep.subr.bf16.mxu0 0
      %1773 = vmatpush1.bf16.msra.mxu0 0
      %1774 = vmatprep.subr.bf16.mxu0 0
      %1775 = vmatpush1.bf16.msra.mxu0 0
      %1776 = vmatprep.subr.bf16.mxu0 0
      %1777 = vmatpush1.bf16.msra.mxu0 0
      %1778 = vmatprep.subr.bf16.mxu0 0
      %1779 = vmatpush1.bf16.msra.mxu0 0
      %1780 = vmatprep.mubr.bf16.mxu0 0
      %1781 = vmatmul.mubr.bf16.gmra.mrb[0].mxu0 %v1743
      %v1782 = vpop.f32.mrb[0].mxu0
      %v1783 = vadd.f32 0.0, %v1782
      %v1784 = vpop.f32.mrb[0].mxu0
      %v1785 = vpop.f32.mrb[0].mxu0
      %v1786 = vpop.f32.mrb[0].mxu0
      %1787 = vdwg.mxu0
      %1789 = vrot.lane.b32.xlu0 %v1562, 64
      %v1790 = vpop.permute.xlu0 %1789
      %1793 = vrot.lane.b32.xlu0 %v1783, 64
      %v1794 = vpop.permute.xlu0 %1793
      %v1796 = vsel %vm1343, %v1449, %v1790
      %v1797 = vsel %vm1343, %v1670, %v1794
      %v1798 = vpack.c.bf16 %v1796, %v1796
      %v1799 = vpack.c.bf16 %v1797, %v1797
      %v1800 = vld [vmem:[%s9] sm:$0xff]
      %v1801 = vld [vmem:[%s9 + $0x8] sm:$0xff]
      %v1802 = vld [vmem:[%s9 + $0x10] sm:$0xff]
      %v1803 = vld [vmem:[%s9 + $0x18] sm:$0xff]
      %v1804 = vld [vmem:[%s9 + $0x20] sm:$0xff]
      %v1805 = vld [vmem:[%s9 + $0x28] sm:$0xff]
      %v1806 = vld [vmem:[%s9 + $0x30] sm:$0xff]
      %v1807 = vld [vmem:[%s9 + $0x38] sm:$0xff]
      %v1808 = vld [vmem:[%s9 + $0x40] sm:$0xff]
      %v1809 = vld [vmem:[%s9 + $0x48] sm:$0xff]
      %v1810 = vld [vmem:[%s9 + $0x50] sm:$0xff]
      %v1811 = vld [vmem:[%s9 + $0x58] sm:$0xff]
      %v1812 = vld [vmem:[%s9 + $0x60] sm:$0xff]
      %v1813 = vld [vmem:[%s9 + $0x68] sm:$0xff]
      %v1814 = vld [vmem:[%s9 + $0x70] sm:$0xff]
      %v1815 = vld [vmem:[%s9 + $0x78] sm:$0xff]
      %v1816 = vld [vmem:[%s9 + $0x80] sm:$0xff]
      %v1817 = vld [vmem:[%s9 + $0x88] sm:$0xff]
      %v1818 = vld [vmem:[%s9 + $0x90] sm:$0xff]
      %v1819 = vld [vmem:[%s9 + $0x98] sm:$0xff]
      %v1820 = vld [vmem:[%s9 + $0xa0] sm:$0xff]
      %v1821 = vld [vmem:[%s9 + $0xa8] sm:$0xff]
      %v1822 = vld [vmem:[%s9 + $0xb0] sm:$0xff]
      %v1823 = vld [vmem:[%s9 + $0xb8] sm:$0xff]
      %v1824 = vld [vmem:[%s9 + $0xc0] sm:$0xff]
      %v1825 = vld [vmem:[%s9 + $0xc8] sm:$0xff]
      %v1826 = vld [vmem:[%s9 + $0xd0] sm:$0xff]
      %v1827 = vld [vmem:[%s9 + $0xd8] sm:$0xff]
      %v1828 = vld [vmem:[%s9 + $0xe0] sm:$0xff]
      %v1829 = vld [vmem:[%s9 + $0xe8] sm:$0xff]
      %v1830 = vld [vmem:[%s9 + $0xf0] sm:$0xff]
      %v1831 = vld [vmem:[%s9 + $0xf8] sm:$0xff]
      %v1864 = vunpack.c.l.b16 %v1800
      %v1865 = vunpack.c.h.b16 %v1800
      %v1866 = vunpack.c.l.b16 %v1801
      %v1867 = vunpack.c.h.b16 %v1801
      %v1868 = vunpack.c.l.b16 %v1802
      %v1869 = vunpack.c.h.b16 %v1802
      %v1870 = vunpack.c.l.b16 %v1803
      %v1871 = vunpack.c.h.b16 %v1803
      %v1872 = vunpack.c.l.b16 %v1804
      %v1873 = vunpack.c.h.b16 %v1804
      %v1874 = vunpack.c.l.b16 %v1805
      %v1875 = vunpack.c.h.b16 %v1805
      %v1876 = vunpack.c.l.b16 %v1806
      %v1877 = vunpack.c.h.b16 %v1806
      %v1878 = vunpack.c.l.b16 %v1807
      %v1879 = vunpack.c.h.b16 %v1807
      %v1880 = vunpack.c.l.b16 %v1808
      %v1881 = vunpack.c.h.b16 %v1808
      %v1882 = vunpack.c.l.b16 %v1809
      %v1883 = vunpack.c.h.b16 %v1809
      %v1884 = vunpack.c.l.b16 %v1810
      %v1885 = vunpack.c.h.b16 %v1810
      %v1886 = vunpack.c.l.b16 %v1811
      %v1887 = vunpack.c.h.b16 %v1811
      %v1888 = vunpack.c.l.b16 %v1812
      %v1889 = vunpack.c.h.b16 %v1812
      %v1890 = vunpack.c.l.b16 %v1813
      %v1891 = vunpack.c.h.b16 %v1813
      %v1892 = vunpack.c.l.b16 %v1814
      %v1893 = vunpack.c.h.b16 %v1814
      %v1894 = vunpack.c.l.b16 %v1815
      %v1895 = vunpack.c.h.b16 %v1815
      %v1896 = vunpack.c.l.b16 %v1816
      %v1897 = vunpack.c.h.b16 %v1816
      %v1898 = vunpack.c.l.b16 %v1817
      %v1899 = vunpack.c.h.b16 %v1817
      %v1900 = vunpack.c.l.b16 %v1818
      %v1901 = vunpack.c.h.b16 %v1818
      %v1902 = vunpack.c.l.b16 %v1819
      %v1903 = vunpack.c.h.b16 %v1819
      %v1904 = vunpack.c.l.b16 %v1820
      %v1905 = vunpack.c.h.b16 %v1820
      %v1906 = vunpack.c.l.b16 %v1821
      %v1907 = vunpack.c.h.b16 %v1821
      %v1908 = vunpack.c.l.b16 %v1822
      %v1909 = vunpack.c.h.b16 %v1822
      %v1910 = vunpack.c.l.b16 %v1823
      %v1911 = vunpack.c.h.b16 %v1823
      %v1912 = vunpack.c.l.b16 %v1824
      %v1913 = vunpack.c.h.b16 %v1824
      %v1914 = vunpack.c.l.b16 %v1825
      %v1915 = vunpack.c.h.b16 %v1825
      %v1916 = vunpack.c.l.b16 %v1826
      %v1917 = vunpack.c.h.b16 %v1826
      %v1918 = vunpack.c.l.b16 %v1827
      %v1919 = vunpack.c.h.b16 %v1827
      %v1920 = vunpack.c.l.b16 %v1828
      %v1921 = vunpack.c.h.b16 %v1828
      %v1922 = vunpack.c.l.b16 %v1829
      %v1923 = vunpack.c.h.b16 %v1829
      %v1924 = vunpack.c.l.b16 %v1830
      %v1925 = vunpack.c.h.b16 %v1830
      %v1926 = vunpack.c.l.b16 %v1831
      %v1927 = vunpack.c.h.b16 %v1831
      %v1928 = vpack.c.b16 %v1866, %v1864
      %v1929 = vpack.c.b16 %v1867, %v1865
      %v1930 = vpack.c.b16 %v1870, %v1868
      %v1931 = vpack.c.b16 %v1871, %v1869
      %v1932 = vpack.c.b16 %v1874, %v1872
      %v1933 = vpack.c.b16 %v1875, %v1873
      %v1934 = vpack.c.b16 %v1878, %v1876
      %v1935 = vpack.c.b16 %v1879, %v1877
      %v1936 = vpack.c.b16 %v1882, %v1880
      %v1937 = vpack.c.b16 %v1883, %v1881
      %v1938 = vpack.c.b16 %v1886, %v1884
      %v1939 = vpack.c.b16 %v1887, %v1885
      %v1940 = vpack.c.b16 %v1890, %v1888
      %v1941 = vpack.c.b16 %v1891, %v1889
      %v1942 = vpack.c.b16 %v1894, %v1892
      %v1943 = vpack.c.b16 %v1895, %v1893
      %v1944 = vpack.c.b16 %v1898, %v1896
      %v1945 = vpack.c.b16 %v1899, %v1897
      %v1946 = vpack.c.b16 %v1902, %v1900
      %v1947 = vpack.c.b16 %v1903, %v1901
      %v1948 = vpack.c.b16 %v1906, %v1904
      %v1949 = vpack.c.b16 %v1907, %v1905
      %v1950 = vpack.c.b16 %v1910, %v1908
      %v1951 = vpack.c.b16 %v1911, %v1909
      %v1952 = vpack.c.b16 %v1914, %v1912
      %v1953 = vpack.c.b16 %v1915, %v1913
      %v1954 = vpack.c.b16 %v1918, %v1916
      %v1955 = vpack.c.b16 %v1919, %v1917
      %v1956 = vpack.c.b16 %v1922, %v1920
      %v1957 = vpack.c.b16 %v1923, %v1921
      %v1958 = vpack.c.b16 %v1926, %v1924
      %v1959 = vpack.c.b16 %v1927, %v1925
      %1992 = vmatprep.subr.bf16.mxu0 %v1929
      %1993 = vmatpush1.bf16.msra.mxu0 %v1928
      %1994 = vmatprep.subr.bf16.mxu0 %v1931
      %1995 = vmatpush1.bf16.msra.mxu0 %v1930
      %1996 = vmatprep.subr.bf16.mxu0 %v1933
      %1997 = vmatpush1.bf16.msra.mxu0 %v1932
      %1998 = vmatprep.subr.bf16.mxu0 %v1935
      %1999 = vmatpush1.bf16.msra.mxu0 %v1934
      %2000 = vmatprep.subr.bf16.mxu0 %v1937
      %2001 = vmatpush1.bf16.msra.mxu0 %v1936
      %2002 = vmatprep.subr.bf16.mxu0 %v1939
      %2003 = vmatpush1.bf16.msra.mxu0 %v1938
      %2004 = vmatprep.subr.bf16.mxu0 %v1941
      %2005 = vmatpush1.bf16.msra.mxu0 %v1940
      %2006 = vmatprep.subr.bf16.mxu0 %v1943
      %2007 = vmatpush1.bf16.msra.mxu0 %v1942
      %2008 = vmatprep.subr.bf16.mxu0 %v1945
      %2009 = vmatpush1.bf16.msra.mxu0 %v1944
      %2010 = vmatprep.subr.bf16.mxu0 %v1947
      %2011 = vmatpush1.bf16.msra.mxu0 %v1946
      %2012 = vmatprep.subr.bf16.mxu0 %v1949
      %2013 = vmatpush1.bf16.msra.mxu0 %v1948
      %2014 = vmatprep.subr.bf16.mxu0 %v1951
      %2015 = vmatpush1.bf16.msra.mxu0 %v1950
      %2016 = vmatprep.subr.bf16.mxu0 %v1953
      %2017 = vmatpush1.bf16.msra.mxu0 %v1952
      %2018 = vmatprep.subr.bf16.mxu0 %v1955
      %2019 = vmatpush1.bf16.msra.mxu0 %v1954
      %2020 = vmatprep.subr.bf16.mxu0 %v1957
      %2021 = vmatpush1.bf16.msra.mxu0 %v1956
      %2022 = vmatprep.subr.bf16.mxu0 %v1959
      %2023 = vmatpush1.bf16.msra.mxu0 %v1958
      %2024 = vmatprep.mubr.bf16.mxu0 %v1799
      %2025 = vmatmul.mubr.bf16.gmra.mrb[0].mxu0 %v1798
      %v2026 = vpop.f32.mrb[0].mxu0
      %v2027 = vadd.f32 0.0, %v2026
      %v2028 = vpop.f32.mrb[0].mxu0
      %v2029 = vadd.f32 0.0, %v2028
      %v2030 = vpop.f32.mrb[0].mxu0
      %v2031 = vpop.f32.mrb[0].mxu0
      %2032 = vdwg.mxu0
      %v2033 = vadd.f32 %v550, %v2027
      %v2034 = vadd.f32 %v551, %v2029
      %v2035 = vld [vmem:[%s10] sm:$0x3]
      %v2037 = vlaneseq
      %v2038 = vshrl.u32 %v2037, 7
      %v2039 = vsub.s32 0, %v2038
      %v2040 = vrot.slane %v2035, %v2039
      %v2041 = vlaneseq
      %v2042 = vshrl.u32 %v2041, 7
      %v2043 = vsub.s32 1, %v2042
      %v2044 = vrot.slane %v2035, %v2043
      %v2047 = vadd.f32 %v2033, %v2040
      %v2048 = vadd.f32 %v2034, %v2044
      %v2049 = vld [vmem:[%s11] sm:$0x3]
      %v2050 = vld [vmem:[%s12] sm:$0x3]
      %v2051 = vsel %vm554, %v2047, 0.0
      %v2052 = vsel %vm554, %v2048, 0.0
      %v2053 = vadd.f32 %v2051, %v2052
      %2054 = vadd.xlane.f32.xlu0 %v2053
      %v2055 = vpop.xlane.xlu0 %2054
      %v2056 = vmul.f32 %v2055, %v560
      %v2057 = vsub.f32 %v2047, %v2056
      %v2058 = vsub.f32 %v2048, %v2056
      %v2059 = vmul.f32 %v2057, %v2057
      %v2060 = vmul.f32 %v2058, %v2058
      %v2061 = vsel %vm554, %v2059, 0.0
      %v2062 = vsel %vm554, %v2060, 0.0
      %v2063 = vadd.f32 %v2061, %v2062
      %2064 = vadd.xlane.f32.xlu0 %v2063
      %v2065 = vpop.xlane.xlu0 %2064
      %v2066 = vmul.f32 %v2065, %v560
      %v2067 = vadd.f32 %v2066, 1e-06
      %v2068 = vrsqrt.pop %v2067
      %v2069 = vmul.f32 %v2057, %v2068
      %v2070 = vmul.f32 %v2058, %v2068
      %v2072 = vlaneseq
      %v2073 = vshrl.u32 %v2072, 7
      %v2074 = vsub.s32 0, %v2073
      %v2075 = vrot.slane %v2049, %v2074
      %v2076 = vlaneseq
      %v2077 = vshrl.u32 %v2076, 7
      %v2078 = vsub.s32 1, %v2077
      %v2079 = vrot.slane %v2049, %v2078
      %v2082 = vmul.f32 %v2069, %v2075
      %v2083 = vmul.f32 %v2070, %v2079
      %v2085 = vlaneseq
      %v2086 = vshrl.u32 %v2085, 7
      %v2087 = vsub.s32 0, %v2086
      %v2088 = vrot.slane %v2050, %v2087
      %v2089 = vlaneseq
      %v2090 = vshrl.u32 %v2089, 7
      %v2091 = vsub.s32 1, %v2090
      %v2092 = vrot.slane %v2050, %v2091
      %v2095 = vadd.f32 %v2082, %v2088
      %v2096 = vadd.f32 %v2083, %v2092
      %v2097 = vpack.c.bf16 %v2095, %v2095
      %v2098 = vpack.c.bf16 %v2096, %v2096
      %v2099 = vld [vmem:[%s13] sm:$0xff]
      %v2100 = vld [vmem:[%s13 + $0x8] sm:$0xff]
      %v2101 = vld [vmem:[%s13 + $0x10] sm:$0xff]
      %v2102 = vld [vmem:[%s13 + $0x18] sm:$0xff]
      %v2103 = vld [vmem:[%s13 + $0x20] sm:$0xff]
      %v2104 = vld [vmem:[%s13 + $0x28] sm:$0xff]
      %v2105 = vld [vmem:[%s13 + $0x30] sm:$0xff]
      %v2106 = vld [vmem:[%s13 + $0x38] sm:$0xff]
      %v2107 = vld [vmem:[%s13 + $0x40] sm:$0xff]
      %v2108 = vld [vmem:[%s13 + $0x48] sm:$0xff]
      %v2109 = vld [vmem:[%s13 + $0x50] sm:$0xff]
      %v2110 = vld [vmem:[%s13 + $0x58] sm:$0xff]
      %v2111 = vld [vmem:[%s13 + $0x60] sm:$0xff]
      %v2112 = vld [vmem:[%s13 + $0x68] sm:$0xff]
      %v2113 = vld [vmem:[%s13 + $0x70] sm:$0xff]
      %v2114 = vld [vmem:[%s13 + $0x78] sm:$0xff]
      %v2115 = vld [vmem:[%s13 + $0x80] sm:$0xff]
      %v2116 = vld [vmem:[%s13 + $0x88] sm:$0xff]
      %v2117 = vld [vmem:[%s13 + $0x90] sm:$0xff]
      %v2118 = vld [vmem:[%s13 + $0x98] sm:$0xff]
      %v2119 = vld [vmem:[%s13 + $0xa0] sm:$0xff]
      %v2120 = vld [vmem:[%s13 + $0xa8] sm:$0xff]
      %v2121 = vld [vmem:[%s13 + $0xb0] sm:$0xff]
      %v2122 = vld [vmem:[%s13 + $0xb8] sm:$0xff]
      %v2123 = vld [vmem:[%s13 + $0xc0] sm:$0xff]
      %v2124 = vld [vmem:[%s13 + $0xc8] sm:$0xff]
      %v2125 = vld [vmem:[%s13 + $0xd0] sm:$0xff]
      %v2126 = vld [vmem:[%s13 + $0xd8] sm:$0xff]
      %v2127 = vld [vmem:[%s13 + $0xe0] sm:$0xff]
      %v2128 = vld [vmem:[%s13 + $0xe8] sm:$0xff]
      %v2129 = vld [vmem:[%s13 + $0xf0] sm:$0xff]
      %v2130 = vld [vmem:[%s13 + $0xf8] sm:$0xff]
      %v2131 = vld [vmem:[%s13 + $0x100] sm:$0xff]
      %v2132 = vld [vmem:[%s13 + $0x108] sm:$0xff]
      %v2133 = vld [vmem:[%s13 + $0x110] sm:$0xff]
      %v2134 = vld [vmem:[%s13 + $0x118] sm:$0xff]
      %v2135 = vld [vmem:[%s13 + $0x120] sm:$0xff]
      %v2136 = vld [vmem:[%s13 + $0x128] sm:$0xff]
      %v2137 = vld [vmem:[%s13 + $0x130] sm:$0xff]
      %v2138 = vld [vmem:[%s13 + $0x138] sm:$0xff]
      %v2139 = vld [vmem:[%s13 + $0x140] sm:$0xff]
      %v2140 = vld [vmem:[%s13 + $0x148] sm:$0xff]
      %v2141 = vld [vmem:[%s13 + $0x150] sm:$0xff]
      %v2142 = vld [vmem:[%s13 + $0x158] sm:$0xff]
      %v2143 = vld [vmem:[%s13 + $0x160] sm:$0xff]
      %v2144 = vld [vmem:[%s13 + $0x168] sm:$0xff]
      %v2145 = vld [vmem:[%s13 + $0x170] sm:$0xff]
      %v2146 = vld [vmem:[%s13 + $0x178] sm:$0xff]
      %v2147 = vld [vmem:[%s13 + $0x180] sm:$0xff]
      %v2148 = vld [vmem:[%s13 + $0x188] sm:$0xff]
      %v2149 = vld [vmem:[%s13 + $0x190] sm:$0xff]
      %v2150 = vld [vmem:[%s13 + $0x198] sm:$0xff]
      %v2151 = vld [vmem:[%s13 + $0x1a0] sm:$0xff]
      %v2152 = vld [vmem:[%s13 + $0x1a8] sm:$0xff]
      %v2153 = vld [vmem:[%s13 + $0x1b0] sm:$0xff]
      %v2154 = vld [vmem:[%s13 + $0x1b8] sm:$0xff]
      %v2155 = vld [vmem:[%s13 + $0x1c0] sm:$0xff]
      %v2156 = vld [vmem:[%s13 + $0x1c8] sm:$0xff]
      %v2157 = vld [vmem:[%s13 + $0x1d0] sm:$0xff]
      %v2158 = vld [vmem:[%s13 + $0x1d8] sm:$0xff]
      %v2159 = vld [vmem:[%s13 + $0x1e0] sm:$0xff]
      %v2160 = vld [vmem:[%s13 + $0x1e8] sm:$0xff]
      %v2161 = vld [vmem:[%s13 + $0x1f0] sm:$0xff]
      %v2162 = vld [vmem:[%s13 + $0x1f8] sm:$0xff]
      %v2163 = vld [vmem:[%s14] sm:$0xf]
      %v2165 = vlaneseq
      %v2166 = vshrl.u32 %v2165, 7
      %v2167 = vsub.s32 0, %v2166
      %v2168 = vrot.slane %v2163, %v2167
      %v2169 = vlaneseq
      %v2170 = vshrl.u32 %v2169, 7
      %v2171 = vsub.s32 1, %v2170
      %v2172 = vrot.slane %v2163, %v2171
      %v2173 = vlaneseq
      %v2174 = vshrl.u32 %v2173, 7
      %v2175 = vsub.s32 2, %v2174
      %v2176 = vrot.slane %v2163, %v2175
      %v2177 = vlaneseq
      %v2178 = vshrl.u32 %v2177, 7
      %v2179 = vsub.s32 3, %v2178
      %v2180 = vrot.slane %v2163, %v2179
      %v2249 = vunpack.c.l.b16 %v2099
      %v2250 = vunpack.c.h.b16 %v2099
      %v2251 = vunpack.c.l.b16 %v2100
      %v2252 = vunpack.c.h.b16 %v2100
      %v2253 = vunpack.c.l.b16 %v2101
      %v2254 = vunpack.c.h.b16 %v2101
      %v2255 = vunpack.c.l.b16 %v2102
      %v2256 = vunpack.c.h.b16 %v2102
      %v2257 = vunpack.c.l.b16 %v2103
      %v2258 = vunpack.c.h.b16 %v2103
      %v2259 = vunpack.c.l.b16 %v2104
      %v2260 = vunpack.c.h.b16 %v2104
      %v2261 = vunpack.c.l.b16 %v2105
      %v2262 = vunpack.c.h.b16 %v2105
      %v2263 = vunpack.c.l.b16 %v2106
      %v2264 = vunpack.c.h.b16 %v2106
      %v2265 = vunpack.c.l.b16 %v2107
      %v2266 = vunpack.c.h.b16 %v2107
      %v2267 = vunpack.c.l.b16 %v2108
      %v2268 = vunpack.c.h.b16 %v2108
      %v2269 = vunpack.c.l.b16 %v2109
      %v2270 = vunpack.c.h.b16 %v2109
      %v2271 = vunpack.c.l.b16 %v2110
      %v2272 = vunpack.c.h.b16 %v2110
      %v2273 = vunpack.c.l.b16 %v2111
      %v2274 = vunpack.c.h.b16 %v2111
      %v2275 = vunpack.c.l.b16 %v2112
      %v2276 = vunpack.c.h.b16 %v2112
      %v2277 = vunpack.c.l.b16 %v2113
      %v2278 = vunpack.c.h.b16 %v2113
      %v2279 = vunpack.c.l.b16 %v2114
      %v2280 = vunpack.c.h.b16 %v2114
      %v2281 = vunpack.c.l.b16 %v2115
      %v2282 = vunpack.c.h.b16 %v2115
      %v2283 = vunpack.c.l.b16 %v2116
      %v2284 = vunpack.c.h.b16 %v2116
      %v2285 = vunpack.c.l.b16 %v2117
      %v2286 = vunpack.c.h.b16 %v2117
      %v2287 = vunpack.c.l.b16 %v2118
      %v2288 = vunpack.c.h.b16 %v2118
      %v2289 = vunpack.c.l.b16 %v2119
      %v2290 = vunpack.c.h.b16 %v2119
      %v2291 = vunpack.c.l.b16 %v2120
      %v2292 = vunpack.c.h.b16 %v2120
      %v2293 = vunpack.c.l.b16 %v2121
      %v2294 = vunpack.c.h.b16 %v2121
      %v2295 = vunpack.c.l.b16 %v2122
      %v2296 = vunpack.c.h.b16 %v2122
      %v2297 = vunpack.c.l.b16 %v2123
      %v2298 = vunpack.c.h.b16 %v2123
      %v2299 = vunpack.c.l.b16 %v2124
      %v2300 = vunpack.c.h.b16 %v2124
      %v2301 = vunpack.c.l.b16 %v2125
      %v2302 = vunpack.c.h.b16 %v2125
      %v2303 = vunpack.c.l.b16 %v2126
      %v2304 = vunpack.c.h.b16 %v2126
      %v2305 = vunpack.c.l.b16 %v2127
      %v2306 = vunpack.c.h.b16 %v2127
      %v2307 = vunpack.c.l.b16 %v2128
      %v2308 = vunpack.c.h.b16 %v2128
      %v2309 = vunpack.c.l.b16 %v2129
      %v2310 = vunpack.c.h.b16 %v2129
      %v2311 = vunpack.c.l.b16 %v2130
      %v2312 = vunpack.c.h.b16 %v2130
      %v2313 = vunpack.c.l.b16 %v2131
      %v2314 = vunpack.c.h.b16 %v2131
      %v2315 = vunpack.c.l.b16 %v2132
      %v2316 = vunpack.c.h.b16 %v2132
      %v2317 = vunpack.c.l.b16 %v2133
      %v2318 = vunpack.c.h.b16 %v2133
      %v2319 = vunpack.c.l.b16 %v2134
      %v2320 = vunpack.c.h.b16 %v2134
      %v2321 = vunpack.c.l.b16 %v2135
      %v2322 = vunpack.c.h.b16 %v2135
      %v2323 = vunpack.c.l.b16 %v2136
      %v2324 = vunpack.c.h.b16 %v2136
      %v2325 = vunpack.c.l.b16 %v2137
      %v2326 = vunpack.c.h.b16 %v2137
      %v2327 = vunpack.c.l.b16 %v2138
      %v2328 = vunpack.c.h.b16 %v2138
      %v2329 = vunpack.c.l.b16 %v2139
      %v2330 = vunpack.c.h.b16 %v2139
      %v2331 = vunpack.c.l.b16 %v2140
      %v2332 = vunpack.c.h.b16 %v2140
      %v2333 = vunpack.c.l.b16 %v2141
      %v2334 = vunpack.c.h.b16 %v2141
      %v2335 = vunpack.c.l.b16 %v2142
      %v2336 = vunpack.c.h.b16 %v2142
      %v2337 = vunpack.c.l.b16 %v2143
      %v2338 = vunpack.c.h.b16 %v2143
      %v2339 = vunpack.c.l.b16 %v2144
      %v2340 = vunpack.c.h.b16 %v2144
      %v2341 = vunpack.c.l.b16 %v2145
      %v2342 = vunpack.c.h.b16 %v2145
      %v2343 = vunpack.c.l.b16 %v2146
      %v2344 = vunpack.c.h.b16 %v2146
      %v2345 = vunpack.c.l.b16 %v2147
      %v2346 = vunpack.c.h.b16 %v2147
      %v2347 = vunpack.c.l.b16 %v2148
      %v2348 = vunpack.c.h.b16 %v2148
      %v2349 = vunpack.c.l.b16 %v2149
      %v2350 = vunpack.c.h.b16 %v2149
      %v2351 = vunpack.c.l.b16 %v2150
      %v2352 = vunpack.c.h.b16 %v2150
      %v2353 = vunpack.c.l.b16 %v2151
      %v2354 = vunpack.c.h.b16 %v2151
      %v2355 = vunpack.c.l.b16 %v2152
      %v2356 = vunpack.c.h.b16 %v2152
      %v2357 = vunpack.c.l.b16 %v2153
      %v2358 = vunpack.c.h.b16 %v2153
      %v2359 = vunpack.c.l.b16 %v2154
      %v2360 = vunpack.c.h.b16 %v2154
      %v2361 = vunpack.c.l.b16 %v2155
      %v2362 = vunpack.c.h.b16 %v2155
      %v2363 = vunpack.c.l.b16 %v2156
      %v2364 = vunpack.c.h.b16 %v2156
      %v2365 = vunpack.c.l.b16 %v2157
      %v2366 = vunpack.c.h.b16 %v2157
      %v2367 = vunpack.c.l.b16 %v2158
      %v2368 = vunpack.c.h.b16 %v2158
      %v2369 = vunpack.c.l.b16 %v2159
      %v2370 = vunpack.c.h.b16 %v2159
      %v2371 = vunpack.c.l.b16 %v2160
      %v2372 = vunpack.c.h.b16 %v2160
      %v2373 = vunpack.c.l.b16 %v2161
      %v2374 = vunpack.c.h.b16 %v2161
      %v2375 = vunpack.c.l.b16 %v2162
      %v2376 = vunpack.c.h.b16 %v2162
      %v2377 = vpack.c.b16 %v2253, %v2249
      %v2378 = vpack.c.b16 %v2254, %v2250
      %v2379 = vpack.c.b16 %v2255, %v2251
      %v2380 = vpack.c.b16 %v2256, %v2252
      %v2381 = vpack.c.b16 %v2261, %v2257
      %v2382 = vpack.c.b16 %v2262, %v2258
      %v2383 = vpack.c.b16 %v2263, %v2259
      %v2384 = vpack.c.b16 %v2264, %v2260
      %v2385 = vpack.c.b16 %v2269, %v2265
      %v2386 = vpack.c.b16 %v2270, %v2266
      %v2387 = vpack.c.b16 %v2271, %v2267
      %v2388 = vpack.c.b16 %v2272, %v2268
      %v2389 = vpack.c.b16 %v2277, %v2273
      %v2390 = vpack.c.b16 %v2278, %v2274
      %v2391 = vpack.c.b16 %v2279, %v2275
      %v2392 = vpack.c.b16 %v2280, %v2276
      %v2393 = vpack.c.b16 %v2285, %v2281
      %v2394 = vpack.c.b16 %v2286, %v2282
      %v2395 = vpack.c.b16 %v2287, %v2283
      %v2396 = vpack.c.b16 %v2288, %v2284
      %v2397 = vpack.c.b16 %v2293, %v2289
      %v2398 = vpack.c.b16 %v2294, %v2290
      %v2399 = vpack.c.b16 %v2295, %v2291
      %v2400 = vpack.c.b16 %v2296, %v2292
      %v2401 = vpack.c.b16 %v2301, %v2297
      %v2402 = vpack.c.b16 %v2302, %v2298
      %v2403 = vpack.c.b16 %v2303, %v2299
      %v2404 = vpack.c.b16 %v2304, %v2300
      %v2405 = vpack.c.b16 %v2309, %v2305
      %v2406 = vpack.c.b16 %v2310, %v2306
      %v2407 = vpack.c.b16 %v2311, %v2307
      %v2408 = vpack.c.b16 %v2312, %v2308
      %v2409 = vpack.c.b16 %v2317, %v2313
      %v2410 = vpack.c.b16 %v2318, %v2314
      %v2411 = vpack.c.b16 %v2319, %v2315
      %v2412 = vpack.c.b16 %v2320, %v2316
      %v2413 = vpack.c.b16 %v2325, %v2321
      %v2414 = vpack.c.b16 %v2326, %v2322
      %v2415 = vpack.c.b16 %v2327, %v2323
      %v2416 = vpack.c.b16 %v2328, %v2324
      %v2417 = vpack.c.b16 %v2333, %v2329
      %v2418 = vpack.c.b16 %v2334, %v2330
      %v2419 = vpack.c.b16 %v2335, %v2331
      %v2420 = vpack.c.b16 %v2336, %v2332
      %v2421 = vpack.c.b16 %v2341, %v2337
      %v2422 = vpack.c.b16 %v2342, %v2338
      %v2423 = vpack.c.b16 %v2343, %v2339
      %v2424 = vpack.c.b16 %v2344, %v2340
      %v2425 = vpack.c.b16 %v2349, %v2345
      %v2426 = vpack.c.b16 %v2350, %v2346
      %v2427 = vpack.c.b16 %v2351, %v2347
      %v2428 = vpack.c.b16 %v2352, %v2348
      %v2429 = vpack.c.b16 %v2357, %v2353
      %v2430 = vpack.c.b16 %v2358, %v2354
      %v2431 = vpack.c.b16 %v2359, %v2355
      %v2432 = vpack.c.b16 %v2360, %v2356
      %v2433 = vpack.c.b16 %v2365, %v2361
      %v2434 = vpack.c.b16 %v2366, %v2362
      %v2435 = vpack.c.b16 %v2367, %v2363
      %v2436 = vpack.c.b16 %v2368, %v2364
      %v2437 = vpack.c.b16 %v2373, %v2369
      %v2438 = vpack.c.b16 %v2374, %v2370
      %v2439 = vpack.c.b16 %v2375, %v2371
      %v2440 = vpack.c.b16 %v2376, %v2372
      %2505 = vmatprep.subr.bf16.mxu0 %v2378
      %2506 = vmatpush1.bf16.msra.mxu0 %v2377
      %2507 = vmatprep.subr.bf16.mxu0 %v2382
      %2508 = vmatpush1.bf16.msra.mxu0 %v2381
      %2509 = vmatprep.subr.bf16.mxu0 %v2386
      %2510 = vmatpush1.bf16.msra.mxu0 %v2385
      %2511 = vmatprep.subr.bf16.mxu0 %v2390
      %2512 = vmatpush1.bf16.msra.mxu0 %v2389
      %2513 = vmatprep.subr.bf16.mxu0 %v2394
      %2514 = vmatpush1.bf16.msra.mxu0 %v2393
      %2515 = vmatprep.subr.bf16.mxu0 %v2398
      %2516 = vmatpush1.bf16.msra.mxu0 %v2397
      %2517 = vmatprep.subr.bf16.mxu0 %v2402
      %2518 = vmatpush1.bf16.msra.mxu0 %v2401
      %2519 = vmatprep.subr.bf16.mxu0 %v2406
      %2520 = vmatpush1.bf16.msra.mxu0 %v2405
      %2521 = vmatprep.subr.bf16.mxu0 %v2410
      %2522 = vmatpush1.bf16.msra.mxu0 %v2409
      %2523 = vmatprep.subr.bf16.mxu0 %v2414
      %2524 = vmatpush1.bf16.msra.mxu0 %v2413
      %2525 = vmatprep.subr.bf16.mxu0 %v2418
      %2526 = vmatpush1.bf16.msra.mxu0 %v2417
      %2527 = vmatprep.subr.bf16.mxu0 %v2422
      %2528 = vmatpush1.bf16.msra.mxu0 %v2421
      %2529 = vmatprep.subr.bf16.mxu0 %v2426
      %2530 = vmatpush1.bf16.msra.mxu0 %v2425
      %2531 = vmatprep.subr.bf16.mxu0 %v2430
      %2532 = vmatpush1.bf16.msra.mxu0 %v2429
      %2533 = vmatprep.subr.bf16.mxu0 %v2434
      %2534 = vmatpush1.bf16.msra.mxu0 %v2433
      %2535 = vmatprep.subr.bf16.mxu0 %v2438
      %2536 = vmatpush1.bf16.msra.mxu0 %v2437
      %2537 = vmatprep.mubr.bf16.mxu0 %v2098
      %2538 = vmatmul.mubr.bf16.gmra.mrb[0].mxu0 %v2097
      %v2539 = vpop.f32.mrb[0].mxu0
      %v2540 = vadd.f32 %v2168, %v2539
      %v2541 = vpop.f32.mrb[0].mxu0
      %v2542 = vadd.f32 %v2172, %v2541
      %v2543 = vpop.f32.mrb[0].mxu0
      %v2544 = vpop.f32.mrb[0].mxu0
      %2545 = vdwg.mxu0
      %2546 = vmatprep.subr.bf16.mxu0 %v2380
      %2547 = vmatpush1.bf16.msra.mxu0 %v2379
      %2548 = vmatprep.subr.bf16.mxu0 %v2384
      %2549 = vmatpush1.bf16.msra.mxu0 %v2383
      %2550 = vmatprep.subr.bf16.mxu0 %v2388
      %2551 = vmatpush1.bf16.msra.mxu0 %v2387
      %2552 = vmatprep.subr.bf16.mxu0 %v2392
      %2553 = vmatpush1.bf16.msra.mxu0 %v2391
      %2554 = vmatprep.subr.bf16.mxu0 %v2396
      %2555 = vmatpush1.bf16.msra.mxu0 %v2395
      %2556 = vmatprep.subr.bf16.mxu0 %v2400
      %2557 = vmatpush1.bf16.msra.mxu0 %v2399
      %2558 = vmatprep.subr.bf16.mxu0 %v2404
      %2559 = vmatpush1.bf16.msra.mxu0 %v2403
      %2560 = vmatprep.subr.bf16.mxu0 %v2408
      %2561 = vmatpush1.bf16.msra.mxu0 %v2407
      %2562 = vmatprep.subr.bf16.mxu0 %v2412
      %2563 = vmatpush1.bf16.msra.mxu0 %v2411
      %2564 = vmatprep.subr.bf16.mxu0 %v2416
      %2565 = vmatpush1.bf16.msra.mxu0 %v2415
      %2566 = vmatprep.subr.bf16.mxu0 %v2420
      %2567 = vmatpush1.bf16.msra.mxu0 %v2419
      %2568 = vmatprep.subr.bf16.mxu0 %v2424
      %2569 = vmatpush1.bf16.msra.mxu0 %v2423
      %2570 = vmatprep.subr.bf16.mxu0 %v2428
      %2571 = vmatpush1.bf16.msra.mxu0 %v2427
      %2572 = vmatprep.subr.bf16.mxu0 %v2432
      %2573 = vmatpush1.bf16.msra.mxu0 %v2431
      %2574 = vmatprep.subr.bf16.mxu0 %v2436
      %2575 = vmatpush1.bf16.msra.mxu0 %v2435
      %2576 = vmatprep.subr.bf16.mxu0 %v2440
      %2577 = vmatpush1.bf16.msra.mxu0 %v2439
      %2578 = vmatprep.mubr.bf16.mxu0 %v2098
      %2579 = vmatmul.mubr.bf16.gmra.mrb[0].mxu0 %v2097
      %v2580 = vpop.f32.mrb[0].mxu0
      %v2581 = vadd.f32 %v2176, %v2580
      %v2582 = vpop.f32.mrb[0].mxu0
      %v2583 = vadd.f32 %v2180, %v2582
      %v2584 = vpop.f32.mrb[0].mxu0
      %v2585 = vpop.f32.mrb[0].mxu0
      %2586 = vdwg.mxu0
      %v2587 = vmul.f32 %v2540, %v2540
      %v2588 = vmul.f32 %v2542, %v2542
      %v2589 = vmul.f32 %v2581, %v2581
      %v2590 = vmul.f32 %v2583, %v2583
      %v2591 = vmul.f32 %v2540, %v2587
      %v2592 = vmul.f32 %v2542, %v2588
      %v2593 = vmul.f32 %v2581, %v2589
      %v2594 = vmul.f32 %v2583, %v2590
      %v2595 = vmul.f32 %v2591, 0.044715
      %v2596 = vmul.f32 %v2592, 0.044715
      %v2597 = vmul.f32 %v2593, 0.044715
      %v2598 = vmul.f32 %v2594, 0.044715
      %v2599 = vadd.f32 %v2540, %v2595
      %v2600 = vadd.f32 %v2542, %v2596
      %v2601 = vadd.f32 %v2581, %v2597
      %v2602 = vadd.f32 %v2583, %v2598
      %v2603 = vmul.f32 %v2599, 0.7978846
      %v2604 = vmul.f32 %v2600, 0.7978846
      %v2605 = vmul.f32 %v2601, 0.7978846
      %v2606 = vmul.f32 %v2602, 0.7978846
      %v2607 = vtanh.pop %v2603
      %v2608 = vtanh.pop %v2604
      %v2609 = vtanh.pop %v2605
      %v2610 = vtanh.pop %v2606
      %v2611 = vadd.f32 %v2607, 1.0
      %v2612 = vadd.f32 %v2608, 1.0
      %v2613 = vadd.f32 %v2609, 1.0
      %v2614 = vadd.f32 %v2610, 1.0
      %v2615 = vmul.f32 %v2611, 0.5
      %v2616 = vmul.f32 %v2612, 0.5
      %v2617 = vmul.f32 %v2613, 0.5
      %v2618 = vmul.f32 %v2614, 0.5
      %v2619 = vmul.f32 %v2540, %v2615
      %v2620 = vmul.f32 %v2542, %v2616
      %v2621 = vmul.f32 %v2581, %v2617
      %v2622 = vmul.f32 %v2583, %v2618
      %v2623 = vpack.c.bf16 %v2619, %v2619
      %v2624 = vpack.c.bf16 %v2620, %v2620
      %v2625 = vpack.c.bf16 %v2621, %v2621
      %v2626 = vpack.c.bf16 %v2622, %v2622
      %v2627 = vld [vmem:[%s15] sm:$0xff]
      %v2628 = vld [vmem:[%s15 + $0x8] sm:$0xff]
      %v2629 = vld [vmem:[%s15 + $0x10] sm:$0xff]
      %v2630 = vld [vmem:[%s15 + $0x18] sm:$0xff]
      %v2631 = vld [vmem:[%s15 + $0x20] sm:$0xff]
      %v2632 = vld [vmem:[%s15 + $0x28] sm:$0xff]
      %v2633 = vld [vmem:[%s15 + $0x30] sm:$0xff]
      %v2634 = vld [vmem:[%s15 + $0x38] sm:$0xff]
      %v2635 = vld [vmem:[%s15 + $0x40] sm:$0xff]
      %v2636 = vld [vmem:[%s15 + $0x48] sm:$0xff]
      %v2637 = vld [vmem:[%s15 + $0x50] sm:$0xff]
      %v2638 = vld [vmem:[%s15 + $0x58] sm:$0xff]
      %v2639 = vld [vmem:[%s15 + $0x60] sm:$0xff]
      %v2640 = vld [vmem:[%s15 + $0x68] sm:$0xff]
      %v2641 = vld [vmem:[%s15 + $0x70] sm:$0xff]
      %v2642 = vld [vmem:[%s15 + $0x78] sm:$0xff]
      %v2643 = vld [vmem:[%s15 + $0x80] sm:$0xff]
      %v2644 = vld [vmem:[%s15 + $0x88] sm:$0xff]
      %v2645 = vld [vmem:[%s15 + $0x90] sm:$0xff]
      %v2646 = vld [vmem:[%s15 + $0x98] sm:$0xff]
      %v2647 = vld [vmem:[%s15 + $0xa0] sm:$0xff]
      %v2648 = vld [vmem:[%s15 + $0xa8] sm:$0xff]
      %v2649 = vld [vmem:[%s15 + $0xb0] sm:$0xff]
      %v2650 = vld [vmem:[%s15 + $0xb8] sm:$0xff]
      %v2651 = vld [vmem:[%s15 + $0xc0] sm:$0xff]
      %v2652 = vld [vmem:[%s15 + $0xc8] sm:$0xff]
      %v2653 = vld [vmem:[%s15 + $0xd0] sm:$0xff]
      %v2654 = vld [vmem:[%s15 + $0xd8] sm:$0xff]
      %v2655 = vld [vmem:[%s15 + $0xe0] sm:$0xff]
      %v2656 = vld [vmem:[%s15 + $0xe8] sm:$0xff]
      %v2657 = vld [vmem:[%s15 + $0xf0] sm:$0xff]
      %v2658 = vld [vmem:[%s15 + $0xf8] sm:$0xff]
      %v2659 = vld [vmem:[%s15 + $0x100] sm:$0xff]
      %v2660 = vld [vmem:[%s15 + $0x108] sm:$0xff]
      %v2661 = vld [vmem:[%s15 + $0x110] sm:$0xff]
      %v2662 = vld [vmem:[%s15 + $0x118] sm:$0xff]
      %v2663 = vld [vmem:[%s15 + $0x120] sm:$0xff]
      %v2664 = vld [vmem:[%s15 + $0x128] sm:$0xff]
      %v2665 = vld [vmem:[%s15 + $0x130] sm:$0xff]
      %v2666 = vld [vmem:[%s15 + $0x138] sm:$0xff]
      %v2667 = vld [vmem:[%s15 + $0x140] sm:$0xff]
      %v2668 = vld [vmem:[%s15 + $0x148] sm:$0xff]
      %v2669 = vld [vmem:[%s15 + $0x150] sm:$0xff]
      %v2670 = vld [vmem:[%s15 + $0x158] sm:$0xff]
      %v2671 = vld [vmem:[%s15 + $0x160] sm:$0xff]
      %v2672 = vld [vmem:[%s15 + $0x168] sm:$0xff]
      %v2673 = vld [vmem:[%s15 + $0x170] sm:$0xff]
      %v2674 = vld [vmem:[%s15 + $0x178] sm:$0xff]
      %v2675 = vld [vmem:[%s15 + $0x180] sm:$0xff]
      %v2676 = vld [vmem:[%s15 + $0x188] sm:$0xff]
      %v2677 = vld [vmem:[%s15 + $0x190] sm:$0xff]
      %v2678 = vld [vmem:[%s15 + $0x198] sm:$0xff]
      %v2679 = vld [vmem:[%s15 + $0x1a0] sm:$0xff]
      %v2680 = vld [vmem:[%s15 + $0x1a8] sm:$0xff]
      %v2681 = vld [vmem:[%s15 + $0x1b0] sm:$0xff]
      %v2682 = vld [vmem:[%s15 + $0x1b8] sm:$0xff]
      %v2683 = vld [vmem:[%s15 + $0x1c0] sm:$0xff]
      %v2684 = vld [vmem:[%s15 + $0x1c8] sm:$0xff]
      %v2685 = vld [vmem:[%s15 + $0x1d0] sm:$0xff]
      %v2686 = vld [vmem:[%s15 + $0x1d8] sm:$0xff]
      %v2687 = vld [vmem:[%s15 + $0x1e0] sm:$0xff]
      %v2688 = vld [vmem:[%s15 + $0x1e8] sm:$0xff]
      %v2689 = vld [vmem:[%s15 + $0x1f0] sm:$0xff]
      %v2690 = vld [vmem:[%s15 + $0x1f8] sm:$0xff]
      %v2755 = vunpack.c.l.b16 %v2627
      %v2756 = vunpack.c.h.b16 %v2627
      %v2757 = vunpack.c.l.b16 %v2628
      %v2758 = vunpack.c.h.b16 %v2628
      %v2759 = vunpack.c.l.b16 %v2629
      %v2760 = vunpack.c.h.b16 %v2629
      %v2761 = vunpack.c.l.b16 %v2630
      %v2762 = vunpack.c.h.b16 %v2630
      %v2763 = vunpack.c.l.b16 %v2631
      %v2764 = vunpack.c.h.b16 %v2631
      %v2765 = vunpack.c.l.b16 %v2632
      %v2766 = vunpack.c.h.b16 %v2632
      %v2767 = vunpack.c.l.b16 %v2633
      %v2768 = vunpack.c.h.b16 %v2633
      %v2769 = vunpack.c.l.b16 %v2634
      %v2770 = vunpack.c.h.b16 %v2634
      %v2771 = vunpack.c.l.b16 %v2635
      %v2772 = vunpack.c.h.b16 %v2635
      %v2773 = vunpack.c.l.b16 %v2636
      %v2774 = vunpack.c.h.b16 %v2636
      %v2775 = vunpack.c.l.b16 %v2637
      %v2776 = vunpack.c.h.b16 %v2637
      %v2777 = vunpack.c.l.b16 %v2638
      %v2778 = vunpack.c.h.b16 %v2638
      %v2779 = vunpack.c.l.b16 %v2639
      %v2780 = vunpack.c.h.b16 %v2639
      %v2781 = vunpack.c.l.b16 %v2640
      %v2782 = vunpack.c.h.b16 %v2640
      %v2783 = vunpack.c.l.b16 %v2641
      %v2784 = vunpack.c.h.b16 %v2641
      %v2785 = vunpack.c.l.b16 %v2642
      %v2786 = vunpack.c.h.b16 %v2642
      %v2787 = vunpack.c.l.b16 %v2643
      %v2788 = vunpack.c.h.b16 %v2643
      %v2789 = vunpack.c.l.b16 %v2644
      %v2790 = vunpack.c.h.b16 %v2644
      %v2791 = vunpack.c.l.b16 %v2645
      %v2792 = vunpack.c.h.b16 %v2645
      %v2793 = vunpack.c.l.b16 %v2646
      %v2794 = vunpack.c.h.b16 %v2646
      %v2795 = vunpack.c.l.b16 %v2647
      %v2796 = vunpack.c.h.b16 %v2647
      %v2797 = vunpack.c.l.b16 %v2648
      %v2798 = vunpack.c.h.b16 %v2648
      %v2799 = vunpack.c.l.b16 %v2649
      %v2800 = vunpack.c.h.b16 %v2649
      %v2801 = vunpack.c.l.b16 %v2650
      %v2802 = vunpack.c.h.b16 %v2650
      %v2803 = vunpack.c.l.b16 %v2651
      %v2804 = vunpack.c.h.b16 %v2651
      %v2805 = vunpack.c.l.b16 %v2652
      %v2806 = vunpack.c.h.b16 %v2652
      %v2807 = vunpack.c.l.b16 %v2653
      %v2808 = vunpack.c.h.b16 %v2653
      %v2809 = vunpack.c.l.b16 %v2654
      %v2810 = vunpack.c.h.b16 %v2654
      %v2811 = vunpack.c.l.b16 %v2655
      %v2812 = vunpack.c.h.b16 %v2655
      %v2813 = vunpack.c.l.b16 %v2656
      %v2814 = vunpack.c.h.b16 %v2656
      %v2815 = vunpack.c.l.b16 %v2657
      %v2816 = vunpack.c.h.b16 %v2657
      %v2817 = vunpack.c.l.b16 %v2658
      %v2818 = vunpack.c.h.b16 %v2658
      %v2819 = vunpack.c.l.b16 %v2659
      %v2820 = vunpack.c.h.b16 %v2659
      %v2821 = vunpack.c.l.b16 %v2660
      %v2822 = vunpack.c.h.b16 %v2660
      %v2823 = vunpack.c.l.b16 %v2661
      %v2824 = vunpack.c.h.b16 %v2661
      %v2825 = vunpack.c.l.b16 %v2662
      %v2826 = vunpack.c.h.b16 %v2662
      %v2827 = vunpack.c.l.b16 %v2663
      %v2828 = vunpack.c.h.b16 %v2663
      %v2829 = vunpack.c.l.b16 %v2664
      %v2830 = vunpack.c.h.b16 %v2664
      %v2831 = vunpack.c.l.b16 %v2665
      %v2832 = vunpack.c.h.b16 %v2665
      %v2833 = vunpack.c.l.b16 %v2666
      %v2834 = vunpack.c.h.b16 %v2666
      %v2835 = vunpack.c.l.b16 %v2667
      %v2836 = vunpack.c.h.b16 %v2667
      %v2837 = vunpack.c.l.b16 %v2668
      %v2838 = vunpack.c.h.b16 %v2668
      %v2839 = vunpack.c.l.b16 %v2669
      %v2840 = vunpack.c.h.b16 %v2669
      %v2841 = vunpack.c.l.b16 %v2670
      %v2842 = vunpack.c.h.b16 %v2670
      %v2843 = vunpack.c.l.b16 %v2671
      %v2844 = vunpack.c.h.b16 %v2671
      %v2845 = vunpack.c.l.b16 %v2672
      %v2846 = vunpack.c.h.b16 %v2672
      %v2847 = vunpack.c.l.b16 %v2673
      %v2848 = vunpack.c.h.b16 %v2673
      %v2849 = vunpack.c.l.b16 %v2674
      %v2850 = vunpack.c.h.b16 %v2674
      %v2851 = vunpack.c.l.b16 %v2675
      %v2852 = vunpack.c.h.b16 %v2675
      %v2853 = vunpack.c.l.b16 %v2676
      %v2854 = vunpack.c.h.b16 %v2676
      %v2855 = vunpack.c.l.b16 %v2677
      %v2856 = vunpack.c.h.b16 %v2677
      %v2857 = vunpack.c.l.b16 %v2678
      %v2858 = vunpack.c.h.b16 %v2678
      %v2859 = vunpack.c.l.b16 %v2679
      %v2860 = vunpack.c.h.b16 %v2679
      %v2861 = vunpack.c.l.b16 %v2680
      %v2862 = vunpack.c.h.b16 %v2680
      %v2863 = vunpack.c.l.b16 %v2681
      %v2864 = vunpack.c.h.b16 %v2681
      %v2865 = vunpack.c.l.b16 %v2682
      %v2866 = vunpack.c.h.b16 %v2682
      %v2867 = vunpack.c.l.b16 %v2683
      %v2868 = vunpack.c.h.b16 %v2683
      %v2869 = vunpack.c.l.b16 %v2684
      %v2870 = vunpack.c.h.b16 %v2684
      %v2871 = vunpack.c.l.b16 %v2685
      %v2872 = vunpack.c.h.b16 %v2685
      %v2873 = vunpack.c.l.b16 %v2686
      %v2874 = vunpack.c.h.b16 %v2686
      %v2875 = vunpack.c.l.b16 %v2687
      %v2876 = vunpack.c.h.b16 %v2687
      %v2877 = vunpack.c.l.b16 %v2688
      %v2878 = vunpack.c.h.b16 %v2688
      %v2879 = vunpack.c.l.b16 %v2689
      %v2880 = vunpack.c.h.b16 %v2689
      %v2881 = vunpack.c.l.b16 %v2690
      %v2882 = vunpack.c.h.b16 %v2690
      %v2883 = vpack.c.b16 %v2757, %v2755
      %v2884 = vpack.c.b16 %v2758, %v2756
      %v2885 = vpack.c.b16 %v2761, %v2759
      %v2886 = vpack.c.b16 %v2762, %v2760
      %v2887 = vpack.c.b16 %v2765, %v2763
      %v2888 = vpack.c.b16 %v2766, %v2764
      %v2889 = vpack.c.b16 %v2769, %v2767
      %v2890 = vpack.c.b16 %v2770, %v2768
      %v2891 = vpack.c.b16 %v2773, %v2771
      %v2892 = vpack.c.b16 %v2774, %v2772
      %v2893 = vpack.c.b16 %v2777, %v2775
      %v2894 = vpack.c.b16 %v2778, %v2776
      %v2895 = vpack.c.b16 %v2781, %v2779
      %v2896 = vpack.c.b16 %v2782, %v2780
      %v2897 = vpack.c.b16 %v2785, %v2783
      %v2898 = vpack.c.b16 %v2786, %v2784
      %v2899 = vpack.c.b16 %v2789, %v2787
      %v2900 = vpack.c.b16 %v2790, %v2788
      %v2901 = vpack.c.b16 %v2793, %v2791
      %v2902 = vpack.c.b16 %v2794, %v2792
      %v2903 = vpack.c.b16 %v2797, %v2795
      %v2904 = vpack.c.b16 %v2798, %v2796
      %v2905 = vpack.c.b16 %v2801, %v2799
      %v2906 = vpack.c.b16 %v2802, %v2800
      %v2907 = vpack.c.b16 %v2805, %v2803
      %v2908 = vpack.c.b16 %v2806, %v2804
      %v2909 = vpack.c.b16 %v2809, %v2807
      %v2910 = vpack.c.b16 %v2810, %v2808
      %v2911 = vpack.c.b16 %v2813, %v2811
      %v2912 = vpack.c.b16 %v2814, %v2812
      %v2913 = vpack.c.b16 %v2817, %v2815
      %v2914 = vpack.c.b16 %v2818, %v2816
      %v2915 = vpack.c.b16 %v2821, %v2819
      %v2916 = vpack.c.b16 %v2822, %v2820
      %v2917 = vpack.c.b16 %v2825, %v2823
      %v2918 = vpack.c.b16 %v2826, %v2824
      %v2919 = vpack.c.b16 %v2829, %v2827
      %v2920 = vpack.c.b16 %v2830, %v2828
      %v2921 = vpack.c.b16 %v2833, %v2831
      %v2922 = vpack.c.b16 %v2834, %v2832
      %v2923 = vpack.c.b16 %v2837, %v2835
      %v2924 = vpack.c.b16 %v2838, %v2836
      %v2925 = vpack.c.b16 %v2841, %v2839
      %v2926 = vpack.c.b16 %v2842, %v2840
      %v2927 = vpack.c.b16 %v2845, %v2843
      %v2928 = vpack.c.b16 %v2846, %v2844
      %v2929 = vpack.c.b16 %v2849, %v2847
      %v2930 = vpack.c.b16 %v2850, %v2848
      %v2931 = vpack.c.b16 %v2853, %v2851
      %v2932 = vpack.c.b16 %v2854, %v2852
      %v2933 = vpack.c.b16 %v2857, %v2855
      %v2934 = vpack.c.b16 %v2858, %v2856
      %v2935 = vpack.c.b16 %v2861, %v2859
      %v2936 = vpack.c.b16 %v2862, %v2860
      %v2937 = vpack.c.b16 %v2865, %v2863
      %v2938 = vpack.c.b16 %v2866, %v2864
      %v2939 = vpack.c.b16 %v2869, %v2867
      %v2940 = vpack.c.b16 %v2870, %v2868
      %v2941 = vpack.c.b16 %v2873, %v2871
      %v2942 = vpack.c.b16 %v2874, %v2872
      %v2943 = vpack.c.b16 %v2877, %v2875
      %v2944 = vpack.c.b16 %v2878, %v2876
      %v2945 = vpack.c.b16 %v2881, %v2879
      %v2946 = vpack.c.b16 %v2882, %v2880
      %3011 = vmatprep.subr.bf16.mxu0 %v2884
      %3012 = vmatpush1.bf16.msra.mxu0 %v2883
      %3013 = vmatprep.subr.bf16.mxu0 %v2886
      %3014 = vmatpush1.bf16.msra.mxu0 %v2885
      %3015 = vmatprep.subr.bf16.mxu0 %v2888
      %3016 = vmatpush1.bf16.msra.mxu0 %v2887
      %3017 = vmatprep.subr.bf16.mxu0 %v2890
      %3018 = vmatpush1.bf16.msra.mxu0 %v2889
      %3019 = vmatprep.subr.bf16.mxu0 %v2892
      %3020 = vmatpush1.bf16.msra.mxu0 %v2891
      %3021 = vmatprep.subr.bf16.mxu0 %v2894
      %3022 = vmatpush1.bf16.msra.mxu0 %v2893
      %3023 = vmatprep.subr.bf16.mxu0 %v2896
      %3024 = vmatpush1.bf16.msra.mxu0 %v2895
      %3025 = vmatprep.subr.bf16.mxu0 %v2898
      %3026 = vmatpush1.bf16.msra.mxu0 %v2897
      %3027 = vmatprep.subr.bf16.mxu0 %v2900
      %3028 = vmatpush1.bf16.msra.mxu0 %v2899
      %3029 = vmatprep.subr.bf16.mxu0 %v2902
      %3030 = vmatpush1.bf16.msra.mxu0 %v2901
      %3031 = vmatprep.subr.bf16.mxu0 %v2904
      %3032 = vmatpush1.bf16.msra.mxu0 %v2903
      %3033 = vmatprep.subr.bf16.mxu0 %v2906
      %3034 = vmatpush1.bf16.msra.mxu0 %v2905
      %3035 = vmatprep.subr.bf16.mxu0 %v2908
      %3036 = vmatpush1.bf16.msra.mxu0 %v2907
      %3037 = vmatprep.subr.bf16.mxu0 %v2910
      %3038 = vmatpush1.bf16.msra.mxu0 %v2909
      %3039 = vmatprep.subr.bf16.mxu0 %v2912
      %3040 = vmatpush1.bf16.msra.mxu0 %v2911
      %3041 = vmatprep.subr.bf16.mxu0 %v2914
      %3042 = vmatpush1.bf16.msra.mxu0 %v2913
      %3043 = vmatprep.mubr.bf16.mxu0 %v2624
      %3044 = vmatmul.mubr.bf16.gmra.mrb[0].mxu0 %v2623
      %v3045 = vpop.f32.mrb[0].mxu0
      %v3046 = vadd.f32 0.0, %v3045
      %v3047 = vpop.f32.mrb[0].mxu0
      %v3048 = vadd.f32 0.0, %v3047
      %v3049 = vpop.f32.mrb[0].mxu0
      %v3050 = vpop.f32.mrb[0].mxu0
      %3051 = vdwg.mxu0
      %3052 = vmatprep.subr.bf16.mxu0 %v2916
      %3053 = vmatpush1.bf16.msra.mxu0 %v2915
      %3054 = vmatprep.subr.bf16.mxu0 %v2918
      %3055 = vmatpush1.bf16.msra.mxu0 %v2917
      %3056 = vmatprep.subr.bf16.mxu0 %v2920
      %3057 = vmatpush1.bf16.msra.mxu0 %v2919
      %3058 = vmatprep.subr.bf16.mxu0 %v2922
      %3059 = vmatpush1.bf16.msra.mxu0 %v2921
      %3060 = vmatprep.subr.bf16.mxu0 %v2924
      %3061 = vmatpush1.bf16.msra.mxu0 %v2923
      %3062 = vmatprep.subr.bf16.mxu0 %v2926
      %3063 = vmatpush1.bf16.msra.mxu0 %v2925
      %3064 = vmatprep.subr.bf16.mxu0 %v2928
      %3065 = vmatpush1.bf16.msra.mxu0 %v2927
      %3066 = vmatprep.subr.bf16.mxu0 %v2930
      %3067 = vmatpush1.bf16.msra.mxu0 %v2929
      %3068 = vmatprep.subr.bf16.mxu0 %v2932
      %3069 = vmatpush1.bf16.msra.mxu0 %v2931
      %3070 = vmatprep.subr.bf16.mxu0 %v2934
      %3071 = vmatpush1.bf16.msra.mxu0 %v2933
      %3072 = vmatprep.subr.bf16.mxu0 %v2936
      %3073 = vmatpush1.bf16.msra.mxu0 %v2935
      %3074 = vmatprep.subr.bf16.mxu0 %v2938
      %3075 = vmatpush1.bf16.msra.mxu0 %v2937
      %3076 = vmatprep.subr.bf16.mxu0 %v2940
      %3077 = vmatpush1.bf16.msra.mxu0 %v2939
      %3078 = vmatprep.subr.bf16.mxu0 %v2942
      %3079 = vmatpush1.bf16.msra.mxu0 %v2941
      %3080 = vmatprep.subr.bf16.mxu0 %v2944
      %3081 = vmatpush1.bf16.msra.mxu0 %v2943
      %3082 = vmatprep.subr.bf16.mxu0 %v2946
      %3083 = vmatpush1.bf16.msra.mxu0 %v2945
      %3084 = vmatprep.mubr.bf16.mxu0 %v2626
      %3085 = vmatmul.mubr.bf16.gmra.mrb[0].mxu0 %v2625
      %v3086 = vpop.f32.mrb[0].mxu0
      %v3087 = vadd.f32 %v3046, %v3086
      %v3088 = vpop.f32.mrb[0].mxu0
      %v3089 = vadd.f32 %v3048, %v3088
      %v3090 = vpop.f32.mrb[0].mxu0
      %v3091 = vpop.f32.mrb[0].mxu0
      %3092 = vdwg.mxu0
      %v3093 = vadd.f32 %v2047, %v3087
      %v3094 = vadd.f32 %v2048, %v3089
      %v3095 = vld [vmem:[%s16] sm:$0x3]
      %v3097 = vlaneseq
      %v3098 = vshrl.u32 %v3097, 7
      %v3099 = vsub.s32 0, %v3098
      %v3100 = vrot.slane %v3095, %v3099
      %v3101 = vlaneseq
      %v3102 = vshrl.u32 %v3101, 7
      %v3103 = vsub.s32 1, %v3102
      %v3104 = vrot.slane %v3095, %v3103
      %v3107 = vadd.f32 %v3093, %v3100
      %v3108 = vadd.f32 %v3094, %v3104
      %3109 = vst [vmem:[%s548] sm:$0x1f] %v3107
      %3110 = vst [vmem:[%s548 + $0x8] sm:$0x1f] %v3108
      %p3111 = scmp.lt.s32.totalorder %s28, 1
      %s3112 = scalar_select %p3111, %s28, 1
      %s3113 = smul.addr %s3112, 2
      %s3114 = smul.addr %s3113, 8
      %s3115 = scalar_lea.vmem %s17, %s3114
      // Predicated region
      $region89: #{_lambda_.6} parent=87 // pred_check
        %p3116 = pneg %p408
      $region90: #{_lambda_.6} parent=87 // pred_check_branch
        %3118 = sbr.rel (%p3116) target = $region92
      $region91: #{_lambda_.6} parent=87 // pred_region
        _
      $region92: #{_lambda_.6} parent=87 // pred_fallthru
        _
    $region88: #{_lambda_.6} parent=5 // pred_fallthru
      _
    %p3119 = scmp.le.s32.totalorder 2, %s23
    // Predicated region
    $region93: #{_lambda_.6} parent=5 // pred_check
      %p3120 = pneg %p3119
    $region94: #{_lambda_.6} parent=5 // pred_check_branch
      %3122 = sbr.rel (%p3120) target = $region96
    $region95: #{_lambda_.6} parent=5 // pred_region
      %s3123 = ssub.s32 %s23, 2
      // Predicated region
      $region97: #{_lambda_.6} parent=95 // pred_check
        %p3124 = pneg %p414
      $region98: #{_lambda_.6} parent=95 // pred_check_branch
        %3126 = sbr.rel (%p3124) target = $region100
      $region99: #{_lambda_.6} parent=95 // pred_region
        %p3127 = scmp.lt.s32.totalorder %s29, 1
        %s3128 = scalar_select %p3127, %s29, 1
        %s3129 = smul.addr %s3128, 2
        %s3130 = smul.addr %s3129, 8
        %s3131 = scalar_lea.vmem %s17, %s3130
      $region100: #{_lambda_.6} parent=95 // pred_fallthru
        _
    $region96: #{_lambda_.6} parent=5 // pred_fallthru
      _
  $region6: #{_lambda_.6} parent=0 // loop_footer
    %s27 = sadd.s32 1, %s23
  $region7: #{_lambda_.6} parent=0 // loop_footer_branch
    %22 = sbr.rel target = $region3
  $region8: #{_lambda_.6} parent=0 // loop_exit
    _

</llo_original>
